<compile_context>
chip_gen: v7x
topology: tpu7x:2x2x1
jax: 0.10.0
libtpu: 0.0.40
codegen_flags: <defaults>
</compile_context>

<pallas_src>
import functools

import numpy as np

import jax
import jax.numpy as jnp
from jax.experimental import pallas as pl
from jax.experimental.pallas import tpu as pltpu


# ----------------------------------------------------------------------------
# In-kernel helper: 3x3 conv read from a zero-border padded VMEM scratch.
# Weights are scalars in SMEM (OIHW, flattened); bias folded into acc init.
# ----------------------------------------------------------------------------
def _conv3x3_acc(src_ref, cin, w_ref, b_ref, cout, h, w):
    accs = [jnp.full((h, w), b_ref[co], dtype=jnp.float32) for co in range(cout)]
    for ci in range(cin):
        xp = src_ref[ci]                                   # (h+2, w+2) padded channel
        # Hoisted lane shifts: 3 column-shifted views, reused for all ky / co.
        cols = [xp[:, kx:kx + w] for kx in range(3)]       # each (h+2, w)
        for kx in range(3):
            colx = cols[kx]
            for ky in range(3):
                patch = colx[ky:ky + h, :]                 # sublane-only shift
                base = ci * 9 + ky * 3 + kx
                for co in range(cout):
                    accs[co] = accs[co] + w_ref[co * cin * 9 + base] * patch
    return accs


# ----------------------------------------------------------------------------
# Fused kernel: upsample + pad + concat + conv1+ReLU + conv2+ReLU, one image
# per grid step.
# ----------------------------------------------------------------------------
def _up_kernel(w1_ref, b1_ref, w2_ref, b2_ref, ah_ref, aw_ref,
               x1_ref, x2_ref, o_ref, xin_ref, h_ref,
               *, c1, c2, cmid, cout, h, w, hs, ws, pad_t, pad_l):
    f32 = jnp.float32
    hu, wu = 2 * hs, 2 * ws

    # Zero the padded staging buffers (conv borders + any pad gap stay zero).
    xin_ref[...] = jnp.zeros(xin_ref.shape, f32)
    h_ref[...] = jnp.zeros(h_ref.shape, f32)

    # --- fused torch.cat: skip connection x2 -> channels [0, c2) ------------
    for c in range(c2):
        xin_ref[c, 1:h + 1, 1:w + 1] = x2_ref[c].astype(f32)

    # --- fused bilinear x2 upsample (align_corners=True) of x1 --------------
    # up = A_h @ x1c @ A_w, computed as exact-f32 outer-product FMAs on the VPU
    # (A_h, A_w are tiny static interpolation matrices held in VMEM).
    for c in range(c1):
        x1c = x1_ref[c].astype(f32)                        # (hs, ws)
        rows = ah_ref[:, 0:1] * x1c[0:1, :]                # (hu, ws)
        for k in range(1, hs):
            rows = rows + ah_ref[:, k:k + 1] * x1c[k:k + 1, :]
        up = rows[:, 0:1] * aw_ref[0:1, :]                 # (hu, wu)
        for k in range(1, ws):
            up = up + rows[:, k:k + 1] * aw_ref[k:k + 1, :]
        # fused F.pad: place into the interior at the symmetric-pad offset.
        xin_ref[c2 + c, 1 + pad_t:1 + pad_t + hu, 1 + pad_l:1 + pad_l + wu] = up

    # --- conv1 + ReLU -> padded VMEM scratch (intermediate never hits HBM) --
    acc1 = _conv3x3_acc(xin_ref, c1 + c2, w1_ref, b1_ref, cmid, h, w)
    for co in range(cmid):
        h_ref[co, 1:h + 1, 1:w + 1] = jnp.maximum(acc1[co], 0.0)

    # --- conv2 + ReLU -> output ---------------------------------------------
    acc2 = _conv3x3_acc(h_ref, cmid, w2_ref, b2_ref, cout, h, w)
    for co in range(cout):
        o_ref[co] = jnp.maximum(acc2[co], 0.0).astype(o_ref.dtype)


# ----------------------------------------------------------------------------
# Static align_corners=True interpolation matrix (out_size x in_size).
# ----------------------------------------------------------------------------
def _upsample_matrix(in_size, out_size):
    m = np.zeros((out_size, in_size), np.float32)
    if in_size == 1:
        m[:, 0] = 1.0
        return jnp.asarray(m)
    for i in range(out_size):
        src = i * (in_size - 1) / (out_size - 1)
        lo = int(np.floor(src))
        hi = min(lo + 1, in_size - 1)
        frac = src - lo
        m[i, lo] += 1.0 - frac
        m[i, hi] += frac
    return jnp.asarray(m)


# ----------------------------------------------------------------------------
# Up.forward (bilinear=True, bn=False): one fused pallas_call.
# ----------------------------------------------------------------------------
def up_forward_pallas(x1, x2, w1, b1, w2, b2):
    N, C1, Hs, Ws = x1.shape
    N2, C2, H, W = x2.shape
    assert N == N2
    Cmid = int(w1.shape[0])
    Cout = int(w2.shape[0])
    assert int(w1.shape[1]) == C1 + C2 and int(w2.shape[1]) == Cmid

    Hu, Wu = 2 * Hs, 2 * Ws
    dy, dx = H - Hu, W - Wu
    # TODO(synk): PyTorch F.pad with negative diff would crop; not supported here.
    assert dy >= 0 and dx >= 0
    pad_t, pad_l = dy // 2, dx // 2

    a_h = _upsample_matrix(Hs, Hu)                        # (Hu, Hs)
    a_w = jnp.transpose(_upsample_matrix(Ws, Wu))         # (Ws, Wu)

    w1_flat = w1.astype(jnp.float32).reshape(-1)          # OIHW flattened
    b1_flat = b1.astype(jnp.float32).reshape(-1)
    w2_flat = w2.astype(jnp.float32).reshape(-1)
    b2_flat = b2.astype(jnp.float32).reshape(-1)

    kernel = functools.partial(
        _up_kernel, c1=C1, c2=C2, cmid=Cmid, cout=Cout,
        h=H, w=W, hs=Hs, ws=Ws, pad_t=pad_t, pad_l=pad_l)

    in_specs = [
        pl.BlockSpec(memory_space=pltpu.MemorySpace.SMEM),            # w1 scalars
        pl.BlockSpec(memory_space=pltpu.MemorySpace.SMEM),            # b1 scalars
        pl.BlockSpec(memory_space=pltpu.MemorySpace.SMEM),            # w2 scalars
        pl.BlockSpec(memory_space=pltpu.MemorySpace.SMEM),            # b2 scalars
        pl.BlockSpec((Hu, Hs), lambda n: (0, 0)),                     # A_h (resident)
        pl.BlockSpec((Ws, Wu), lambda n: (0, 0)),                     # A_w (resident)
        pl.BlockSpec((None, C1, Hs, Ws), lambda n: (n, 0, 0, 0)),     # x1 (unpadded)
        pl.BlockSpec((None, C2, H, W), lambda n: (n, 0, 0, 0)),       # x2 (unpadded)
    ]

    # NOTE: per-step VMEM is tiny at these shapes (scratches ~10 KiB +
    # double-buffered input/output blocks), well under the 32 MiB scoped
    # default on every generation, so no explicit vmem_limit_bytes is set.
    return pl.pallas_call(
        kernel,
        out_shape=jax.ShapeDtypeStruct((N, Cout, H, W), x2.dtype),
        grid=(N,),
        in_specs=in_specs,
        out_specs=pl.BlockSpec((None, Cout, H, W), lambda n: (n, 0, 0, 0)),
        scratch_shapes=[
            pltpu.VMEM((C1 + C2, H + 2, W + 2), jnp.float32),  # padded conv1 input
            pltpu.VMEM((Cmid, H + 2, W + 2), jnp.float32),     # padded intermediate
        ],
        compiler_params=pltpu.CompilerParams(dimension_semantics=("parallel",)),
    )(w1_flat, b1_flat, w2_flat, b2_flat, a_h, a_w, x1, x2)


# ----------------------------------------------------------------------------
# Pure-JAX reference (PyTorch semantics)
# ----------------------------------------------------------------------------
def _ref_upsample_x2_align_corners(x):
    N, C, H, W = x.shape
    Ho, Wo = 2 * H, 2 * W

    def src_coords(out_size, in_size):
        if in_size == 1:
            return jnp.zeros((out_size,), jnp.float32)
        return jnp.arange(out_size, dtype=jnp.float32) * (in_size - 1) / (out_size - 1)

    ys = src_coords(Ho, H)
    xs = src_coords(Wo, W)
    y0 = jnp.floor(ys).astype(jnp.int32)
    y1 = jnp.minimum(y0 + 1, H - 1)
    wy = ys - y0.astype(jnp.float32)
    x0 = jnp.floor(xs).astype(jnp.int32)
    x1 = jnp.minimum(x0 + 1, W - 1)
    wx = xs - x0.astype(jnp.float32)

    r0 = x[:, :, y0, :]
    r1 = x[:, :, y1, :]
    rows = r0 * (1.0 - wy)[None, None, :, None] + r1 * wy[None, None, :, None]
    c0 = rows[:, :, :, x0]
    c1 = rows[:, :, :, x1]
    return c0 * (1.0 - wx)[None, None, None, :] + c1 * wx[None, None, None, :]


def _ref_conv3x3_relu(x, w, b):
    y = jax.lax.conv_general_dilated(
        x, w, window_strides=(1, 1), padding=((1, 1), (1, 1)),
        dimension_numbers=("NCHW", "OIHW", "NCHW"))
    return jnp.maximum(y + b[None, :, None, None], 0.0)


def up_forward_reference(x1, x2, w1, b1, w2, b2):
    x1u = _ref_upsample_x2_align_corners(x1)
    dy = x2.shape[2] - x1u.shape[2]
    dx = x2.shape[3] - x1u.shape[3]
    x1u = jnp.pad(x1u, ((0, 0), (0, 0), (dy // 2, dy - dy // 2), (dx // 2, dx - dx // 2)))
    x = jnp.concatenate([x2, x1u], axis=1)
    h = _ref_conv3x3_relu(x, w1, b1)
    return _ref_conv3x3_relu(h, w2, b2)


if __name__ == "__main__":
    key = jax.random.PRNGKey(0)
    k1, k2, kw1, kb1, kw2, kb2 = jax.random.split(key, 6)

    # Up(in_channels=4, out_channels=4, bilinear=True):
    #   x1: deep features (N, 2, 8, 8)  -> upsampled to 16x16
    #   x2: skip features (N, 2, 16, 16)
    #   cat channels = 4 = in_channels; DoubleConv: 4->4 then 4->4.
    N = 2
    C1, C2 = 2, 2
    in_channels = C1 + C2
    out_channels = 4
    H2 = W2 = 16

    x1 = jax.random.normal(k1, (N, C1, H2 // 2, W2 // 2), dtype=jnp.float32)
    x2 = jax.random.normal(k2, (N, C2, H2, W2), dtype=jnp.float32)

    w1 = jax.random.normal(kw1, (out_channels, in_channels, 3, 3), jnp.float32) \
        * (1.0 / (in_channels * 9)) ** 0.5
    b1 = jax.random.normal(kb1, (out_channels,), jnp.float32) * 0.1
    w2 = jax.random.normal(kw2, (out_channels, out_channels, 3, 3), jnp.float32) \
        * (1.0 / (out_channels * 9)) ** 0.5
    b2 = jax.random.normal(kb2, (out_channels,), jnp.float32) * 0.1

    out = up_forward_pallas(x1, x2, w1, b1, w2, b2)
    jax.block_until_ready(out)

    ref = up_forward_reference(x1, x2, w1, b1, w2, b2)
    assert out.shape == (N, out_channels, H2, W2)
    assert jnp.allclose(out, ref, atol=1e-4, rtol=1e-4)

    print("KERNEL_OK")
</pallas_src>

<mosaic_0001>
module attributes {stable_mosaic.version = 11 : i64} {
  func.func @_up_kernel(%arg0: i32, %arg1: memref<144xf32, #tpu.memory_space<smem>>, %arg2: memref<4xf32, #tpu.memory_space<smem>>, %arg3: memref<144xf32, #tpu.memory_space<smem>>, %arg4: memref<4xf32, #tpu.memory_space<smem>>, %arg5: memref<16x8xf32, #tpu.memory_space<vmem>>, %arg6: memref<8x16xf32, #tpu.memory_space<vmem>>, %arg7: memref<1x2x8x8xf32, #tpu.memory_space<vmem>>, %arg8: memref<1x2x16x16xf32, #tpu.memory_space<vmem>>, %arg9: memref<1x4x16x16xf32, #tpu.memory_space<vmem>>, %arg10: memref<4x18x18xf32, #tpu.memory_space<vmem>>, %arg11: memref<4x18x18xf32, #tpu.memory_space<vmem>>) attributes {dimension_semantics = [#tpu.dimension_semantics<parallel>], iteration_bounds = array<i64: 2>, scalar_prefetch = 0 : i64, scratch_operands = 2 : i64, tpu.core_type = #tpu.core_type<tc>, window_params = [{transform_indices = @transform_0, window_bounds = array<i64: 144>}, {transform_indices = @transform_1, window_bounds = array<i64: 4>}, {transform_indices = @transform_2, window_bounds = array<i64: 144>}, {transform_indices = @transform_3, window_bounds = array<i64: 4>}, {pipeline_mode = #tpu.pipeline_mode<synchronous>, transform_indices = @transform_4, window_bounds = array<i64: 16, 8>}, {pipeline_mode = #tpu.pipeline_mode<synchronous>, transform_indices = @transform_5, window_bounds = array<i64: 8, 16>}, {transform_indices = @transform_6, window_bounds = array<i64: 1, 2, 8, 8>}, {transform_indices = @transform_7, window_bounds = array<i64: 1, 2, 16, 16>}, {transform_indices = @transform_8, window_bounds = array<i64: 1, 4, 16, 16>}]} {
    %cst = arith.constant 0.000000e+00 : f32
    %0 = vector.broadcast %cst : f32 to vector<4x18x18xf32>
    %c0 = arith.constant 0 : index
    %c0_0 = arith.constant 0 : index
    %c0_1 = arith.constant 0 : index
    %1 = vector.load %arg10[%c0, %c0_0, %c0_1] : memref<4x18x18xf32, #tpu.memory_space<vmem>>, vector<4x18x18xf32>
    tpu.vector_store %arg10[%c0, %c0_0, %c0_1], %0 {strides = array<i32>} : memref<4x18x18xf32, #tpu.memory_space<vmem>>, vector<4x18x18xf32>,
    %cst_2 = arith.constant 0.000000e+00 : f32
    %2 = vector.broadcast %cst_2 : f32 to vector<4x18x18xf32>
    %c0_3 = arith.constant 0 : index
    %c0_4 = arith.constant 0 : index
    %c0_5 = arith.constant 0 : index
    %3 = vector.load %arg11[%c0_3, %c0_4, %c0_5] : memref<4x18x18xf32, #tpu.memory_space<vmem>>, vector<4x18x18xf32>
    tpu.vector_store %arg11[%c0_3, %c0_4, %c0_5], %2 {strides = array<i32>} : memref<4x18x18xf32, #tpu.memory_space<vmem>>, vector<4x18x18xf32>,
    %c0_6 = arith.constant 0 : index
    %c0_7 = arith.constant 0 : index
    %c0_8 = arith.constant 0 : index
    %c0_9 = arith.constant 0 : index
    %4 = vector.load %arg8[%c0_6, %c0_7, %c0_8, %c0_9] : memref<1x2x16x16xf32, #tpu.memory_space<vmem>>, vector<1x1x16x16xf32>
    %5 = vector.shape_cast %4 : vector<1x1x16x16xf32> to vector<16x16xf32>
    %c0_10 = arith.constant 0 : index
    %c1 = arith.constant 1 : index
    %c1_11 = arith.constant 1 : index
    %6 = vector.load %arg10[%c0_10, %c1, %c1_11] : memref<4x18x18xf32, #tpu.memory_space<vmem>>, vector<1x16x16xf32>
    %7 = vector.shape_cast %6 : vector<1x16x16xf32> to vector<16x16xf32>
    %8 = vector.shape_cast %5 : vector<16x16xf32> to vector<1x16x16xf32>
    tpu.vector_store %arg10[%c0_10, %c1, %c1_11], %8 {strides = array<i32>} : memref<4x18x18xf32, #tpu.memory_space<vmem>>, vector<1x16x16xf32>,
    %c0_12 = arith.constant 0 : index
    %c1_13 = arith.constant 1 : index
    %c0_14 = arith.constant 0 : index
    %c0_15 = arith.constant 0 : index
    %9 = vector.load %arg8[%c0_12, %c1_13, %c0_14, %c0_15] : memref<1x2x16x16xf32, #tpu.memory_space<vmem>>, vector<1x1x16x16xf32>
    %10 = vector.shape_cast %9 : vector<1x1x16x16xf32> to vector<16x16xf32>
    %c1_16 = arith.constant 1 : index
    %c1_17 = arith.constant 1 : index
    %c1_18 = arith.constant 1 : index
    %11 = vector.load %arg10[%c1_16, %c1_17, %c1_18] : memref<4x18x18xf32, #tpu.memory_space<vmem>>, vector<1x16x16xf32>
    %12 = vector.shape_cast %11 : vector<1x16x16xf32> to vector<16x16xf32>
    %13 = vector.shape_cast %10 : vector<16x16xf32> to vector<1x16x16xf32>
    tpu.vector_store %arg10[%c1_16, %c1_17, %c1_18], %13 {strides = array<i32>} : memref<4x18x18xf32, #tpu.memory_space<vmem>>, vector<1x16x16xf32>,
    %c0_19 = arith.constant 0 : index
    %c0_20 = arith.constant 0 : index
    %c0_21 = arith.constant 0 : index
    %c0_22 = arith.constant 0 : index
    %14 = vector.load %arg7[%c0_19, %c0_20, %c0_21, %c0_22] : memref<1x2x8x8xf32, #tpu.memory_space<vmem>>, vector<1x1x8x8xf32>
    %15 = vector.shape_cast %14 : vector<1x1x8x8xf32> to vector<8x8xf32>
    %c0_23 = arith.constant 0 : index
    %c0_24 = arith.constant 0 : index
    %16 = vector.load %arg5[%c0_23, %c0_24] : memref<16x8xf32, #tpu.memory_space<vmem>>, vector<16x1xf32>
    %17 = vector.extract_strided_slice %15 {offsets = [0, 0], sizes = [1, 8], strides = [1, 1]} : vector<8x8xf32> to vector<1x8xf32>
    %18 = vector.broadcast %16 : vector<16x1xf32> to vector<16x8xf32>
    %19 = vector.broadcast %17 : vector<1x8xf32> to vector<16x8xf32>
    %20 = arith.mulf %18, %19 : vector<16x8xf32>
    %c0_25 = arith.constant 0 : index
    %c1_26 = arith.constant 1 : index
    %21 = vector.load %arg5[%c0_25, %c1_26] : memref<16x8xf32, #tpu.memory_space<vmem>>, vector<16x1xf32>
    %22 = vector.extract_strided_slice %15 {offsets = [1, 0], sizes = [1, 8], strides = [1, 1]} : vector<8x8xf32> to vector<1x8xf32>
    %23 = vector.broadcast %21 : vector<16x1xf32> to vector<16x8xf32>
    %24 = vector.broadcast %22 : vector<1x8xf32> to vector<16x8xf32>
    %25 = arith.mulf %23, %24 : vector<16x8xf32>
    %26 = arith.addf %20, %25 : vector<16x8xf32>
    %c0_27 = arith.constant 0 : index
    %c2 = arith.constant 2 : index
    %27 = vector.load %arg5[%c0_27, %c2] : memref<16x8xf32, #tpu.memory_space<vmem>>, vector<16x1xf32>
    %28 = vector.extract_strided_slice %15 {offsets = [2, 0], sizes = [1, 8], strides = [1, 1]} : vector<8x8xf32> to vector<1x8xf32>
    %29 = vector.broadcast %27 : vector<16x1xf32> to vector<16x8xf32>
    %30 = vector.broadcast %28 : vector<1x8xf32> to vector<16x8xf32>
    %31 = arith.mulf %29, %30 : vector<16x8xf32>
    %32 = arith.addf %26, %31 : vector<16x8xf32>
    %c0_28 = arith.constant 0 : index
    %c3 = arith.constant 3 : index
    %33 = vector.load %arg5[%c0_28, %c3] : memref<16x8xf32, #tpu.memory_space<vmem>>, vector<16x1xf32>
    %34 = vector.extract_strided_slice %15 {offsets = [3, 0], sizes = [1, 8], strides = [1, 1]} : vector<8x8xf32> to vector<1x8xf32>
    %35 = vector.broadcast %33 : vector<16x1xf32> to vector<16x8xf32>
    %36 = vector.broadcast %34 : vector<1x8xf32> to vector<16x8xf32>
    %37 = arith.mulf %35, %36 : vector<16x8xf32>
    %38 = arith.addf %32, %37 : vector<16x8xf32>
    %c0_29 = arith.constant 0 : index
    %c4 = arith.constant 4 : index
    %39 = vector.load %arg5[%c0_29, %c4] : memref<16x8xf32, #tpu.memory_space<vmem>>, vector<16x1xf32>
    %40 = vector.extract_strided_slice %15 {offsets = [4, 0], sizes = [1, 8], strides = [1, 1]} : vector<8x8xf32> to vector<1x8xf32>
    %41 = vector.broadcast %39 : vector<16x1xf32> to vector<16x8xf32>
    %42 = vector.broadcast %40 : vector<1x8xf32> to vector<16x8xf32>
    %43 = arith.mulf %41, %42 : vector<16x8xf32>
    %44 = arith.addf %38, %43 : vector<16x8xf32>
    %c0_30 = arith.constant 0 : index
    %c5 = arith.constant 5 : index
    %45 = vector.load %arg5[%c0_30, %c5] : memref<16x8xf32, #tpu.memory_space<vmem>>, vector<16x1xf32>
    %46 = vector.extract_strided_slice %15 {offsets = [5, 0], sizes = [1, 8], strides = [1, 1]} : vector<8x8xf32> to vector<1x8xf32>
    %47 = vector.broadcast %45 : vector<16x1xf32> to vector<16x8xf32>
    %48 = vector.broadcast %46 : vector<1x8xf32> to vector<16x8xf32>
    %49 = arith.mulf %47, %48 : vector<16x8xf32>
    %50 = arith.addf %44, %49 : vector<16x8xf32>
    %c0_31 = arith.constant 0 : index
    %c6 = arith.constant 6 : index
    %51 = vector.load %arg5[%c0_31, %c6] : memref<16x8xf32, #tpu.memory_space<vmem>>, vector<16x1xf32>
    %52 = vector.extract_strided_slice %15 {offsets = [6, 0], sizes = [1, 8], strides = [1, 1]} : vector<8x8xf32> to vector<1x8xf32>
    %53 = vector.broadcast %51 : vector<16x1xf32> to vector<16x8xf32>
    %54 = vector.broadcast %52 : vector<1x8xf32> to vector<16x8xf32>
    %55 = arith.mulf %53, %54 : vector<16x8xf32>
    %56 = arith.addf %50, %55 : vector<16x8xf32>
    %c0_32 = arith.constant 0 : index
    %c7 = arith.constant 7 : index
    %57 = vector.load %arg5[%c0_32, %c7] : memref<16x8xf32, #tpu.memory_space<vmem>>, vector<16x1xf32>
    %58 = vector.extract_strided_slice %15 {offsets = [7, 0], sizes = [1, 8], strides = [1, 1]} : vector<8x8xf32> to vector<1x8xf32>
    %59 = vector.broadcast %57 : vector<16x1xf32> to vector<16x8xf32>
    %60 = vector.broadcast %58 : vector<1x8xf32> to vector<16x8xf32>
    %61 = arith.mulf %59, %60 : vector<16x8xf32>
    %62 = arith.addf %56, %61 : vector<16x8xf32>
    %63 = vector.extract_strided_slice %62 {offsets = [0, 0], sizes = [16, 1], strides = [1, 1]} : vector<16x8xf32> to vector<16x1xf32>
    %c0_33 = arith.constant 0 : index
    %c0_34 = arith.constant 0 : index
    %64 = vector.load %arg6[%c0_33, %c0_34] : memref<8x16xf32, #tpu.memory_space<vmem>>, vector<1x16xf32>
    %65 = vector.broadcast %63 : vector<16x1xf32> to vector<16x16xf32>
    %66 = vector.broadcast %64 : vector<1x16xf32> to vector<16x16xf32>
    %67 = arith.mulf %65, %66 : vector<16x16xf32>
    %68 = vector.extract_strided_slice %62 {offsets = [0, 1], sizes = [16, 1], strides = [1, 1]} : vector<16x8xf32> to vector<16x1xf32>
    %c1_35 = arith.constant 1 : index
    %c0_36 = arith.constant 0 : index
    %69 = vector.load %arg6[%c1_35, %c0_36] : memref<8x16xf32, #tpu.memory_space<vmem>>, vector<1x16xf32>
    %70 = vector.broadcast %68 : vector<16x1xf32> to vector<16x16xf32>
    %71 = vector.broadcast %69 : vector<1x16xf32> to vector<16x16xf32>
    %72 = arith.mulf %70, %71 : vector<16x16xf32>
    %73 = arith.addf %67, %72 : vector<16x16xf32>
    %74 = vector.extract_strided_slice %62 {offsets = [0, 2], sizes = [16, 1], strides = [1, 1]} : vector<16x8xf32> to vector<16x1xf32>
    %c2_37 = arith.constant 2 : index
    %c0_38 = arith.constant 0 : index
    %75 = vector.load %arg6[%c2_37, %c0_38] : memref<8x16xf32, #tpu.memory_space<vmem>>, vector<1x16xf32>
    %76 = vector.broadcast %74 : vector<16x1xf32> to vector<16x16xf32>
    %77 = vector.broadcast %75 : vector<1x16xf32> to vector<16x16xf32>
    %78 = arith.mulf %76, %77 : vector<16x16xf32>
    %79 = arith.addf %73, %78 : vector<16x16xf32>
    %80 = vector.extract_strided_slice %62 {offsets = [0, 3], sizes = [16, 1], strides = [1, 1]} : vector<16x8xf32> to vector<16x1xf32>
    %c3_39 = arith.constant 3 : index
    %c0_40 = arith.constant 0 : index
    %81 = vector.load %arg6[%c3_39, %c0_40] : memref<8x16xf32, #tpu.memory_space<vmem>>, vector<1x16xf32>
    %82 = vector.broadcast %80 : vector<16x1xf32> to vector<16x16xf32>
    %83 = vector.broadcast %81 : vector<1x16xf32> to vector<16x16xf32>
    %84 = arith.mulf %82, %83 : vector<16x16xf32>
    %85 = arith.addf %79, %84 : vector<16x16xf32>
    %86 = vector.extract_strided_slice %62 {offsets = [0, 4], sizes = [16, 1], strides = [1, 1]} : vector<16x8xf32> to vector<16x1xf32>
    %c4_41 = arith.constant 4 : index
    %c0_42 = arith.constant 0 : index
    %87 = vector.load %arg6[%c4_41, %c0_42] : memref<8x16xf32, #tpu.memory_space<vmem>>, vector<1x16xf32>
    %88 = vector.broadcast %86 : vector<16x1xf32> to vector<16x16xf32>
    %89 = vector.broadcast %87 : vector<1x16xf32> to vector<16x16xf32>
    %90 = arith.mulf %88, %89 : vector<16x16xf32>
    %91 = arith.addf %85, %90 : vector<16x16xf32>
    %92 = vector.extract_strided_slice %62 {offsets = [0, 5], sizes = [16, 1], strides = [1, 1]} : vector<16x8xf32> to vector<16x1xf32>
    %c5_43 = arith.constant 5 : index
    %c0_44 = arith.constant 0 : index
    %93 = vector.load %arg6[%c5_43, %c0_44] : memref<8x16xf32, #tpu.memory_space<vmem>>, vector<1x16xf32>
    %94 = vector.broadcast %92 : vector<16x1xf32> to vector<16x16xf32>
    %95 = vector.broadcast %93 : vector<1x16xf32> to vector<16x16xf32>
    %96 = arith.mulf %94, %95 : vector<16x16xf32>
    %97 = arith.addf %91, %96 : vector<16x16xf32>
    %98 = vector.extract_strided_slice %62 {offsets = [0, 6], sizes = [16, 1], strides = [1, 1]} : vector<16x8xf32> to vector<16x1xf32>
    %c6_45 = arith.constant 6 : index
    %c0_46 = arith.constant 0 : index
    %99 = vector.load %arg6[%c6_45, %c0_46] : memref<8x16xf32, #tpu.memory_space<vmem>>, vector<1x16xf32>
    %100 = vector.broadcast %98 : vector<16x1xf32> to vector<16x16xf32>
    %101 = vector.broadcast %99 : vector<1x16xf32> to vector<16x16xf32>
    %102 = arith.mulf %100, %101 : vector<16x16xf32>
    %103 = arith.addf %97, %102 : vector<16x16xf32>
    %104 = vector.extract_strided_slice %62 {offsets = [0, 7], sizes = [16, 1], strides = [1, 1]} : vector<16x8xf32> to vector<16x1xf32>
    %c7_47 = arith.constant 7 : index
    %c0_48 = arith.constant 0 : index
    %105 = vector.load %arg6[%c7_47, %c0_48] : memref<8x16xf32, #tpu.memory_space<vmem>>, vector<1x16xf32>
    %106 = vector.broadcast %104 : vector<16x1xf32> to vector<16x16xf32>
    %107 = vector.broadcast %105 : vector<1x16xf32> to vector<16x16xf32>
    %108 = arith.mulf %106, %107 : vector<16x16xf32>
    %109 = arith.addf %103, %108 : vector<16x16xf32>
    %c2_49 = arith.constant 2 : index
    %c1_50 = arith.constant 1 : index
    %c1_51 = arith.constant 1 : index
    %110 = vector.load %arg10[%c2_49, %c1_50, %c1_51] : memref<4x18x18xf32, #tpu.memory_space<vmem>>, vector<1x16x16xf32>
    %111 = vector.shape_cast %110 : vector<1x16x16xf32> to vector<16x16xf32>
    %112 = vector.shape_cast %109 : vector<16x16xf32> to vector<1x16x16xf32>
    tpu.vector_store %arg10[%c2_49, %c1_50, %c1_51], %112 {strides = array<i32>} : memref<4x18x18xf32, #tpu.memory_space<vmem>>, vector<1x16x16xf32>,
    %c0_52 = arith.constant 0 : index
    %c1_53 = arith.constant 1 : index
    %c0_54 = arith.constant 0 : index
    %c0_55 = arith.constant 0 : index
    %113 = vector.load %arg7[%c0_52, %c1_53, %c0_54, %c0_55] : memref<1x2x8x8xf32, #tpu.memory_space<vmem>>, vector<1x1x8x8xf32>
    %114 = vector.shape_cast %113 : vector<1x1x8x8xf32> to vector<8x8xf32>
    %c0_56 = arith.constant 0 : index
    %c0_57 = arith.constant 0 : index
    %115 = vector.load %arg5[%c0_56, %c0_57] : memref<16x8xf32, #tpu.memory_space<vmem>>, vector<16x1xf32>
    %116 = vector.extract_strided_slice %114 {offsets = [0, 0], sizes = [1, 8], strides = [1, 1]} : vector<8x8xf32> to vector<1x8xf32>
    %117 = vector.broadcast %115 : vector<16x1xf32> to vector<16x8xf32>
    %118 = vector.broadcast %116 : vector<1x8xf32> to vector<16x8xf32>
    %119 = arith.mulf %117, %118 : vector<16x8xf32>
    %c0_58 = arith.constant 0 : index
    %c1_59 = arith.constant 1 : index
    %120 = vector.load %arg5[%c0_58, %c1_59] : memref<16x8xf32, #tpu.memory_space<vmem>>, vector<16x1xf32>
    %121 = vector.extract_strided_slice %114 {offsets = [1, 0], sizes = [1, 8], strides = [1, 1]} : vector<8x8xf32> to vector<1x8xf32>
    %122 = vector.broadcast %120 : vector<16x1xf32> to vector<16x8xf32>
    %123 = vector.broadcast %121 : vector<1x8xf32> to vector<16x8xf32>
    %124 = arith.mulf %122, %123 : vector<16x8xf32>
    %125 = arith.addf %119, %124 : vector<16x8xf32>
    %c0_60 = arith.constant 0 : index
    %c2_61 = arith.constant 2 : index
    %126 = vector.load %arg5[%c0_60, %c2_61] : memref<16x8xf32, #tpu.memory_space<vmem>>, vector<16x1xf32>
    %127 = vector.extract_strided_slice %114 {offsets = [2, 0], sizes = [1, 8], strides = [1, 1]} : vector<8x8xf32> to vector<1x8xf32>
    %128 = vector.broadcast %126 : vector<16x1xf32> to vector<16x8xf32>
    %129 = vector.broadcast %127 : vector<1x8xf32> to vector<16x8xf32>
    %130 = arith.mulf %128, %129 : vector<16x8xf32>
    %131 = arith.addf %125, %130 : vector<16x8xf32>
    %c0_62 = arith.constant 0 : index
    %c3_63 = arith.constant 3 : index
    %132 = vector.load %arg5[%c0_62, %c3_63] : memref<16x8xf32, #tpu.memory_space<vmem>>, vector<16x1xf32>
    %133 = vector.extract_strided_slice %114 {offsets = [3, 0], sizes = [1, 8], strides = [1, 1]} : vector<8x8xf32> to vector<1x8xf32>
    %134 = vector.broadcast %132 : vector<16x1xf32> to vector<16x8xf32>
    %135 = vector.broadcast %133 : vector<1x8xf32> to vector<16x8xf32>
    %136 = arith.mulf %134, %135 : vector<16x8xf32>
    %137 = arith.addf %131, %136 : vector<16x8xf32>
    %c0_64 = arith.constant 0 : index
    %c4_65 = arith.constant 4 : index
    %138 = vector.load %arg5[%c0_64, %c4_65] : memref<16x8xf32, #tpu.memory_space<vmem>>, vector<16x1xf32>
    %139 = vector.extract_strided_slice %114 {offsets = [4, 0], sizes = [1, 8], strides = [1, 1]} : vector<8x8xf32> to vector<1x8xf32>
    %140 = vector.broadcast %138 : vector<16x1xf32> to vector<16x8xf32>
    %141 = vector.broadcast %139 : vector<1x8xf32> to vector<16x8xf32>
    %142 = arith.mulf %140, %141 : vector<16x8xf32>
    %143 = arith.addf %137, %142 : vector<16x8xf32>
    %c0_66 = arith.constant 0 : index
    %c5_67 = arith.constant 5 : index
    %144 = vector.load %arg5[%c0_66, %c5_67] : memref<16x8xf32, #tpu.memory_space<vmem>>, vector<16x1xf32>
    %145 = vector.extract_strided_slice %114 {offsets = [5, 0], sizes = [1, 8], strides = [1, 1]} : vector<8x8xf32> to vector<1x8xf32>
    %146 = vector.broadcast %144 : vector<16x1xf32> to vector<16x8xf32>
    %147 = vector.broadcast %145 : vector<1x8xf32> to vector<16x8xf32>
    %148 = arith.mulf %146, %147 : vector<16x8xf32>
    %149 = arith.addf %143, %148 : vector<16x8xf32>
    %c0_68 = arith.constant 0 : index
    %c6_69 = arith.constant 6 : index
    %150 = vector.load %arg5[%c0_68, %c6_69] : memref<16x8xf32, #tpu.memory_space<vmem>>, vector<16x1xf32>
    %151 = vector.extract_strided_slice %114 {offsets = [6, 0], sizes = [1, 8], strides = [1, 1]} : vector<8x8xf32> to vector<1x8xf32>
    %152 = vector.broadcast %150 : vector<16x1xf32> to vector<16x8xf32>
    %153 = vector.broadcast %151 : vector<1x8xf32> to vector<16x8xf32>
    %154 = arith.mulf %152, %153 : vector<16x8xf32>
    %155 = arith.addf %149, %154 : vector<16x8xf32>
    %c0_70 = arith.constant 0 : index
    %c7_71 = arith.constant 7 : index
    %156 = vector.load %arg5[%c0_70, %c7_71] : memref<16x8xf32, #tpu.memory_space<vmem>>, vector<16x1xf32>
    %157 = vector.extract_strided_slice %114 {offsets = [7, 0], sizes = [1, 8], strides = [1, 1]} : vector<8x8xf32> to vector<1x8xf32>
    %158 = vector.broadcast %156 : vector<16x1xf32> to vector<16x8xf32>
    %159 = vector.broadcast %157 : vector<1x8xf32> to vector<16x8xf32>
    %160 = arith.mulf %158, %159 : vector<16x8xf32>
    %161 = arith.addf %155, %160 : vector<16x8xf32>
    %162 = vector.extract_strided_slice %161 {offsets = [0, 0], sizes = [16, 1], strides = [1, 1]} : vector<16x8xf32> to vector<16x1xf32>
    %c0_72 = arith.constant 0 : index
    %c0_73 = arith.constant 0 : index
    %163 = vector.load %arg6[%c0_72, %c0_73] : memref<8x16xf32, #tpu.memory_space<vmem>>, vector<1x16xf32>
    %164 = vector.broadcast %162 : vector<16x1xf32> to vector<16x16xf32>
    %165 = vector.broadcast %163 : vector<1x16xf32> to vector<16x16xf32>
    %166 = arith.mulf %164, %165 : vector<16x16xf32>
    %167 = vector.extract_strided_slice %161 {offsets = [0, 1], sizes = [16, 1], strides = [1, 1]} : vector<16x8xf32> to vector<16x1xf32>
    %c1_74 = arith.constant 1 : index
    %c0_75 = arith.constant 0 : index
    %168 = vector.load %arg6[%c1_74, %c0_75] : memref<8x16xf32, #tpu.memory_space<vmem>>, vector<1x16xf32>
    %169 = vector.broadcast %167 : vector<16x1xf32> to vector<16x16xf32>
    %170 = vector.broadcast %168 : vector<1x16xf32> to vector<16x16xf32>
    %171 = arith.mulf %169, %170 : vector<16x16xf32>
    %172 = arith.addf %166, %171 : vector<16x16xf32>
    %173 = vector.extract_strided_slice %161 {offsets = [0, 2], sizes = [16, 1], strides = [1, 1]} : vector<16x8xf32> to vector<16x1xf32>
    %c2_76 = arith.constant 2 : index
    %c0_77 = arith.constant 0 : index
    %174 = vector.load %arg6[%c2_76, %c0_77] : memref<8x16xf32, #tpu.memory_space<vmem>>, vector<1x16xf32>
    %175 = vector.broadcast %173 : vector<16x1xf32> to vector<16x16xf32>
    %176 = vector.broadcast %174 : vector<1x16xf32> to vector<16x16xf32>
    %177 = arith.mulf %175, %176 : vector<16x16xf32>
    %178 = arith.addf %172, %177 : vector<16x16xf32>
    %179 = vector.extract_strided_slice %161 {offsets = [0, 3], sizes = [16, 1], strides = [1, 1]} : vector<16x8xf32> to vector<16x1xf32>
    %c3_78 = arith.constant 3 : index
    %c0_79 = arith.constant 0 : index
    %180 = vector.load %arg6[%c3_78, %c0_79] : memref<8x16xf32, #tpu.memory_space<vmem>>, vector<1x16xf32>
    %181 = vector.broadcast %179 : vector<16x1xf32> to vector<16x16xf32>
    %182 = vector.broadcast %180 : vector<1x16xf32> to vector<16x16xf32>
    %183 = arith.mulf %181, %182 : vector<16x16xf32>
    %184 = arith.addf %178, %183 : vector<16x16xf32>
    %185 = vector.extract_strided_slice %161 {offsets = [0, 4], sizes = [16, 1], strides = [1, 1]} : vector<16x8xf32> to vector<16x1xf32>
    %c4_80 = arith.constant 4 : index
    %c0_81 = arith.constant 0 : index
    %186 = vector.load %arg6[%c4_80, %c0_81] : memref<8x16xf32, #tpu.memory_space<vmem>>, vector<1x16xf32>
    %187 = vector.broadcast %185 : vector<16x1xf32> to vector<16x16xf32>
    %188 = vector.broadcast %186 : vector<1x16xf32> to vector<16x16xf32>
    %189 = arith.mulf %187, %188 : vector<16x16xf32>
    %190 = arith.addf %184, %189 : vector<16x16xf32>
    %191 = vector.extract_strided_slice %161 {offsets = [0, 5], sizes = [16, 1], strides = [1, 1]} : vector<16x8xf32> to vector<16x1xf32>
    %c5_82 = arith.constant 5 : index
    %c0_83 = arith.constant 0 : index
    %192 = vector.load %arg6[%c5_82, %c0_83] : memref<8x16xf32, #tpu.memory_space<vmem>>, vector<1x16xf32>
    %193 = vector.broadcast %191 : vector<16x1xf32> to vector<16x16xf32>
    %194 = vector.broadcast %192 : vector<1x16xf32> to vector<16x16xf32>
    %195 = arith.mulf %193, %194 : vector<16x16xf32>
    %196 = arith.addf %190, %195 : vector<16x16xf32>
    %197 = vector.extract_strided_slice %161 {offsets = [0, 6], sizes = [16, 1], strides = [1, 1]} : vector<16x8xf32> to vector<16x1xf32>
    %c6_84 = arith.constant 6 : index
    %c0_85 = arith.constant 0 : index
    %198 = vector.load %arg6[%c6_84, %c0_85] : memref<8x16xf32, #tpu.memory_space<vmem>>, vector<1x16xf32>
    %199 = vector.broadcast %197 : vector<16x1xf32> to vector<16x16xf32>
    %200 = vector.broadcast %198 : vector<1x16xf32> to vector<16x16xf32>
    %201 = arith.mulf %199, %200 : vector<16x16xf32>
    %202 = arith.addf %196, %201 : vector<16x16xf32>
    %203 = vector.extract_strided_slice %161 {offsets = [0, 7], sizes = [16, 1], strides = [1, 1]} : vector<16x8xf32> to vector<16x1xf32>
    %c7_86 = arith.constant 7 : index
    %c0_87 = arith.constant 0 : index
    %204 = vector.load %arg6[%c7_86, %c0_87] : memref<8x16xf32, #tpu.memory_space<vmem>>, vector<1x16xf32>
    %205 = vector.broadcast %203 : vector<16x1xf32> to vector<16x16xf32>
    %206 = vector.broadcast %204 : vector<1x16xf32> to vector<16x16xf32>
    %207 = arith.mulf %205, %206 : vector<16x16xf32>
    %208 = arith.addf %202, %207 : vector<16x16xf32>
    %c3_88 = arith.constant 3 : index
    %c1_89 = arith.constant 1 : index
    %c1_90 = arith.constant 1 : index
    %209 = vector.load %arg10[%c3_88, %c1_89, %c1_90] : memref<4x18x18xf32, #tpu.memory_space<vmem>>, vector<1x16x16xf32>
    %210 = vector.shape_cast %209 : vector<1x16x16xf32> to vector<16x16xf32>
    %211 = vector.shape_cast %208 : vector<16x16xf32> to vector<1x16x16xf32>
    tpu.vector_store %arg10[%c3_88, %c1_89, %c1_90], %211 {strides = array<i32>} : memref<4x18x18xf32, #tpu.memory_space<vmem>>, vector<1x16x16xf32>,
    %c0_91 = arith.constant 0 : index
    %212 = memref.load %arg2[%c0_91] : memref<4xf32, #tpu.memory_space<smem>>
    %213 = vector.broadcast %212 : f32 to vector<16x16xf32>
    %c1_92 = arith.constant 1 : index
    %214 = memref.load %arg2[%c1_92] : memref<4xf32, #tpu.memory_space<smem>>
    %215 = vector.broadcast %214 : f32 to vector<16x16xf32>
    %c2_93 = arith.constant 2 : index
    %216 = memref.load %arg2[%c2_93] : memref<4xf32, #tpu.memory_space<smem>>
    %217 = vector.broadcast %216 : f32 to vector<16x16xf32>
    %c3_94 = arith.constant 3 : index
    %218 = memref.load %arg2[%c3_94] : memref<4xf32, #tpu.memory_space<smem>>
    %219 = vector.broadcast %218 : f32 to vector<16x16xf32>
    %c0_95 = arith.constant 0 : index
    %c0_96 = arith.constant 0 : index
    %c0_97 = arith.constant 0 : index
    %220 = vector.load %arg10[%c0_95, %c0_96, %c0_97] : memref<4x18x18xf32, #tpu.memory_space<vmem>>, vector<1x18x18xf32>
    %221 = vector.shape_cast %220 : vector<1x18x18xf32> to vector<18x18xf32>
    %222 = vector.extract_strided_slice %221 {offsets = [0, 0], sizes = [18, 16], strides = [1, 1]} : vector<18x18xf32> to vector<18x16xf32>
    %223 = vector.extract_strided_slice %221 {offsets = [0, 1], sizes = [18, 16], strides = [1, 1]} : vector<18x18xf32> to vector<18x16xf32>
    %224 = vector.extract_strided_slice %221 {offsets = [0, 2], sizes = [18, 16], strides = [1, 1]} : vector<18x18xf32> to vector<18x16xf32>
    %225 = vector.extract_strided_slice %222 {offsets = [0, 0], sizes = [16, 16], strides = [1, 1]} : vector<18x16xf32> to vector<16x16xf32>
    %c0_98 = arith.constant 0 : index
    %226 = memref.load %arg1[%c0_98] : memref<144xf32, #tpu.memory_space<smem>>
    %227 = vector.broadcast %226 : f32 to vector<16x16xf32>
    %228 = arith.mulf %227, %225 : vector<16x16xf32>
    %229 = arith.addf %213, %228 : vector<16x16xf32>
    %c36 = arith.constant 36 : index
    %230 = memref.load %arg1[%c36] : memref<144xf32, #tpu.memory_space<smem>>
    %231 = vector.broadcast %230 : f32 to vector<16x16xf32>
    %232 = arith.mulf %231, %225 : vector<16x16xf32>
    %233 = arith.addf %215, %232 : vector<16x16xf32>
    %c72 = arith.constant 72 : index
    %234 = memref.load %arg1[%c72] : memref<144xf32, #tpu.memory_space<smem>>
    %235 = vector.broadcast %234 : f32 to vector<16x16xf32>
    %236 = arith.mulf %235, %225 : vector<16x16xf32>
    %237 = arith.addf %217, %236 : vector<16x16xf32>
    %c108 = arith.constant 108 : index
    %238 = memref.load %arg1[%c108] : memref<144xf32, #tpu.memory_space<smem>>
    %239 = vector.broadcast %238 : f32 to vector<16x16xf32>
    %240 = arith.mulf %239, %225 : vector<16x16xf32>
    %241 = arith.addf %219, %240 : vector<16x16xf32>
    %242 = vector.extract_strided_slice %222 {offsets = [1, 0], sizes = [16, 16], strides = [1, 1]} : vector<18x16xf32> to vector<16x16xf32>
    %c3_99 = arith.constant 3 : index
    %243 = memref.load %arg1[%c3_99] : memref<144xf32, #tpu.memory_space<smem>>
    %244 = vector.broadcast %243 : f32 to vector<16x16xf32>
    %245 = arith.mulf %244, %242 : vector<16x16xf32>
    %246 = arith.addf %229, %245 : vector<16x16xf32>
    %c39 = arith.constant 39 : index
    %247 = memref.load %arg1[%c39] : memref<144xf32, #tpu.memory_space<smem>>
    %248 = vector.broadcast %247 : f32 to vector<16x16xf32>
    %249 = arith.mulf %248, %242 : vector<16x16xf32>
    %250 = arith.addf %233, %249 : vector<16x16xf32>
    %c75 = arith.constant 75 : index
    %251 = memref.load %arg1[%c75] : memref<144xf32, #tpu.memory_space<smem>>
    %252 = vector.broadcast %251 : f32 to vector<16x16xf32>
    %253 = arith.mulf %252, %242 : vector<16x16xf32>
    %254 = arith.addf %237, %253 : vector<16x16xf32>
    %c111 = arith.constant 111 : index
    %255 = memref.load %arg1[%c111] : memref<144xf32, #tpu.memory_space<smem>>
    %256 = vector.broadcast %255 : f32 to vector<16x16xf32>
    %257 = arith.mulf %256, %242 : vector<16x16xf32>
    %258 = arith.addf %241, %257 : vector<16x16xf32>
    %259 = vector.extract_strided_slice %222 {offsets = [2, 0], sizes = [16, 16], strides = [1, 1]} : vector<18x16xf32> to vector<16x16xf32>
    %c6_100 = arith.constant 6 : index
    %260 = memref.load %arg1[%c6_100] : memref<144xf32, #tpu.memory_space<smem>>
    %261 = vector.broadcast %260 : f32 to vector<16x16xf32>
    %262 = arith.mulf %261, %259 : vector<16x16xf32>
    %263 = arith.addf %246, %262 : vector<16x16xf32>
    %c42 = arith.constant 42 : index
    %264 = memref.load %arg1[%c42] : memref<144xf32, #tpu.memory_space<smem>>
    %265 = vector.broadcast %264 : f32 to vector<16x16xf32>
    %266 = arith.mulf %265, %259 : vector<16x16xf32>
    %267 = arith.addf %250, %266 : vector<16x16xf32>
    %c78 = arith.constant 78 : index
    %268 = memref.load %arg1[%c78] : memref<144xf32, #tpu.memory_space<smem>>
    %269 = vector.broadcast %268 : f32 to vector<16x16xf32>
    %270 = arith.mulf %269, %259 : vector<16x16xf32>
    %271 = arith.addf %254, %270 : vector<16x16xf32>
    %c114 = arith.constant 114 : index
    %272 = memref.load %arg1[%c114] : memref<144xf32, #tpu.memory_space<smem>>
    %273 = vector.broadcast %272 : f32 to vector<16x16xf32>
    %274 = arith.mulf %273, %259 : vector<16x16xf32>
    %275 = arith.addf %258, %274 : vector<16x16xf32>
    %276 = vector.extract_strided_slice %223 {offsets = [0, 0], sizes = [16, 16], strides = [1, 1]} : vector<18x16xf32> to vector<16x16xf32>
    %c1_101 = arith.constant 1 : index
    %277 = memref.load %arg1[%c1_101] : memref<144xf32, #tpu.memory_space<smem>>
    %278 = vector.broadcast %277 : f32 to vector<16x16xf32>
    %279 = arith.mulf %278, %276 : vector<16x16xf32>
    %280 = arith.addf %263, %279 : vector<16x16xf32>
    %c37 = arith.constant 37 : index
    %281 = memref.load %arg1[%c37] : memref<144xf32, #tpu.memory_space<smem>>
    %282 = vector.broadcast %281 : f32 to vector<16x16xf32>
    %283 = arith.mulf %282, %276 : vector<16x16xf32>
    %284 = arith.addf %267, %283 : vector<16x16xf32>
    %c73 = arith.constant 73 : index
    %285 = memref.load %arg1[%c73] : memref<144xf32, #tpu.memory_space<smem>>
    %286 = vector.broadcast %285 : f32 to vector<16x16xf32>
    %287 = arith.mulf %286, %276 : vector<16x16xf32>
    %288 = arith.addf %271, %287 : vector<16x16xf32>
    %c109 = arith.constant 109 : index
    %289 = memref.load %arg1[%c109] : memref<144xf32, #tpu.memory_space<smem>>
    %290 = vector.broadcast %289 : f32 to vector<16x16xf32>
    %291 = arith.mulf %290, %276 : vector<16x16xf32>
    %292 = arith.addf %275, %291 : vector<16x16xf32>
    %293 = vector.extract_strided_slice %223 {offsets = [1, 0], sizes = [16, 16], strides = [1, 1]} : vector<18x16xf32> to vector<16x16xf32>
    %c4_102 = arith.constant 4 : index
    %294 = memref.load %arg1[%c4_102] : memref<144xf32, #tpu.memory_space<smem>>
    %295 = vector.broadcast %294 : f32 to vector<16x16xf32>
    %296 = arith.mulf %295, %293 : vector<16x16xf32>
    %297 = arith.addf %280, %296 : vector<16x16xf32>
    %c40 = arith.constant 40 : index
    %298 = memref.load %arg1[%c40] : memref<144xf32, #tpu.memory_space<smem>>
    %299 = vector.broadcast %298 : f32 to vector<16x16xf32>
    %300 = arith.mulf %299, %293 : vector<16x16xf32>
    %301 = arith.addf %284, %300 : vector<16x16xf32>
    %c76 = arith.constant 76 : index
    %302 = memref.load %arg1[%c76] : memref<144xf32, #tpu.memory_space<smem>>
    %303 = vector.broadcast %302 : f32 to vector<16x16xf32>
    %304 = arith.mulf %303, %293 : vector<16x16xf32>
    %305 = arith.addf %288, %304 : vector<16x16xf32>
    %c112 = arith.constant 112 : index
    %306 = memref.load %arg1[%c112] : memref<144xf32, #tpu.memory_space<smem>>
    %307 = vector.broadcast %306 : f32 to vector<16x16xf32>
    %308 = arith.mulf %307, %293 : vector<16x16xf32>
    %309 = arith.addf %292, %308 : vector<16x16xf32>
    %310 = vector.extract_strided_slice %223 {offsets = [2, 0], sizes = [16, 16], strides = [1, 1]} : vector<18x16xf32> to vector<16x16xf32>
    %c7_103 = arith.constant 7 : index
    %311 = memref.load %arg1[%c7_103] : memref<144xf32, #tpu.memory_space<smem>>
    %312 = vector.broadcast %311 : f32 to vector<16x16xf32>
    %313 = arith.mulf %312, %310 : vector<16x16xf32>
    %314 = arith.addf %297, %313 : vector<16x16xf32>
    %c43 = arith.constant 43 : index
    %315 = memref.load %arg1[%c43] : memref<144xf32, #tpu.memory_space<smem>>
    %316 = vector.broadcast %315 : f32 to vector<16x16xf32>
    %317 = arith.mulf %316, %310 : vector<16x16xf32>
    %318 = arith.addf %301, %317 : vector<16x16xf32>
    %c79 = arith.constant 79 : index
    %319 = memref.load %arg1[%c79] : memref<144xf32, #tpu.memory_space<smem>>
    %320 = vector.broadcast %319 : f32 to vector<16x16xf32>
    %321 = arith.mulf %320, %310 : vector<16x16xf32>
    %322 = arith.addf %305, %321 : vector<16x16xf32>
    %c115 = arith.constant 115 : index
    %323 = memref.load %arg1[%c115] : memref<144xf32, #tpu.memory_space<smem>>
    %324 = vector.broadcast %323 : f32 to vector<16x16xf32>
    %325 = arith.mulf %324, %310 : vector<16x16xf32>
    %326 = arith.addf %309, %325 : vector<16x16xf32>
    %327 = vector.extract_strided_slice %224 {offsets = [0, 0], sizes = [16, 16], strides = [1, 1]} : vector<18x16xf32> to vector<16x16xf32>
    %c2_104 = arith.constant 2 : index
    %328 = memref.load %arg1[%c2_104] : memref<144xf32, #tpu.memory_space<smem>>
    %329 = vector.broadcast %328 : f32 to vector<16x16xf32>
    %330 = arith.mulf %329, %327 : vector<16x16xf32>
    %331 = arith.addf %314, %330 : vector<16x16xf32>
    %c38 = arith.constant 38 : index
    %332 = memref.load %arg1[%c38] : memref<144xf32, #tpu.memory_space<smem>>
    %333 = vector.broadcast %332 : f32 to vector<16x16xf32>
    %334 = arith.mulf %333, %327 : vector<16x16xf32>
    %335 = arith.addf %318, %334 : vector<16x16xf32>
    %c74 = arith.constant 74 : index
    %336 = memref.load %arg1[%c74] : memref<144xf32, #tpu.memory_space<smem>>
    %337 = vector.broadcast %336 : f32 to vector<16x16xf32>
    %338 = arith.mulf %337, %327 : vector<16x16xf32>
    %339 = arith.addf %322, %338 : vector<16x16xf32>
    %c110 = arith.constant 110 : index
    %340 = memref.load %arg1[%c110] : memref<144xf32, #tpu.memory_space<smem>>
    %341 = vector.broadcast %340 : f32 to vector<16x16xf32>
    %342 = arith.mulf %341, %327 : vector<16x16xf32>
    %343 = arith.addf %326, %342 : vector<16x16xf32>
    %344 = vector.extract_strided_slice %224 {offsets = [1, 0], sizes = [16, 16], strides = [1, 1]} : vector<18x16xf32> to vector<16x16xf32>
    %c5_105 = arith.constant 5 : index
    %345 = memref.load %arg1[%c5_105] : memref<144xf32, #tpu.memory_space<smem>>
    %346 = vector.broadcast %345 : f32 to vector<16x16xf32>
    %347 = arith.mulf %346, %344 : vector<16x16xf32>
    %348 = arith.addf %331, %347 : vector<16x16xf32>
    %c41 = arith.constant 41 : index
    %349 = memref.load %arg1[%c41] : memref<144xf32, #tpu.memory_space<smem>>
    %350 = vector.broadcast %349 : f32 to vector<16x16xf32>
    %351 = arith.mulf %350, %344 : vector<16x16xf32>
    %352 = arith.addf %335, %351 : vector<16x16xf32>
    %c77 = arith.constant 77 : index
    %353 = memref.load %arg1[%c77] : memref<144xf32, #tpu.memory_space<smem>>
    %354 = vector.broadcast %353 : f32 to vector<16x16xf32>
    %355 = arith.mulf %354, %344 : vector<16x16xf32>
    %356 = arith.addf %339, %355 : vector<16x16xf32>
    %c113 = arith.constant 113 : index
    %357 = memref.load %arg1[%c113] : memref<144xf32, #tpu.memory_space<smem>>
    %358 = vector.broadcast %357 : f32 to vector<16x16xf32>
    %359 = arith.mulf %358, %344 : vector<16x16xf32>
    %360 = arith.addf %343, %359 : vector<16x16xf32>
    %361 = vector.extract_strided_slice %224 {offsets = [2, 0], sizes = [16, 16], strides = [1, 1]} : vector<18x16xf32> to vector<16x16xf32>
    %c8 = arith.constant 8 : index
    %362 = memref.load %arg1[%c8] : memref<144xf32, #tpu.memory_space<smem>>
    %363 = vector.broadcast %362 : f32 to vector<16x16xf32>
    %364 = arith.mulf %363, %361 : vector<16x16xf32>
    %365 = arith.addf %348, %364 : vector<16x16xf32>
    %c44 = arith.constant 44 : index
    %366 = memref.load %arg1[%c44] : memref<144xf32, #tpu.memory_space<smem>>
    %367 = vector.broadcast %366 : f32 to vector<16x16xf32>
    %368 = arith.mulf %367, %361 : vector<16x16xf32>
    %369 = arith.addf %352, %368 : vector<16x16xf32>
    %c80 = arith.constant 80 : index
    %370 = memref.load %arg1[%c80] : memref<144xf32, #tpu.memory_space<smem>>
    %371 = vector.broadcast %370 : f32 to vector<16x16xf32>
    %372 = arith.mulf %371, %361 : vector<16x16xf32>
    %373 = arith.addf %356, %372 : vector<16x16xf32>
    %c116 = arith.constant 116 : index
    %374 = memref.load %arg1[%c116] : memref<144xf32, #tpu.memory_space<smem>>
    %375 = vector.broadcast %374 : f32 to vector<16x16xf32>
    %376 = arith.mulf %375, %361 : vector<16x16xf32>
    %377 = arith.addf %360, %376 : vector<16x16xf32>
    %c1_106 = arith.constant 1 : index
    %c0_107 = arith.constant 0 : index
    %c0_108 = arith.constant 0 : index
    %378 = vector.load %arg10[%c1_106, %c0_107, %c0_108] : memref<4x18x18xf32, #tpu.memory_space<vmem>>, vector<1x18x18xf32>
    %379 = vector.shape_cast %378 : vector<1x18x18xf32> to vector<18x18xf32>
    %380 = vector.extract_strided_slice %379 {offsets = [0, 0], sizes = [18, 16], strides = [1, 1]} : vector<18x18xf32> to vector<18x16xf32>
    %381 = vector.extract_strided_slice %379 {offsets = [0, 1], sizes = [18, 16], strides = [1, 1]} : vector<18x18xf32> to vector<18x16xf32>
    %382 = vector.extract_strided_slice %379 {offsets = [0, 2], sizes = [18, 16], strides = [1, 1]} : vector<18x18xf32> to vector<18x16xf32>
    %383 = vector.extract_strided_slice %380 {offsets = [0, 0], sizes = [16, 16], strides = [1, 1]} : vector<18x16xf32> to vector<16x16xf32>
    %c9 = arith.constant 9 : index
    %384 = memref.load %arg1[%c9] : memref<144xf32, #tpu.memory_space<smem>>
    %385 = vector.broadcast %384 : f32 to vector<16x16xf32>
    %386 = arith.mulf %385, %383 : vector<16x16xf32>
    %387 = arith.addf %365, %386 : vector<16x16xf32>
    %c45 = arith.constant 45 : index
    %388 = memref.load %arg1[%c45] : memref<144xf32, #tpu.memory_space<smem>>
    %389 = vector.broadcast %388 : f32 to vector<16x16xf32>
    %390 = arith.mulf %389, %383 : vector<16x16xf32>
    %391 = arith.addf %369, %390 : vector<16x16xf32>
    %c81 = arith.constant 81 : index
    %392 = memref.load %arg1[%c81] : memref<144xf32, #tpu.memory_space<smem>>
    %393 = vector.broadcast %392 : f32 to vector<16x16xf32>
    %394 = arith.mulf %393, %383 : vector<16x16xf32>
    %395 = arith.addf %373, %394 : vector<16x16xf32>
    %c117 = arith.constant 117 : index
    %396 = memref.load %arg1[%c117] : memref<144xf32, #tpu.memory_space<smem>>
    %397 = vector.broadcast %396 : f32 to vector<16x16xf32>
    %398 = arith.mulf %397, %383 : vector<16x16xf32>
    %399 = arith.addf %377, %398 : vector<16x16xf32>
    %400 = vector.extract_strided_slice %380 {offsets = [1, 0], sizes = [16, 16], strides = [1, 1]} : vector<18x16xf32> to vector<16x16xf32>
    %c12 = arith.constant 12 : index
    %401 = memref.load %arg1[%c12] : memref<144xf32, #tpu.memory_space<smem>>
    %402 = vector.broadcast %401 : f32 to vector<16x16xf32>
    %403 = arith.mulf %402, %400 : vector<16x16xf32>
    %404 = arith.addf %387, %403 : vector<16x16xf32>
    %c48 = arith.constant 48 : index
    %405 = memref.load %arg1[%c48] : memref<144xf32, #tpu.memory_space<smem>>
    %406 = vector.broadcast %405 : f32 to vector<16x16xf32>
    %407 = arith.mulf %406, %400 : vector<16x16xf32>
    %408 = arith.addf %391, %407 : vector<16x16xf32>
    %c84 = arith.constant 84 : index
    %409 = memref.load %arg1[%c84] : memref<144xf32, #tpu.memory_space<smem>>
    %410 = vector.broadcast %409 : f32 to vector<16x16xf32>
    %411 = arith.mulf %410, %400 : vector<16x16xf32>
    %412 = arith.addf %395, %411 : vector<16x16xf32>
    %c120 = arith.constant 120 : index
    %413 = memref.load %arg1[%c120] : memref<144xf32, #tpu.memory_space<smem>>
    %414 = vector.broadcast %413 : f32 to vector<16x16xf32>
    %415 = arith.mulf %414, %400 : vector<16x16xf32>
    %416 = arith.addf %399, %415 : vector<16x16xf32>
    %417 = vector.extract_strided_slice %380 {offsets = [2, 0], sizes = [16, 16], strides = [1, 1]} : vector<18x16xf32> to vector<16x16xf32>
    %c15 = arith.constant 15 : index
    %418 = memref.load %arg1[%c15] : memref<144xf32, #tpu.memory_space<smem>>
    %419 = vector.broadcast %418 : f32 to vector<16x16xf32>
    %420 = arith.mulf %419, %417 : vector<16x16xf32>
    %421 = arith.addf %404, %420 : vector<16x16xf32>
    %c51 = arith.constant 51 : index
    %422 = memref.load %arg1[%c51] : memref<144xf32, #tpu.memory_space<smem>>
    %423 = vector.broadcast %422 : f32 to vector<16x16xf32>
    %424 = arith.mulf %423, %417 : vector<16x16xf32>
    %425 = arith.addf %408, %424 : vector<16x16xf32>
    %c87 = arith.constant 87 : index
    %426 = memref.load %arg1[%c87] : memref<144xf32, #tpu.memory_space<smem>>
    %427 = vector.broadcast %426 : f32 to vector<16x16xf32>
    %428 = arith.mulf %427, %417 : vector<16x16xf32>
    %429 = arith.addf %412, %428 : vector<16x16xf32>
    %c123 = arith.constant 123 : index
    %430 = memref.load %arg1[%c123] : memref<144xf32, #tpu.memory_space<smem>>
    %431 = vector.broadcast %430 : f32 to vector<16x16xf32>
    %432 = arith.mulf %431, %417 : vector<16x16xf32>
    %433 = arith.addf %416, %432 : vector<16x16xf32>
    %434 = vector.extract_strided_slice %381 {offsets = [0, 0], sizes = [16, 16], strides = [1, 1]} : vector<18x16xf32> to vector<16x16xf32>
    %c10 = arith.constant 10 : index
    %435 = memref.load %arg1[%c10] : memref<144xf32, #tpu.memory_space<smem>>
    %436 = vector.broadcast %435 : f32 to vector<16x16xf32>
    %437 = arith.mulf %436, %434 : vector<16x16xf32>
    %438 = arith.addf %421, %437 : vector<16x16xf32>
    %c46 = arith.constant 46 : index
    %439 = memref.load %arg1[%c46] : memref<144xf32, #tpu.memory_space<smem>>
    %440 = vector.broadcast %439 : f32 to vector<16x16xf32>
    %441 = arith.mulf %440, %434 : vector<16x16xf32>
    %442 = arith.addf %425, %441 : vector<16x16xf32>
    %c82 = arith.constant 82 : index
    %443 = memref.load %arg1[%c82] : memref<144xf32, #tpu.memory_space<smem>>
    %444 = vector.broadcast %443 : f32 to vector<16x16xf32>
    %445 = arith.mulf %444, %434 : vector<16x16xf32>
    %446 = arith.addf %429, %445 : vector<16x16xf32>
    %c118 = arith.constant 118 : index
    %447 = memref.load %arg1[%c118] : memref<144xf32, #tpu.memory_space<smem>>
    %448 = vector.broadcast %447 : f32 to vector<16x16xf32>
    %449 = arith.mulf %448, %434 : vector<16x16xf32>
    %450 = arith.addf %433, %449 : vector<16x16xf32>
    %451 = vector.extract_strided_slice %381 {offsets = [1, 0], sizes = [16, 16], strides = [1, 1]} : vector<18x16xf32> to vector<16x16xf32>
    %c13 = arith.constant 13 : index
    %452 = memref.load %arg1[%c13] : memref<144xf32, #tpu.memory_space<smem>>
    %453 = vector.broadcast %452 : f32 to vector<16x16xf32>
    %454 = arith.mulf %453, %451 : vector<16x16xf32>
    %455 = arith.addf %438, %454 : vector<16x16xf32>
    %c49 = arith.constant 49 : index
    %456 = memref.load %arg1[%c49] : memref<144xf32, #tpu.memory_space<smem>>
    %457 = vector.broadcast %456 : f32 to vector<16x16xf32>
    %458 = arith.mulf %457, %451 : vector<16x16xf32>
    %459 = arith.addf %442, %458 : vector<16x16xf32>
    %c85 = arith.constant 85 : index
    %460 = memref.load %arg1[%c85] : memref<144xf32, #tpu.memory_space<smem>>
    %461 = vector.broadcast %460 : f32 to vector<16x16xf32>
    %462 = arith.mulf %461, %451 : vector<16x16xf32>
    %463 = arith.addf %446, %462 : vector<16x16xf32>
    %c121 = arith.constant 121 : index
    %464 = memref.load %arg1[%c121] : memref<144xf32, #tpu.memory_space<smem>>
    %465 = vector.broadcast %464 : f32 to vector<16x16xf32>
    %466 = arith.mulf %465, %451 : vector<16x16xf32>
    %467 = arith.addf %450, %466 : vector<16x16xf32>
    %468 = vector.extract_strided_slice %381 {offsets = [2, 0], sizes = [16, 16], strides = [1, 1]} : vector<18x16xf32> to vector<16x16xf32>
    %c16 = arith.constant 16 : index
    %469 = memref.load %arg1[%c16] : memref<144xf32, #tpu.memory_space<smem>>
    %470 = vector.broadcast %469 : f32 to vector<16x16xf32>
    %471 = arith.mulf %470, %468 : vector<16x16xf32>
    %472 = arith.addf %455, %471 : vector<16x16xf32>
    %c52 = arith.constant 52 : index
    %473 = memref.load %arg1[%c52] : memref<144xf32, #tpu.memory_space<smem>>
    %474 = vector.broadcast %473 : f32 to vector<16x16xf32>
    %475 = arith.mulf %474, %468 : vector<16x16xf32>
    %476 = arith.addf %459, %475 : vector<16x16xf32>
    %c88 = arith.constant 88 : index
    %477 = memref.load %arg1[%c88] : memref<144xf32, #tpu.memory_space<smem>>
    %478 = vector.broadcast %477 : f32 to vector<16x16xf32>
    %479 = arith.mulf %478, %468 : vector<16x16xf32>
    %480 = arith.addf %463, %479 : vector<16x16xf32>
    %c124 = arith.constant 124 : index
    %481 = memref.load %arg1[%c124] : memref<144xf32, #tpu.memory_space<smem>>
    %482 = vector.broadcast %481 : f32 to vector<16x16xf32>
    %483 = arith.mulf %482, %468 : vector<16x16xf32>
    %484 = arith.addf %467, %483 : vector<16x16xf32>
    %485 = vector.extract_strided_slice %382 {offsets = [0, 0], sizes = [16, 16], strides = [1, 1]} : vector<18x16xf32> to vector<16x16xf32>
    %c11 = arith.constant 11 : index
    %486 = memref.load %arg1[%c11] : memref<144xf32, #tpu.memory_space<smem>>
    %487 = vector.broadcast %486 : f32 to vector<16x16xf32>
    %488 = arith.mulf %487, %485 : vector<16x16xf32>
    %489 = arith.addf %472, %488 : vector<16x16xf32>
    %c47 = arith.constant 47 : index
    %490 = memref.load %arg1[%c47] : memref<144xf32, #tpu.memory_space<smem>>
    %491 = vector.broadcast %490 : f32 to vector<16x16xf32>
    %492 = arith.mulf %491, %485 : vector<16x16xf32>
    %493 = arith.addf %476, %492 : vector<16x16xf32>
    %c83 = arith.constant 83 : index
    %494 = memref.load %arg1[%c83] : memref<144xf32, #tpu.memory_space<smem>>
    %495 = vector.broadcast %494 : f32 to vector<16x16xf32>
    %496 = arith.mulf %495, %485 : vector<16x16xf32>
    %497 = arith.addf %480, %496 : vector<16x16xf32>
    %c119 = arith.constant 119 : index
    %498 = memref.load %arg1[%c119] : memref<144xf32, #tpu.memory_space<smem>>
    %499 = vector.broadcast %498 : f32 to vector<16x16xf32>
    %500 = arith.mulf %499, %485 : vector<16x16xf32>
    %501 = arith.addf %484, %500 : vector<16x16xf32>
    %502 = vector.extract_strided_slice %382 {offsets = [1, 0], sizes = [16, 16], strides = [1, 1]} : vector<18x16xf32> to vector<16x16xf32>
    %c14 = arith.constant 14 : index
    %503 = memref.load %arg1[%c14] : memref<144xf32, #tpu.memory_space<smem>>
    %504 = vector.broadcast %503 : f32 to vector<16x16xf32>
    %505 = arith.mulf %504, %502 : vector<16x16xf32>
    %506 = arith.addf %489, %505 : vector<16x16xf32>
    %c50 = arith.constant 50 : index
    %507 = memref.load %arg1[%c50] : memref<144xf32, #tpu.memory_space<smem>>
    %508 = vector.broadcast %507 : f32 to vector<16x16xf32>
    %509 = arith.mulf %508, %502 : vector<16x16xf32>
    %510 = arith.addf %493, %509 : vector<16x16xf32>
    %c86 = arith.constant 86 : index
    %511 = memref.load %arg1[%c86] : memref<144xf32, #tpu.memory_space<smem>>
    %512 = vector.broadcast %511 : f32 to vector<16x16xf32>
    %513 = arith.mulf %512, %502 : vector<16x16xf32>
    %514 = arith.addf %497, %513 : vector<16x16xf32>
    %c122 = arith.constant 122 : index
    %515 = memref.load %arg1[%c122] : memref<144xf32, #tpu.memory_space<smem>>
    %516 = vector.broadcast %515 : f32 to vector<16x16xf32>
    %517 = arith.mulf %516, %502 : vector<16x16xf32>
    %518 = arith.addf %501, %517 : vector<16x16xf32>
    %519 = vector.extract_strided_slice %382 {offsets = [2, 0], sizes = [16, 16], strides = [1, 1]} : vector<18x16xf32> to vector<16x16xf32>
    %c17 = arith.constant 17 : index
    %520 = memref.load %arg1[%c17] : memref<144xf32, #tpu.memory_space<smem>>
    %521 = vector.broadcast %520 : f32 to vector<16x16xf32>
    %522 = arith.mulf %521, %519 : vector<16x16xf32>
    %523 = arith.addf %506, %522 : vector<16x16xf32>
    %c53 = arith.constant 53 : index
    %524 = memref.load %arg1[%c53] : memref<144xf32, #tpu.memory_space<smem>>
    %525 = vector.broadcast %524 : f32 to vector<16x16xf32>
    %526 = arith.mulf %525, %519 : vector<16x16xf32>
    %527 = arith.addf %510, %526 : vector<16x16xf32>
    %c89 = arith.constant 89 : index
    %528 = memref.load %arg1[%c89] : memref<144xf32, #tpu.memory_space<smem>>
    %529 = vector.broadcast %528 : f32 to vector<16x16xf32>
    %530 = arith.mulf %529, %519 : vector<16x16xf32>
    %531 = arith.addf %514, %530 : vector<16x16xf32>
    %c125 = arith.constant 125 : index
    %532 = memref.load %arg1[%c125] : memref<144xf32, #tpu.memory_space<smem>>
    %533 = vector.broadcast %532 : f32 to vector<16x16xf32>
    %534 = arith.mulf %533, %519 : vector<16x16xf32>
    %535 = arith.addf %518, %534 : vector<16x16xf32>
    %c2_109 = arith.constant 2 : index
    %c0_110 = arith.constant 0 : index
    %c0_111 = arith.constant 0 : index
    %536 = vector.load %arg10[%c2_109, %c0_110, %c0_111] : memref<4x18x18xf32, #tpu.memory_space<vmem>>, vector<1x18x18xf32>
    %537 = vector.shape_cast %536 : vector<1x18x18xf32> to vector<18x18xf32>
    %538 = vector.extract_strided_slice %537 {offsets = [0, 0], sizes = [18, 16], strides = [1, 1]} : vector<18x18xf32> to vector<18x16xf32>
    %539 = vector.extract_strided_slice %537 {offsets = [0, 1], sizes = [18, 16], strides = [1, 1]} : vector<18x18xf32> to vector<18x16xf32>
    %540 = vector.extract_strided_slice %537 {offsets = [0, 2], sizes = [18, 16], strides = [1, 1]} : vector<18x18xf32> to vector<18x16xf32>
    %541 = vector.extract_strided_slice %538 {offsets = [0, 0], sizes = [16, 16], strides = [1, 1]} : vector<18x16xf32> to vector<16x16xf32>
    %c18 = arith.constant 18 : index
    %542 = memref.load %arg1[%c18] : memref<144xf32, #tpu.memory_space<smem>>
    %543 = vector.broadcast %542 : f32 to vector<16x16xf32>
    %544 = arith.mulf %543, %541 : vector<16x16xf32>
    %545 = arith.addf %523, %544 : vector<16x16xf32>
    %c54 = arith.constant 54 : index
    %546 = memref.load %arg1[%c54] : memref<144xf32, #tpu.memory_space<smem>>
    %547 = vector.broadcast %546 : f32 to vector<16x16xf32>
    %548 = arith.mulf %547, %541 : vector<16x16xf32>
    %549 = arith.addf %527, %548 : vector<16x16xf32>
    %c90 = arith.constant 90 : index
    %550 = memref.load %arg1[%c90] : memref<144xf32, #tpu.memory_space<smem>>
    %551 = vector.broadcast %550 : f32 to vector<16x16xf32>
    %552 = arith.mulf %551, %541 : vector<16x16xf32>
    %553 = arith.addf %531, %552 : vector<16x16xf32>
    %c126 = arith.constant 126 : index
    %554 = memref.load %arg1[%c126] : memref<144xf32, #tpu.memory_space<smem>>
    %555 = vector.broadcast %554 : f32 to vector<16x16xf32>
    %556 = arith.mulf %555, %541 : vector<16x16xf32>
    %557 = arith.addf %535, %556 : vector<16x16xf32>
    %558 = vector.extract_strided_slice %538 {offsets = [1, 0], sizes = [16, 16], strides = [1, 1]} : vector<18x16xf32> to vector<16x16xf32>
    %c21 = arith.constant 21 : index
    %559 = memref.load %arg1[%c21] : memref<144xf32, #tpu.memory_space<smem>>
    %560 = vector.broadcast %559 : f32 to vector<16x16xf32>
    %561 = arith.mulf %560, %558 : vector<16x16xf32>
    %562 = arith.addf %545, %561 : vector<16x16xf32>
    %c57 = arith.constant 57 : index
    %563 = memref.load %arg1[%c57] : memref<144xf32, #tpu.memory_space<smem>>
    %564 = vector.broadcast %563 : f32 to vector<16x16xf32>
    %565 = arith.mulf %564, %558 : vector<16x16xf32>
    %566 = arith.addf %549, %565 : vector<16x16xf32>
    %c93 = arith.constant 93 : index
    %567 = memref.load %arg1[%c93] : memref<144xf32, #tpu.memory_space<smem>>
    %568 = vector.broadcast %567 : f32 to vector<16x16xf32>
    %569 = arith.mulf %568, %558 : vector<16x16xf32>
    %570 = arith.addf %553, %569 : vector<16x16xf32>
    %c129 = arith.constant 129 : index
    %571 = memref.load %arg1[%c129] : memref<144xf32, #tpu.memory_space<smem>>
    %572 = vector.broadcast %571 : f32 to vector<16x16xf32>
    %573 = arith.mulf %572, %558 : vector<16x16xf32>
    %574 = arith.addf %557, %573 : vector<16x16xf32>
    %575 = vector.extract_strided_slice %538 {offsets = [2, 0], sizes = [16, 16], strides = [1, 1]} : vector<18x16xf32> to vector<16x16xf32>
    %c24 = arith.constant 24 : index
    %576 = memref.load %arg1[%c24] : memref<144xf32, #tpu.memory_space<smem>>
    %577 = vector.broadcast %576 : f32 to vector<16x16xf32>
    %578 = arith.mulf %577, %575 : vector<16x16xf32>
    %579 = arith.addf %562, %578 : vector<16x16xf32>
    %c60 = arith.constant 60 : index
    %580 = memref.load %arg1[%c60] : memref<144xf32, #tpu.memory_space<smem>>
    %581 = vector.broadcast %580 : f32 to vector<16x16xf32>
    %582 = arith.mulf %581, %575 : vector<16x16xf32>
    %583 = arith.addf %566, %582 : vector<16x16xf32>
    %c96 = arith.constant 96 : index
    %584 = memref.load %arg1[%c96] : memref<144xf32, #tpu.memory_space<smem>>
    %585 = vector.broadcast %584 : f32 to vector<16x16xf32>
    %586 = arith.mulf %585, %575 : vector<16x16xf32>
    %587 = arith.addf %570, %586 : vector<16x16xf32>
    %c132 = arith.constant 132 : index
    %588 = memref.load %arg1[%c132] : memref<144xf32, #tpu.memory_space<smem>>
    %589 = vector.broadcast %588 : f32 to vector<16x16xf32>
    %590 = arith.mulf %589, %575 : vector<16x16xf32>
    %591 = arith.addf %574, %590 : vector<16x16xf32>
    %592 = vector.extract_strided_slice %539 {offsets = [0, 0], sizes = [16, 16], strides = [1, 1]} : vector<18x16xf32> to vector<16x16xf32>
    %c19 = arith.constant 19 : index
    %593 = memref.load %arg1[%c19] : memref<144xf32, #tpu.memory_space<smem>>
    %594 = vector.broadcast %593 : f32 to vector<16x16xf32>
    %595 = arith.mulf %594, %592 : vector<16x16xf32>
    %596 = arith.addf %579, %595 : vector<16x16xf32>
    %c55 = arith.constant 55 : index
    %597 = memref.load %arg1[%c55] : memref<144xf32, #tpu.memory_space<smem>>
    %598 = vector.broadcast %597 : f32 to vector<16x16xf32>
    %599 = arith.mulf %598, %592 : vector<16x16xf32>
    %600 = arith.addf %583, %599 : vector<16x16xf32>
    %c91 = arith.constant 91 : index
    %601 = memref.load %arg1[%c91] : memref<144xf32, #tpu.memory_space<smem>>
    %602 = vector.broadcast %601 : f32 to vector<16x16xf32>
    %603 = arith.mulf %602, %592 : vector<16x16xf32>
    %604 = arith.addf %587, %603 : vector<16x16xf32>
    %c127 = arith.constant 127 : index
    %605 = memref.load %arg1[%c127] : memref<144xf32, #tpu.memory_space<smem>>
    %606 = vector.broadcast %605 : f32 to vector<16x16xf32>
    %607 = arith.mulf %606, %592 : vector<16x16xf32>
    %608 = arith.addf %591, %607 : vector<16x16xf32>
    %609 = vector.extract_strided_slice %539 {offsets = [1, 0], sizes = [16, 16], strides = [1, 1]} : vector<18x16xf32> to vector<16x16xf32>
    %c22 = arith.constant 22 : index
    %610 = memref.load %arg1[%c22] : memref<144xf32, #tpu.memory_space<smem>>
    %611 = vector.broadcast %610 : f32 to vector<16x16xf32>
    %612 = arith.mulf %611, %609 : vector<16x16xf32>
    %613 = arith.addf %596, %612 : vector<16x16xf32>
    %c58 = arith.constant 58 : index
    %614 = memref.load %arg1[%c58] : memref<144xf32, #tpu.memory_space<smem>>
    %615 = vector.broadcast %614 : f32 to vector<16x16xf32>
    %616 = arith.mulf %615, %609 : vector<16x16xf32>
    %617 = arith.addf %600, %616 : vector<16x16xf32>
    %c94 = arith.constant 94 : index
    %618 = memref.load %arg1[%c94] : memref<144xf32, #tpu.memory_space<smem>>
    %619 = vector.broadcast %618 : f32 to vector<16x16xf32>
    %620 = arith.mulf %619, %609 : vector<16x16xf32>
    %621 = arith.addf %604, %620 : vector<16x16xf32>
    %c130 = arith.constant 130 : index
    %622 = memref.load %arg1[%c130] : memref<144xf32, #tpu.memory_space<smem>>
    %623 = vector.broadcast %622 : f32 to vector<16x16xf32>
    %624 = arith.mulf %623, %609 : vector<16x16xf32>
    %625 = arith.addf %608, %624 : vector<16x16xf32>
    %626 = vector.extract_strided_slice %539 {offsets = [2, 0], sizes = [16, 16], strides = [1, 1]} : vector<18x16xf32> to vector<16x16xf32>
    %c25 = arith.constant 25 : index
    %627 = memref.load %arg1[%c25] : memref<144xf32, #tpu.memory_space<smem>>
    %628 = vector.broadcast %627 : f32 to vector<16x16xf32>
    %629 = arith.mulf %628, %626 : vector<16x16xf32>
    %630 = arith.addf %613, %629 : vector<16x16xf32>
    %c61 = arith.constant 61 : index
    %631 = memref.load %arg1[%c61] : memref<144xf32, #tpu.memory_space<smem>>
    %632 = vector.broadcast %631 : f32 to vector<16x16xf32>
    %633 = arith.mulf %632, %626 : vector<16x16xf32>
    %634 = arith.addf %617, %633 : vector<16x16xf32>
    %c97 = arith.constant 97 : index
    %635 = memref.load %arg1[%c97] : memref<144xf32, #tpu.memory_space<smem>>
    %636 = vector.broadcast %635 : f32 to vector<16x16xf32>
    %637 = arith.mulf %636, %626 : vector<16x16xf32>
    %638 = arith.addf %621, %637 : vector<16x16xf32>
    %c133 = arith.constant 133 : index
    %639 = memref.load %arg1[%c133] : memref<144xf32, #tpu.memory_space<smem>>
    %640 = vector.broadcast %639 : f32 to vector<16x16xf32>
    %641 = arith.mulf %640, %626 : vector<16x16xf32>
    %642 = arith.addf %625, %641 : vector<16x16xf32>
    %643 = vector.extract_strided_slice %540 {offsets = [0, 0], sizes = [16, 16], strides = [1, 1]} : vector<18x16xf32> to vector<16x16xf32>
    %c20 = arith.constant 20 : index
    %644 = memref.load %arg1[%c20] : memref<144xf32, #tpu.memory_space<smem>>
    %645 = vector.broadcast %644 : f32 to vector<16x16xf32>
    %646 = arith.mulf %645, %643 : vector<16x16xf32>
    %647 = arith.addf %630, %646 : vector<16x16xf32>
    %c56 = arith.constant 56 : index
    %648 = memref.load %arg1[%c56] : memref<144xf32, #tpu.memory_space<smem>>
    %649 = vector.broadcast %648 : f32 to vector<16x16xf32>
    %650 = arith.mulf %649, %643 : vector<16x16xf32>
    %651 = arith.addf %634, %650 : vector<16x16xf32>
    %c92 = arith.constant 92 : index
    %652 = memref.load %arg1[%c92] : memref<144xf32, #tpu.memory_space<smem>>
    %653 = vector.broadcast %652 : f32 to vector<16x16xf32>
    %654 = arith.mulf %653, %643 : vector<16x16xf32>
    %655 = arith.addf %638, %654 : vector<16x16xf32>
    %c128 = arith.constant 128 : index
    %656 = memref.load %arg1[%c128] : memref<144xf32, #tpu.memory_space<smem>>
    %657 = vector.broadcast %656 : f32 to vector<16x16xf32>
    %658 = arith.mulf %657, %643 : vector<16x16xf32>
    %659 = arith.addf %642, %658 : vector<16x16xf32>
    %660 = vector.extract_strided_slice %540 {offsets = [1, 0], sizes = [16, 16], strides = [1, 1]} : vector<18x16xf32> to vector<16x16xf32>
    %c23 = arith.constant 23 : index
    %661 = memref.load %arg1[%c23] : memref<144xf32, #tpu.memory_space<smem>>
    %662 = vector.broadcast %661 : f32 to vector<16x16xf32>
    %663 = arith.mulf %662, %660 : vector<16x16xf32>
    %664 = arith.addf %647, %663 : vector<16x16xf32>
    %c59 = arith.constant 59 : index
    %665 = memref.load %arg1[%c59] : memref<144xf32, #tpu.memory_space<smem>>
    %666 = vector.broadcast %665 : f32 to vector<16x16xf32>
    %667 = arith.mulf %666, %660 : vector<16x16xf32>
    %668 = arith.addf %651, %667 : vector<16x16xf32>
    %c95 = arith.constant 95 : index
    %669 = memref.load %arg1[%c95] : memref<144xf32, #tpu.memory_space<smem>>
    %670 = vector.broadcast %669 : f32 to vector<16x16xf32>
    %671 = arith.mulf %670, %660 : vector<16x16xf32>
    %672 = arith.addf %655, %671 : vector<16x16xf32>
    %c131 = arith.constant 131 : index
    %673 = memref.load %arg1[%c131] : memref<144xf32, #tpu.memory_space<smem>>
    %674 = vector.broadcast %673 : f32 to vector<16x16xf32>
    %675 = arith.mulf %674, %660 : vector<16x16xf32>
    %676 = arith.addf %659, %675 : vector<16x16xf32>
    %677 = vector.extract_strided_slice %540 {offsets = [2, 0], sizes = [16, 16], strides = [1, 1]} : vector<18x16xf32> to vector<16x16xf32>
    %c26 = arith.constant 26 : index
    %678 = memref.load %arg1[%c26] : memref<144xf32, #tpu.memory_space<smem>>
    %679 = vector.broadcast %678 : f32 to vector<16x16xf32>
    %680 = arith.mulf %679, %677 : vector<16x16xf32>
    %681 = arith.addf %664, %680 : vector<16x16xf32>
    %c62 = arith.constant 62 : index
    %682 = memref.load %arg1[%c62] : memref<144xf32, #tpu.memory_space<smem>>
    %683 = vector.broadcast %682 : f32 to vector<16x16xf32>
    %684 = arith.mulf %683, %677 : vector<16x16xf32>
    %685 = arith.addf %668, %684 : vector<16x16xf32>
    %c98 = arith.constant 98 : index
    %686 = memref.load %arg1[%c98] : memref<144xf32, #tpu.memory_space<smem>>
    %687 = vector.broadcast %686 : f32 to vector<16x16xf32>
    %688 = arith.mulf %687, %677 : vector<16x16xf32>
    %689 = arith.addf %672, %688 : vector<16x16xf32>
    %c134 = arith.constant 134 : index
    %690 = memref.load %arg1[%c134] : memref<144xf32, #tpu.memory_space<smem>>
    %691 = vector.broadcast %690 : f32 to vector<16x16xf32>
    %692 = arith.mulf %691, %677 : vector<16x16xf32>
    %693 = arith.addf %676, %692 : vector<16x16xf32>
    %c3_112 = arith.constant 3 : index
    %c0_113 = arith.constant 0 : index
    %c0_114 = arith.constant 0 : index
    %694 = vector.load %arg10[%c3_112, %c0_113, %c0_114] : memref<4x18x18xf32, #tpu.memory_space<vmem>>, vector<1x18x18xf32>
    %695 = vector.shape_cast %694 : vector<1x18x18xf32> to vector<18x18xf32>
    %696 = vector.extract_strided_slice %695 {offsets = [0, 0], sizes = [18, 16], strides = [1, 1]} : vector<18x18xf32> to vector<18x16xf32>
    %697 = vector.extract_strided_slice %695 {offsets = [0, 1], sizes = [18, 16], strides = [1, 1]} : vector<18x18xf32> to vector<18x16xf32>
    %698 = vector.extract_strided_slice %695 {offsets = [0, 2], sizes = [18, 16], strides = [1, 1]} : vector<18x18xf32> to vector<18x16xf32>
    %699 = vector.extract_strided_slice %696 {offsets = [0, 0], sizes = [16, 16], strides = [1, 1]} : vector<18x16xf32> to vector<16x16xf32>
    %c27 = arith.constant 27 : index
    %700 = memref.load %arg1[%c27] : memref<144xf32, #tpu.memory_space<smem>>
    %701 = vector.broadcast %700 : f32 to vector<16x16xf32>
    %702 = arith.mulf %701, %699 : vector<16x16xf32>
    %703 = arith.addf %681, %702 : vector<16x16xf32>
    %c63 = arith.constant 63 : index
    %704 = memref.load %arg1[%c63] : memref<144xf32, #tpu.memory_space<smem>>
    %705 = vector.broadcast %704 : f32 to vector<16x16xf32>
    %706 = arith.mulf %705, %699 : vector<16x16xf32>
    %707 = arith.addf %685, %706 : vector<16x16xf32>
    %c99 = arith.constant 99 : index
    %708 = memref.load %arg1[%c99] : memref<144xf32, #tpu.memory_space<smem>>
    %709 = vector.broadcast %708 : f32 to vector<16x16xf32>
    %710 = arith.mulf %709, %699 : vector<16x16xf32>
    %711 = arith.addf %689, %710 : vector<16x16xf32>
    %c135 = arith.constant 135 : index
    %712 = memref.load %arg1[%c135] : memref<144xf32, #tpu.memory_space<smem>>
    %713 = vector.broadcast %712 : f32 to vector<16x16xf32>
    %714 = arith.mulf %713, %699 : vector<16x16xf32>
    %715 = arith.addf %693, %714 : vector<16x16xf32>
    %716 = vector.extract_strided_slice %696 {offsets = [1, 0], sizes = [16, 16], strides = [1, 1]} : vector<18x16xf32> to vector<16x16xf32>
    %c30 = arith.constant 30 : index
    %717 = memref.load %arg1[%c30] : memref<144xf32, #tpu.memory_space<smem>>
    %718 = vector.broadcast %717 : f32 to vector<16x16xf32>
    %719 = arith.mulf %718, %716 : vector<16x16xf32>
    %720 = arith.addf %703, %719 : vector<16x16xf32>
    %c66 = arith.constant 66 : index
    %721 = memref.load %arg1[%c66] : memref<144xf32, #tpu.memory_space<smem>>
    %722 = vector.broadcast %721 : f32 to vector<16x16xf32>
    %723 = arith.mulf %722, %716 : vector<16x16xf32>
    %724 = arith.addf %707, %723 : vector<16x16xf32>
    %c102 = arith.constant 102 : index
    %725 = memref.load %arg1[%c102] : memref<144xf32, #tpu.memory_space<smem>>
    %726 = vector.broadcast %725 : f32 to vector<16x16xf32>
    %727 = arith.mulf %726, %716 : vector<16x16xf32>
    %728 = arith.addf %711, %727 : vector<16x16xf32>
    %c138 = arith.constant 138 : index
    %729 = memref.load %arg1[%c138] : memref<144xf32, #tpu.memory_space<smem>>
    %730 = vector.broadcast %729 : f32 to vector<16x16xf32>
    %731 = arith.mulf %730, %716 : vector<16x16xf32>
    %732 = arith.addf %715, %731 : vector<16x16xf32>
    %733 = vector.extract_strided_slice %696 {offsets = [2, 0], sizes = [16, 16], strides = [1, 1]} : vector<18x16xf32> to vector<16x16xf32>
    %c33 = arith.constant 33 : index
    %734 = memref.load %arg1[%c33] : memref<144xf32, #tpu.memory_space<smem>>
    %735 = vector.broadcast %734 : f32 to vector<16x16xf32>
    %736 = arith.mulf %735, %733 : vector<16x16xf32>
    %737 = arith.addf %720, %736 : vector<16x16xf32>
    %c69 = arith.constant 69 : index
    %738 = memref.load %arg1[%c69] : memref<144xf32, #tpu.memory_space<smem>>
    %739 = vector.broadcast %738 : f32 to vector<16x16xf32>
    %740 = arith.mulf %739, %733 : vector<16x16xf32>
    %741 = arith.addf %724, %740 : vector<16x16xf32>
    %c105 = arith.constant 105 : index
    %742 = memref.load %arg1[%c105] : memref<144xf32, #tpu.memory_space<smem>>
    %743 = vector.broadcast %742 : f32 to vector<16x16xf32>
    %744 = arith.mulf %743, %733 : vector<16x16xf32>
    %745 = arith.addf %728, %744 : vector<16x16xf32>
    %c141 = arith.constant 141 : index
    %746 = memref.load %arg1[%c141] : memref<144xf32, #tpu.memory_space<smem>>
    %747 = vector.broadcast %746 : f32 to vector<16x16xf32>
    %748 = arith.mulf %747, %733 : vector<16x16xf32>
    %749 = arith.addf %732, %748 : vector<16x16xf32>
    %750 = vector.extract_strided_slice %697 {offsets = [0, 0], sizes = [16, 16], strides = [1, 1]} : vector<18x16xf32> to vector<16x16xf32>
    %c28 = arith.constant 28 : index
    %751 = memref.load %arg1[%c28] : memref<144xf32, #tpu.memory_space<smem>>
    %752 = vector.broadcast %751 : f32 to vector<16x16xf32>
    %753 = arith.mulf %752, %750 : vector<16x16xf32>
    %754 = arith.addf %737, %753 : vector<16x16xf32>
    %c64 = arith.constant 64 : index
    %755 = memref.load %arg1[%c64] : memref<144xf32, #tpu.memory_space<smem>>
    %756 = vector.broadcast %755 : f32 to vector<16x16xf32>
    %757 = arith.mulf %756, %750 : vector<16x16xf32>
    %758 = arith.addf %741, %757 : vector<16x16xf32>
    %c100 = arith.constant 100 : index
    %759 = memref.load %arg1[%c100] : memref<144xf32, #tpu.memory_space<smem>>
    %760 = vector.broadcast %759 : f32 to vector<16x16xf32>
    %761 = arith.mulf %760, %750 : vector<16x16xf32>
    %762 = arith.addf %745, %761 : vector<16x16xf32>
    %c136 = arith.constant 136 : index
    %763 = memref.load %arg1[%c136] : memref<144xf32, #tpu.memory_space<smem>>
    %764 = vector.broadcast %763 : f32 to vector<16x16xf32>
    %765 = arith.mulf %764, %750 : vector<16x16xf32>
    %766 = arith.addf %749, %765 : vector<16x16xf32>
    %767 = vector.extract_strided_slice %697 {offsets = [1, 0], sizes = [16, 16], strides = [1, 1]} : vector<18x16xf32> to vector<16x16xf32>
    %c31 = arith.constant 31 : index
    %768 = memref.load %arg1[%c31] : memref<144xf32, #tpu.memory_space<smem>>
    %769 = vector.broadcast %768 : f32 to vector<16x16xf32>
    %770 = arith.mulf %769, %767 : vector<16x16xf32>
    %771 = arith.addf %754, %770 : vector<16x16xf32>
    %c67 = arith.constant 67 : index
    %772 = memref.load %arg1[%c67] : memref<144xf32, #tpu.memory_space<smem>>
    %773 = vector.broadcast %772 : f32 to vector<16x16xf32>
    %774 = arith.mulf %773, %767 : vector<16x16xf32>
    %775 = arith.addf %758, %774 : vector<16x16xf32>
    %c103 = arith.constant 103 : index
    %776 = memref.load %arg1[%c103] : memref<144xf32, #tpu.memory_space<smem>>
    %777 = vector.broadcast %776 : f32 to vector<16x16xf32>
    %778 = arith.mulf %777, %767 : vector<16x16xf32>
    %779 = arith.addf %762, %778 : vector<16x16xf32>
    %c139 = arith.constant 139 : index
    %780 = memref.load %arg1[%c139] : memref<144xf32, #tpu.memory_space<smem>>
    %781 = vector.broadcast %780 : f32 to vector<16x16xf32>
    %782 = arith.mulf %781, %767 : vector<16x16xf32>
    %783 = arith.addf %766, %782 : vector<16x16xf32>
    %784 = vector.extract_strided_slice %697 {offsets = [2, 0], sizes = [16, 16], strides = [1, 1]} : vector<18x16xf32> to vector<16x16xf32>
    %c34 = arith.constant 34 : index
    %785 = memref.load %arg1[%c34] : memref<144xf32, #tpu.memory_space<smem>>
    %786 = vector.broadcast %785 : f32 to vector<16x16xf32>
    %787 = arith.mulf %786, %784 : vector<16x16xf32>
    %788 = arith.addf %771, %787 : vector<16x16xf32>
    %c70 = arith.constant 70 : index
    %789 = memref.load %arg1[%c70] : memref<144xf32, #tpu.memory_space<smem>>
    %790 = vector.broadcast %789 : f32 to vector<16x16xf32>
    %791 = arith.mulf %790, %784 : vector<16x16xf32>
    %792 = arith.addf %775, %791 : vector<16x16xf32>
    %c106 = arith.constant 106 : index
    %793 = memref.load %arg1[%c106] : memref<144xf32, #tpu.memory_space<smem>>
    %794 = vector.broadcast %793 : f32 to vector<16x16xf32>
    %795 = arith.mulf %794, %784 : vector<16x16xf32>
    %796 = arith.addf %779, %795 : vector<16x16xf32>
    %c142 = arith.constant 142 : index
    %797 = memref.load %arg1[%c142] : memref<144xf32, #tpu.memory_space<smem>>
    %798 = vector.broadcast %797 : f32 to vector<16x16xf32>
    %799 = arith.mulf %798, %784 : vector<16x16xf32>
    %800 = arith.addf %783, %799 : vector<16x16xf32>
    %801 = vector.extract_strided_slice %698 {offsets = [0, 0], sizes = [16, 16], strides = [1, 1]} : vector<18x16xf32> to vector<16x16xf32>
    %c29 = arith.constant 29 : index
    %802 = memref.load %arg1[%c29] : memref<144xf32, #tpu.memory_space<smem>>
    %803 = vector.broadcast %802 : f32 to vector<16x16xf32>
    %804 = arith.mulf %803, %801 : vector<16x16xf32>
    %805 = arith.addf %788, %804 : vector<16x16xf32>
    %c65 = arith.constant 65 : index
    %806 = memref.load %arg1[%c65] : memref<144xf32, #tpu.memory_space<smem>>
    %807 = vector.broadcast %806 : f32 to vector<16x16xf32>
    %808 = arith.mulf %807, %801 : vector<16x16xf32>
    %809 = arith.addf %792, %808 : vector<16x16xf32>
    %c101 = arith.constant 101 : index
    %810 = memref.load %arg1[%c101] : memref<144xf32, #tpu.memory_space<smem>>
    %811 = vector.broadcast %810 : f32 to vector<16x16xf32>
    %812 = arith.mulf %811, %801 : vector<16x16xf32>
    %813 = arith.addf %796, %812 : vector<16x16xf32>
    %c137 = arith.constant 137 : index
    %814 = memref.load %arg1[%c137] : memref<144xf32, #tpu.memory_space<smem>>
    %815 = vector.broadcast %814 : f32 to vector<16x16xf32>
    %816 = arith.mulf %815, %801 : vector<16x16xf32>
    %817 = arith.addf %800, %816 : vector<16x16xf32>
    %818 = vector.extract_strided_slice %698 {offsets = [1, 0], sizes = [16, 16], strides = [1, 1]} : vector<18x16xf32> to vector<16x16xf32>
    %c32 = arith.constant 32 : index
    %819 = memref.load %arg1[%c32] : memref<144xf32, #tpu.memory_space<smem>>
    %820 = vector.broadcast %819 : f32 to vector<16x16xf32>
    %821 = arith.mulf %820, %818 : vector<16x16xf32>
    %822 = arith.addf %805, %821 : vector<16x16xf32>
    %c68 = arith.constant 68 : index
    %823 = memref.load %arg1[%c68] : memref<144xf32, #tpu.memory_space<smem>>
    %824 = vector.broadcast %823 : f32 to vector<16x16xf32>
    %825 = arith.mulf %824, %818 : vector<16x16xf32>
    %826 = arith.addf %809, %825 : vector<16x16xf32>
    %c104 = arith.constant 104 : index
    %827 = memref.load %arg1[%c104] : memref<144xf32, #tpu.memory_space<smem>>
    %828 = vector.broadcast %827 : f32 to vector<16x16xf32>
    %829 = arith.mulf %828, %818 : vector<16x16xf32>
    %830 = arith.addf %813, %829 : vector<16x16xf32>
    %c140 = arith.constant 140 : index
    %831 = memref.load %arg1[%c140] : memref<144xf32, #tpu.memory_space<smem>>
    %832 = vector.broadcast %831 : f32 to vector<16x16xf32>
    %833 = arith.mulf %832, %818 : vector<16x16xf32>
    %834 = arith.addf %817, %833 : vector<16x16xf32>
    %835 = vector.extract_strided_slice %698 {offsets = [2, 0], sizes = [16, 16], strides = [1, 1]} : vector<18x16xf32> to vector<16x16xf32>
    %c35 = arith.constant 35 : index
    %836 = memref.load %arg1[%c35] : memref<144xf32, #tpu.memory_space<smem>>
    %837 = vector.broadcast %836 : f32 to vector<16x16xf32>
    %838 = arith.mulf %837, %835 : vector<16x16xf32>
    %839 = arith.addf %822, %838 : vector<16x16xf32>
    %c71 = arith.constant 71 : index
    %840 = memref.load %arg1[%c71] : memref<144xf32, #tpu.memory_space<smem>>
    %841 = vector.broadcast %840 : f32 to vector<16x16xf32>
    %842 = arith.mulf %841, %835 : vector<16x16xf32>
    %843 = arith.addf %826, %842 : vector<16x16xf32>
    %c107 = arith.constant 107 : index
    %844 = memref.load %arg1[%c107] : memref<144xf32, #tpu.memory_space<smem>>
    %845 = vector.broadcast %844 : f32 to vector<16x16xf32>
    %846 = arith.mulf %845, %835 : vector<16x16xf32>
    %847 = arith.addf %830, %846 : vector<16x16xf32>
    %c143 = arith.constant 143 : index
    %848 = memref.load %arg1[%c143] : memref<144xf32, #tpu.memory_space<smem>>
    %849 = vector.broadcast %848 : f32 to vector<16x16xf32>
    %850 = arith.mulf %849, %835 : vector<16x16xf32>
    %851 = arith.addf %834, %850 : vector<16x16xf32>
    %cst_115 = arith.constant 0.000000e+00 : f32
    %852 = vector.broadcast %cst_115 : f32 to vector<16x16xf32>
    %853 = arith.maximumf %839, %852 : vector<16x16xf32>
    %c0_116 = arith.constant 0 : index
    %c1_117 = arith.constant 1 : index
    %c1_118 = arith.constant 1 : index
    %854 = vector.load %arg11[%c0_116, %c1_117, %c1_118] : memref<4x18x18xf32, #tpu.memory_space<vmem>>, vector<1x16x16xf32>
    %855 = vector.shape_cast %854 : vector<1x16x16xf32> to vector<16x16xf32>
    %856 = vector.shape_cast %853 : vector<16x16xf32> to vector<1x16x16xf32>
    tpu.vector_store %arg11[%c0_116, %c1_117, %c1_118], %856 {strides = array<i32>} : memref<4x18x18xf32, #tpu.memory_space<vmem>>, vector<1x16x16xf32>,
    %cst_119 = arith.constant 0.000000e+00 : f32
    %857 = vector.broadcast %cst_119 : f32 to vector<16x16xf32>
    %858 = arith.maximumf %843, %857 : vector<16x16xf32>
    %c1_120 = arith.constant 1 : index
    %c1_121 = arith.constant 1 : index
    %c1_122 = arith.constant 1 : index
    %859 = vector.load %arg11[%c1_120, %c1_121, %c1_122] : memref<4x18x18xf32, #tpu.memory_space<vmem>>, vector<1x16x16xf32>
    %860 = vector.shape_cast %859 : vector<1x16x16xf32> to vector<16x16xf32>
    %861 = vector.shape_cast %858 : vector<16x16xf32> to vector<1x16x16xf32>
    tpu.vector_store %arg11[%c1_120, %c1_121, %c1_122], %861 {strides = array<i32>} : memref<4x18x18xf32, #tpu.memory_space<vmem>>, vector<1x16x16xf32>,
    %cst_123 = arith.constant 0.000000e+00 : f32
    %862 = vector.broadcast %cst_123 : f32 to vector<16x16xf32>
    %863 = arith.maximumf %847, %862 : vector<16x16xf32>
    %c2_124 = arith.constant 2 : index
    %c1_125 = arith.constant 1 : index
    %c1_126 = arith.constant 1 : index
    %864 = vector.load %arg11[%c2_124, %c1_125, %c1_126] : memref<4x18x18xf32, #tpu.memory_space<vmem>>, vector<1x16x16xf32>
    %865 = vector.shape_cast %864 : vector<1x16x16xf32> to vector<16x16xf32>
    %866 = vector.shape_cast %863 : vector<16x16xf32> to vector<1x16x16xf32>
    tpu.vector_store %arg11[%c2_124, %c1_125, %c1_126], %866 {strides = array<i32>} : memref<4x18x18xf32, #tpu.memory_space<vmem>>, vector<1x16x16xf32>,
    %cst_127 = arith.constant 0.000000e+00 : f32
    %867 = vector.broadcast %cst_127 : f32 to vector<16x16xf32>
    %868 = arith.maximumf %851, %867 : vector<16x16xf32>
    %c3_128 = arith.constant 3 : index
    %c1_129 = arith.constant 1 : index
    %c1_130 = arith.constant 1 : index
    %869 = vector.load %arg11[%c3_128, %c1_129, %c1_130] : memref<4x18x18xf32, #tpu.memory_space<vmem>>, vector<1x16x16xf32>
    %870 = vector.shape_cast %869 : vector<1x16x16xf32> to vector<16x16xf32>
    %871 = vector.shape_cast %868 : vector<16x16xf32> to vector<1x16x16xf32>
    tpu.vector_store %arg11[%c3_128, %c1_129, %c1_130], %871 {strides = array<i32>} : memref<4x18x18xf32, #tpu.memory_space<vmem>>, vector<1x16x16xf32>,
    %c0_131 = arith.constant 0 : index
    %872 = memref.load %arg4[%c0_131] : memref<4xf32, #tpu.memory_space<smem>>
    %873 = vector.broadcast %872 : f32 to vector<16x16xf32>
    %c1_132 = arith.constant 1 : index
    %874 = memref.load %arg4[%c1_132] : memref<4xf32, #tpu.memory_space<smem>>
    %875 = vector.broadcast %874 : f32 to vector<16x16xf32>
    %c2_133 = arith.constant 2 : index
    %876 = memref.load %arg4[%c2_133] : memref<4xf32, #tpu.memory_space<smem>>
    %877 = vector.broadcast %876 : f32 to vector<16x16xf32>
    %c3_134 = arith.constant 3 : index
    %878 = memref.load %arg4[%c3_134] : memref<4xf32, #tpu.memory_space<smem>>
    %879 = vector.broadcast %878 : f32 to vector<16x16xf32>
    %c0_135 = arith.constant 0 : index
    %c0_136 = arith.constant 0 : index
    %c0_137 = arith.constant 0 : index
    %880 = vector.load %arg11[%c0_135, %c0_136, %c0_137] : memref<4x18x18xf32, #tpu.memory_space<vmem>>, vector<1x18x18xf32>
    %881 = vector.shape_cast %880 : vector<1x18x18xf32> to vector<18x18xf32>
    %882 = vector.extract_strided_slice %881 {offsets = [0, 0], sizes = [18, 16], strides = [1, 1]} : vector<18x18xf32> to vector<18x16xf32>
    %883 = vector.extract_strided_slice %881 {offsets = [0, 1], sizes = [18, 16], strides = [1, 1]} : vector<18x18xf32> to vector<18x16xf32>
    %884 = vector.extract_strided_slice %881 {offsets = [0, 2], sizes = [18, 16], strides = [1, 1]} : vector<18x18xf32> to vector<18x16xf32>
    %885 = vector.extract_strided_slice %882 {offsets = [0, 0], sizes = [16, 16], strides = [1, 1]} : vector<18x16xf32> to vector<16x16xf32>
    %c0_138 = arith.constant 0 : index
    %886 = memref.load %arg3[%c0_138] : memref<144xf32, #tpu.memory_space<smem>>
    %887 = vector.broadcast %886 : f32 to vector<16x16xf32>
    %888 = arith.mulf %887, %885 : vector<16x16xf32>
    %889 = arith.addf %873, %888 : vector<16x16xf32>
    %c36_139 = arith.constant 36 : index
    %890 = memref.load %arg3[%c36_139] : memref<144xf32, #tpu.memory_space<smem>>
    %891 = vector.broadcast %890 : f32 to vector<16x16xf32>
    %892 = arith.mulf %891, %885 : vector<16x16xf32>
    %893 = arith.addf %875, %892 : vector<16x16xf32>
    %c72_140 = arith.constant 72 : index
    %894 = memref.load %arg3[%c72_140] : memref<144xf32, #tpu.memory_space<smem>>
    %895 = vector.broadcast %894 : f32 to vector<16x16xf32>
    %896 = arith.mulf %895, %885 : vector<16x16xf32>
    %897 = arith.addf %877, %896 : vector<16x16xf32>
    %c108_141 = arith.constant 108 : index
    %898 = memref.load %arg3[%c108_141] : memref<144xf32, #tpu.memory_space<smem>>
    %899 = vector.broadcast %898 : f32 to vector<16x16xf32>
    %900 = arith.mulf %899, %885 : vector<16x16xf32>
    %901 = arith.addf %879, %900 : vector<16x16xf32>
    %902 = vector.extract_strided_slice %882 {offsets = [1, 0], sizes = [16, 16], strides = [1, 1]} : vector<18x16xf32> to vector<16x16xf32>
    %c3_142 = arith.constant 3 : index
    %903 = memref.load %arg3[%c3_142] : memref<144xf32, #tpu.memory_space<smem>>
    %904 = vector.broadcast %903 : f32 to vector<16x16xf32>
    %905 = arith.mulf %904, %902 : vector<16x16xf32>
    %906 = arith.addf %889, %905 : vector<16x16xf32>
    %c39_143 = arith.constant 39 : index
    %907 = memref.load %arg3[%c39_143] : memref<144xf32, #tpu.memory_space<smem>>
    %908 = vector.broadcast %907 : f32 to vector<16x16xf32>
    %909 = arith.mulf %908, %902 : vector<16x16xf32>
    %910 = arith.addf %893, %909 : vector<16x16xf32>
    %c75_144 = arith.constant 75 : index
    %911 = memref.load %arg3[%c75_144] : memref<144xf32, #tpu.memory_space<smem>>
    %912 = vector.broadcast %911 : f32 to vector<16x16xf32>
    %913 = arith.mulf %912, %902 : vector<16x16xf32>
    %914 = arith.addf %897, %913 : vector<16x16xf32>
    %c111_145 = arith.constant 111 : index
    %915 = memref.load %arg3[%c111_145] : memref<144xf32, #tpu.memory_space<smem>>
    %916 = vector.broadcast %915 : f32 to vector<16x16xf32>
    %917 = arith.mulf %916, %902 : vector<16x16xf32>
    %918 = arith.addf %901, %917 : vector<16x16xf32>
    %919 = vector.extract_strided_slice %882 {offsets = [2, 0], sizes = [16, 16], strides = [1, 1]} : vector<18x16xf32> to vector<16x16xf32>
    %c6_146 = arith.constant 6 : index
    %920 = memref.load %arg3[%c6_146] : memref<144xf32, #tpu.memory_space<smem>>
    %921 = vector.broadcast %920 : f32 to vector<16x16xf32>
    %922 = arith.mulf %921, %919 : vector<16x16xf32>
    %923 = arith.addf %906, %922 : vector<16x16xf32>
    %c42_147 = arith.constant 42 : index
    %924 = memref.load %arg3[%c42_147] : memref<144xf32, #tpu.memory_space<smem>>
    %925 = vector.broadcast %924 : f32 to vector<16x16xf32>
    %926 = arith.mulf %925, %919 : vector<16x16xf32>
    %927 = arith.addf %910, %926 : vector<16x16xf32>
    %c78_148 = arith.constant 78 : index
    %928 = memref.load %arg3[%c78_148] : memref<144xf32, #tpu.memory_space<smem>>
    %929 = vector.broadcast %928 : f32 to vector<16x16xf32>
    %930 = arith.mulf %929, %919 : vector<16x16xf32>
    %931 = arith.addf %914, %930 : vector<16x16xf32>
    %c114_149 = arith.constant 114 : index
    %932 = memref.load %arg3[%c114_149] : memref<144xf32, #tpu.memory_space<smem>>
    %933 = vector.broadcast %932 : f32 to vector<16x16xf32>
    %934 = arith.mulf %933, %919 : vector<16x16xf32>
    %935 = arith.addf %918, %934 : vector<16x16xf32>
    %936 = vector.extract_strided_slice %883 {offsets = [0, 0], sizes = [16, 16], strides = [1, 1]} : vector<18x16xf32> to vector<16x16xf32>
    %c1_150 = arith.constant 1 : index
    %937 = memref.load %arg3[%c1_150] : memref<144xf32, #tpu.memory_space<smem>>
    %938 = vector.broadcast %937 : f32 to vector<16x16xf32>
    %939 = arith.mulf %938, %936 : vector<16x16xf32>
    %940 = arith.addf %923, %939 : vector<16x16xf32>
    %c37_151 = arith.constant 37 : index
    %941 = memref.load %arg3[%c37_151] : memref<144xf32, #tpu.memory_space<smem>>
    %942 = vector.broadcast %941 : f32 to vector<16x16xf32>
    %943 = arith.mulf %942, %936 : vector<16x16xf32>
    %944 = arith.addf %927, %943 : vector<16x16xf32>
    %c73_152 = arith.constant 73 : index
    %945 = memref.load %arg3[%c73_152] : memref<144xf32, #tpu.memory_space<smem>>
    %946 = vector.broadcast %945 : f32 to vector<16x16xf32>
    %947 = arith.mulf %946, %936 : vector<16x16xf32>
    %948 = arith.addf %931, %947 : vector<16x16xf32>
    %c109_153 = arith.constant 109 : index
    %949 = memref.load %arg3[%c109_153] : memref<144xf32, #tpu.memory_space<smem>>
    %950 = vector.broadcast %949 : f32 to vector<16x16xf32>
    %951 = arith.mulf %950, %936 : vector<16x16xf32>
    %952 = arith.addf %935, %951 : vector<16x16xf32>
    %953 = vector.extract_strided_slice %883 {offsets = [1, 0], sizes = [16, 16], strides = [1, 1]} : vector<18x16xf32> to vector<16x16xf32>
    %c4_154 = arith.constant 4 : index
    %954 = memref.load %arg3[%c4_154] : memref<144xf32, #tpu.memory_space<smem>>
    %955 = vector.broadcast %954 : f32 to vector<16x16xf32>
    %956 = arith.mulf %955, %953 : vector<16x16xf32>
    %957 = arith.addf %940, %956 : vector<16x16xf32>
    %c40_155 = arith.constant 40 : index
    %958 = memref.load %arg3[%c40_155] : memref<144xf32, #tpu.memory_space<smem>>
    %959 = vector.broadcast %958 : f32 to vector<16x16xf32>
    %960 = arith.mulf %959, %953 : vector<16x16xf32>
    %961 = arith.addf %944, %960 : vector<16x16xf32>
    %c76_156 = arith.constant 76 : index
    %962 = memref.load %arg3[%c76_156] : memref<144xf32, #tpu.memory_space<smem>>
    %963 = vector.broadcast %962 : f32 to vector<16x16xf32>
    %964 = arith.mulf %963, %953 : vector<16x16xf32>
    %965 = arith.addf %948, %964 : vector<16x16xf32>
    %c112_157 = arith.constant 112 : index
    %966 = memref.load %arg3[%c112_157] : memref<144xf32, #tpu.memory_space<smem>>
    %967 = vector.broadcast %966 : f32 to vector<16x16xf32>
    %968 = arith.mulf %967, %953 : vector<16x16xf32>
    %969 = arith.addf %952, %968 : vector<16x16xf32>
    %970 = vector.extract_strided_slice %883 {offsets = [2, 0], sizes = [16, 16], strides = [1, 1]} : vector<18x16xf32> to vector<16x16xf32>
    %c7_158 = arith.constant 7 : index
    %971 = memref.load %arg3[%c7_158] : memref<144xf32, #tpu.memory_space<smem>>
    %972 = vector.broadcast %971 : f32 to vector<16x16xf32>
    %973 = arith.mulf %972, %970 : vector<16x16xf32>
    %974 = arith.addf %957, %973 : vector<16x16xf32>
    %c43_159 = arith.constant 43 : index
    %975 = memref.load %arg3[%c43_159] : memref<144xf32, #tpu.memory_space<smem>>
    %976 = vector.broadcast %975 : f32 to vector<16x16xf32>
    %977 = arith.mulf %976, %970 : vector<16x16xf32>
    %978 = arith.addf %961, %977 : vector<16x16xf32>
    %c79_160 = arith.constant 79 : index
    %979 = memref.load %arg3[%c79_160] : memref<144xf32, #tpu.memory_space<smem>>
    %980 = vector.broadcast %979 : f32 to vector<16x16xf32>
    %981 = arith.mulf %980, %970 : vector<16x16xf32>
    %982 = arith.addf %965, %981 : vector<16x16xf32>
    %c115_161 = arith.constant 115 : index
    %983 = memref.load %arg3[%c115_161] : memref<144xf32, #tpu.memory_space<smem>>
    %984 = vector.broadcast %983 : f32 to vector<16x16xf32>
    %985 = arith.mulf %984, %970 : vector<16x16xf32>
    %986 = arith.addf %969, %985 : vector<16x16xf32>
    %987 = vector.extract_strided_slice %884 {offsets = [0, 0], sizes = [16, 16], strides = [1, 1]} : vector<18x16xf32> to vector<16x16xf32>
    %c2_162 = arith.constant 2 : index
    %988 = memref.load %arg3[%c2_162] : memref<144xf32, #tpu.memory_space<smem>>
    %989 = vector.broadcast %988 : f32 to vector<16x16xf32>
    %990 = arith.mulf %989, %987 : vector<16x16xf32>
    %991 = arith.addf %974, %990 : vector<16x16xf32>
    %c38_163 = arith.constant 38 : index
    %992 = memref.load %arg3[%c38_163] : memref<144xf32, #tpu.memory_space<smem>>
    %993 = vector.broadcast %992 : f32 to vector<16x16xf32>
    %994 = arith.mulf %993, %987 : vector<16x16xf32>
    %995 = arith.addf %978, %994 : vector<16x16xf32>
    %c74_164 = arith.constant 74 : index
    %996 = memref.load %arg3[%c74_164] : memref<144xf32, #tpu.memory_space<smem>>
    %997 = vector.broadcast %996 : f32 to vector<16x16xf32>
    %998 = arith.mulf %997, %987 : vector<16x16xf32>
    %999 = arith.addf %982, %998 : vector<16x16xf32>
    %c110_165 = arith.constant 110 : index
    %1000 = memref.load %arg3[%c110_165] : memref<144xf32, #tpu.memory_space<smem>>
    %1001 = vector.broadcast %1000 : f32 to vector<16x16xf32>
    %1002 = arith.mulf %1001, %987 : vector<16x16xf32>
    %1003 = arith.addf %986, %1002 : vector<16x16xf32>
    %1004 = vector.extract_strided_slice %884 {offsets = [1, 0], sizes = [16, 16], strides = [1, 1]} : vector<18x16xf32> to vector<16x16xf32>
    %c5_166 = arith.constant 5 : index
    %1005 = memref.load %arg3[%c5_166] : memref<144xf32, #tpu.memory_space<smem>>
    %1006 = vector.broadcast %1005 : f32 to vector<16x16xf32>
    %1007 = arith.mulf %1006, %1004 : vector<16x16xf32>
    %1008 = arith.addf %991, %1007 : vector<16x16xf32>
    %c41_167 = arith.constant 41 : index
    %1009 = memref.load %arg3[%c41_167] : memref<144xf32, #tpu.memory_space<smem>>
    %1010 = vector.broadcast %1009 : f32 to vector<16x16xf32>
    %1011 = arith.mulf %1010, %1004 : vector<16x16xf32>
    %1012 = arith.addf %995, %1011 : vector<16x16xf32>
    %c77_168 = arith.constant 77 : index
    %1013 = memref.load %arg3[%c77_168] : memref<144xf32, #tpu.memory_space<smem>>
    %1014 = vector.broadcast %1013 : f32 to vector<16x16xf32>
    %1015 = arith.mulf %1014, %1004 : vector<16x16xf32>
    %1016 = arith.addf %999, %1015 : vector<16x16xf32>
    %c113_169 = arith.constant 113 : index
    %1017 = memref.load %arg3[%c113_169] : memref<144xf32, #tpu.memory_space<smem>>
    %1018 = vector.broadcast %1017 : f32 to vector<16x16xf32>
    %1019 = arith.mulf %1018, %1004 : vector<16x16xf32>
    %1020 = arith.addf %1003, %1019 : vector<16x16xf32>
    %1021 = vector.extract_strided_slice %884 {offsets = [2, 0], sizes = [16, 16], strides = [1, 1]} : vector<18x16xf32> to vector<16x16xf32>
    %c8_170 = arith.constant 8 : index
    %1022 = memref.load %arg3[%c8_170] : memref<144xf32, #tpu.memory_space<smem>>
    %1023 = vector.broadcast %1022 : f32 to vector<16x16xf32>
    %1024 = arith.mulf %1023, %1021 : vector<16x16xf32>
    %1025 = arith.addf %1008, %1024 : vector<16x16xf32>
    %c44_171 = arith.constant 44 : index
    %1026 = memref.load %arg3[%c44_171] : memref<144xf32, #tpu.memory_space<smem>>
    %1027 = vector.broadcast %1026 : f32 to vector<16x16xf32>
    %1028 = arith.mulf %1027, %1021 : vector<16x16xf32>
    %1029 = arith.addf %1012, %1028 : vector<16x16xf32>
    %c80_172 = arith.constant 80 : index
    %1030 = memref.load %arg3[%c80_172] : memref<144xf32, #tpu.memory_space<smem>>
    %1031 = vector.broadcast %1030 : f32 to vector<16x16xf32>
    %1032 = arith.mulf %1031, %1021 : vector<16x16xf32>
    %1033 = arith.addf %1016, %1032 : vector<16x16xf32>
    %c116_173 = arith.constant 116 : index
    %1034 = memref.load %arg3[%c116_173] : memref<144xf32, #tpu.memory_space<smem>>
    %1035 = vector.broadcast %1034 : f32 to vector<16x16xf32>
    %1036 = arith.mulf %1035, %1021 : vector<16x16xf32>
    %1037 = arith.addf %1020, %1036 : vector<16x16xf32>
    %c1_174 = arith.constant 1 : index
    %c0_175 = arith.constant 0 : index
    %c0_176 = arith.constant 0 : index
    %1038 = vector.load %arg11[%c1_174, %c0_175, %c0_176] : memref<4x18x18xf32, #tpu.memory_space<vmem>>, vector<1x18x18xf32>
    %1039 = vector.shape_cast %1038 : vector<1x18x18xf32> to vector<18x18xf32>
    %1040 = vector.extract_strided_slice %1039 {offsets = [0, 0], sizes = [18, 16], strides = [1, 1]} : vector<18x18xf32> to vector<18x16xf32>
    %1041 = vector.extract_strided_slice %1039 {offsets = [0, 1], sizes = [18, 16], strides = [1, 1]} : vector<18x18xf32> to vector<18x16xf32>
    %1042 = vector.extract_strided_slice %1039 {offsets = [0, 2], sizes = [18, 16], strides = [1, 1]} : vector<18x18xf32> to vector<18x16xf32>
    %1043 = vector.extract_strided_slice %1040 {offsets = [0, 0], sizes = [16, 16], strides = [1, 1]} : vector<18x16xf32> to vector<16x16xf32>
    %c9_177 = arith.constant 9 : index
    %1044 = memref.load %arg3[%c9_177] : memref<144xf32, #tpu.memory_space<smem>>
    %1045 = vector.broadcast %1044 : f32 to vector<16x16xf32>
    %1046 = arith.mulf %1045, %1043 : vector<16x16xf32>
    %1047 = arith.addf %1025, %1046 : vector<16x16xf32>
    %c45_178 = arith.constant 45 : index
    %1048 = memref.load %arg3[%c45_178] : memref<144xf32, #tpu.memory_space<smem>>
    %1049 = vector.broadcast %1048 : f32 to vector<16x16xf32>
    %1050 = arith.mulf %1049, %1043 : vector<16x16xf32>
    %1051 = arith.addf %1029, %1050 : vector<16x16xf32>
    %c81_179 = arith.constant 81 : index
    %1052 = memref.load %arg3[%c81_179] : memref<144xf32, #tpu.memory_space<smem>>
    %1053 = vector.broadcast %1052 : f32 to vector<16x16xf32>
    %1054 = arith.mulf %1053, %1043 : vector<16x16xf32>
    %1055 = arith.addf %1033, %1054 : vector<16x16xf32>
    %c117_180 = arith.constant 117 : index
    %1056 = memref.load %arg3[%c117_180] : memref<144xf32, #tpu.memory_space<smem>>
    %1057 = vector.broadcast %1056 : f32 to vector<16x16xf32>
    %1058 = arith.mulf %1057, %1043 : vector<16x16xf32>
    %1059 = arith.addf %1037, %1058 : vector<16x16xf32>
    %1060 = vector.extract_strided_slice %1040 {offsets = [1, 0], sizes = [16, 16], strides = [1, 1]} : vector<18x16xf32> to vector<16x16xf32>
    %c12_181 = arith.constant 12 : index
    %1061 = memref.load %arg3[%c12_181] : memref<144xf32, #tpu.memory_space<smem>>
    %1062 = vector.broadcast %1061 : f32 to vector<16x16xf32>
    %1063 = arith.mulf %1062, %1060 : vector<16x16xf32>
    %1064 = arith.addf %1047, %1063 : vector<16x16xf32>
    %c48_182 = arith.constant 48 : index
    %1065 = memref.load %arg3[%c48_182] : memref<144xf32, #tpu.memory_space<smem>>
    %1066 = vector.broadcast %1065 : f32 to vector<16x16xf32>
    %1067 = arith.mulf %1066, %1060 : vector<16x16xf32>
    %1068 = arith.addf %1051, %1067 : vector<16x16xf32>
    %c84_183 = arith.constant 84 : index
    %1069 = memref.load %arg3[%c84_183] : memref<144xf32, #tpu.memory_space<smem>>
    %1070 = vector.broadcast %1069 : f32 to vector<16x16xf32>
    %1071 = arith.mulf %1070, %1060 : vector<16x16xf32>
    %1072 = arith.addf %1055, %1071 : vector<16x16xf32>
    %c120_184 = arith.constant 120 : index
    %1073 = memref.load %arg3[%c120_184] : memref<144xf32, #tpu.memory_space<smem>>
    %1074 = vector.broadcast %1073 : f32 to vector<16x16xf32>
    %1075 = arith.mulf %1074, %1060 : vector<16x16xf32>
    %1076 = arith.addf %1059, %1075 : vector<16x16xf32>
    %1077 = vector.extract_strided_slice %1040 {offsets = [2, 0], sizes = [16, 16], strides = [1, 1]} : vector<18x16xf32> to vector<16x16xf32>
    %c15_185 = arith.constant 15 : index
    %1078 = memref.load %arg3[%c15_185] : memref<144xf32, #tpu.memory_space<smem>>
    %1079 = vector.broadcast %1078 : f32 to vector<16x16xf32>
    %1080 = arith.mulf %1079, %1077 : vector<16x16xf32>
    %1081 = arith.addf %1064, %1080 : vector<16x16xf32>
    %c51_186 = arith.constant 51 : index
    %1082 = memref.load %arg3[%c51_186] : memref<144xf32, #tpu.memory_space<smem>>
    %1083 = vector.broadcast %1082 : f32 to vector<16x16xf32>
    %1084 = arith.mulf %1083, %1077 : vector<16x16xf32>
    %1085 = arith.addf %1068, %1084 : vector<16x16xf32>
    %c87_187 = arith.constant 87 : index
    %1086 = memref.load %arg3[%c87_187] : memref<144xf32, #tpu.memory_space<smem>>
    %1087 = vector.broadcast %1086 : f32 to vector<16x16xf32>
    %1088 = arith.mulf %1087, %1077 : vector<16x16xf32>
    %1089 = arith.addf %1072, %1088 : vector<16x16xf32>
    %c123_188 = arith.constant 123 : index
    %1090 = memref.load %arg3[%c123_188] : memref<144xf32, #tpu.memory_space<smem>>
    %1091 = vector.broadcast %1090 : f32 to vector<16x16xf32>
    %1092 = arith.mulf %1091, %1077 : vector<16x16xf32>
    %1093 = arith.addf %1076, %1092 : vector<16x16xf32>
    %1094 = vector.extract_strided_slice %1041 {offsets = [0, 0], sizes = [16, 16], strides = [1, 1]} : vector<18x16xf32> to vector<16x16xf32>
    %c10_189 = arith.constant 10 : index
    %1095 = memref.load %arg3[%c10_189] : memref<144xf32, #tpu.memory_space<smem>>
    %1096 = vector.broadcast %1095 : f32 to vector<16x16xf32>
    %1097 = arith.mulf %1096, %1094 : vector<16x16xf32>
    %1098 = arith.addf %1081, %1097 : vector<16x16xf32>
    %c46_190 = arith.constant 46 : index
    %1099 = memref.load %arg3[%c46_190] : memref<144xf32, #tpu.memory_space<smem>>
    %1100 = vector.broadcast %1099 : f32 to vector<16x16xf32>
    %1101 = arith.mulf %1100, %1094 : vector<16x16xf32>
    %1102 = arith.addf %1085, %1101 : vector<16x16xf32>
    %c82_191 = arith.constant 82 : index
    %1103 = memref.load %arg3[%c82_191] : memref<144xf32, #tpu.memory_space<smem>>
    %1104 = vector.broadcast %1103 : f32 to vector<16x16xf32>
    %1105 = arith.mulf %1104, %1094 : vector<16x16xf32>
    %1106 = arith.addf %1089, %1105 : vector<16x16xf32>
    %c118_192 = arith.constant 118 : index
    %1107 = memref.load %arg3[%c118_192] : memref<144xf32, #tpu.memory_space<smem>>
    %1108 = vector.broadcast %1107 : f32 to vector<16x16xf32>
    %1109 = arith.mulf %1108, %1094 : vector<16x16xf32>
    %1110 = arith.addf %1093, %1109 : vector<16x16xf32>
    %1111 = vector.extract_strided_slice %1041 {offsets = [1, 0], sizes = [16, 16], strides = [1, 1]} : vector<18x16xf32> to vector<16x16xf32>
    %c13_193 = arith.constant 13 : index
    %1112 = memref.load %arg3[%c13_193] : memref<144xf32, #tpu.memory_space<smem>>
    %1113 = vector.broadcast %1112 : f32 to vector<16x16xf32>
    %1114 = arith.mulf %1113, %1111 : vector<16x16xf32>
    %1115 = arith.addf %1098, %1114 : vector<16x16xf32>
    %c49_194 = arith.constant 49 : index
    %1116 = memref.load %arg3[%c49_194] : memref<144xf32, #tpu.memory_space<smem>>
    %1117 = vector.broadcast %1116 : f32 to vector<16x16xf32>
    %1118 = arith.mulf %1117, %1111 : vector<16x16xf32>
    %1119 = arith.addf %1102, %1118 : vector<16x16xf32>
    %c85_195 = arith.constant 85 : index
    %1120 = memref.load %arg3[%c85_195] : memref<144xf32, #tpu.memory_space<smem>>
    %1121 = vector.broadcast %1120 : f32 to vector<16x16xf32>
    %1122 = arith.mulf %1121, %1111 : vector<16x16xf32>
    %1123 = arith.addf %1106, %1122 : vector<16x16xf32>
    %c121_196 = arith.constant 121 : index
    %1124 = memref.load %arg3[%c121_196] : memref<144xf32, #tpu.memory_space<smem>>
    %1125 = vector.broadcast %1124 : f32 to vector<16x16xf32>
    %1126 = arith.mulf %1125, %1111 : vector<16x16xf32>
    %1127 = arith.addf %1110, %1126 : vector<16x16xf32>
    %1128 = vector.extract_strided_slice %1041 {offsets = [2, 0], sizes = [16, 16], strides = [1, 1]} : vector<18x16xf32> to vector<16x16xf32>
    %c16_197 = arith.constant 16 : index
    %1129 = memref.load %arg3[%c16_197] : memref<144xf32, #tpu.memory_space<smem>>
    %1130 = vector.broadcast %1129 : f32 to vector<16x16xf32>
    %1131 = arith.mulf %1130, %1128 : vector<16x16xf32>
    %1132 = arith.addf %1115, %1131 : vector<16x16xf32>
    %c52_198 = arith.constant 52 : index
    %1133 = memref.load %arg3[%c52_198] : memref<144xf32, #tpu.memory_space<smem>>
    %1134 = vector.broadcast %1133 : f32 to vector<16x16xf32>
    %1135 = arith.mulf %1134, %1128 : vector<16x16xf32>
    %1136 = arith.addf %1119, %1135 : vector<16x16xf32>
    %c88_199 = arith.constant 88 : index
    %1137 = memref.load %arg3[%c88_199] : memref<144xf32, #tpu.memory_space<smem>>
    %1138 = vector.broadcast %1137 : f32 to vector<16x16xf32>
    %1139 = arith.mulf %1138, %1128 : vector<16x16xf32>
    %1140 = arith.addf %1123, %1139 : vector<16x16xf32>
    %c124_200 = arith.constant 124 : index
    %1141 = memref.load %arg3[%c124_200] : memref<144xf32, #tpu.memory_space<smem>>
    %1142 = vector.broadcast %1141 : f32 to vector<16x16xf32>
    %1143 = arith.mulf %1142, %1128 : vector<16x16xf32>
    %1144 = arith.addf %1127, %1143 : vector<16x16xf32>
    %1145 = vector.extract_strided_slice %1042 {offsets = [0, 0], sizes = [16, 16], strides = [1, 1]} : vector<18x16xf32> to vector<16x16xf32>
    %c11_201 = arith.constant 11 : index
    %1146 = memref.load %arg3[%c11_201] : memref<144xf32, #tpu.memory_space<smem>>
    %1147 = vector.broadcast %1146 : f32 to vector<16x16xf32>
    %1148 = arith.mulf %1147, %1145 : vector<16x16xf32>
    %1149 = arith.addf %1132, %1148 : vector<16x16xf32>
    %c47_202 = arith.constant 47 : index
    %1150 = memref.load %arg3[%c47_202] : memref<144xf32, #tpu.memory_space<smem>>
    %1151 = vector.broadcast %1150 : f32 to vector<16x16xf32>
    %1152 = arith.mulf %1151, %1145 : vector<16x16xf32>
    %1153 = arith.addf %1136, %1152 : vector<16x16xf32>
    %c83_203 = arith.constant 83 : index
    %1154 = memref.load %arg3[%c83_203] : memref<144xf32, #tpu.memory_space<smem>>
    %1155 = vector.broadcast %1154 : f32 to vector<16x16xf32>
    %1156 = arith.mulf %1155, %1145 : vector<16x16xf32>
    %1157 = arith.addf %1140, %1156 : vector<16x16xf32>
    %c119_204 = arith.constant 119 : index
    %1158 = memref.load %arg3[%c119_204] : memref<144xf32, #tpu.memory_space<smem>>
    %1159 = vector.broadcast %1158 : f32 to vector<16x16xf32>
    %1160 = arith.mulf %1159, %1145 : vector<16x16xf32>
    %1161 = arith.addf %1144, %1160 : vector<16x16xf32>
    %1162 = vector.extract_strided_slice %1042 {offsets = [1, 0], sizes = [16, 16], strides = [1, 1]} : vector<18x16xf32> to vector<16x16xf32>
    %c14_205 = arith.constant 14 : index
    %1163 = memref.load %arg3[%c14_205] : memref<144xf32, #tpu.memory_space<smem>>
    %1164 = vector.broadcast %1163 : f32 to vector<16x16xf32>
    %1165 = arith.mulf %1164, %1162 : vector<16x16xf32>
    %1166 = arith.addf %1149, %1165 : vector<16x16xf32>
    %c50_206 = arith.constant 50 : index
    %1167 = memref.load %arg3[%c50_206] : memref<144xf32, #tpu.memory_space<smem>>
    %1168 = vector.broadcast %1167 : f32 to vector<16x16xf32>
    %1169 = arith.mulf %1168, %1162 : vector<16x16xf32>
    %1170 = arith.addf %1153, %1169 : vector<16x16xf32>
    %c86_207 = arith.constant 86 : index
    %1171 = memref.load %arg3[%c86_207] : memref<144xf32, #tpu.memory_space<smem>>
    %1172 = vector.broadcast %1171 : f32 to vector<16x16xf32>
    %1173 = arith.mulf %1172, %1162 : vector<16x16xf32>
    %1174 = arith.addf %1157, %1173 : vector<16x16xf32>
    %c122_208 = arith.constant 122 : index
    %1175 = memref.load %arg3[%c122_208] : memref<144xf32, #tpu.memory_space<smem>>
    %1176 = vector.broadcast %1175 : f32 to vector<16x16xf32>
    %1177 = arith.mulf %1176, %1162 : vector<16x16xf32>
    %1178 = arith.addf %1161, %1177 : vector<16x16xf32>
    %1179 = vector.extract_strided_slice %1042 {offsets = [2, 0], sizes = [16, 16], strides = [1, 1]} : vector<18x16xf32> to vector<16x16xf32>
    %c17_209 = arith.constant 17 : index
    %1180 = memref.load %arg3[%c17_209] : memref<144xf32, #tpu.memory_space<smem>>
    %1181 = vector.broadcast %1180 : f32 to vector<16x16xf32>
    %1182 = arith.mulf %1181, %1179 : vector<16x16xf32>
    %1183 = arith.addf %1166, %1182 : vector<16x16xf32>
    %c53_210 = arith.constant 53 : index
    %1184 = memref.load %arg3[%c53_210] : memref<144xf32, #tpu.memory_space<smem>>
    %1185 = vector.broadcast %1184 : f32 to vector<16x16xf32>
    %1186 = arith.mulf %1185, %1179 : vector<16x16xf32>
    %1187 = arith.addf %1170, %1186 : vector<16x16xf32>
    %c89_211 = arith.constant 89 : index
    %1188 = memref.load %arg3[%c89_211] : memref<144xf32, #tpu.memory_space<smem>>
    %1189 = vector.broadcast %1188 : f32 to vector<16x16xf32>
    %1190 = arith.mulf %1189, %1179 : vector<16x16xf32>
    %1191 = arith.addf %1174, %1190 : vector<16x16xf32>
    %c125_212 = arith.constant 125 : index
    %1192 = memref.load %arg3[%c125_212] : memref<144xf32, #tpu.memory_space<smem>>
    %1193 = vector.broadcast %1192 : f32 to vector<16x16xf32>
    %1194 = arith.mulf %1193, %1179 : vector<16x16xf32>
    %1195 = arith.addf %1178, %1194 : vector<16x16xf32>
    %c2_213 = arith.constant 2 : index
    %c0_214 = arith.constant 0 : index
    %c0_215 = arith.constant 0 : index
    %1196 = vector.load %arg11[%c2_213, %c0_214, %c0_215] : memref<4x18x18xf32, #tpu.memory_space<vmem>>, vector<1x18x18xf32>
    %1197 = vector.shape_cast %1196 : vector<1x18x18xf32> to vector<18x18xf32>
    %1198 = vector.extract_strided_slice %1197 {offsets = [0, 0], sizes = [18, 16], strides = [1, 1]} : vector<18x18xf32> to vector<18x16xf32>
    %1199 = vector.extract_strided_slice %1197 {offsets = [0, 1], sizes = [18, 16], strides = [1, 1]} : vector<18x18xf32> to vector<18x16xf32>
    %1200 = vector.extract_strided_slice %1197 {offsets = [0, 2], sizes = [18, 16], strides = [1, 1]} : vector<18x18xf32> to vector<18x16xf32>
    %1201 = vector.extract_strided_slice %1198 {offsets = [0, 0], sizes = [16, 16], strides = [1, 1]} : vector<18x16xf32> to vector<16x16xf32>
    %c18_216 = arith.constant 18 : index
    %1202 = memref.load %arg3[%c18_216] : memref<144xf32, #tpu.memory_space<smem>>
    %1203 = vector.broadcast %1202 : f32 to vector<16x16xf32>
    %1204 = arith.mulf %1203, %1201 : vector<16x16xf32>
    %1205 = arith.addf %1183, %1204 : vector<16x16xf32>
    %c54_217 = arith.constant 54 : index
    %1206 = memref.load %arg3[%c54_217] : memref<144xf32, #tpu.memory_space<smem>>
    %1207 = vector.broadcast %1206 : f32 to vector<16x16xf32>
    %1208 = arith.mulf %1207, %1201 : vector<16x16xf32>
    %1209 = arith.addf %1187, %1208 : vector<16x16xf32>
    %c90_218 = arith.constant 90 : index
    %1210 = memref.load %arg3[%c90_218] : memref<144xf32, #tpu.memory_space<smem>>
    %1211 = vector.broadcast %1210 : f32 to vector<16x16xf32>
    %1212 = arith.mulf %1211, %1201 : vector<16x16xf32>
    %1213 = arith.addf %1191, %1212 : vector<16x16xf32>
    %c126_219 = arith.constant 126 : index
    %1214 = memref.load %arg3[%c126_219] : memref<144xf32, #tpu.memory_space<smem>>
    %1215 = vector.broadcast %1214 : f32 to vector<16x16xf32>
    %1216 = arith.mulf %1215, %1201 : vector<16x16xf32>
    %1217 = arith.addf %1195, %1216 : vector<16x16xf32>
    %1218 = vector.extract_strided_slice %1198 {offsets = [1, 0], sizes = [16, 16], strides = [1, 1]} : vector<18x16xf32> to vector<16x16xf32>
    %c21_220 = arith.constant 21 : index
    %1219 = memref.load %arg3[%c21_220] : memref<144xf32, #tpu.memory_space<smem>>
    %1220 = vector.broadcast %1219 : f32 to vector<16x16xf32>
    %1221 = arith.mulf %1220, %1218 : vector<16x16xf32>
    %1222 = arith.addf %1205, %1221 : vector<16x16xf32>
    %c57_221 = arith.constant 57 : index
    %1223 = memref.load %arg3[%c57_221] : memref<144xf32, #tpu.memory_space<smem>>
    %1224 = vector.broadcast %1223 : f32 to vector<16x16xf32>
    %1225 = arith.mulf %1224, %1218 : vector<16x16xf32>
    %1226 = arith.addf %1209, %1225 : vector<16x16xf32>
    %c93_222 = arith.constant 93 : index
    %1227 = memref.load %arg3[%c93_222] : memref<144xf32, #tpu.memory_space<smem>>
    %1228 = vector.broadcast %1227 : f32 to vector<16x16xf32>
    %1229 = arith.mulf %1228, %1218 : vector<16x16xf32>
    %1230 = arith.addf %1213, %1229 : vector<16x16xf32>
    %c129_223 = arith.constant 129 : index
    %1231 = memref.load %arg3[%c129_223] : memref<144xf32, #tpu.memory_space<smem>>
    %1232 = vector.broadcast %1231 : f32 to vector<16x16xf32>
    %1233 = arith.mulf %1232, %1218 : vector<16x16xf32>
    %1234 = arith.addf %1217, %1233 : vector<16x16xf32>
    %1235 = vector.extract_strided_slice %1198 {offsets = [2, 0], sizes = [16, 16], strides = [1, 1]} : vector<18x16xf32> to vector<16x16xf32>
    %c24_224 = arith.constant 24 : index
    %1236 = memref.load %arg3[%c24_224] : memref<144xf32, #tpu.memory_space<smem>>
    %1237 = vector.broadcast %1236 : f32 to vector<16x16xf32>
    %1238 = arith.mulf %1237, %1235 : vector<16x16xf32>
    %1239 = arith.addf %1222, %1238 : vector<16x16xf32>
    %c60_225 = arith.constant 60 : index
    %1240 = memref.load %arg3[%c60_225] : memref<144xf32, #tpu.memory_space<smem>>
    %1241 = vector.broadcast %1240 : f32 to vector<16x16xf32>
    %1242 = arith.mulf %1241, %1235 : vector<16x16xf32>
    %1243 = arith.addf %1226, %1242 : vector<16x16xf32>
    %c96_226 = arith.constant 96 : index
    %1244 = memref.load %arg3[%c96_226] : memref<144xf32, #tpu.memory_space<smem>>
    %1245 = vector.broadcast %1244 : f32 to vector<16x16xf32>
    %1246 = arith.mulf %1245, %1235 : vector<16x16xf32>
    %1247 = arith.addf %1230, %1246 : vector<16x16xf32>
    %c132_227 = arith.constant 132 : index
    %1248 = memref.load %arg3[%c132_227] : memref<144xf32, #tpu.memory_space<smem>>
    %1249 = vector.broadcast %1248 : f32 to vector<16x16xf32>
    %1250 = arith.mulf %1249, %1235 : vector<16x16xf32>
    %1251 = arith.addf %1234, %1250 : vector<16x16xf32>
    %1252 = vector.extract_strided_slice %1199 {offsets = [0, 0], sizes = [16, 16], strides = [1, 1]} : vector<18x16xf32> to vector<16x16xf32>
    %c19_228 = arith.constant 19 : index
    %1253 = memref.load %arg3[%c19_228] : memref<144xf32, #tpu.memory_space<smem>>
    %1254 = vector.broadcast %1253 : f32 to vector<16x16xf32>
    %1255 = arith.mulf %1254, %1252 : vector<16x16xf32>
    %1256 = arith.addf %1239, %1255 : vector<16x16xf32>
    %c55_229 = arith.constant 55 : index
    %1257 = memref.load %arg3[%c55_229] : memref<144xf32, #tpu.memory_space<smem>>
    %1258 = vector.broadcast %1257 : f32 to vector<16x16xf32>
    %1259 = arith.mulf %1258, %1252 : vector<16x16xf32>
    %1260 = arith.addf %1243, %1259 : vector<16x16xf32>
    %c91_230 = arith.constant 91 : index
    %1261 = memref.load %arg3[%c91_230] : memref<144xf32, #tpu.memory_space<smem>>
    %1262 = vector.broadcast %1261 : f32 to vector<16x16xf32>
    %1263 = arith.mulf %1262, %1252 : vector<16x16xf32>
    %1264 = arith.addf %1247, %1263 : vector<16x16xf32>
    %c127_231 = arith.constant 127 : index
    %1265 = memref.load %arg3[%c127_231] : memref<144xf32, #tpu.memory_space<smem>>
    %1266 = vector.broadcast %1265 : f32 to vector<16x16xf32>
    %1267 = arith.mulf %1266, %1252 : vector<16x16xf32>
    %1268 = arith.addf %1251, %1267 : vector<16x16xf32>
    %1269 = vector.extract_strided_slice %1199 {offsets = [1, 0], sizes = [16, 16], strides = [1, 1]} : vector<18x16xf32> to vector<16x16xf32>
    %c22_232 = arith.constant 22 : index
    %1270 = memref.load %arg3[%c22_232] : memref<144xf32, #tpu.memory_space<smem>>
    %1271 = vector.broadcast %1270 : f32 to vector<16x16xf32>
    %1272 = arith.mulf %1271, %1269 : vector<16x16xf32>
    %1273 = arith.addf %1256, %1272 : vector<16x16xf32>
    %c58_233 = arith.constant 58 : index
    %1274 = memref.load %arg3[%c58_233] : memref<144xf32, #tpu.memory_space<smem>>
    %1275 = vector.broadcast %1274 : f32 to vector<16x16xf32>
    %1276 = arith.mulf %1275, %1269 : vector<16x16xf32>
    %1277 = arith.addf %1260, %1276 : vector<16x16xf32>
    %c94_234 = arith.constant 94 : index
    %1278 = memref.load %arg3[%c94_234] : memref<144xf32, #tpu.memory_space<smem>>
    %1279 = vector.broadcast %1278 : f32 to vector<16x16xf32>
    %1280 = arith.mulf %1279, %1269 : vector<16x16xf32>
    %1281 = arith.addf %1264, %1280 : vector<16x16xf32>
    %c130_235 = arith.constant 130 : index
    %1282 = memref.load %arg3[%c130_235] : memref<144xf32, #tpu.memory_space<smem>>
    %1283 = vector.broadcast %1282 : f32 to vector<16x16xf32>
    %1284 = arith.mulf %1283, %1269 : vector<16x16xf32>
    %1285 = arith.addf %1268, %1284 : vector<16x16xf32>
    %1286 = vector.extract_strided_slice %1199 {offsets = [2, 0], sizes = [16, 16], strides = [1, 1]} : vector<18x16xf32> to vector<16x16xf32>
    %c25_236 = arith.constant 25 : index
    %1287 = memref.load %arg3[%c25_236] : memref<144xf32, #tpu.memory_space<smem>>
    %1288 = vector.broadcast %1287 : f32 to vector<16x16xf32>
    %1289 = arith.mulf %1288, %1286 : vector<16x16xf32>
    %1290 = arith.addf %1273, %1289 : vector<16x16xf32>
    %c61_237 = arith.constant 61 : index
    %1291 = memref.load %arg3[%c61_237] : memref<144xf32, #tpu.memory_space<smem>>
    %1292 = vector.broadcast %1291 : f32 to vector<16x16xf32>
    %1293 = arith.mulf %1292, %1286 : vector<16x16xf32>
    %1294 = arith.addf %1277, %1293 : vector<16x16xf32>
    %c97_238 = arith.constant 97 : index
    %1295 = memref.load %arg3[%c97_238] : memref<144xf32, #tpu.memory_space<smem>>
    %1296 = vector.broadcast %1295 : f32 to vector<16x16xf32>
    %1297 = arith.mulf %1296, %1286 : vector<16x16xf32>
    %1298 = arith.addf %1281, %1297 : vector<16x16xf32>
    %c133_239 = arith.constant 133 : index
    %1299 = memref.load %arg3[%c133_239] : memref<144xf32, #tpu.memory_space<smem>>
    %1300 = vector.broadcast %1299 : f32 to vector<16x16xf32>
    %1301 = arith.mulf %1300, %1286 : vector<16x16xf32>
    %1302 = arith.addf %1285, %1301 : vector<16x16xf32>
    %1303 = vector.extract_strided_slice %1200 {offsets = [0, 0], sizes = [16, 16], strides = [1, 1]} : vector<18x16xf32> to vector<16x16xf32>
    %c20_240 = arith.constant 20 : index
    %1304 = memref.load %arg3[%c20_240] : memref<144xf32, #tpu.memory_space<smem>>
    %1305 = vector.broadcast %1304 : f32 to vector<16x16xf32>
    %1306 = arith.mulf %1305, %1303 : vector<16x16xf32>
    %1307 = arith.addf %1290, %1306 : vector<16x16xf32>
    %c56_241 = arith.constant 56 : index
    %1308 = memref.load %arg3[%c56_241] : memref<144xf32, #tpu.memory_space<smem>>
    %1309 = vector.broadcast %1308 : f32 to vector<16x16xf32>
    %1310 = arith.mulf %1309, %1303 : vector<16x16xf32>
    %1311 = arith.addf %1294, %1310 : vector<16x16xf32>
    %c92_242 = arith.constant 92 : index
    %1312 = memref.load %arg3[%c92_242] : memref<144xf32, #tpu.memory_space<smem>>
    %1313 = vector.broadcast %1312 : f32 to vector<16x16xf32>
    %1314 = arith.mulf %1313, %1303 : vector<16x16xf32>
    %1315 = arith.addf %1298, %1314 : vector<16x16xf32>
    %c128_243 = arith.constant 128 : index
    %1316 = memref.load %arg3[%c128_243] : memref<144xf32, #tpu.memory_space<smem>>
    %1317 = vector.broadcast %1316 : f32 to vector<16x16xf32>
    %1318 = arith.mulf %1317, %1303 : vector<16x16xf32>
    %1319 = arith.addf %1302, %1318 : vector<16x16xf32>
    %1320 = vector.extract_strided_slice %1200 {offsets = [1, 0], sizes = [16, 16], strides = [1, 1]} : vector<18x16xf32> to vector<16x16xf32>
    %c23_244 = arith.constant 23 : index
    %1321 = memref.load %arg3[%c23_244] : memref<144xf32, #tpu.memory_space<smem>>
    %1322 = vector.broadcast %1321 : f32 to vector<16x16xf32>
    %1323 = arith.mulf %1322, %1320 : vector<16x16xf32>
    %1324 = arith.addf %1307, %1323 : vector<16x16xf32>
    %c59_245 = arith.constant 59 : index
    %1325 = memref.load %arg3[%c59_245] : memref<144xf32, #tpu.memory_space<smem>>
    %1326 = vector.broadcast %1325 : f32 to vector<16x16xf32>
    %1327 = arith.mulf %1326, %1320 : vector<16x16xf32>
    %1328 = arith.addf %1311, %1327 : vector<16x16xf32>
    %c95_246 = arith.constant 95 : index
    %1329 = memref.load %arg3[%c95_246] : memref<144xf32, #tpu.memory_space<smem>>
    %1330 = vector.broadcast %1329 : f32 to vector<16x16xf32>
    %1331 = arith.mulf %1330, %1320 : vector<16x16xf32>
    %1332 = arith.addf %1315, %1331 : vector<16x16xf32>
    %c131_247 = arith.constant 131 : index
    %1333 = memref.load %arg3[%c131_247] : memref<144xf32, #tpu.memory_space<smem>>
    %1334 = vector.broadcast %1333 : f32 to vector<16x16xf32>
    %1335 = arith.mulf %1334, %1320 : vector<16x16xf32>
    %1336 = arith.addf %1319, %1335 : vector<16x16xf32>
    %1337 = vector.extract_strided_slice %1200 {offsets = [2, 0], sizes = [16, 16], strides = [1, 1]} : vector<18x16xf32> to vector<16x16xf32>
    %c26_248 = arith.constant 26 : index
    %1338 = memref.load %arg3[%c26_248] : memref<144xf32, #tpu.memory_space<smem>>
    %1339 = vector.broadcast %1338 : f32 to vector<16x16xf32>
    %1340 = arith.mulf %1339, %1337 : vector<16x16xf32>
    %1341 = arith.addf %1324, %1340 : vector<16x16xf32>
    %c62_249 = arith.constant 62 : index
    %1342 = memref.load %arg3[%c62_249] : memref<144xf32, #tpu.memory_space<smem>>
    %1343 = vector.broadcast %1342 : f32 to vector<16x16xf32>
    %1344 = arith.mulf %1343, %1337 : vector<16x16xf32>
    %1345 = arith.addf %1328, %1344 : vector<16x16xf32>
    %c98_250 = arith.constant 98 : index
    %1346 = memref.load %arg3[%c98_250] : memref<144xf32, #tpu.memory_space<smem>>
    %1347 = vector.broadcast %1346 : f32 to vector<16x16xf32>
    %1348 = arith.mulf %1347, %1337 : vector<16x16xf32>
    %1349 = arith.addf %1332, %1348 : vector<16x16xf32>
    %c134_251 = arith.constant 134 : index
    %1350 = memref.load %arg3[%c134_251] : memref<144xf32, #tpu.memory_space<smem>>
    %1351 = vector.broadcast %1350 : f32 to vector<16x16xf32>
    %1352 = arith.mulf %1351, %1337 : vector<16x16xf32>
    %1353 = arith.addf %1336, %1352 : vector<16x16xf32>
    %c3_252 = arith.constant 3 : index
    %c0_253 = arith.constant 0 : index
    %c0_254 = arith.constant 0 : index
    %1354 = vector.load %arg11[%c3_252, %c0_253, %c0_254] : memref<4x18x18xf32, #tpu.memory_space<vmem>>, vector<1x18x18xf32>
    %1355 = vector.shape_cast %1354 : vector<1x18x18xf32> to vector<18x18xf32>
    %1356 = vector.extract_strided_slice %1355 {offsets = [0, 0], sizes = [18, 16], strides = [1, 1]} : vector<18x18xf32> to vector<18x16xf32>
    %1357 = vector.extract_strided_slice %1355 {offsets = [0, 1], sizes = [18, 16], strides = [1, 1]} : vector<18x18xf32> to vector<18x16xf32>
    %1358 = vector.extract_strided_slice %1355 {offsets = [0, 2], sizes = [18, 16], strides = [1, 1]} : vector<18x18xf32> to vector<18x16xf32>
    %1359 = vector.extract_strided_slice %1356 {offsets = [0, 0], sizes = [16, 16], strides = [1, 1]} : vector<18x16xf32> to vector<16x16xf32>
    %c27_255 = arith.constant 27 : index
    %1360 = memref.load %arg3[%c27_255] : memref<144xf32, #tpu.memory_space<smem>>
    %1361 = vector.broadcast %1360 : f32 to vector<16x16xf32>
    %1362 = arith.mulf %1361, %1359 : vector<16x16xf32>
    %1363 = arith.addf %1341, %1362 : vector<16x16xf32>
    %c63_256 = arith.constant 63 : index
    %1364 = memref.load %arg3[%c63_256] : memref<144xf32, #tpu.memory_space<smem>>
    %1365 = vector.broadcast %1364 : f32 to vector<16x16xf32>
    %1366 = arith.mulf %1365, %1359 : vector<16x16xf32>
    %1367 = arith.addf %1345, %1366 : vector<16x16xf32>
    %c99_257 = arith.constant 99 : index
    %1368 = memref.load %arg3[%c99_257] : memref<144xf32, #tpu.memory_space<smem>>
    %1369 = vector.broadcast %1368 : f32 to vector<16x16xf32>
    %1370 = arith.mulf %1369, %1359 : vector<16x16xf32>
    %1371 = arith.addf %1349, %1370 : vector<16x16xf32>
    %c135_258 = arith.constant 135 : index
    %1372 = memref.load %arg3[%c135_258] : memref<144xf32, #tpu.memory_space<smem>>
    %1373 = vector.broadcast %1372 : f32 to vector<16x16xf32>
    %1374 = arith.mulf %1373, %1359 : vector<16x16xf32>
    %1375 = arith.addf %1353, %1374 : vector<16x16xf32>
    %1376 = vector.extract_strided_slice %1356 {offsets = [1, 0], sizes = [16, 16], strides = [1, 1]} : vector<18x16xf32> to vector<16x16xf32>
    %c30_259 = arith.constant 30 : index
    %1377 = memref.load %arg3[%c30_259] : memref<144xf32, #tpu.memory_space<smem>>
    %1378 = vector.broadcast %1377 : f32 to vector<16x16xf32>
    %1379 = arith.mulf %1378, %1376 : vector<16x16xf32>
    %1380 = arith.addf %1363, %1379 : vector<16x16xf32>
    %c66_260 = arith.constant 66 : index
    %1381 = memref.load %arg3[%c66_260] : memref<144xf32, #tpu.memory_space<smem>>
    %1382 = vector.broadcast %1381 : f32 to vector<16x16xf32>
    %1383 = arith.mulf %1382, %1376 : vector<16x16xf32>
    %1384 = arith.addf %1367, %1383 : vector<16x16xf32>
    %c102_261 = arith.constant 102 : index
    %1385 = memref.load %arg3[%c102_261] : memref<144xf32, #tpu.memory_space<smem>>
    %1386 = vector.broadcast %1385 : f32 to vector<16x16xf32>
    %1387 = arith.mulf %1386, %1376 : vector<16x16xf32>
    %1388 = arith.addf %1371, %1387 : vector<16x16xf32>
    %c138_262 = arith.constant 138 : index
    %1389 = memref.load %arg3[%c138_262] : memref<144xf32, #tpu.memory_space<smem>>
    %1390 = vector.broadcast %1389 : f32 to vector<16x16xf32>
    %1391 = arith.mulf %1390, %1376 : vector<16x16xf32>
    %1392 = arith.addf %1375, %1391 : vector<16x16xf32>
    %1393 = vector.extract_strided_slice %1356 {offsets = [2, 0], sizes = [16, 16], strides = [1, 1]} : vector<18x16xf32> to vector<16x16xf32>
    %c33_263 = arith.constant 33 : index
    %1394 = memref.load %arg3[%c33_263] : memref<144xf32, #tpu.memory_space<smem>>
    %1395 = vector.broadcast %1394 : f32 to vector<16x16xf32>
    %1396 = arith.mulf %1395, %1393 : vector<16x16xf32>
    %1397 = arith.addf %1380, %1396 : vector<16x16xf32>
    %c69_264 = arith.constant 69 : index
    %1398 = memref.load %arg3[%c69_264] : memref<144xf32, #tpu.memory_space<smem>>
    %1399 = vector.broadcast %1398 : f32 to vector<16x16xf32>
    %1400 = arith.mulf %1399, %1393 : vector<16x16xf32>
    %1401 = arith.addf %1384, %1400 : vector<16x16xf32>
    %c105_265 = arith.constant 105 : index
    %1402 = memref.load %arg3[%c105_265] : memref<144xf32, #tpu.memory_space<smem>>
    %1403 = vector.broadcast %1402 : f32 to vector<16x16xf32>
    %1404 = arith.mulf %1403, %1393 : vector<16x16xf32>
    %1405 = arith.addf %1388, %1404 : vector<16x16xf32>
    %c141_266 = arith.constant 141 : index
    %1406 = memref.load %arg3[%c141_266] : memref<144xf32, #tpu.memory_space<smem>>
    %1407 = vector.broadcast %1406 : f32 to vector<16x16xf32>
    %1408 = arith.mulf %1407, %1393 : vector<16x16xf32>
    %1409 = arith.addf %1392, %1408 : vector<16x16xf32>
    %1410 = vector.extract_strided_slice %1357 {offsets = [0, 0], sizes = [16, 16], strides = [1, 1]} : vector<18x16xf32> to vector<16x16xf32>
    %c28_267 = arith.constant 28 : index
    %1411 = memref.load %arg3[%c28_267] : memref<144xf32, #tpu.memory_space<smem>>
    %1412 = vector.broadcast %1411 : f32 to vector<16x16xf32>
    %1413 = arith.mulf %1412, %1410 : vector<16x16xf32>
    %1414 = arith.addf %1397, %1413 : vector<16x16xf32>
    %c64_268 = arith.constant 64 : index
    %1415 = memref.load %arg3[%c64_268] : memref<144xf32, #tpu.memory_space<smem>>
    %1416 = vector.broadcast %1415 : f32 to vector<16x16xf32>
    %1417 = arith.mulf %1416, %1410 : vector<16x16xf32>
    %1418 = arith.addf %1401, %1417 : vector<16x16xf32>
    %c100_269 = arith.constant 100 : index
    %1419 = memref.load %arg3[%c100_269] : memref<144xf32, #tpu.memory_space<smem>>
    %1420 = vector.broadcast %1419 : f32 to vector<16x16xf32>
    %1421 = arith.mulf %1420, %1410 : vector<16x16xf32>
    %1422 = arith.addf %1405, %1421 : vector<16x16xf32>
    %c136_270 = arith.constant 136 : index
    %1423 = memref.load %arg3[%c136_270] : memref<144xf32, #tpu.memory_space<smem>>
    %1424 = vector.broadcast %1423 : f32 to vector<16x16xf32>
    %1425 = arith.mulf %1424, %1410 : vector<16x16xf32>
    %1426 = arith.addf %1409, %1425 : vector<16x16xf32>
    %1427 = vector.extract_strided_slice %1357 {offsets = [1, 0], sizes = [16, 16], strides = [1, 1]} : vector<18x16xf32> to vector<16x16xf32>
    %c31_271 = arith.constant 31 : index
    %1428 = memref.load %arg3[%c31_271] : memref<144xf32, #tpu.memory_space<smem>>
    %1429 = vector.broadcast %1428 : f32 to vector<16x16xf32>
    %1430 = arith.mulf %1429, %1427 : vector<16x16xf32>
    %1431 = arith.addf %1414, %1430 : vector<16x16xf32>
    %c67_272 = arith.constant 67 : index
    %1432 = memref.load %arg3[%c67_272] : memref<144xf32, #tpu.memory_space<smem>>
    %1433 = vector.broadcast %1432 : f32 to vector<16x16xf32>
    %1434 = arith.mulf %1433, %1427 : vector<16x16xf32>
    %1435 = arith.addf %1418, %1434 : vector<16x16xf32>
    %c103_273 = arith.constant 103 : index
    %1436 = memref.load %arg3[%c103_273] : memref<144xf32, #tpu.memory_space<smem>>
    %1437 = vector.broadcast %1436 : f32 to vector<16x16xf32>
    %1438 = arith.mulf %1437, %1427 : vector<16x16xf32>
    %1439 = arith.addf %1422, %1438 : vector<16x16xf32>
    %c139_274 = arith.constant 139 : index
    %1440 = memref.load %arg3[%c139_274] : memref<144xf32, #tpu.memory_space<smem>>
    %1441 = vector.broadcast %1440 : f32 to vector<16x16xf32>
    %1442 = arith.mulf %1441, %1427 : vector<16x16xf32>
    %1443 = arith.addf %1426, %1442 : vector<16x16xf32>
    %1444 = vector.extract_strided_slice %1357 {offsets = [2, 0], sizes = [16, 16], strides = [1, 1]} : vector<18x16xf32> to vector<16x16xf32>
    %c34_275 = arith.constant 34 : index
    %1445 = memref.load %arg3[%c34_275] : memref<144xf32, #tpu.memory_space<smem>>
    %1446 = vector.broadcast %1445 : f32 to vector<16x16xf32>
    %1447 = arith.mulf %1446, %1444 : vector<16x16xf32>
    %1448 = arith.addf %1431, %1447 : vector<16x16xf32>
    %c70_276 = arith.constant 70 : index
    %1449 = memref.load %arg3[%c70_276] : memref<144xf32, #tpu.memory_space<smem>>
    %1450 = vector.broadcast %1449 : f32 to vector<16x16xf32>
    %1451 = arith.mulf %1450, %1444 : vector<16x16xf32>
    %1452 = arith.addf %1435, %1451 : vector<16x16xf32>
    %c106_277 = arith.constant 106 : index
    %1453 = memref.load %arg3[%c106_277] : memref<144xf32, #tpu.memory_space<smem>>
    %1454 = vector.broadcast %1453 : f32 to vector<16x16xf32>
    %1455 = arith.mulf %1454, %1444 : vector<16x16xf32>
    %1456 = arith.addf %1439, %1455 : vector<16x16xf32>
    %c142_278 = arith.constant 142 : index
    %1457 = memref.load %arg3[%c142_278] : memref<144xf32, #tpu.memory_space<smem>>
    %1458 = vector.broadcast %1457 : f32 to vector<16x16xf32>
    %1459 = arith.mulf %1458, %1444 : vector<16x16xf32>
    %1460 = arith.addf %1443, %1459 : vector<16x16xf32>
    %1461 = vector.extract_strided_slice %1358 {offsets = [0, 0], sizes = [16, 16], strides = [1, 1]} : vector<18x16xf32> to vector<16x16xf32>
    %c29_279 = arith.constant 29 : index
    %1462 = memref.load %arg3[%c29_279] : memref<144xf32, #tpu.memory_space<smem>>
    %1463 = vector.broadcast %1462 : f32 to vector<16x16xf32>
    %1464 = arith.mulf %1463, %1461 : vector<16x16xf32>
    %1465 = arith.addf %1448, %1464 : vector<16x16xf32>
    %c65_280 = arith.constant 65 : index
    %1466 = memref.load %arg3[%c65_280] : memref<144xf32, #tpu.memory_space<smem>>
    %1467 = vector.broadcast %1466 : f32 to vector<16x16xf32>
    %1468 = arith.mulf %1467, %1461 : vector<16x16xf32>
    %1469 = arith.addf %1452, %1468 : vector<16x16xf32>
    %c101_281 = arith.constant 101 : index
    %1470 = memref.load %arg3[%c101_281] : memref<144xf32, #tpu.memory_space<smem>>
    %1471 = vector.broadcast %1470 : f32 to vector<16x16xf32>
    %1472 = arith.mulf %1471, %1461 : vector<16x16xf32>
    %1473 = arith.addf %1456, %1472 : vector<16x16xf32>
    %c137_282 = arith.constant 137 : index
    %1474 = memref.load %arg3[%c137_282] : memref<144xf32, #tpu.memory_space<smem>>
    %1475 = vector.broadcast %1474 : f32 to vector<16x16xf32>
    %1476 = arith.mulf %1475, %1461 : vector<16x16xf32>
    %1477 = arith.addf %1460, %1476 : vector<16x16xf32>
    %1478 = vector.extract_strided_slice %1358 {offsets = [1, 0], sizes = [16, 16], strides = [1, 1]} : vector<18x16xf32> to vector<16x16xf32>
    %c32_283 = arith.constant 32 : index
    %1479 = memref.load %arg3[%c32_283] : memref<144xf32, #tpu.memory_space<smem>>
    %1480 = vector.broadcast %1479 : f32 to vector<16x16xf32>
    %1481 = arith.mulf %1480, %1478 : vector<16x16xf32>
    %1482 = arith.addf %1465, %1481 : vector<16x16xf32>
    %c68_284 = arith.constant 68 : index
    %1483 = memref.load %arg3[%c68_284] : memref<144xf32, #tpu.memory_space<smem>>
    %1484 = vector.broadcast %1483 : f32 to vector<16x16xf32>
    %1485 = arith.mulf %1484, %1478 : vector<16x16xf32>
    %1486 = arith.addf %1469, %1485 : vector<16x16xf32>
    %c104_285 = arith.constant 104 : index
    %1487 = memref.load %arg3[%c104_285] : memref<144xf32, #tpu.memory_space<smem>>
    %1488 = vector.broadcast %1487 : f32 to vector<16x16xf32>
    %1489 = arith.mulf %1488, %1478 : vector<16x16xf32>
    %1490 = arith.addf %1473, %1489 : vector<16x16xf32>
    %c140_286 = arith.constant 140 : index
    %1491 = memref.load %arg3[%c140_286] : memref<144xf32, #tpu.memory_space<smem>>
    %1492 = vector.broadcast %1491 : f32 to vector<16x16xf32>
    %1493 = arith.mulf %1492, %1478 : vector<16x16xf32>
    %1494 = arith.addf %1477, %1493 : vector<16x16xf32>
    %1495 = vector.extract_strided_slice %1358 {offsets = [2, 0], sizes = [16, 16], strides = [1, 1]} : vector<18x16xf32> to vector<16x16xf32>
    %c35_287 = arith.constant 35 : index
    %1496 = memref.load %arg3[%c35_287] : memref<144xf32, #tpu.memory_space<smem>>
    %1497 = vector.broadcast %1496 : f32 to vector<16x16xf32>
    %1498 = arith.mulf %1497, %1495 : vector<16x16xf32>
    %1499 = arith.addf %1482, %1498 : vector<16x16xf32>
    %c71_288 = arith.constant 71 : index
    %1500 = memref.load %arg3[%c71_288] : memref<144xf32, #tpu.memory_space<smem>>
    %1501 = vector.broadcast %1500 : f32 to vector<16x16xf32>
    %1502 = arith.mulf %1501, %1495 : vector<16x16xf32>
    %1503 = arith.addf %1486, %1502 : vector<16x16xf32>
    %c107_289 = arith.constant 107 : index
    %1504 = memref.load %arg3[%c107_289] : memref<144xf32, #tpu.memory_space<smem>>
    %1505 = vector.broadcast %1504 : f32 to vector<16x16xf32>
    %1506 = arith.mulf %1505, %1495 : vector<16x16xf32>
    %1507 = arith.addf %1490, %1506 : vector<16x16xf32>
    %c143_290 = arith.constant 143 : index
    %1508 = memref.load %arg3[%c143_290] : memref<144xf32, #tpu.memory_space<smem>>
    %1509 = vector.broadcast %1508 : f32 to vector<16x16xf32>
    %1510 = arith.mulf %1509, %1495 : vector<16x16xf32>
    %1511 = arith.addf %1494, %1510 : vector<16x16xf32>
    %cst_291 = arith.constant 0.000000e+00 : f32
    %1512 = vector.broadcast %cst_291 : f32 to vector<16x16xf32>
    %1513 = arith.maximumf %1499, %1512 : vector<16x16xf32>
    %c0_292 = arith.constant 0 : index
    %c0_293 = arith.constant 0 : index
    %c0_294 = arith.constant 0 : index
    %c0_295 = arith.constant 0 : index
    %1514 = vector.load %arg9[%c0_292, %c0_293, %c0_294, %c0_295] : memref<1x4x16x16xf32, #tpu.memory_space<vmem>>, vector<1x1x16x16xf32>
    %1515 = vector.shape_cast %1514 : vector<1x1x16x16xf32> to vector<16x16xf32>
    %1516 = vector.shape_cast %1513 : vector<16x16xf32> to vector<1x1x16x16xf32>
    tpu.vector_store %arg9[%c0_292, %c0_293, %c0_294, %c0_295], %1516 {strides = array<i32>} : memref<1x4x16x16xf32, #tpu.memory_space<vmem>>, vector<1x1x16x16xf32>,
    %cst_296 = arith.constant 0.000000e+00 : f32
    %1517 = vector.broadcast %cst_296 : f32 to vector<16x16xf32>
    %1518 = arith.maximumf %1503, %1517 : vector<16x16xf32>
    %c0_297 = arith.constant 0 : index
    %c1_298 = arith.constant 1 : index
    %c0_299 = arith.constant 0 : index
    %c0_300 = arith.constant 0 : index
    %1519 = vector.load %arg9[%c0_297, %c1_298, %c0_299, %c0_300] : memref<1x4x16x16xf32, #tpu.memory_space<vmem>>, vector<1x1x16x16xf32>
    %1520 = vector.shape_cast %1519 : vector<1x1x16x16xf32> to vector<16x16xf32>
    %1521 = vector.shape_cast %1518 : vector<16x16xf32> to vector<1x1x16x16xf32>
    tpu.vector_store %arg9[%c0_297, %c1_298, %c0_299, %c0_300], %1521 {strides = array<i32>} : memref<1x4x16x16xf32, #tpu.memory_space<vmem>>, vector<1x1x16x16xf32>,
    %cst_301 = arith.constant 0.000000e+00 : f32
    %1522 = vector.broadcast %cst_301 : f32 to vector<16x16xf32>
    %1523 = arith.maximumf %1507, %1522 : vector<16x16xf32>
    %c0_302 = arith.constant 0 : index
    %c2_303 = arith.constant 2 : index
    %c0_304 = arith.constant 0 : index
    %c0_305 = arith.constant 0 : index
    %1524 = vector.load %arg9[%c0_302, %c2_303, %c0_304, %c0_305] : memref<1x4x16x16xf32, #tpu.memory_space<vmem>>, vector<1x1x16x16xf32>
    %1525 = vector.shape_cast %1524 : vector<1x1x16x16xf32> to vector<16x16xf32>
    %1526 = vector.shape_cast %1523 : vector<16x16xf32> to vector<1x1x16x16xf32>
    tpu.vector_store %arg9[%c0_302, %c2_303, %c0_304, %c0_305], %1526 {strides = array<i32>} : memref<1x4x16x16xf32, #tpu.memory_space<vmem>>, vector<1x1x16x16xf32>,
    %cst_306 = arith.constant 0.000000e+00 : f32
    %1527 = vector.broadcast %cst_306 : f32 to vector<16x16xf32>
    %1528 = arith.maximumf %1511, %1527 : vector<16x16xf32>
    %c0_307 = arith.constant 0 : index
    %c3_308 = arith.constant 3 : index
    %c0_309 = arith.constant 0 : index
    %c0_310 = arith.constant 0 : index
    %1529 = vector.load %arg9[%c0_307, %c3_308, %c0_309, %c0_310] : memref<1x4x16x16xf32, #tpu.memory_space<vmem>>, vector<1x1x16x16xf32>
    %1530 = vector.shape_cast %1529 : vector<1x1x16x16xf32> to vector<16x16xf32>
    %1531 = vector.shape_cast %1528 : vector<16x16xf32> to vector<1x1x16x16xf32>
    tpu.vector_store %arg9[%c0_307, %c3_308, %c0_309, %c0_310], %1531 {strides = array<i32>} : memref<1x4x16x16xf32, #tpu.memory_space<vmem>>, vector<1x1x16x16xf32>,
    return
  }
  func.func @transform_0(%arg0: i32) -> i32 {
    %c0_i32 = arith.constant 0 : i32
    %c0_i32_0 = arith.constant 0 : i32
    return %c0_i32 : i32
  }
  func.func @transform_1(%arg0: i32) -> i32 {
    %c0_i32 = arith.constant 0 : i32
    %c0_i32_0 = arith.constant 0 : i32
    return %c0_i32 : i32
  }
  func.func @transform_2(%arg0: i32) -> i32 {
    %c0_i32 = arith.constant 0 : i32
    %c0_i32_0 = arith.constant 0 : i32
    return %c0_i32 : i32
  }
  func.func @transform_3(%arg0: i32) -> i32 {
    %c0_i32 = arith.constant 0 : i32
    %c0_i32_0 = arith.constant 0 : i32
    return %c0_i32 : i32
  }
  func.func @transform_4(%arg0: i32) -> (i32, i32) {
    %c0_i32 = arith.constant 0 : i32
    %c0_i32_0 = arith.constant 0 : i32
    %c0_i32_1 = arith.constant 0 : i32
    return %c0_i32, %c0_i32_0 : i32, i32
  }
  func.func @transform_5(%arg0: i32) -> (i32, i32) {
    %c0_i32 = arith.constant 0 : i32
    %c0_i32_0 = arith.constant 0 : i32
    %c0_i32_1 = arith.constant 0 : i32
    return %c0_i32, %c0_i32_0 : i32, i32
  }
  func.func @transform_6(%arg0: i32) -> (i32, i32, i32, i32) {
    %c0_i32 = arith.constant 0 : i32
    %c0_i32_0 = arith.constant 0 : i32
    %c0_i32_1 = arith.constant 0 : i32
    %c0_i32_2 = arith.constant 0 : i32
    return %arg0, %c0_i32, %c0_i32_0, %c0_i32_1 : i32, i32, i32, i32
  }
  func.func @transform_7(%arg0: i32) -> (i32, i32, i32, i32) {
    %c0_i32 = arith.constant 0 : i32
    %c0_i32_0 = arith.constant 0 : i32
    %c0_i32_1 = arith.constant 0 : i32
    %c0_i32_2 = arith.constant 0 : i32
    return %arg0, %c0_i32, %c0_i32_0, %c0_i32_1 : i32, i32, i32, i32
  }
  func.func @transform_8(%arg0: i32) -> (i32, i32, i32, i32) {
    %c0_i32 = arith.constant 0 : i32
    %c0_i32_0 = arith.constant 0 : i32
    %c0_i32_1 = arith.constant 0 : i32
    %c0_i32_2 = arith.constant 0 : i32
    return %arg0, %c0_i32, %c0_i32_0, %c0_i32_1 : i32, i32, i32, i32
  }
}

</mosaic_0001>

<llo_original>
// kernel: tpu_custom_call.1
$region0: #{tpu_custom_call.1}
  #allocation0 [shape = 'u32[]', space=smem, size = 0x4, offset = 0x4, fixed_abs, tag = 'smem constant byte address 0x4 - core index']
  #allocation1 [shape = 'u32[144,128]{1,0:T(1,128)}', space=vmem, size = 0x12000, scoped, tag = 'internal scratch']
  #allocation2 [shape = 'f32[4,18,18]{2,1,0:T(8,128)}', space=vmem, size = 0xc000, scoped, tag = 'scratch operand']
  #allocation3 [shape = 'f32[4,18,18]{2,1,0:T(8,128)}', space=vmem, size = 0xc000, scoped, tag = 'scratch operand']
  %s0 = inlined_call_operand.vmem [shape: f32[144], index: 0, kind: input, shape index: {}]
  %s1 = inlined_call_operand.vmem [shape: f32[4], index: 1, kind: input, shape index: {}]
  %s2 = inlined_call_operand.vmem [shape: f32[144], index: 2, kind: input, shape index: {}]
  %s3 = inlined_call_operand.vmem [shape: f32[4], index: 3, kind: input, shape index: {}]
  %s4 = inlined_call_operand.vmem [shape: f32[16,8], index: 4, kind: input, shape index: {}]
  %s5 = inlined_call_operand.vmem [shape: f32[8,16], index: 5, kind: input, shape index: {}]
  %s6 = inlined_call_operand.vmem [shape: f32[2,2,8,8], index: 6, kind: input, shape index: {}]
  %s7 = inlined_call_operand.hbm [shape: f32[2,2,16,16], index: 7, kind: input, shape index: {}]
  %s8 = inlined_call_operand.hbm [shape: f32[2,4,16,16], index: 8, kind: output, shape index: {}]
  %s9 = sld [smem:[#allocation0]]
  $region85: #{tpu_custom_call.1} parent=0
    _
  %s11 = ssub.s32 1, %s9
  %s12 = scalar_select 0, %s11, %s9
  $region1: #{tpu_custom_call.1} parent=0
    #allocation4 [shape = 'u8[1024]{0}', space=smem, size = 0x400, scoped, tag = 'input window, operand 0, single buffered']
    #allocation5 [shape = 's32[2]{0}', space=sflag, size = 0x8, scoped, tag = 'scoped memory for tpu_custom_call.1']
    #allocation6 [shape = 's32[2]{0}', space=sflag, size = 0x8, scoped, tag = 'scoped memory for tpu_custom_call.1']
    #allocation7 [shape = 's32[2]{0}', space=sflag, size = 0x8, scoped, tag = 'scoped memory for tpu_custom_call.1']
    #allocation8 [shape = 'u8[512]{0}', space=smem, size = 0x200, scoped, tag = 'input window, operand 1, single buffered']
    #allocation9 [shape = 's32[1]{0}', space=sflag, size = 0x4, scoped, tag = 'scoped memory for tpu_custom_call.1']
    #allocation10 [shape = 'u8[1024]{0}', space=smem, size = 0x400, scoped, tag = 'input window, operand 2, single buffered']
    #allocation11 [shape = 'u8[512]{0}', space=smem, size = 0x200, scoped, tag = 'input window, operand 3, single buffered']
    #allocation12 [shape = 's32[1]{0}', space=sflag, size = 0x4, scoped, tag = 'scoped memory for tpu_custom_call.1']
    #allocation13 [shape = 'u8[32768]{0}', space=vmem, size = 0x8000, scoped, tag = 'input window, operand 7']
    #allocation14 [shape = 'u8[65536]{0}', space=vmem, size = 0x10000, scoped, tag = 'output window, operand 0']
    %13 = vsyncpa [#allocation7], 0
    %14 = vsyncpa [#allocation9], 0
    %15 = vsyncpa [#allocation12], 0
    %16 = vsyncpa [#allocation5], 0
    %s17 = scalar_lea.sflag [#allocation5], 1
    %18 = vsyncpa %s17, 0
    %19 = vsyncpa [#allocation6], 0
    %s20 = scalar_lea.sflag [#allocation6], 1
    %21 = vsyncpa %s20, 0
    loop: start=0, step=1, limit=4
    $region2: #{tpu_custom_call.1} parent=1 // loop_pre_header
      _
    $region3: #{tpu_custom_call.1} parent=1 // loop_header
      %s23 = sphi 0, %s27
      %p24 = scmp.ge.s32.totalorder %s23, 4
      %s31 = sphi 0, %s31
      %s33 = sphi 0, %s31
      %s34 = sphi 0, %s33
      %s48 = sphi 0, %s34
      %s52 = sphi 0, %s52
      %s54 = sphi 0, %s52
      %s55 = sphi 0, %s54
      %s69 = sphi 0, %s55
      %s73 = sphi 0, %s73
      %s75 = sphi 0, %s73
      %s76 = sphi 0, %s75
      %s90 = sphi 0, %s76
      %s94 = sphi 0, %s94
      %s96 = sphi 0, %s94
      %s97 = sphi 0, %s96
      %s111 = sphi 0, %s97
      %s115 = sphi 0, %s115
      %s117 = sphi 0, %s115
      %s118 = sphi 0, %s117
      %s132 = sphi 0, %s118
      %s136 = sphi 0, %s136
      %s138 = sphi 0, %s136
      %s139 = sphi 0, %s138
      %s153 = sphi 0, %s139
      %s159 = sphi 0, %s161
      %s162 = sphi 0, %s159
      %s163 = sphi 0, %s162
      %s179 = sphi 0, %s163
      %s185 = sphi 0, %s187
      %s188 = sphi 0, %s185
      %s189 = sphi 0, %s188
      %s205 = sphi 0, %s189
      %s211 = sphi 0, %s213
      %s214 = sphi 0, %s211
      %s215 = sphi 0, %s214
      %s231 = sphi 0, %s215
    $region4: #{tpu_custom_call.1} parent=1 // loop_header_branch
      %26 = sbr.rel (%p24) target = $region8
    $region5: #{tpu_custom_call.1} parent=1 // loop_body
      %s28 = ssub.s32 %s23, 1
      %s29 = ssub.s32 %s23, 2
      %s30 = sadd.s32 %s23, 1
      %s32 = sadd.s32 %s31, 1
      %p35 = scmp.eq.s32.totalorder %s23, 1
      %p36 = scmp.ne.s32.totalorder %s31, %s33
      %p37 = scmp.eq.s32.totalorder %s23, 0
      %p38 = por %p36, %p37
      %p39 = scmp.ne.s32.totalorder %s31, %s33
      %p40 = scmp.eq.s32.totalorder %s28, 1
      %p41 = por %p39, %p40
      %p42 = scmp.ne.s32.totalorder %s33, %s34
      %p43 = scmp.eq.s32.totalorder %s28, 0
      %p44 = por %p42, %p43
      %p45 = scmp.ne.s32.totalorder %s33, %s34
      %p46 = scmp.eq.s32.totalorder %s29, 1
      %p47 = por %p45, %p46
      %p49 = scmp.ne.s32.totalorder %s34, %s48
      %p50 = scmp.eq.s32.totalorder %s29, 0
      %p51 = por %p49, %p50
      %s53 = sadd.s32 %s52, 1
      %p56 = scmp.eq.s32.totalorder %s23, 1
      %p57 = scmp.ne.s32.totalorder %s52, %s54
      %p58 = scmp.eq.s32.totalorder %s23, 0
      %p59 = por %p57, %p58
      %p60 = scmp.ne.s32.totalorder %s52, %s54
      %p61 = scmp.eq.s32.totalorder %s28, 1
      %p62 = por %p60, %p61
      %p63 = scmp.ne.s32.totalorder %s54, %s55
      %p64 = scmp.eq.s32.totalorder %s28, 0
      %p65 = por %p63, %p64
      %p66 = scmp.ne.s32.totalorder %s54, %s55
      %p67 = scmp.eq.s32.totalorder %s29, 1
      %p68 = por %p66, %p67
      %p70 = scmp.ne.s32.totalorder %s55, %s69
      %p71 = scmp.eq.s32.totalorder %s29, 0
      %p72 = por %p70, %p71
      %s74 = sadd.s32 %s73, 1
      %p77 = scmp.eq.s32.totalorder %s23, 1
      %p78 = scmp.ne.s32.totalorder %s73, %s75
      %p79 = scmp.eq.s32.totalorder %s23, 0
      %p80 = por %p78, %p79
      %p81 = scmp.ne.s32.totalorder %s73, %s75
      %p82 = scmp.eq.s32.totalorder %s28, 1
      %p83 = por %p81, %p82
      %p84 = scmp.ne.s32.totalorder %s75, %s76
      %p85 = scmp.eq.s32.totalorder %s28, 0
      %p86 = por %p84, %p85
      %p87 = scmp.ne.s32.totalorder %s75, %s76
      %p88 = scmp.eq.s32.totalorder %s29, 1
      %p89 = por %p87, %p88
      %p91 = scmp.ne.s32.totalorder %s76, %s90
      %p92 = scmp.eq.s32.totalorder %s29, 0
      %p93 = por %p91, %p92
      %s95 = sadd.s32 %s94, 1
      %p98 = scmp.eq.s32.totalorder %s23, 1
      %p99 = scmp.ne.s32.totalorder %s94, %s96
      %p100 = scmp.eq.s32.totalorder %s23, 0
      %p101 = por %p99, %p100
      %p102 = scmp.ne.s32.totalorder %s94, %s96
      %p103 = scmp.eq.s32.totalorder %s28, 1
      %p104 = por %p102, %p103
      %p105 = scmp.ne.s32.totalorder %s96, %s97
      %p106 = scmp.eq.s32.totalorder %s28, 0
      %p107 = por %p105, %p106
      %p108 = scmp.ne.s32.totalorder %s96, %s97
      %p109 = scmp.eq.s32.totalorder %s29, 1
      %p110 = por %p108, %p109
      %p112 = scmp.ne.s32.totalorder %s97, %s111
      %p113 = scmp.eq.s32.totalorder %s29, 0
      %p114 = por %p112, %p113
      %s116 = sadd.s32 %s115, 1
      %p119 = scmp.eq.s32.totalorder %s23, 1
      %p120 = scmp.ne.s32.totalorder %s115, %s117
      %p121 = scmp.eq.s32.totalorder %s23, 0
      %p122 = por %p120, %p121
      %p123 = scmp.ne.s32.totalorder %s115, %s117
      %p124 = scmp.eq.s32.totalorder %s28, 1
      %p125 = por %p123, %p124
      %p126 = scmp.ne.s32.totalorder %s117, %s118
      %p127 = scmp.eq.s32.totalorder %s28, 0
      %p128 = por %p126, %p127
      %p129 = scmp.ne.s32.totalorder %s117, %s118
      %p130 = scmp.eq.s32.totalorder %s29, 1
      %p131 = por %p129, %p130
      %p133 = scmp.ne.s32.totalorder %s118, %s132
      %p134 = scmp.eq.s32.totalorder %s29, 0
      %p135 = por %p133, %p134
      %s137 = sadd.s32 %s136, 1
      %p140 = scmp.eq.s32.totalorder %s23, 1
      %p141 = scmp.ne.s32.totalorder %s136, %s138
      %p142 = scmp.eq.s32.totalorder %s23, 0
      %p143 = por %p141, %p142
      %p144 = scmp.ne.s32.totalorder %s136, %s138
      %p145 = scmp.eq.s32.totalorder %s28, 1
      %p146 = por %p144, %p145
      %p147 = scmp.ne.s32.totalorder %s138, %s139
      %p148 = scmp.eq.s32.totalorder %s28, 0
      %p149 = por %p147, %p148
      %p150 = scmp.ne.s32.totalorder %s138, %s139
      %p151 = scmp.eq.s32.totalorder %s29, 1
      %p152 = por %p150, %p151
      %p154 = scmp.ne.s32.totalorder %s139, %s153
      %p155 = scmp.eq.s32.totalorder %s29, 0
      %p156 = por %p154, %p155
      %s157 = ssub.s32 %s23, %s30
      %p158 = scmp.eq.s32.totalorder %s157, 0
      %s160 = sadd.s32 %s159, 1
      %s161 = scalar_select %p158, %s159, %s160
      %p164 = pneg %p158
      %p165 = scmp.eq.s32.totalorder %s23, 1
      %p166 = por %p164, %p165
      %p167 = scmp.ne.s32.totalorder %s159, %s162
      %p168 = scmp.eq.s32.totalorder %s23, 0
      %p169 = por %p167, %p168
      %p170 = scmp.ne.s32.totalorder %s159, %s162
      %p171 = scmp.eq.s32.totalorder %s28, 1
      %p172 = por %p170, %p171
      %p173 = scmp.ne.s32.totalorder %s162, %s163
      %p174 = scmp.eq.s32.totalorder %s28, 0
      %p175 = por %p173, %p174
      %p176 = scmp.ne.s32.totalorder %s162, %s163
      %p177 = scmp.eq.s32.totalorder %s29, 1
      %p178 = por %p176, %p177
      %p180 = scmp.ne.s32.totalorder %s163, %s179
      %p181 = scmp.eq.s32.totalorder %s29, 0
      %p182 = por %p180, %p181
      %s183 = ssub.s32 %s23, %s30
      %p184 = scmp.eq.s32.totalorder %s183, 0
      %s186 = sadd.s32 %s185, 1
      %s187 = scalar_select %p184, %s185, %s186
      %p190 = pneg %p184
      %p191 = scmp.eq.s32.totalorder %s23, 1
      %p192 = por %p190, %p191
      %p193 = scmp.ne.s32.totalorder %s185, %s188
      %p194 = scmp.eq.s32.totalorder %s23, 0
      %p195 = por %p193, %p194
      %p196 = scmp.ne.s32.totalorder %s185, %s188
      %p197 = scmp.eq.s32.totalorder %s28, 1
      %p198 = por %p196, %p197
      %p199 = scmp.ne.s32.totalorder %s188, %s189
      %p200 = scmp.eq.s32.totalorder %s28, 0
      %p201 = por %p199, %p200
      %p202 = scmp.ne.s32.totalorder %s188, %s189
      %p203 = scmp.eq.s32.totalorder %s29, 1
      %p204 = por %p202, %p203
      %p206 = scmp.ne.s32.totalorder %s189, %s205
      %p207 = scmp.eq.s32.totalorder %s29, 0
      %p208 = por %p206, %p207
      %s209 = ssub.s32 %s23, %s30
      %p210 = scmp.eq.s32.totalorder %s209, 0
      %s212 = sadd.s32 %s211, 1
      %s213 = scalar_select %p210, %s211, %s212
      %p216 = pneg %p210
      %p217 = scmp.eq.s32.totalorder %s23, 1
      %p218 = por %p216, %p217
      %p219 = scmp.ne.s32.totalorder %s211, %s214
      %p220 = scmp.eq.s32.totalorder %s23, 0
      %p221 = por %p219, %p220
      %p222 = scmp.ne.s32.totalorder %s211, %s214
      %p223 = scmp.eq.s32.totalorder %s28, 1
      %p224 = por %p222, %p223
      %p225 = scmp.ne.s32.totalorder %s214, %s215
      %p226 = scmp.eq.s32.totalorder %s28, 0
      %p227 = por %p225, %p226
      %p228 = scmp.ne.s32.totalorder %s214, %s215
      %p229 = scmp.eq.s32.totalorder %s29, 1
      %p230 = por %p228, %p229
      %p232 = scmp.ne.s32.totalorder %s215, %s231
      %p233 = scmp.eq.s32.totalorder %s29, 0
      %p234 = por %p232, %p233
      %p235 = scmp.le.s32.totalorder 1, %s23
      %p236 = scmp.lt.s32.totalorder %s23, 3
      %p237 = pnand %p235, %p236
      %p238 = pneg %p237
      // Predicated region
      $region9: #{tpu_custom_call.1} parent=5 // pred_check
        _
      $region10: #{tpu_custom_call.1} parent=5 // pred_check_branch
        %240 = sbr.rel (%p237) target = $region12
      $region11: #{tpu_custom_call.1} parent=5 // pred_region
        %s241 = ssub.s32 %s23, 1
        // Predicated region
        $region13: #{tpu_custom_call.1} parent=11 // pred_check
          %p242 = pneg %p44
        $region14: #{tpu_custom_call.1} parent=11 // pred_check_branch
          %244 = sbr.rel (%p242) target = $region16
        $region15: #{tpu_custom_call.1} parent=11 // pred_region
          %s246 = ssub.s32 32, 32
          %247 = vsyncadd [#allocation7], %s246
          %s249 = sshll.u32 %s0, 4
          %s250 = int_to_ptr.vmem [resolvable:$true] %s249
          %252 = dma.vmem_to_smem %s250, 32, [#allocation4], [#allocation7]
        $region16: #{tpu_custom_call.1} parent=11 // pred_fallthru
          _
        // Predicated region
        $region17: #{tpu_custom_call.1} parent=11 // pred_check
          %p253 = pneg %p65
        $region18: #{tpu_custom_call.1} parent=11 // pred_check_branch
          %255 = sbr.rel (%p253) target = $region20
        $region19: #{tpu_custom_call.1} parent=11 // pred_region
          %s257 = ssub.s32 16, 16
          %258 = vsyncadd [#allocation9], %s257
          %s260 = sshll.u32 %s1, 4
          %s261 = int_to_ptr.vmem [resolvable:$true] %s260
          %263 = dma.vmem_to_smem %s261, 16, [#allocation8], [#allocation9]
        $region20: #{tpu_custom_call.1} parent=11 // pred_fallthru
          _
        // Predicated region
        $region21: #{tpu_custom_call.1} parent=11 // pred_check
          %p264 = pneg %p86
        $region22: #{tpu_custom_call.1} parent=11 // pred_check_branch
          %266 = sbr.rel (%p264) target = $region24
        $region23: #{tpu_custom_call.1} parent=11 // pred_region
          %s268 = ssub.s32 32, 32
          %269 = vsyncadd [#allocation9], %s268
          %s271 = sshll.u32 %s2, 4
          %s272 = int_to_ptr.vmem [resolvable:$true] %s271
          %274 = dma.vmem_to_smem %s272, 32, [#allocation10], [#allocation9]
        $region24: #{tpu_custom_call.1} parent=11 // pred_fallthru
          _
        // Predicated region
        $region25: #{tpu_custom_call.1} parent=11 // pred_check
          %p275 = pneg %p107
        $region26: #{tpu_custom_call.1} parent=11 // pred_check_branch
          %277 = sbr.rel (%p275) target = $region28
        $region27: #{tpu_custom_call.1} parent=11 // pred_region
          %s279 = ssub.s32 16, 16
          %280 = vsyncadd [#allocation12], %s279
          %s282 = sshll.u32 %s3, 4
          %s283 = int_to_ptr.vmem [resolvable:$true] %s282
          %285 = dma.vmem_to_smem %s283, 16, [#allocation11], [#allocation12]
        $region28: #{tpu_custom_call.1} parent=11 // pred_fallthru
          _
        // Predicated region
        $region29: #{tpu_custom_call.1} parent=11 // pred_check
          %p286 = pneg %p128
        $region30: #{tpu_custom_call.1} parent=11 // pred_check_branch
          %288 = sbr.rel (%p286) target = $region32
        $region31: #{tpu_custom_call.1} parent=11 // pred_region
          _
        $region32: #{tpu_custom_call.1} parent=11 // pred_fallthru
          _
        // Predicated region
        $region33: #{tpu_custom_call.1} parent=11 // pred_check
          %p289 = pneg %p149
        $region34: #{tpu_custom_call.1} parent=11 // pred_check_branch
          %291 = sbr.rel (%p289) target = $region36
        $region35: #{tpu_custom_call.1} parent=11 // pred_region
          _
        $region36: #{tpu_custom_call.1} parent=11 // pred_fallthru
          _
      $region12: #{tpu_custom_call.1} parent=5 // pred_fallthru
        _
      %p292 = scmp.lt.s32.totalorder %s23, 2
      // Predicated region
      $region37: #{tpu_custom_call.1} parent=5 // pred_check
        %p293 = pneg %p292
      $region38: #{tpu_custom_call.1} parent=5 // pred_check_branch
        %295 = sbr.rel (%p293) target = $region40
      $region39: #{tpu_custom_call.1} parent=5 // pred_region
        // Predicated region
        $region41: #{tpu_custom_call.1} parent=39 // pred_check
          %p296 = pneg %p169
        $region42: #{tpu_custom_call.1} parent=39 // pred_check_branch
          %298 = sbr.rel (%p296) target = $region44
        $region43: #{tpu_custom_call.1} parent=39 // pred_region
          %p299 = scmp.lt.s32.totalorder %s23, 1
          %s300 = scalar_select %p299, %s23, 1
          %s301 = smul.addr %s300, 2
          %s302 = smul.addr %s301, 8
          %s303 = scalar_lea.vmem %s6, %s302
        $region44: #{tpu_custom_call.1} parent=39 // pred_fallthru
          _
        // Predicated region
        $region45: #{tpu_custom_call.1} parent=39 // pred_check
          %p304 = pneg %p195
        $region46: #{tpu_custom_call.1} parent=39 // pred_check_branch
          %306 = sbr.rel (%p304) target = $region48
        $region47: #{tpu_custom_call.1} parent=39 // pred_region
          %s307 = sand.u32 %s185, 1
          %s308 = scalar_lea.sflag [#allocation5], %s307
          %s309 = sand.u32 %s185, 1
          %s310 = smul.addr %s309, 32
          %s311 = scalar_lea.vmem [#allocation13], %s310
          %s313 = ssub.s32 512, 512
          %314 = vsyncadd %s308, %s313
          %s315 = smul.addr %s23, 4
          %s316 = smul.addr %s315, 128
          %s317 = scalar_lea.hbm %s7, %s316
          %s318 = sshll.u32 %s311, 4
          %s319 = int_to_ptr.vmem [resolvable:$true] %s318
          %324 = dma.hbm_to_vmem [thread:$0]  %s317, 512, %s319, %s308, 128, 128, 8
        $region48: #{tpu_custom_call.1} parent=39 // pred_fallthru
          _
      $region40: #{tpu_custom_call.1} parent=5 // pred_fallthru
        _
      %p325 = scmp.le.s32.totalorder 1, %s23
      %p326 = scmp.lt.s32.totalorder %s23, 3
      %p327 = pnand %p325, %p326
      %p328 = pneg %p327
      // Predicated region
      $region49: #{tpu_custom_call.1} parent=5 // pred_check
        _
      $region50: #{tpu_custom_call.1} parent=5 // pred_check_branch
        %330 = sbr.rel (%p327) target = $region52
      $region51: #{tpu_custom_call.1} parent=5 // pred_region
        %s331 = ssub.s32 %s23, 1
        // Predicated region
        $region53: #{tpu_custom_call.1} parent=51 // pred_check
          %p332 = pneg %p44
        $region54: #{tpu_custom_call.1} parent=51 // pred_check_branch
          %334 = sbr.rel (%p332) target = $region56
        $region55: #{tpu_custom_call.1} parent=51 // pred_region
          %335 = dma.done [#allocation7], 32
        $region56: #{tpu_custom_call.1} parent=51 // pred_fallthru
          _
        // Predicated region
        $region57: #{tpu_custom_call.1} parent=51 // pred_check
          %p336 = pneg %p65
        $region58: #{tpu_custom_call.1} parent=51 // pred_check_branch
          %338 = sbr.rel (%p336) target = $region60
        $region59: #{tpu_custom_call.1} parent=51 // pred_region
          %339 = dma.done [#allocation9], 16
        $region60: #{tpu_custom_call.1} parent=51 // pred_fallthru
          _
        // Predicated region
        $region61: #{tpu_custom_call.1} parent=51 // pred_check
          %p340 = pneg %p86
        $region62: #{tpu_custom_call.1} parent=51 // pred_check_branch
          %342 = sbr.rel (%p340) target = $region64
        $region63: #{tpu_custom_call.1} parent=51 // pred_region
          %343 = dma.done [#allocation9], 32
        $region64: #{tpu_custom_call.1} parent=51 // pred_fallthru
          _
        // Predicated region
        $region65: #{tpu_custom_call.1} parent=51 // pred_check
          %p344 = pneg %p107
        $region66: #{tpu_custom_call.1} parent=51 // pred_check_branch
          %346 = sbr.rel (%p344) target = $region68
        $region67: #{tpu_custom_call.1} parent=51 // pred_region
          %347 = dma.done [#allocation12], 16
        $region68: #{tpu_custom_call.1} parent=51 // pred_fallthru
          _
        %s348 = sand.u32 %s188, 1
        %s349 = scalar_lea.sflag [#allocation5], %s348
        %s350 = sand.u32 %s188, 1
        %s351 = smul.addr %s350, 32
        %s352 = scalar_lea.vmem [#allocation13], %s351
        // Predicated region
        $region69: #{tpu_custom_call.1} parent=51 // pred_check
          %p353 = pneg %p201
        $region70: #{tpu_custom_call.1} parent=51 // pred_check_branch
          %355 = sbr.rel (%p353) target = $region72
        $region71: #{tpu_custom_call.1} parent=51 // pred_region
          %356 = dma.done %s349, 512
        $region72: #{tpu_custom_call.1} parent=51 // pred_fallthru
          _
        %357 = sfence
        %p358 = pneg %p44
        %p359 = pneg %p41
        %p360 = pneg %p65
        %p361 = pneg %p62
        %p362 = pneg %p86
        %p363 = pneg %p83
        %p364 = pneg %p107
        %p365 = pneg %p104
        %p366 = pneg %p128
        %p367 = pneg %p125
        %p368 = pneg %p149
        %p369 = pneg %p146
        %p370 = scmp.lt.s32.totalorder %s28, 1
        %s371 = scalar_select %p370, %s28, 1
        %s372 = smul.addr %s371, 2
        %s373 = smul.addr %s372, 8
        %s374 = scalar_lea.vmem %s6, %s373
        %p375 = pneg %p175
        %p376 = pneg %p172
        %s377 = sand.u32 %s188, 1
        %s378 = scalar_lea.sflag [#allocation5], %s377
        %s379 = sand.u32 %s188, 1
        %s380 = smul.addr %s379, 32
        %s381 = scalar_lea.vmem [#allocation13], %s380
        %p382 = pneg %p201
        %p383 = pneg %p198
        %p384 = pneg %p227
        %p385 = pneg %p224
        %s386 = sand.u32 %s214, 1
        %s387 = scalar_lea.sflag [#allocation6], %s386
        %s388 = sand.u32 %s214, 1
        %s389 = smul.addr %s388, 64
        %s390 = scalar_lea.vmem [#allocation14], %s389
        %p391 = scmp.lt.s32.totalorder %s28, 1
        %s392 = scalar_select %p391, %s28, 1
        %s393 = smul.addr %s392, 2
        %s394 = smul.addr %s393, 8
        %s395 = scalar_lea.vmem %s6, %s394
        %vm396 = vcmask 146432
        %397 = vst.msk [vmem:[#allocation2] sm:$0xff] %vm396, 0.0
        %398 = vst.msk [vmem:[#allocation2 + $0x8] sm:$0xff] %vm396, 0.0
        %vm399 = vcmask 140288
        %400 = vst.msk [vmem:[#allocation2 + $0x10] sm:$0x3] %vm399, 0.0
        %401 = vst.msk [vmem:[#allocation2 + $0x18] sm:$0xff] %vm396, 0.0
        %402 = vst.msk [vmem:[#allocation2 + $0x20] sm:$0xff] %vm396, 0.0
        %403 = vst.msk [vmem:[#allocation2 + $0x28] sm:$0x3] %vm399, 0.0
        %404 = vst.msk [vmem:[#allocation2 + $0x30] sm:$0xff] %vm396, 0.0
        %405 = vst.msk [vmem:[#allocation2 + $0x38] sm:$0xff] %vm396, 0.0
        %406 = vst.msk [vmem:[#allocation2 + $0x40] sm:$0x3] %vm399, 0.0
        %407 = vst.msk [vmem:[#allocation2 + $0x48] sm:$0xff] %vm396, 0.0
        %408 = vst.msk [vmem:[#allocation2 + $0x50] sm:$0xff] %vm396, 0.0
        %409 = vst.msk [vmem:[#allocation2 + $0x58] sm:$0x3] %vm399, 0.0
        %410 = vst.msk [vmem:[#allocation3] sm:$0xff] %vm396, 0.0
        %411 = vst.msk [vmem:[#allocation3 + $0x8] sm:$0xff] %vm396, 0.0
        %412 = vst.msk [vmem:[#allocation3 + $0x10] sm:$0x3] %vm399, 0.0
        %413 = vst.msk [vmem:[#allocation3 + $0x18] sm:$0xff] %vm396, 0.0
        %414 = vst.msk [vmem:[#allocation3 + $0x20] sm:$0xff] %vm396, 0.0
        %415 = vst.msk [vmem:[#allocation3 + $0x28] sm:$0x3] %vm399, 0.0
        %416 = vst.msk [vmem:[#allocation3 + $0x30] sm:$0xff] %vm396, 0.0
        %417 = vst.msk [vmem:[#allocation3 + $0x38] sm:$0xff] %vm396, 0.0
        %418 = vst.msk [vmem:[#allocation3 + $0x40] sm:$0x3] %vm399, 0.0
        %419 = vst.msk [vmem:[#allocation3 + $0x48] sm:$0xff] %vm396, 0.0
        %420 = vst.msk [vmem:[#allocation3 + $0x50] sm:$0xff] %vm396, 0.0
        %421 = vst.msk [vmem:[#allocation3 + $0x58] sm:$0x3] %vm399, 0.0
        %v422 = vld [vmem:[%s352] sm:$0xff]
        %v423 = vld [vmem:[%s352 + $0x8] sm:$0xff]
        %426 = vrot.lane.b32.xlu0 %v422, 1
        %v427 = vpop.permute.xlu0 %426
        %428 = vrot.lane.b32.xlu0 %v423, 1
        %v429 = vpop.permute.xlu0 %428
        %vm432 = vcmask 138248
        %433 = vst.msk [vmem:[#allocation2 + $0x1] sm:$0xff] %vm432, %v427
        %434 = vst.msk [vmem:[#allocation2 + $0x9] sm:$0xff] %vm432, %v429
        %s435 = scalar_lea.vmem %s352, 16 [#allocation13]
        %v436 = vld [vmem:[%s435] sm:$0xff]
        %v437 = vld [vmem:[%s435 + $0x8] sm:$0xff]
        %440 = vrot.lane.b32.xlu0 %v436, 1
        %v441 = vpop.permute.xlu0 %440
        %442 = vrot.lane.b32.xlu0 %v437, 1
        %v443 = vpop.permute.xlu0 %442
        %s446 = scalar_lea.vmem [#allocation2], 24
        %447 = vst.msk [vmem:[%s446 + $0x1] sm:$0xff] %vm432, %v441
        %448 = vst.msk [vmem:[%s446 + $0x9] sm:$0xff] %vm432, %v443
        %v449 = vld [vmem:[%s395] sm:$0xff]
        %v450 = vld [vmem:[%s4] sm:$0xff]
        %v451 = vld [vmem:[%s4 + $0x8] sm:$0xff]
        %453 = vset.pattern.permute.xlu0 0
        %454 = vperm.xlu0 %453, %v450
        %v455 = vpop.permute.xlu0 %454
        %458 = vset.pattern.permute.xlu0 0
        %459 = vperm.xlu0 %458, %v451
        %v460 = vpop.permute.xlu0 %459
        %v462 = vlaneseq
        %v463 = vshrl.u32 %v462, 7
        %v464 = vsub.s32 0, %v463
        %v465 = vrot.slane %v449, %v464
        %v466 = vmul.f32 %v455, %v465
        %v467 = vmul.f32 %v460, %v465
        %468 = vset.pattern.permute.xlu0 1
        %469 = vperm.xlu0 %468, %v450
        %v470 = vpop.permute.xlu0 %469
        %472 = vset.pattern.permute.xlu0 1
        %473 = vperm.xlu0 %472, %v451
        %v474 = vpop.permute.xlu0 %473
        %v476 = vlaneseq
        %v477 = vshrl.u32 %v476, 7
        %v478 = vsub.s32 1, %v477
        %v479 = vrot.slane %v449, %v478
        %v480 = vmul.f32 %v470, %v479
        %v481 = vmul.f32 %v474, %v479
        %v482 = vadd.f32 %v466, %v480
        %v483 = vadd.f32 %v467, %v481
        %484 = vset.pattern.permute.xlu0 2
        %485 = vperm.xlu0 %484, %v450
        %v486 = vpop.permute.xlu0 %485
        %488 = vset.pattern.permute.xlu0 2
        %489 = vperm.xlu0 %488, %v451
        %v490 = vpop.permute.xlu0 %489
        %v492 = vlaneseq
        %v493 = vshrl.u32 %v492, 7
        %v494 = vsub.s32 2, %v493
        %v495 = vrot.slane %v449, %v494
        %v496 = vmul.f32 %v486, %v495
        %v497 = vmul.f32 %v490, %v495
        %v498 = vadd.f32 %v482, %v496
        %v499 = vadd.f32 %v483, %v497
        %500 = vset.pattern.permute.xlu0 3
        %501 = vperm.xlu0 %500, %v450
        %v502 = vpop.permute.xlu0 %501
        %504 = vset.pattern.permute.xlu0 3
        %505 = vperm.xlu0 %504, %v451
        %v506 = vpop.permute.xlu0 %505
        %v508 = vlaneseq
        %v509 = vshrl.u32 %v508, 7
        %v510 = vsub.s32 3, %v509
        %v511 = vrot.slane %v449, %v510
        %v512 = vmul.f32 %v502, %v511
        %v513 = vmul.f32 %v506, %v511
        %v514 = vadd.f32 %v498, %v512
        %v515 = vadd.f32 %v499, %v513
        %516 = vset.pattern.permute.xlu0 4
        %517 = vperm.xlu0 %516, %v450
        %v518 = vpop.permute.xlu0 %517
        %520 = vset.pattern.permute.xlu0 4
        %521 = vperm.xlu0 %520, %v451
        %v522 = vpop.permute.xlu0 %521
        %v524 = vlaneseq
        %v525 = vshrl.u32 %v524, 7
        %v526 = vsub.s32 4, %v525
        %v527 = vrot.slane %v449, %v526
        %v528 = vmul.f32 %v518, %v527
        %v529 = vmul.f32 %v522, %v527
        %v530 = vadd.f32 %v514, %v528
        %v531 = vadd.f32 %v515, %v529
        %532 = vset.pattern.permute.xlu0 5
        %533 = vperm.xlu0 %532, %v450
        %v534 = vpop.permute.xlu0 %533
        %536 = vset.pattern.permute.xlu0 5
        %537 = vperm.xlu0 %536, %v451
        %v538 = vpop.permute.xlu0 %537
        %v540 = vlaneseq
        %v541 = vshrl.u32 %v540, 7
        %v542 = vsub.s32 5, %v541
        %v543 = vrot.slane %v449, %v542
        %v544 = vmul.f32 %v534, %v543
        %v545 = vmul.f32 %v538, %v543
        %v546 = vadd.f32 %v530, %v544
        %v547 = vadd.f32 %v531, %v545
        %548 = vset.pattern.permute.xlu0 6
        %549 = vperm.xlu0 %548, %v450
        %v550 = vpop.permute.xlu0 %549
        %552 = vset.pattern.permute.xlu0 6
        %553 = vperm.xlu0 %552, %v451
        %v554 = vpop.permute.xlu0 %553
        %v556 = vlaneseq
        %v557 = vshrl.u32 %v556, 7
        %v558 = vsub.s32 6, %v557
        %v559 = vrot.slane %v449, %v558
        %v560 = vmul.f32 %v550, %v559
        %v561 = vmul.f32 %v554, %v559
        %v562 = vadd.f32 %v546, %v560
        %v563 = vadd.f32 %v547, %v561
        %564 = vset.pattern.permute.xlu0 7
        %565 = vperm.xlu0 %564, %v450
        %v566 = vpop.permute.xlu0 %565
        %568 = vset.pattern.permute.xlu0 7
        %569 = vperm.xlu0 %568, %v451
        %v570 = vpop.permute.xlu0 %569
        %v572 = vlaneseq
        %v573 = vshrl.u32 %v572, 7
        %v574 = vsub.s32 7, %v573
        %v575 = vrot.slane %v449, %v574
        %v576 = vmul.f32 %v566, %v575
        %v577 = vmul.f32 %v570, %v575
        %v578 = vadd.f32 %v562, %v576
        %v579 = vadd.f32 %v563, %v577
        %v580 = vld [vmem:[%s5] sm:$0x1]
        %582 = vset.pattern.permute.xlu0 0
        %583 = vperm.xlu0 %582, %v578
        %v584 = vpop.permute.xlu0 %583
        %587 = vset.pattern.permute.xlu0 0
        %588 = vperm.xlu0 %587, %v579
        %v589 = vpop.permute.xlu0 %588
        %v591 = vlaneseq
        %v592 = vshrl.u32 %v591, 7
        %v593 = vsub.s32 0, %v592
        %v594 = vrot.slane %v580, %v593
        %v595 = vmul.f32 %v584, %v594
        %v596 = vmul.f32 %v589, %v594
        %v597 = vld [vmem:[%s5 + $0x1] sm:$0x1]
        %598 = vset.pattern.permute.xlu0 1
        %599 = vperm.xlu0 %598, %v578
        %v600 = vpop.permute.xlu0 %599
        %602 = vset.pattern.permute.xlu0 1
        %603 = vperm.xlu0 %602, %v579
        %v604 = vpop.permute.xlu0 %603
        %v606 = vlaneseq
        %v607 = vshrl.u32 %v606, 7
        %v608 = vsub.s32 0, %v607
        %v609 = vrot.slane %v597, %v608
        %v610 = vmul.f32 %v600, %v609
        %v611 = vmul.f32 %v604, %v609
        %v612 = vadd.f32 %v595, %v610
        %v613 = vadd.f32 %v596, %v611
        %v614 = vld [vmem:[%s5 + $0x2] sm:$0x1]
        %615 = vset.pattern.permute.xlu0 2
        %616 = vperm.xlu0 %615, %v578
        %v617 = vpop.permute.xlu0 %616
        %619 = vset.pattern.permute.xlu0 2
        %620 = vperm.xlu0 %619, %v579
        %v621 = vpop.permute.xlu0 %620
        %v623 = vlaneseq
        %v624 = vshrl.u32 %v623, 7
        %v625 = vsub.s32 0, %v624
        %v626 = vrot.slane %v614, %v625
        %v627 = vmul.f32 %v617, %v626
        %v628 = vmul.f32 %v621, %v626
        %v629 = vadd.f32 %v612, %v627
        %v630 = vadd.f32 %v613, %v628
        %v631 = vld [vmem:[%s5 + $0x3] sm:$0x1]
        %632 = vset.pattern.permute.xlu0 3
        %633 = vperm.xlu0 %632, %v578
        %v634 = vpop.permute.xlu0 %633
        %636 = vset.pattern.permute.xlu0 3
        %637 = vperm.xlu0 %636, %v579
        %v638 = vpop.permute.xlu0 %637
        %v640 = vlaneseq
        %v641 = vshrl.u32 %v640, 7
        %v642 = vsub.s32 0, %v641
        %v643 = vrot.slane %v631, %v642
        %v644 = vmul.f32 %v634, %v643
        %v645 = vmul.f32 %v638, %v643
        %v646 = vadd.f32 %v629, %v644
        %v647 = vadd.f32 %v630, %v645
        %v648 = vld [vmem:[%s5 + $0x4] sm:$0x1]
        %649 = vset.pattern.permute.xlu0 4
        %650 = vperm.xlu0 %649, %v578
        %v651 = vpop.permute.xlu0 %650
        %653 = vset.pattern.permute.xlu0 4
        %654 = vperm.xlu0 %653, %v579
        %v655 = vpop.permute.xlu0 %654
        %v657 = vlaneseq
        %v658 = vshrl.u32 %v657, 7
        %v659 = vsub.s32 0, %v658
        %v660 = vrot.slane %v648, %v659
        %v661 = vmul.f32 %v651, %v660
        %v662 = vmul.f32 %v655, %v660
        %v663 = vadd.f32 %v646, %v661
        %v664 = vadd.f32 %v647, %v662
        %v665 = vld [vmem:[%s5 + $0x5] sm:$0x1]
        %666 = vset.pattern.permute.xlu0 5
        %667 = vperm.xlu0 %666, %v578
        %v668 = vpop.permute.xlu0 %667
        %670 = vset.pattern.permute.xlu0 5
        %671 = vperm.xlu0 %670, %v579
        %v672 = vpop.permute.xlu0 %671
        %v674 = vlaneseq
        %v675 = vshrl.u32 %v674, 7
        %v676 = vsub.s32 0, %v675
        %v677 = vrot.slane %v665, %v676
        %v678 = vmul.f32 %v668, %v677
        %v679 = vmul.f32 %v672, %v677
        %v680 = vadd.f32 %v663, %v678
        %v681 = vadd.f32 %v664, %v679
        %v682 = vld [vmem:[%s5 + $0x6] sm:$0x1]
        %683 = vset.pattern.permute.xlu0 6
        %684 = vperm.xlu0 %683, %v578
        %v685 = vpop.permute.xlu0 %684
        %687 = vset.pattern.permute.xlu0 6
        %688 = vperm.xlu0 %687, %v579
        %v689 = vpop.permute.xlu0 %688
        %v691 = vlaneseq
        %v692 = vshrl.u32 %v691, 7
        %v693 = vsub.s32 0, %v692
        %v694 = vrot.slane %v682, %v693
        %v695 = vmul.f32 %v685, %v694
        %v696 = vmul.f32 %v689, %v694
        %v697 = vadd.f32 %v680, %v695
        %v698 = vadd.f32 %v681, %v696
        %v699 = vld [vmem:[%s5 + $0x7] sm:$0x1]
        %700 = vset.pattern.permute.xlu0 7
        %701 = vperm.xlu0 %700, %v578
        %v702 = vpop.permute.xlu0 %701
        %704 = vset.pattern.permute.xlu0 7
        %705 = vperm.xlu0 %704, %v579
        %v706 = vpop.permute.xlu0 %705
        %v708 = vlaneseq
        %v709 = vshrl.u32 %v708, 7
        %v710 = vsub.s32 0, %v709
        %v711 = vrot.slane %v699, %v710
        %v712 = vmul.f32 %v702, %v711
        %v713 = vmul.f32 %v706, %v711
        %v714 = vadd.f32 %v697, %v712
        %v715 = vadd.f32 %v698, %v713
        %718 = vrot.lane.b32.xlu0 %v714, 1
        %v719 = vpop.permute.xlu0 %718
        %720 = vrot.lane.b32.xlu0 %v715, 1
        %v721 = vpop.permute.xlu0 %720
        %s724 = scalar_lea.vmem [#allocation2], 48
        %725 = vst.msk [vmem:[%s724 + $0x1] sm:$0xff] %vm432, %v719
        %726 = vst.msk [vmem:[%s724 + $0x9] sm:$0xff] %vm432, %v721
        %s727 = scalar_lea.vmem %s395, 8
        %v728 = vld [vmem:[%s727] sm:$0xff]
        %v729 = vld [vmem:[%s4] sm:$0xff]
        %v730 = vld [vmem:[%s4 + $0x8] sm:$0xff]
        %732 = vset.pattern.permute.xlu0 0
        %733 = vperm.xlu0 %732, %v729
        %v734 = vpop.permute.xlu0 %733
        %737 = vset.pattern.permute.xlu0 0
        %738 = vperm.xlu0 %737, %v730
        %v739 = vpop.permute.xlu0 %738
        %v741 = vlaneseq
        %v742 = vshrl.u32 %v741, 7
        %v743 = vsub.s32 0, %v742
        %v744 = vrot.slane %v728, %v743
        %v745 = vmul.f32 %v734, %v744
        %v746 = vmul.f32 %v739, %v744
        %747 = vset.pattern.permute.xlu0 1
        %748 = vperm.xlu0 %747, %v729
        %v749 = vpop.permute.xlu0 %748
        %751 = vset.pattern.permute.xlu0 1
        %752 = vperm.xlu0 %751, %v730
        %v753 = vpop.permute.xlu0 %752
        %v755 = vlaneseq
        %v756 = vshrl.u32 %v755, 7
        %v757 = vsub.s32 1, %v756
        %v758 = vrot.slane %v728, %v757
        %v759 = vmul.f32 %v749, %v758
        %v760 = vmul.f32 %v753, %v758
        %v761 = vadd.f32 %v745, %v759
        %v762 = vadd.f32 %v746, %v760
        %763 = vset.pattern.permute.xlu0 2
        %764 = vperm.xlu0 %763, %v729
        %v765 = vpop.permute.xlu0 %764
        %767 = vset.pattern.permute.xlu0 2
        %768 = vperm.xlu0 %767, %v730
        %v769 = vpop.permute.xlu0 %768
        %v771 = vlaneseq
        %v772 = vshrl.u32 %v771, 7
        %v773 = vsub.s32 2, %v772
        %v774 = vrot.slane %v728, %v773
        %v775 = vmul.f32 %v765, %v774
        %v776 = vmul.f32 %v769, %v774
        %v777 = vadd.f32 %v761, %v775
        %v778 = vadd.f32 %v762, %v776
        %779 = vset.pattern.permute.xlu0 3
        %780 = vperm.xlu0 %779, %v729
        %v781 = vpop.permute.xlu0 %780
        %783 = vset.pattern.permute.xlu0 3
        %784 = vperm.xlu0 %783, %v730
        %v785 = vpop.permute.xlu0 %784
        %v787 = vlaneseq
        %v788 = vshrl.u32 %v787, 7
        %v789 = vsub.s32 3, %v788
        %v790 = vrot.slane %v728, %v789
        %v791 = vmul.f32 %v781, %v790
        %v792 = vmul.f32 %v785, %v790
        %v793 = vadd.f32 %v777, %v791
        %v794 = vadd.f32 %v778, %v792
        %795 = vset.pattern.permute.xlu0 4
        %796 = vperm.xlu0 %795, %v729
        %v797 = vpop.permute.xlu0 %796
        %799 = vset.pattern.permute.xlu0 4
        %800 = vperm.xlu0 %799, %v730
        %v801 = vpop.permute.xlu0 %800
        %v803 = vlaneseq
        %v804 = vshrl.u32 %v803, 7
        %v805 = vsub.s32 4, %v804
        %v806 = vrot.slane %v728, %v805
        %v807 = vmul.f32 %v797, %v806
        %v808 = vmul.f32 %v801, %v806
        %v809 = vadd.f32 %v793, %v807
        %v810 = vadd.f32 %v794, %v808
        %811 = vset.pattern.permute.xlu0 5
        %812 = vperm.xlu0 %811, %v729
        %v813 = vpop.permute.xlu0 %812
        %815 = vset.pattern.permute.xlu0 5
        %816 = vperm.xlu0 %815, %v730
        %v817 = vpop.permute.xlu0 %816
        %v819 = vlaneseq
        %v820 = vshrl.u32 %v819, 7
        %v821 = vsub.s32 5, %v820
        %v822 = vrot.slane %v728, %v821
        %v823 = vmul.f32 %v813, %v822
        %v824 = vmul.f32 %v817, %v822
        %v825 = vadd.f32 %v809, %v823
        %v826 = vadd.f32 %v810, %v824
        %827 = vset.pattern.permute.xlu0 6
        %828 = vperm.xlu0 %827, %v729
        %v829 = vpop.permute.xlu0 %828
        %831 = vset.pattern.permute.xlu0 6
        %832 = vperm.xlu0 %831, %v730
        %v833 = vpop.permute.xlu0 %832
        %v835 = vlaneseq
        %v836 = vshrl.u32 %v835, 7
        %v837 = vsub.s32 6, %v836
        %v838 = vrot.slane %v728, %v837
        %v839 = vmul.f32 %v829, %v838
        %v840 = vmul.f32 %v833, %v838
        %v841 = vadd.f32 %v825, %v839
        %v842 = vadd.f32 %v826, %v840
        %843 = vset.pattern.permute.xlu0 7
        %844 = vperm.xlu0 %843, %v729
        %v845 = vpop.permute.xlu0 %844
        %847 = vset.pattern.permute.xlu0 7
        %848 = vperm.xlu0 %847, %v730
        %v849 = vpop.permute.xlu0 %848
        %v851 = vlaneseq
        %v852 = vshrl.u32 %v851, 7
        %v853 = vsub.s32 7, %v852
        %v854 = vrot.slane %v728, %v853
        %v855 = vmul.f32 %v845, %v854
        %v856 = vmul.f32 %v849, %v854
        %v857 = vadd.f32 %v841, %v855
        %v858 = vadd.f32 %v842, %v856
        %v859 = vld [vmem:[%s5] sm:$0x1]
        %861 = vset.pattern.permute.xlu0 0
        %862 = vperm.xlu0 %861, %v857
        %v863 = vpop.permute.xlu0 %862
        %866 = vset.pattern.permute.xlu0 0
        %867 = vperm.xlu0 %866, %v858
        %v868 = vpop.permute.xlu0 %867
        %v870 = vlaneseq
        %v871 = vshrl.u32 %v870, 7
        %v872 = vsub.s32 0, %v871
        %v873 = vrot.slane %v859, %v872
        %v874 = vmul.f32 %v863, %v873
        %v875 = vmul.f32 %v868, %v873
        %v876 = vld [vmem:[%s5 + $0x1] sm:$0x1]
        %877 = vset.pattern.permute.xlu0 1
        %878 = vperm.xlu0 %877, %v857
        %v879 = vpop.permute.xlu0 %878
        %881 = vset.pattern.permute.xlu0 1
        %882 = vperm.xlu0 %881, %v858
        %v883 = vpop.permute.xlu0 %882
        %v885 = vlaneseq
        %v886 = vshrl.u32 %v885, 7
        %v887 = vsub.s32 0, %v886
        %v888 = vrot.slane %v876, %v887
        %v889 = vmul.f32 %v879, %v888
        %v890 = vmul.f32 %v883, %v888
        %v891 = vadd.f32 %v874, %v889
        %v892 = vadd.f32 %v875, %v890
        %v893 = vld [vmem:[%s5 + $0x2] sm:$0x1]
        %894 = vset.pattern.permute.xlu0 2
        %895 = vperm.xlu0 %894, %v857
        %v896 = vpop.permute.xlu0 %895
        %898 = vset.pattern.permute.xlu0 2
        %899 = vperm.xlu0 %898, %v858
        %v900 = vpop.permute.xlu0 %899
        %v902 = vlaneseq
        %v903 = vshrl.u32 %v902, 7
        %v904 = vsub.s32 0, %v903
        %v905 = vrot.slane %v893, %v904
        %v906 = vmul.f32 %v896, %v905
        %v907 = vmul.f32 %v900, %v905
        %v908 = vadd.f32 %v891, %v906
        %v909 = vadd.f32 %v892, %v907
        %v910 = vld [vmem:[%s5 + $0x3] sm:$0x1]
        %911 = vset.pattern.permute.xlu0 3
        %912 = vperm.xlu0 %911, %v857
        %v913 = vpop.permute.xlu0 %912
        %915 = vset.pattern.permute.xlu0 3
        %916 = vperm.xlu0 %915, %v858
        %v917 = vpop.permute.xlu0 %916
        %v919 = vlaneseq
        %v920 = vshrl.u32 %v919, 7
        %v921 = vsub.s32 0, %v920
        %v922 = vrot.slane %v910, %v921
        %v923 = vmul.f32 %v913, %v922
        %v924 = vmul.f32 %v917, %v922
        %v925 = vadd.f32 %v908, %v923
        %v926 = vadd.f32 %v909, %v924
        %v927 = vld [vmem:[%s5 + $0x4] sm:$0x1]
        %928 = vset.pattern.permute.xlu0 4
        %929 = vperm.xlu0 %928, %v857
        %v930 = vpop.permute.xlu0 %929
        %932 = vset.pattern.permute.xlu0 4
        %933 = vperm.xlu0 %932, %v858
        %v934 = vpop.permute.xlu0 %933
        %v936 = vlaneseq
        %v937 = vshrl.u32 %v936, 7
        %v938 = vsub.s32 0, %v937
        %v939 = vrot.slane %v927, %v938
        %v940 = vmul.f32 %v930, %v939
        %v941 = vmul.f32 %v934, %v939
        %v942 = vadd.f32 %v925, %v940
        %v943 = vadd.f32 %v926, %v941
        %v944 = vld [vmem:[%s5 + $0x5] sm:$0x1]
        %945 = vset.pattern.permute.xlu0 5
        %946 = vperm.xlu0 %945, %v857
        %v947 = vpop.permute.xlu0 %946
        %949 = vset.pattern.permute.xlu0 5
        %950 = vperm.xlu0 %949, %v858
        %v951 = vpop.permute.xlu0 %950
        %v953 = vlaneseq
        %v954 = vshrl.u32 %v953, 7
        %v955 = vsub.s32 0, %v954
        %v956 = vrot.slane %v944, %v955
        %v957 = vmul.f32 %v947, %v956
        %v958 = vmul.f32 %v951, %v956
        %v959 = vadd.f32 %v942, %v957
        %v960 = vadd.f32 %v943, %v958
        %v961 = vld [vmem:[%s5 + $0x6] sm:$0x1]
        %962 = vset.pattern.permute.xlu0 6
        %963 = vperm.xlu0 %962, %v857
        %v964 = vpop.permute.xlu0 %963
        %966 = vset.pattern.permute.xlu0 6
        %967 = vperm.xlu0 %966, %v858
        %v968 = vpop.permute.xlu0 %967
        %v970 = vlaneseq
        %v971 = vshrl.u32 %v970, 7
        %v972 = vsub.s32 0, %v971
        %v973 = vrot.slane %v961, %v972
        %v974 = vmul.f32 %v964, %v973
        %v975 = vmul.f32 %v968, %v973
        %v976 = vadd.f32 %v959, %v974
        %v977 = vadd.f32 %v960, %v975
        %v978 = vld [vmem:[%s5 + $0x7] sm:$0x1]
        %979 = vset.pattern.permute.xlu0 7
        %980 = vperm.xlu0 %979, %v857
        %v981 = vpop.permute.xlu0 %980
        %983 = vset.pattern.permute.xlu0 7
        %984 = vperm.xlu0 %983, %v858
        %v985 = vpop.permute.xlu0 %984
        %v987 = vlaneseq
        %v988 = vshrl.u32 %v987, 7
        %v989 = vsub.s32 0, %v988
        %v990 = vrot.slane %v978, %v989
        %v991 = vmul.f32 %v981, %v990
        %v992 = vmul.f32 %v985, %v990
        %v993 = vadd.f32 %v976, %v991
        %v994 = vadd.f32 %v977, %v992
        %997 = vrot.lane.b32.xlu0 %v993, 1
        %v998 = vpop.permute.xlu0 %997
        %999 = vrot.lane.b32.xlu0 %v994, 1
        %v1000 = vpop.permute.xlu0 %999
        %s1003 = scalar_lea.vmem [#allocation2], 72
        %1004 = vst.msk [vmem:[%s1003 + $0x1] sm:$0xff] %vm432, %v998
        %1005 = vst.msk [vmem:[%s1003 + $0x9] sm:$0xff] %vm432, %v1000
        %s1006 = sld [smem:[#allocation8]]
        %v1007 = vstv %s1006
        %s1008 = sld [smem:[#allocation8 + $0x1]]
        %v1009 = vstv %s1008
        %s1010 = sld [smem:[#allocation8 + $0x2]]
        %v1011 = vstv %s1010
        %s1012 = sld [smem:[#allocation8 + $0x3]]
        %v1013 = vstv %s1012
        %v1014 = vld [vmem:[#allocation2] sm:$0xff]
        %v1015 = vld [vmem:[#allocation2 + $0x8] sm:$0xff]
        %v1016 = vld [vmem:[#allocation2 + $0x10] sm:$0x3]
        %s1017 = sld [smem:[#allocation4]]
        %v1018 = vstv %s1017
        %v1019 = vmul.f32 %v1018, %v1014
        %v1020 = vmul.f32 %v1018, %v1015
        %v1021 = vadd.f32 %v1007, %v1019
        %v1022 = vadd.f32 %v1007, %v1020
        %s1023 = sld [smem:[#allocation4 + $0x24]]
        %v1024 = vstv %s1023
        %v1025 = vmul.f32 %v1024, %v1014
        %v1026 = vmul.f32 %v1024, %v1015
        %v1027 = vadd.f32 %v1009, %v1025
        %v1028 = vadd.f32 %v1009, %v1026
        %s1029 = sld [smem:[#allocation4 + $0x48]]
        %v1030 = vstv %s1029
        %v1031 = vmul.f32 %v1030, %v1014
        %v1032 = vmul.f32 %v1030, %v1015
        %v1033 = vadd.f32 %v1011, %v1031
        %v1034 = vadd.f32 %v1011, %v1032
        %s1035 = sld [smem:[#allocation4 + $0x6c]]
        %v1036 = vstv %s1035
        %v1037 = vmul.f32 %v1036, %v1014
        %v1038 = vmul.f32 %v1036, %v1015
        %v1039 = vadd.f32 %v1013, %v1037
        %v1040 = vadd.f32 %v1013, %v1038
        %s1041 = sld [smem:[#allocation4 + $0x3]]
        %v1042 = vstv %s1041
        %v1043 = vmul.f32 %v1042, %v1014
        %v1044 = vmul.f32 %v1042, %v1015
        %v1045 = vmul.f32 %v1042, %v1016
        %vm1049 = vcmask 1046528
        %v1050 = vrot.slane %v1043, 1
        %v1051 = vrot.slane %v1044, 1
        %v1052 = vsel %vm1049, %v1050, %v1051
        %v1053 = vrot.slane %v1045, 1
        %v1054 = vsel %vm1049, %v1051, %v1053
        %v1057 = vadd.f32 %v1021, %v1052
        %v1058 = vadd.f32 %v1022, %v1054
        %s1059 = sld [smem:[#allocation4 + $0x27]]
        %v1060 = vstv %s1059
        %v1061 = vmul.f32 %v1060, %v1014
        %v1062 = vmul.f32 %v1060, %v1015
        %v1063 = vmul.f32 %v1060, %v1016
        %v1067 = vrot.slane %v1061, 1
        %v1068 = vrot.slane %v1062, 1
        %v1069 = vsel %vm1049, %v1067, %v1068
        %v1070 = vrot.slane %v1063, 1
        %v1071 = vsel %vm1049, %v1068, %v1070
        %v1074 = vadd.f32 %v1027, %v1069
        %v1075 = vadd.f32 %v1028, %v1071
        %s1076 = sld [smem:[#allocation4 + $0x4b]]
        %v1077 = vstv %s1076
        %v1078 = vmul.f32 %v1077, %v1014
        %v1079 = vmul.f32 %v1077, %v1015
        %v1080 = vmul.f32 %v1077, %v1016
        %v1084 = vrot.slane %v1078, 1
        %v1085 = vrot.slane %v1079, 1
        %v1086 = vsel %vm1049, %v1084, %v1085
        %v1087 = vrot.slane %v1080, 1
        %v1088 = vsel %vm1049, %v1085, %v1087
        %v1091 = vadd.f32 %v1033, %v1086
        %v1092 = vadd.f32 %v1034, %v1088
        %s1093 = sld [smem:[#allocation4 + $0x6f]]
        %v1094 = vstv %s1093
        %v1095 = vmul.f32 %v1094, %v1014
        %v1096 = vmul.f32 %v1094, %v1015
        %v1097 = vmul.f32 %v1094, %v1016
        %v1101 = vrot.slane %v1095, 1
        %v1102 = vrot.slane %v1096, 1
        %v1103 = vsel %vm1049, %v1101, %v1102
        %v1104 = vrot.slane %v1097, 1
        %v1105 = vsel %vm1049, %v1102, %v1104
        %v1108 = vadd.f32 %v1039, %v1103
        %v1109 = vadd.f32 %v1040, %v1105
        %s1110 = sld [smem:[#allocation4 + $0x6]]
        %v1111 = vstv %s1110
        %v1112 = vmul.f32 %v1111, %v1014
        %v1113 = vmul.f32 %v1111, %v1015
        %v1114 = vmul.f32 %v1111, %v1016
        %vm1118 = vcmask 1045504
        %v1119 = vrot.slane %v1112, 2
        %v1120 = vrot.slane %v1113, 2
        %v1121 = vsel %vm1118, %v1119, %v1120
        %v1122 = vrot.slane %v1114, 2
        %v1123 = vsel %vm1118, %v1120, %v1122
        %v1126 = vadd.f32 %v1057, %v1121
        %v1127 = vadd.f32 %v1058, %v1123
        %s1128 = sld [smem:[#allocation4 + $0x2a]]
        %v1129 = vstv %s1128
        %v1130 = vmul.f32 %v1129, %v1014
        %v1131 = vmul.f32 %v1129, %v1015
        %v1132 = vmul.f32 %v1129, %v1016
        %v1136 = vrot.slane %v1130, 2
        %v1137 = vrot.slane %v1131, 2
        %v1138 = vsel %vm1118, %v1136, %v1137
        %v1139 = vrot.slane %v1132, 2
        %v1140 = vsel %vm1118, %v1137, %v1139
        %v1143 = vadd.f32 %v1074, %v1138
        %v1144 = vadd.f32 %v1075, %v1140
        %s1145 = sld [smem:[#allocation4 + $0x4e]]
        %v1146 = vstv %s1145
        %v1147 = vmul.f32 %v1146, %v1014
        %v1148 = vmul.f32 %v1146, %v1015
        %v1149 = vmul.f32 %v1146, %v1016
        %v1153 = vrot.slane %v1147, 2
        %v1154 = vrot.slane %v1148, 2
        %v1155 = vsel %vm1118, %v1153, %v1154
        %v1156 = vrot.slane %v1149, 2
        %v1157 = vsel %vm1118, %v1154, %v1156
        %v1160 = vadd.f32 %v1091, %v1155
        %v1161 = vadd.f32 %v1092, %v1157
        %s1162 = sld [smem:[#allocation4 + $0x72]]
        %v1163 = vstv %s1162
        %v1164 = vmul.f32 %v1163, %v1014
        %v1165 = vmul.f32 %v1163, %v1015
        %v1166 = vmul.f32 %v1163, %v1016
        %v1170 = vrot.slane %v1164, 2
        %v1171 = vrot.slane %v1165, 2
        %v1172 = vsel %vm1118, %v1170, %v1171
        %v1173 = vrot.slane %v1166, 2
        %v1174 = vsel %vm1118, %v1171, %v1173
        %v1177 = vadd.f32 %v1108, %v1172
        %v1178 = vadd.f32 %v1109, %v1174
        %s1179 = sld [smem:[#allocation4 + $0x1]]
        %v1180 = vstv %s1179
        %v1181 = vmul.f32 %v1180, %v1014
        %v1182 = vmul.f32 %v1180, %v1015
        %1185 = vrot.lane.b32.xlu0 %v1181, 127
        %v1186 = vpop.permute.xlu0 %1185
        %1187 = vrot.lane.b32.xlu0 %v1182, 127
        %v1188 = vpop.permute.xlu0 %1187
        %v1191 = vadd.f32 %v1126, %v1186
        %v1192 = vadd.f32 %v1127, %v1188
        %s1193 = sld [smem:[#allocation4 + $0x25]]
        %v1194 = vstv %s1193
        %v1195 = vmul.f32 %v1194, %v1014
        %v1196 = vmul.f32 %v1194, %v1015
        %1199 = vrot.lane.b32.xlu0 %v1195, 127
        %v1200 = vpop.permute.xlu0 %1199
        %1201 = vrot.lane.b32.xlu0 %v1196, 127
        %v1202 = vpop.permute.xlu0 %1201
        %v1205 = vadd.f32 %v1143, %v1200
        %v1206 = vadd.f32 %v1144, %v1202
        %s1207 = sld [smem:[#allocation4 + $0x49]]
        %v1208 = vstv %s1207
        %v1209 = vmul.f32 %v1208, %v1014
        %v1210 = vmul.f32 %v1208, %v1015
        %1213 = vrot.lane.b32.xlu0 %v1209, 127
        %v1214 = vpop.permute.xlu0 %1213
        %1215 = vrot.lane.b32.xlu0 %v1210, 127
        %v1216 = vpop.permute.xlu0 %1215
        %v1219 = vadd.f32 %v1160, %v1214
        %v1220 = vadd.f32 %v1161, %v1216
        %s1221 = sld [smem:[#allocation4 + $0x6d]]
        %v1222 = vstv %s1221
        %v1223 = vmul.f32 %v1222, %v1014
        %v1224 = vmul.f32 %v1222, %v1015
        %1227 = vrot.lane.b32.xlu0 %v1223, 127
        %v1228 = vpop.permute.xlu0 %1227
        %1229 = vrot.lane.b32.xlu0 %v1224, 127
        %v1230 = vpop.permute.xlu0 %1229
        %v1233 = vadd.f32 %v1177, %v1228
        %v1234 = vadd.f32 %v1178, %v1230
        %s1235 = sld [smem:[#allocation4 + $0x4]]
        %v1236 = vstv %s1235
        %v1237 = vmul.f32 %v1236, %v1014
        %v1238 = vmul.f32 %v1236, %v1015
        %v1239 = vmul.f32 %v1236, %v1016
        %v1243 = vrot.slane %v1237, 1
        %v1244 = vrot.slane %v1238, 1
        %v1245 = vsel %vm1049, %v1243, %v1244
        %v1246 = vrot.slane %v1239, 1
        %v1247 = vsel %vm1049, %v1244, %v1246
        %1248 = vrot.lane.b32.xlu0 %v1245, 127
        %v1249 = vpop.permute.xlu0 %1248
        %1250 = vrot.lane.b32.xlu0 %v1247, 127
        %v1251 = vpop.permute.xlu0 %1250
        %v1254 = vadd.f32 %v1191, %v1249
        %v1255 = vadd.f32 %v1192, %v1251
        %s1256 = sld [smem:[#allocation4 + $0x28]]
        %v1257 = vstv %s1256
        %v1258 = vmul.f32 %v1257, %v1014
        %v1259 = vmul.f32 %v1257, %v1015
        %v1260 = vmul.f32 %v1257, %v1016
        %v1264 = vrot.slane %v1258, 1
        %v1265 = vrot.slane %v1259, 1
        %v1266 = vsel %vm1049, %v1264, %v1265
        %v1267 = vrot.slane %v1260, 1
        %v1268 = vsel %vm1049, %v1265, %v1267
        %1269 = vrot.lane.b32.xlu0 %v1266, 127
        %v1270 = vpop.permute.xlu0 %1269
        %1271 = vrot.lane.b32.xlu0 %v1268, 127
        %v1272 = vpop.permute.xlu0 %1271
        %v1275 = vadd.f32 %v1205, %v1270
        %v1276 = vadd.f32 %v1206, %v1272
        %s1277 = sld [smem:[#allocation4 + $0x4c]]
        %v1278 = vstv %s1277
        %v1279 = vmul.f32 %v1278, %v1014
        %v1280 = vmul.f32 %v1278, %v1015
        %v1281 = vmul.f32 %v1278, %v1016
        %v1285 = vrot.slane %v1279, 1
        %v1286 = vrot.slane %v1280, 1
        %v1287 = vsel %vm1049, %v1285, %v1286
        %v1288 = vrot.slane %v1281, 1
        %v1289 = vsel %vm1049, %v1286, %v1288
        %1290 = vrot.lane.b32.xlu0 %v1287, 127
        %v1291 = vpop.permute.xlu0 %1290
        %1292 = vrot.lane.b32.xlu0 %v1289, 127
        %v1293 = vpop.permute.xlu0 %1292
        %v1296 = vadd.f32 %v1219, %v1291
        %v1297 = vadd.f32 %v1220, %v1293
        %s1298 = sld [smem:[#allocation4 + $0x70]]
        %v1299 = vstv %s1298
        %v1300 = vmul.f32 %v1299, %v1014
        %v1301 = vmul.f32 %v1299, %v1015
        %v1302 = vmul.f32 %v1299, %v1016
        %v1306 = vrot.slane %v1300, 1
        %v1307 = vrot.slane %v1301, 1
        %v1308 = vsel %vm1049, %v1306, %v1307
        %v1309 = vrot.slane %v1302, 1
        %v1310 = vsel %vm1049, %v1307, %v1309
        %1311 = vrot.lane.b32.xlu0 %v1308, 127
        %v1312 = vpop.permute.xlu0 %1311
        %1313 = vrot.lane.b32.xlu0 %v1310, 127
        %v1314 = vpop.permute.xlu0 %1313
        %v1317 = vadd.f32 %v1233, %v1312
        %v1318 = vadd.f32 %v1234, %v1314
        %s1319 = sld [smem:[#allocation4 + $0x7]]
        %v1320 = vstv %s1319
        %v1321 = vmul.f32 %v1320, %v1014
        %v1322 = vmul.f32 %v1320, %v1015
        %v1323 = vmul.f32 %v1320, %v1016
        %v1327 = vrot.slane %v1321, 2
        %v1328 = vrot.slane %v1322, 2
        %v1329 = vsel %vm1118, %v1327, %v1328
        %v1330 = vrot.slane %v1323, 2
        %v1331 = vsel %vm1118, %v1328, %v1330
        %1332 = vrot.lane.b32.xlu0 %v1329, 127
        %v1333 = vpop.permute.xlu0 %1332
        %1334 = vrot.lane.b32.xlu0 %v1331, 127
        %v1335 = vpop.permute.xlu0 %1334
        %v1338 = vadd.f32 %v1254, %v1333
        %v1339 = vadd.f32 %v1255, %v1335
        %s1340 = sld [smem:[#allocation4 + $0x2b]]
        %v1341 = vstv %s1340
        %v1342 = vmul.f32 %v1341, %v1014
        %v1343 = vmul.f32 %v1341, %v1015
        %v1344 = vmul.f32 %v1341, %v1016
        %v1348 = vrot.slane %v1342, 2
        %v1349 = vrot.slane %v1343, 2
        %v1350 = vsel %vm1118, %v1348, %v1349
        %v1351 = vrot.slane %v1344, 2
        %v1352 = vsel %vm1118, %v1349, %v1351
        %1353 = vrot.lane.b32.xlu0 %v1350, 127
        %v1354 = vpop.permute.xlu0 %1353
        %1355 = vrot.lane.b32.xlu0 %v1352, 127
        %v1356 = vpop.permute.xlu0 %1355
        %v1359 = vadd.f32 %v1275, %v1354
        %v1360 = vadd.f32 %v1276, %v1356
        %s1361 = sld [smem:[#allocation4 + $0x4f]]
        %v1362 = vstv %s1361
        %v1363 = vmul.f32 %v1362, %v1014
        %v1364 = vmul.f32 %v1362, %v1015
        %v1365 = vmul.f32 %v1362, %v1016
        %v1369 = vrot.slane %v1363, 2
        %v1370 = vrot.slane %v1364, 2
        %v1371 = vsel %vm1118, %v1369, %v1370
        %v1372 = vrot.slane %v1365, 2
        %v1373 = vsel %vm1118, %v1370, %v1372
        %1374 = vrot.lane.b32.xlu0 %v1371, 127
        %v1375 = vpop.permute.xlu0 %1374
        %1376 = vrot.lane.b32.xlu0 %v1373, 127
        %v1377 = vpop.permute.xlu0 %1376
        %v1380 = vadd.f32 %v1296, %v1375
        %v1381 = vadd.f32 %v1297, %v1377
        %s1382 = sld [smem:[#allocation4 + $0x73]]
        %v1383 = vstv %s1382
        %v1384 = vmul.f32 %v1383, %v1014
        %v1385 = vmul.f32 %v1383, %v1015
        %v1386 = vmul.f32 %v1383, %v1016
        %v1390 = vrot.slane %v1384, 2
        %v1391 = vrot.slane %v1385, 2
        %v1392 = vsel %vm1118, %v1390, %v1391
        %v1393 = vrot.slane %v1386, 2
        %v1394 = vsel %vm1118, %v1391, %v1393
        %1395 = vrot.lane.b32.xlu0 %v1392, 127
        %v1396 = vpop.permute.xlu0 %1395
        %1397 = vrot.lane.b32.xlu0 %v1394, 127
        %v1398 = vpop.permute.xlu0 %1397
        %v1401 = vadd.f32 %v1317, %v1396
        %v1402 = vadd.f32 %v1318, %v1398
        %s1403 = sld [smem:[#allocation4 + $0x2]]
        %v1404 = vstv %s1403
        %v1405 = vmul.f32 %v1404, %v1014
        %v1406 = vmul.f32 %v1404, %v1015
        %1409 = vrot.lane.b32.xlu0 %v1405, 126
        %v1410 = vpop.permute.xlu0 %1409
        %1411 = vrot.lane.b32.xlu0 %v1406, 126
        %v1412 = vpop.permute.xlu0 %1411
        %v1415 = vadd.f32 %v1338, %v1410
        %v1416 = vadd.f32 %v1339, %v1412
        %s1417 = sld [smem:[#allocation4 + $0x26]]
        %v1418 = vstv %s1417
        %v1419 = vmul.f32 %v1418, %v1014
        %v1420 = vmul.f32 %v1418, %v1015
        %1423 = vrot.lane.b32.xlu0 %v1419, 126
        %v1424 = vpop.permute.xlu0 %1423
        %1425 = vrot.lane.b32.xlu0 %v1420, 126
        %v1426 = vpop.permute.xlu0 %1425
        %v1429 = vadd.f32 %v1359, %v1424
        %v1430 = vadd.f32 %v1360, %v1426
        %s1431 = sld [smem:[#allocation4 + $0x4a]]
        %v1432 = vstv %s1431
        %v1433 = vmul.f32 %v1432, %v1014
        %v1434 = vmul.f32 %v1432, %v1015
        %1437 = vrot.lane.b32.xlu0 %v1433, 126
        %v1438 = vpop.permute.xlu0 %1437
        %1439 = vrot.lane.b32.xlu0 %v1434, 126
        %v1440 = vpop.permute.xlu0 %1439
        %v1443 = vadd.f32 %v1380, %v1438
        %v1444 = vadd.f32 %v1381, %v1440
        %s1445 = sld [smem:[#allocation4 + $0x6e]]
        %v1446 = vstv %s1445
        %v1447 = vmul.f32 %v1446, %v1014
        %v1448 = vmul.f32 %v1446, %v1015
        %1451 = vrot.lane.b32.xlu0 %v1447, 126
        %v1452 = vpop.permute.xlu0 %1451
        %1453 = vrot.lane.b32.xlu0 %v1448, 126
        %v1454 = vpop.permute.xlu0 %1453
        %v1457 = vadd.f32 %v1401, %v1452
        %v1458 = vadd.f32 %v1402, %v1454
        %s1459 = sld [smem:[#allocation4 + $0x5]]
        %v1460 = vstv %s1459
        %v1461 = vmul.f32 %v1460, %v1014
        %v1462 = vmul.f32 %v1460, %v1015
        %v1463 = vmul.f32 %v1460, %v1016
        %v1467 = vrot.slane %v1461, 1
        %v1468 = vrot.slane %v1462, 1
        %v1469 = vsel %vm1049, %v1467, %v1468
        %v1470 = vrot.slane %v1463, 1
        %v1471 = vsel %vm1049, %v1468, %v1470
        %1472 = vrot.lane.b32.xlu0 %v1469, 126
        %v1473 = vpop.permute.xlu0 %1472
        %1474 = vrot.lane.b32.xlu0 %v1471, 126
        %v1475 = vpop.permute.xlu0 %1474
        %v1478 = vadd.f32 %v1415, %v1473
        %v1479 = vadd.f32 %v1416, %v1475
        %s1480 = sld [smem:[#allocation4 + $0x29]]
        %v1481 = vstv %s1480
        %v1482 = vmul.f32 %v1481, %v1014
        %v1483 = vmul.f32 %v1481, %v1015
        %v1484 = vmul.f32 %v1481, %v1016
        %v1488 = vrot.slane %v1482, 1
        %v1489 = vrot.slane %v1483, 1
        %v1490 = vsel %vm1049, %v1488, %v1489
        %v1491 = vrot.slane %v1484, 1
        %v1492 = vsel %vm1049, %v1489, %v1491
        %1493 = vrot.lane.b32.xlu0 %v1490, 126
        %v1494 = vpop.permute.xlu0 %1493
        %1495 = vrot.lane.b32.xlu0 %v1492, 126
        %v1496 = vpop.permute.xlu0 %1495
        %v1499 = vadd.f32 %v1429, %v1494
        %v1500 = vadd.f32 %v1430, %v1496
        %s1501 = sld [smem:[#allocation4 + $0x4d]]
        %v1502 = vstv %s1501
        %v1503 = vmul.f32 %v1502, %v1014
        %v1504 = vmul.f32 %v1502, %v1015
        %v1505 = vmul.f32 %v1502, %v1016
        %v1509 = vrot.slane %v1503, 1
        %v1510 = vrot.slane %v1504, 1
        %v1511 = vsel %vm1049, %v1509, %v1510
        %v1512 = vrot.slane %v1505, 1
        %v1513 = vsel %vm1049, %v1510, %v1512
        %1514 = vrot.lane.b32.xlu0 %v1511, 126
        %v1515 = vpop.permute.xlu0 %1514
        %1516 = vrot.lane.b32.xlu0 %v1513, 126
        %v1517 = vpop.permute.xlu0 %1516
        %v1520 = vadd.f32 %v1443, %v1515
        %v1521 = vadd.f32 %v1444, %v1517
        %s1522 = sld [smem:[#allocation4 + $0x71]]
        %v1523 = vstv %s1522
        %v1524 = vmul.f32 %v1523, %v1014
        %v1525 = vmul.f32 %v1523, %v1015
        %v1526 = vmul.f32 %v1523, %v1016
        %v1530 = vrot.slane %v1524, 1
        %v1531 = vrot.slane %v1525, 1
        %v1532 = vsel %vm1049, %v1530, %v1531
        %v1533 = vrot.slane %v1526, 1
        %v1534 = vsel %vm1049, %v1531, %v1533
        %1535 = vrot.lane.b32.xlu0 %v1532, 126
        %v1536 = vpop.permute.xlu0 %1535
        %1537 = vrot.lane.b32.xlu0 %v1534, 126
        %v1538 = vpop.permute.xlu0 %1537
        %v1541 = vadd.f32 %v1457, %v1536
        %v1542 = vadd.f32 %v1458, %v1538
        %s1543 = sld [smem:[#allocation4 + $0x8]]
        %v1544 = vstv %s1543
        %v1545 = vmul.f32 %v1544, %v1014
        %v1546 = vmul.f32 %v1544, %v1015
        %v1547 = vmul.f32 %v1544, %v1016
        %v1551 = vrot.slane %v1545, 2
        %v1552 = vrot.slane %v1546, 2
        %v1553 = vsel %vm1118, %v1551, %v1552
        %v1554 = vrot.slane %v1547, 2
        %v1555 = vsel %vm1118, %v1552, %v1554
        %1556 = vrot.lane.b32.xlu0 %v1553, 126
        %v1557 = vpop.permute.xlu0 %1556
        %1558 = vrot.lane.b32.xlu0 %v1555, 126
        %v1559 = vpop.permute.xlu0 %1558
        %v1562 = vadd.f32 %v1478, %v1557
        %v1563 = vadd.f32 %v1479, %v1559
        %s1564 = sld [smem:[#allocation4 + $0x2c]]
        %v1565 = vstv %s1564
        %v1566 = vmul.f32 %v1565, %v1014
        %v1567 = vmul.f32 %v1565, %v1015
        %v1568 = vmul.f32 %v1565, %v1016
        %v1572 = vrot.slane %v1566, 2
        %v1573 = vrot.slane %v1567, 2
        %v1574 = vsel %vm1118, %v1572, %v1573
        %v1575 = vrot.slane %v1568, 2
        %v1576 = vsel %vm1118, %v1573, %v1575
        %1577 = vrot.lane.b32.xlu0 %v1574, 126
        %v1578 = vpop.permute.xlu0 %1577
        %1579 = vrot.lane.b32.xlu0 %v1576, 126
        %v1580 = vpop.permute.xlu0 %1579
        %v1583 = vadd.f32 %v1499, %v1578
        %v1584 = vadd.f32 %v1500, %v1580
        %s1585 = sld [smem:[#allocation4 + $0x50]]
        %v1586 = vstv %s1585
        %v1587 = vmul.f32 %v1586, %v1014
        %v1588 = vmul.f32 %v1586, %v1015
        %v1589 = vmul.f32 %v1586, %v1016
        %v1593 = vrot.slane %v1587, 2
        %v1594 = vrot.slane %v1588, 2
        %v1595 = vsel %vm1118, %v1593, %v1594
        %v1596 = vrot.slane %v1589, 2
        %v1597 = vsel %vm1118, %v1594, %v1596
        %1598 = vrot.lane.b32.xlu0 %v1595, 126
        %v1599 = vpop.permute.xlu0 %1598
        %1600 = vrot.lane.b32.xlu0 %v1597, 126
        %v1601 = vpop.permute.xlu0 %1600
        %v1604 = vadd.f32 %v1520, %v1599
        %v1605 = vadd.f32 %v1521, %v1601
        %s1606 = sld [smem:[#allocation4 + $0x74]]
        %v1607 = vstv %s1606
        %v1608 = vmul.f32 %v1607, %v1014
        %v1609 = vmul.f32 %v1607, %v1015
        %v1610 = vmul.f32 %v1607, %v1016
        %v1614 = vrot.slane %v1608, 2
        %v1615 = vrot.slane %v1609, 2
        %v1616 = vsel %vm1118, %v1614, %v1615
        %v1617 = vrot.slane %v1610, 2
        %v1618 = vsel %vm1118, %v1615, %v1617
        %1619 = vrot.lane.b32.xlu0 %v1616, 126
        %v1620 = vpop.permute.xlu0 %1619
        %1621 = vrot.lane.b32.xlu0 %v1618, 126
        %v1622 = vpop.permute.xlu0 %1621
        %v1625 = vadd.f32 %v1541, %v1620
        %v1626 = vadd.f32 %v1542, %v1622
        %v1627 = vld [vmem:[%s446] sm:$0xff]
        %v1628 = vld [vmem:[%s446 + $0x8] sm:$0xff]
        %v1629 = vld [vmem:[%s446 + $0x10] sm:$0x3]
        %s1630 = sld [smem:[#allocation4 + $0x9]]
        %v1631 = vstv %s1630
        %v1632 = vmul.f32 %v1631, %v1627
        %v1633 = vmul.f32 %v1631, %v1628
        %v1634 = vadd.f32 %v1562, %v1632
        %v1635 = vadd.f32 %v1563, %v1633
        %s1636 = sld [smem:[#allocation4 + $0x2d]]
        %v1637 = vstv %s1636
        %v1638 = vmul.f32 %v1637, %v1627
        %v1639 = vmul.f32 %v1637, %v1628
        %v1640 = vadd.f32 %v1583, %v1638
        %v1641 = vadd.f32 %v1584, %v1639
        %s1642 = sld [smem:[#allocation4 + $0x51]]
        %v1643 = vstv %s1642
        %v1644 = vmul.f32 %v1643, %v1627
        %v1645 = vmul.f32 %v1643, %v1628
        %v1646 = vadd.f32 %v1604, %v1644
        %v1647 = vadd.f32 %v1605, %v1645
        %s1648 = sld [smem:[#allocation4 + $0x75]]
        %v1649 = vstv %s1648
        %v1650 = vmul.f32 %v1649, %v1627
        %v1651 = vmul.f32 %v1649, %v1628
        %v1652 = vadd.f32 %v1625, %v1650
        %v1653 = vadd.f32 %v1626, %v1651
        %s1654 = sld [smem:[#allocation4 + $0xc]]
        %v1655 = vstv %s1654
        %v1656 = vmul.f32 %v1655, %v1627
        %v1657 = vmul.f32 %v1655, %v1628
        %v1658 = vmul.f32 %v1655, %v1629
        %v1662 = vrot.slane %v1656, 1
        %v1663 = vrot.slane %v1657, 1
        %v1664 = vsel %vm1049, %v1662, %v1663
        %v1665 = vrot.slane %v1658, 1
        %v1666 = vsel %vm1049, %v1663, %v1665
        %v1669 = vadd.f32 %v1634, %v1664
        %v1670 = vadd.f32 %v1635, %v1666
        %s1671 = sld [smem:[#allocation4 + $0x30]]
        %v1672 = vstv %s1671
        %v1673 = vmul.f32 %v1672, %v1627
        %v1674 = vmul.f32 %v1672, %v1628
        %v1675 = vmul.f32 %v1672, %v1629
        %v1679 = vrot.slane %v1673, 1
        %v1680 = vrot.slane %v1674, 1
        %v1681 = vsel %vm1049, %v1679, %v1680
        %v1682 = vrot.slane %v1675, 1
        %v1683 = vsel %vm1049, %v1680, %v1682
        %v1686 = vadd.f32 %v1640, %v1681
        %v1687 = vadd.f32 %v1641, %v1683
        %s1688 = sld [smem:[#allocation4 + $0x54]]
        %v1689 = vstv %s1688
        %v1690 = vmul.f32 %v1689, %v1627
        %v1691 = vmul.f32 %v1689, %v1628
        %v1692 = vmul.f32 %v1689, %v1629
        %v1696 = vrot.slane %v1690, 1
        %v1697 = vrot.slane %v1691, 1
        %v1698 = vsel %vm1049, %v1696, %v1697
        %v1699 = vrot.slane %v1692, 1
        %v1700 = vsel %vm1049, %v1697, %v1699
        %v1703 = vadd.f32 %v1646, %v1698
        %v1704 = vadd.f32 %v1647, %v1700
        %s1705 = sld [smem:[#allocation4 + $0x78]]
        %v1706 = vstv %s1705
        %v1707 = vmul.f32 %v1706, %v1627
        %v1708 = vmul.f32 %v1706, %v1628
        %v1709 = vmul.f32 %v1706, %v1629
        %v1713 = vrot.slane %v1707, 1
        %v1714 = vrot.slane %v1708, 1
        %v1715 = vsel %vm1049, %v1713, %v1714
        %v1716 = vrot.slane %v1709, 1
        %v1717 = vsel %vm1049, %v1714, %v1716
        %v1720 = vadd.f32 %v1652, %v1715
        %v1721 = vadd.f32 %v1653, %v1717
        %s1722 = sld [smem:[#allocation4 + $0xf]]
        %v1723 = vstv %s1722
        %v1724 = vmul.f32 %v1723, %v1627
        %v1725 = vmul.f32 %v1723, %v1628
        %v1726 = vmul.f32 %v1723, %v1629
        %v1730 = vrot.slane %v1724, 2
        %v1731 = vrot.slane %v1725, 2
        %v1732 = vsel %vm1118, %v1730, %v1731
        %v1733 = vrot.slane %v1726, 2
        %v1734 = vsel %vm1118, %v1731, %v1733
        %v1737 = vadd.f32 %v1669, %v1732
        %v1738 = vadd.f32 %v1670, %v1734
        %s1739 = sld [smem:[#allocation4 + $0x33]]
        %v1740 = vstv %s1739
        %v1741 = vmul.f32 %v1740, %v1627
        %v1742 = vmul.f32 %v1740, %v1628
        %v1743 = vmul.f32 %v1740, %v1629
        %v1747 = vrot.slane %v1741, 2
        %v1748 = vrot.slane %v1742, 2
        %v1749 = vsel %vm1118, %v1747, %v1748
        %v1750 = vrot.slane %v1743, 2
        %v1751 = vsel %vm1118, %v1748, %v1750
        %v1754 = vadd.f32 %v1686, %v1749
        %v1755 = vadd.f32 %v1687, %v1751
        %s1756 = sld [smem:[#allocation4 + $0x57]]
        %v1757 = vstv %s1756
        %v1758 = vmul.f32 %v1757, %v1627
        %v1759 = vmul.f32 %v1757, %v1628
        %v1760 = vmul.f32 %v1757, %v1629
        %v1764 = vrot.slane %v1758, 2
        %v1765 = vrot.slane %v1759, 2
        %v1766 = vsel %vm1118, %v1764, %v1765
        %v1767 = vrot.slane %v1760, 2
        %v1768 = vsel %vm1118, %v1765, %v1767
        %v1771 = vadd.f32 %v1703, %v1766
        %v1772 = vadd.f32 %v1704, %v1768
        %s1773 = sld [smem:[#allocation4 + $0x7b]]
        %v1774 = vstv %s1773
        %v1775 = vmul.f32 %v1774, %v1627
        %v1776 = vmul.f32 %v1774, %v1628
        %v1777 = vmul.f32 %v1774, %v1629
        %v1781 = vrot.slane %v1775, 2
        %v1782 = vrot.slane %v1776, 2
        %v1783 = vsel %vm1118, %v1781, %v1782
        %v1784 = vrot.slane %v1777, 2
        %v1785 = vsel %vm1118, %v1782, %v1784
        %v1788 = vadd.f32 %v1720, %v1783
        %v1789 = vadd.f32 %v1721, %v1785
        %s1790 = sld [smem:[#allocation4 + $0xa]]
        %v1791 = vstv %s1790
        %v1792 = vmul.f32 %v1791, %v1627
        %v1793 = vmul.f32 %v1791, %v1628
        %1796 = vrot.lane.b32.xlu0 %v1792, 127
        %v1797 = vpop.permute.xlu0 %1796
        %1798 = vrot.lane.b32.xlu0 %v1793, 127
        %v1799 = vpop.permute.xlu0 %1798
        %v1802 = vadd.f32 %v1737, %v1797
        %v1803 = vadd.f32 %v1738, %v1799
        %s1804 = sld [smem:[#allocation4 + $0x2e]]
        %v1805 = vstv %s1804
        %v1806 = vmul.f32 %v1805, %v1627
        %v1807 = vmul.f32 %v1805, %v1628
        %1810 = vrot.lane.b32.xlu0 %v1806, 127
        %v1811 = vpop.permute.xlu0 %1810
        %1812 = vrot.lane.b32.xlu0 %v1807, 127
        %v1813 = vpop.permute.xlu0 %1812
        %v1816 = vadd.f32 %v1754, %v1811
        %v1817 = vadd.f32 %v1755, %v1813
        %s1818 = sld [smem:[#allocation4 + $0x52]]
        %v1819 = vstv %s1818
        %v1820 = vmul.f32 %v1819, %v1627
        %v1821 = vmul.f32 %v1819, %v1628
        %1824 = vrot.lane.b32.xlu0 %v1820, 127
        %v1825 = vpop.permute.xlu0 %1824
        %1826 = vrot.lane.b32.xlu0 %v1821, 127
        %v1827 = vpop.permute.xlu0 %1826
        %v1830 = vadd.f32 %v1771, %v1825
        %v1831 = vadd.f32 %v1772, %v1827
        %s1832 = sld [smem:[#allocation4 + $0x76]]
        %v1833 = vstv %s1832
        %v1834 = vmul.f32 %v1833, %v1627
        %v1835 = vmul.f32 %v1833, %v1628
        %1838 = vrot.lane.b32.xlu0 %v1834, 127
        %v1839 = vpop.permute.xlu0 %1838
        %1840 = vrot.lane.b32.xlu0 %v1835, 127
        %v1841 = vpop.permute.xlu0 %1840
        %v1844 = vadd.f32 %v1788, %v1839
        %v1845 = vadd.f32 %v1789, %v1841
        %s1846 = sld [smem:[#allocation4 + $0xd]]
        %v1847 = vstv %s1846
        %v1848 = vmul.f32 %v1847, %v1627
        %v1849 = vmul.f32 %v1847, %v1628
        %v1850 = vmul.f32 %v1847, %v1629
        %v1854 = vrot.slane %v1848, 1
        %v1855 = vrot.slane %v1849, 1
        %v1856 = vsel %vm1049, %v1854, %v1855
        %v1857 = vrot.slane %v1850, 1
        %v1858 = vsel %vm1049, %v1855, %v1857
        %1859 = vrot.lane.b32.xlu0 %v1856, 127
        %v1860 = vpop.permute.xlu0 %1859
        %1861 = vrot.lane.b32.xlu0 %v1858, 127
        %v1862 = vpop.permute.xlu0 %1861
        %v1865 = vadd.f32 %v1802, %v1860
        %v1866 = vadd.f32 %v1803, %v1862
        %s1867 = sld [smem:[#allocation4 + $0x31]]
        %v1868 = vstv %s1867
        %v1869 = vmul.f32 %v1868, %v1627
        %v1870 = vmul.f32 %v1868, %v1628
        %v1871 = vmul.f32 %v1868, %v1629
        %v1875 = vrot.slane %v1869, 1
        %v1876 = vrot.slane %v1870, 1
        %v1877 = vsel %vm1049, %v1875, %v1876
        %v1878 = vrot.slane %v1871, 1
        %v1879 = vsel %vm1049, %v1876, %v1878
        %1880 = vrot.lane.b32.xlu0 %v1877, 127
        %v1881 = vpop.permute.xlu0 %1880
        %1882 = vrot.lane.b32.xlu0 %v1879, 127
        %v1883 = vpop.permute.xlu0 %1882
        %v1886 = vadd.f32 %v1816, %v1881
        %v1887 = vadd.f32 %v1817, %v1883
        %s1888 = sld [smem:[#allocation4 + $0x55]]
        %v1889 = vstv %s1888
        %v1890 = vmul.f32 %v1889, %v1627
        %v1891 = vmul.f32 %v1889, %v1628
        %v1892 = vmul.f32 %v1889, %v1629
        %v1896 = vrot.slane %v1890, 1
        %v1897 = vrot.slane %v1891, 1
        %v1898 = vsel %vm1049, %v1896, %v1897
        %v1899 = vrot.slane %v1892, 1
        %v1900 = vsel %vm1049, %v1897, %v1899
        %1901 = vrot.lane.b32.xlu0 %v1898, 127
        %v1902 = vpop.permute.xlu0 %1901
        %1903 = vrot.lane.b32.xlu0 %v1900, 127
        %v1904 = vpop.permute.xlu0 %1903
        %v1907 = vadd.f32 %v1830, %v1902
        %v1908 = vadd.f32 %v1831, %v1904
        %s1909 = sld [smem:[#allocation4 + $0x79]]
        %v1910 = vstv %s1909
        %v1911 = vmul.f32 %v1910, %v1627
        %v1912 = vmul.f32 %v1910, %v1628
        %v1913 = vmul.f32 %v1910, %v1629
        %v1917 = vrot.slane %v1911, 1
        %v1918 = vrot.slane %v1912, 1
        %v1919 = vsel %vm1049, %v1917, %v1918
        %v1920 = vrot.slane %v1913, 1
        %v1921 = vsel %vm1049, %v1918, %v1920
        %1922 = vrot.lane.b32.xlu0 %v1919, 127
        %v1923 = vpop.permute.xlu0 %1922
        %1924 = vrot.lane.b32.xlu0 %v1921, 127
        %v1925 = vpop.permute.xlu0 %1924
        %v1928 = vadd.f32 %v1844, %v1923
        %v1929 = vadd.f32 %v1845, %v1925
        %s1930 = sld [smem:[#allocation4 + $0x10]]
        %v1931 = vstv %s1930
        %v1932 = vmul.f32 %v1931, %v1627
        %v1933 = vmul.f32 %v1931, %v1628
        %v1934 = vmul.f32 %v1931, %v1629
        %v1938 = vrot.slane %v1932, 2
        %v1939 = vrot.slane %v1933, 2
        %v1940 = vsel %vm1118, %v1938, %v1939
        %v1941 = vrot.slane %v1934, 2
        %v1942 = vsel %vm1118, %v1939, %v1941
        %1943 = vrot.lane.b32.xlu0 %v1940, 127
        %v1944 = vpop.permute.xlu0 %1943
        %1945 = vrot.lane.b32.xlu0 %v1942, 127
        %v1946 = vpop.permute.xlu0 %1945
        %v1949 = vadd.f32 %v1865, %v1944
        %v1950 = vadd.f32 %v1866, %v1946
        %s1951 = sld [smem:[#allocation4 + $0x34]]
        %v1952 = vstv %s1951
        %v1953 = vmul.f32 %v1952, %v1627
        %v1954 = vmul.f32 %v1952, %v1628
        %v1955 = vmul.f32 %v1952, %v1629
        %v1959 = vrot.slane %v1953, 2
        %v1960 = vrot.slane %v1954, 2
        %v1961 = vsel %vm1118, %v1959, %v1960
        %v1962 = vrot.slane %v1955, 2
        %v1963 = vsel %vm1118, %v1960, %v1962
        %1964 = vrot.lane.b32.xlu0 %v1961, 127
        %v1965 = vpop.permute.xlu0 %1964
        %1966 = vrot.lane.b32.xlu0 %v1963, 127
        %v1967 = vpop.permute.xlu0 %1966
        %v1970 = vadd.f32 %v1886, %v1965
        %v1971 = vadd.f32 %v1887, %v1967
        %s1972 = sld [smem:[#allocation4 + $0x58]]
        %v1973 = vstv %s1972
        %v1974 = vmul.f32 %v1973, %v1627
        %v1975 = vmul.f32 %v1973, %v1628
        %v1976 = vmul.f32 %v1973, %v1629
        %v1980 = vrot.slane %v1974, 2
        %v1981 = vrot.slane %v1975, 2
        %v1982 = vsel %vm1118, %v1980, %v1981
        %v1983 = vrot.slane %v1976, 2
        %v1984 = vsel %vm1118, %v1981, %v1983
        %1985 = vrot.lane.b32.xlu0 %v1982, 127
        %v1986 = vpop.permute.xlu0 %1985
        %1987 = vrot.lane.b32.xlu0 %v1984, 127
        %v1988 = vpop.permute.xlu0 %1987
        %v1991 = vadd.f32 %v1907, %v1986
        %v1992 = vadd.f32 %v1908, %v1988
        %s1993 = sld [smem:[#allocation4 + $0x7c]]
        %v1994 = vstv %s1993
        %v1995 = vmul.f32 %v1994, %v1627
        %v1996 = vmul.f32 %v1994, %v1628
        %v1997 = vmul.f32 %v1994, %v1629
        %v2001 = vrot.slane %v1995, 2
        %v2002 = vrot.slane %v1996, 2
        %v2003 = vsel %vm1118, %v2001, %v2002
        %v2004 = vrot.slane %v1997, 2
        %v2005 = vsel %vm1118, %v2002, %v2004
        %2006 = vrot.lane.b32.xlu0 %v2003, 127
        %v2007 = vpop.permute.xlu0 %2006
        %2008 = vrot.lane.b32.xlu0 %v2005, 127
        %v2009 = vpop.permute.xlu0 %2008
        %v2012 = vadd.f32 %v1928, %v2007
        %v2013 = vadd.f32 %v1929, %v2009
        %s2014 = sld [smem:[#allocation4 + $0xb]]
        %v2015 = vstv %s2014
        %v2016 = vmul.f32 %v2015, %v1627
        %v2017 = vmul.f32 %v2015, %v1628
        %2020 = vrot.lane.b32.xlu0 %v2016, 126
        %v2021 = vpop.permute.xlu0 %2020
        %2022 = vrot.lane.b32.xlu0 %v2017, 126
        %v2023 = vpop.permute.xlu0 %2022
        %v2026 = vadd.f32 %v1949, %v2021
        %v2027 = vadd.f32 %v1950, %v2023
        %s2028 = sld [smem:[#allocation4 + $0x2f]]
        %v2029 = vstv %s2028
        %v2030 = vmul.f32 %v2029, %v1627
        %v2031 = vmul.f32 %v2029, %v1628
        %2034 = vrot.lane.b32.xlu0 %v2030, 126
        %v2035 = vpop.permute.xlu0 %2034
        %2036 = vrot.lane.b32.xlu0 %v2031, 126
        %v2037 = vpop.permute.xlu0 %2036
        %v2040 = vadd.f32 %v1970, %v2035
        %v2041 = vadd.f32 %v1971, %v2037
        %s2042 = sld [smem:[#allocation4 + $0x53]]
        %v2043 = vstv %s2042
        %v2044 = vmul.f32 %v2043, %v1627
        %v2045 = vmul.f32 %v2043, %v1628
        %2048 = vrot.lane.b32.xlu0 %v2044, 126
        %v2049 = vpop.permute.xlu0 %2048
        %2050 = vrot.lane.b32.xlu0 %v2045, 126
        %v2051 = vpop.permute.xlu0 %2050
        %v2054 = vadd.f32 %v1991, %v2049
        %v2055 = vadd.f32 %v1992, %v2051
        %s2056 = sld [smem:[#allocation4 + $0x77]]
        %v2057 = vstv %s2056
        %v2058 = vmul.f32 %v2057, %v1627
        %v2059 = vmul.f32 %v2057, %v1628
        %2062 = vrot.lane.b32.xlu0 %v2058, 126
        %v2063 = vpop.permute.xlu0 %2062
        %2064 = vrot.lane.b32.xlu0 %v2059, 126
        %v2065 = vpop.permute.xlu0 %2064
        %v2068 = vadd.f32 %v2012, %v2063
        %v2069 = vadd.f32 %v2013, %v2065
        %s2070 = sld [smem:[#allocation4 + $0xe]]
        %v2071 = vstv %s2070
        %v2072 = vmul.f32 %v2071, %v1627
        %v2073 = vmul.f32 %v2071, %v1628
        %v2074 = vmul.f32 %v2071, %v1629
        %v2078 = vrot.slane %v2072, 1
        %v2079 = vrot.slane %v2073, 1
        %v2080 = vsel %vm1049, %v2078, %v2079
        %v2081 = vrot.slane %v2074, 1
        %v2082 = vsel %vm1049, %v2079, %v2081
        %2083 = vrot.lane.b32.xlu0 %v2080, 126
        %v2084 = vpop.permute.xlu0 %2083
        %2085 = vrot.lane.b32.xlu0 %v2082, 126
        %v2086 = vpop.permute.xlu0 %2085
        %v2089 = vadd.f32 %v2026, %v2084
        %v2090 = vadd.f32 %v2027, %v2086
        %s2091 = sld [smem:[#allocation4 + $0x32]]
        %v2092 = vstv %s2091
        %v2093 = vmul.f32 %v2092, %v1627
        %v2094 = vmul.f32 %v2092, %v1628
        %v2095 = vmul.f32 %v2092, %v1629
        %v2099 = vrot.slane %v2093, 1
        %v2100 = vrot.slane %v2094, 1
        %v2101 = vsel %vm1049, %v2099, %v2100
        %v2102 = vrot.slane %v2095, 1
        %v2103 = vsel %vm1049, %v2100, %v2102
        %2104 = vrot.lane.b32.xlu0 %v2101, 126
        %v2105 = vpop.permute.xlu0 %2104
        %2106 = vrot.lane.b32.xlu0 %v2103, 126
        %v2107 = vpop.permute.xlu0 %2106
        %v2110 = vadd.f32 %v2040, %v2105
        %v2111 = vadd.f32 %v2041, %v2107
        %s2112 = sld [smem:[#allocation4 + $0x56]]
        %v2113 = vstv %s2112
        %v2114 = vmul.f32 %v2113, %v1627
        %v2115 = vmul.f32 %v2113, %v1628
        %v2116 = vmul.f32 %v2113, %v1629
        %v2120 = vrot.slane %v2114, 1
        %v2121 = vrot.slane %v2115, 1
        %v2122 = vsel %vm1049, %v2120, %v2121
        %v2123 = vrot.slane %v2116, 1
        %v2124 = vsel %vm1049, %v2121, %v2123
        %2125 = vrot.lane.b32.xlu0 %v2122, 126
        %v2126 = vpop.permute.xlu0 %2125
        %2127 = vrot.lane.b32.xlu0 %v2124, 126
        %v2128 = vpop.permute.xlu0 %2127
        %v2131 = vadd.f32 %v2054, %v2126
        %v2132 = vadd.f32 %v2055, %v2128
        %s2133 = sld [smem:[#allocation4 + $0x7a]]
        %v2134 = vstv %s2133
        %v2135 = vmul.f32 %v2134, %v1627
        %v2136 = vmul.f32 %v2134, %v1628
        %v2137 = vmul.f32 %v2134, %v1629
        %v2141 = vrot.slane %v2135, 1
        %v2142 = vrot.slane %v2136, 1
        %v2143 = vsel %vm1049, %v2141, %v2142
        %v2144 = vrot.slane %v2137, 1
        %v2145 = vsel %vm1049, %v2142, %v2144
        %2146 = vrot.lane.b32.xlu0 %v2143, 126
        %v2147 = vpop.permute.xlu0 %2146
        %2148 = vrot.lane.b32.xlu0 %v2145, 126
        %v2149 = vpop.permute.xlu0 %2148
        %v2152 = vadd.f32 %v2068, %v2147
        %v2153 = vadd.f32 %v2069, %v2149
        %s2154 = sld [smem:[#allocation4 + $0x11]]
        %v2155 = vstv %s2154
        %v2156 = vmul.f32 %v2155, %v1627
        %v2157 = vmul.f32 %v2155, %v1628
        %v2158 = vmul.f32 %v2155, %v1629
        %v2162 = vrot.slane %v2156, 2
        %v2163 = vrot.slane %v2157, 2
        %v2164 = vsel %vm1118, %v2162, %v2163
        %v2165 = vrot.slane %v2158, 2
        %v2166 = vsel %vm1118, %v2163, %v2165
        %2167 = vrot.lane.b32.xlu0 %v2164, 126
        %v2168 = vpop.permute.xlu0 %2167
        %2169 = vrot.lane.b32.xlu0 %v2166, 126
        %v2170 = vpop.permute.xlu0 %2169
        %v2173 = vadd.f32 %v2089, %v2168
        %v2174 = vadd.f32 %v2090, %v2170
        %s2175 = sld [smem:[#allocation4 + $0x35]]
        %v2176 = vstv %s2175
        %v2177 = vmul.f32 %v2176, %v1627
        %v2178 = vmul.f32 %v2176, %v1628
        %v2179 = vmul.f32 %v2176, %v1629
        %v2183 = vrot.slane %v2177, 2
        %v2184 = vrot.slane %v2178, 2
        %v2185 = vsel %vm1118, %v2183, %v2184
        %v2186 = vrot.slane %v2179, 2
        %v2187 = vsel %vm1118, %v2184, %v2186
        %2188 = vrot.lane.b32.xlu0 %v2185, 126
        %v2189 = vpop.permute.xlu0 %2188
        %2190 = vrot.lane.b32.xlu0 %v2187, 126
        %v2191 = vpop.permute.xlu0 %2190
        %v2194 = vadd.f32 %v2110, %v2189
        %v2195 = vadd.f32 %v2111, %v2191
        %s2196 = sld [smem:[#allocation4 + $0x59]]
        %v2197 = vstv %s2196
        %v2198 = vmul.f32 %v2197, %v1627
        %v2199 = vmul.f32 %v2197, %v1628
        %v2200 = vmul.f32 %v2197, %v1629
        %v2204 = vrot.slane %v2198, 2
        %v2205 = vrot.slane %v2199, 2
        %v2206 = vsel %vm1118, %v2204, %v2205
        %v2207 = vrot.slane %v2200, 2
        %v2208 = vsel %vm1118, %v2205, %v2207
        %2209 = vrot.lane.b32.xlu0 %v2206, 126
        %v2210 = vpop.permute.xlu0 %2209
        %2211 = vrot.lane.b32.xlu0 %v2208, 126
        %v2212 = vpop.permute.xlu0 %2211
        %v2215 = vadd.f32 %v2131, %v2210
        %v2216 = vadd.f32 %v2132, %v2212
        %s2217 = sld [smem:[#allocation4 + $0x7d]]
        %v2218 = vstv %s2217
        %v2219 = vmul.f32 %v2218, %v1627
        %v2220 = vmul.f32 %v2218, %v1628
        %v2221 = vmul.f32 %v2218, %v1629
        %v2225 = vrot.slane %v2219, 2
        %v2226 = vrot.slane %v2220, 2
        %v2227 = vsel %vm1118, %v2225, %v2226
        %v2228 = vrot.slane %v2221, 2
        %v2229 = vsel %vm1118, %v2226, %v2228
        %2230 = vrot.lane.b32.xlu0 %v2227, 126
        %v2231 = vpop.permute.xlu0 %2230
        %2232 = vrot.lane.b32.xlu0 %v2229, 126
        %v2233 = vpop.permute.xlu0 %2232
        %v2236 = vadd.f32 %v2152, %v2231
        %v2237 = vadd.f32 %v2153, %v2233
        %v2238 = vld [vmem:[%s724] sm:$0xff]
        %v2239 = vld [vmem:[%s724 + $0x8] sm:$0xff]
        %v2240 = vld [vmem:[%s724 + $0x10] sm:$0x3]
        %s2241 = sld [smem:[#allocation4 + $0x12]]
        %v2242 = vstv %s2241
        %v2243 = vmul.f32 %v2242, %v2238
        %v2244 = vmul.f32 %v2242, %v2239
        %v2245 = vadd.f32 %v2173, %v2243
        %v2246 = vadd.f32 %v2174, %v2244
        %s2247 = sld [smem:[#allocation4 + $0x36]]
        %v2248 = vstv %s2247
        %v2249 = vmul.f32 %v2248, %v2238
        %v2250 = vmul.f32 %v2248, %v2239
        %v2251 = vadd.f32 %v2194, %v2249
        %v2252 = vadd.f32 %v2195, %v2250
        %s2253 = sld [smem:[#allocation4 + $0x5a]]
        %v2254 = vstv %s2253
        %v2255 = vmul.f32 %v2254, %v2238
        %v2256 = vmul.f32 %v2254, %v2239
        %v2257 = vadd.f32 %v2215, %v2255
        %v2258 = vadd.f32 %v2216, %v2256
        %s2259 = sld [smem:[#allocation4 + $0x7e]]
        %v2260 = vstv %s2259
        %v2261 = vmul.f32 %v2260, %v2238
        %v2262 = vmul.f32 %v2260, %v2239
        %v2263 = vadd.f32 %v2236, %v2261
        %v2264 = vadd.f32 %v2237, %v2262
        %s2265 = sld [smem:[#allocation4 + $0x15]]
        %v2266 = vstv %s2265
        %v2267 = vmul.f32 %v2266, %v2238
        %v2268 = vmul.f32 %v2266, %v2239
        %v2269 = vmul.f32 %v2266, %v2240
        %v2273 = vrot.slane %v2267, 1
        %v2274 = vrot.slane %v2268, 1
        %v2275 = vsel %vm1049, %v2273, %v2274
        %v2276 = vrot.slane %v2269, 1
        %v2277 = vsel %vm1049, %v2274, %v2276
        %v2280 = vadd.f32 %v2245, %v2275
        %v2281 = vadd.f32 %v2246, %v2277
        %s2282 = sld [smem:[#allocation4 + $0x39]]
        %v2283 = vstv %s2282
        %v2284 = vmul.f32 %v2283, %v2238
        %v2285 = vmul.f32 %v2283, %v2239
        %v2286 = vmul.f32 %v2283, %v2240
        %v2290 = vrot.slane %v2284, 1
        %v2291 = vrot.slane %v2285, 1
        %v2292 = vsel %vm1049, %v2290, %v2291
        %v2293 = vrot.slane %v2286, 1
        %v2294 = vsel %vm1049, %v2291, %v2293
        %v2297 = vadd.f32 %v2251, %v2292
        %v2298 = vadd.f32 %v2252, %v2294
        %s2299 = sld [smem:[#allocation4 + $0x5d]]
        %v2300 = vstv %s2299
        %v2301 = vmul.f32 %v2300, %v2238
        %v2302 = vmul.f32 %v2300, %v2239
        %v2303 = vmul.f32 %v2300, %v2240
        %v2307 = vrot.slane %v2301, 1
        %v2308 = vrot.slane %v2302, 1
        %v2309 = vsel %vm1049, %v2307, %v2308
        %v2310 = vrot.slane %v2303, 1
        %v2311 = vsel %vm1049, %v2308, %v2310
        %v2314 = vadd.f32 %v2257, %v2309
        %v2315 = vadd.f32 %v2258, %v2311
        %s2316 = sld [smem:[#allocation4 + $0x81]]
        %v2317 = vstv %s2316
        %v2318 = vmul.f32 %v2317, %v2238
        %v2319 = vmul.f32 %v2317, %v2239
        %v2320 = vmul.f32 %v2317, %v2240
        %v2324 = vrot.slane %v2318, 1
        %v2325 = vrot.slane %v2319, 1
        %v2326 = vsel %vm1049, %v2324, %v2325
        %v2327 = vrot.slane %v2320, 1
        %v2328 = vsel %vm1049, %v2325, %v2327
        %v2331 = vadd.f32 %v2263, %v2326
        %v2332 = vadd.f32 %v2264, %v2328
        %s2333 = sld [smem:[#allocation4 + $0x18]]
        %v2334 = vstv %s2333
        %v2335 = vmul.f32 %v2334, %v2238
        %v2336 = vmul.f32 %v2334, %v2239
        %v2337 = vmul.f32 %v2334, %v2240
        %v2341 = vrot.slane %v2335, 2
        %v2342 = vrot.slane %v2336, 2
        %v2343 = vsel %vm1118, %v2341, %v2342
        %v2344 = vrot.slane %v2337, 2
        %v2345 = vsel %vm1118, %v2342, %v2344
        %v2348 = vadd.f32 %v2280, %v2343
        %v2349 = vadd.f32 %v2281, %v2345
        %s2350 = sld [smem:[#allocation4 + $0x3c]]
        %v2351 = vstv %s2350
        %v2352 = vmul.f32 %v2351, %v2238
        %v2353 = vmul.f32 %v2351, %v2239
        %v2354 = vmul.f32 %v2351, %v2240
        %v2358 = vrot.slane %v2352, 2
        %v2359 = vrot.slane %v2353, 2
        %v2360 = vsel %vm1118, %v2358, %v2359
        %v2361 = vrot.slane %v2354, 2
        %v2362 = vsel %vm1118, %v2359, %v2361
        %v2365 = vadd.f32 %v2297, %v2360
        %v2366 = vadd.f32 %v2298, %v2362
        %s2367 = sld [smem:[#allocation4 + $0x60]]
        %v2368 = vstv %s2367
        %v2369 = vmul.f32 %v2368, %v2238
        %v2370 = vmul.f32 %v2368, %v2239
        %v2371 = vmul.f32 %v2368, %v2240
        %v2375 = vrot.slane %v2369, 2
        %v2376 = vrot.slane %v2370, 2
        %v2377 = vsel %vm1118, %v2375, %v2376
        %v2378 = vrot.slane %v2371, 2
        %v2379 = vsel %vm1118, %v2376, %v2378
        %v2382 = vadd.f32 %v2314, %v2377
        %v2383 = vadd.f32 %v2315, %v2379
        %s2384 = sld [smem:[#allocation4 + $0x84]]
        %v2385 = vstv %s2384
        %v2386 = vmul.f32 %v2385, %v2238
        %v2387 = vmul.f32 %v2385, %v2239
        %v2388 = vmul.f32 %v2385, %v2240
        %v2392 = vrot.slane %v2386, 2
        %v2393 = vrot.slane %v2387, 2
        %v2394 = vsel %vm1118, %v2392, %v2393
        %v2395 = vrot.slane %v2388, 2
        %v2396 = vsel %vm1118, %v2393, %v2395
        %v2399 = vadd.f32 %v2331, %v2394
        %v2400 = vadd.f32 %v2332, %v2396
        %s2401 = sld [smem:[#allocation4 + $0x13]]
        %v2402 = vstv %s2401
        %v2403 = vmul.f32 %v2402, %v2238
        %v2404 = vmul.f32 %v2402, %v2239
        %2407 = vrot.lane.b32.xlu0 %v2403, 127
        %v2408 = vpop.permute.xlu0 %2407
        %2409 = vrot.lane.b32.xlu0 %v2404, 127
        %v2410 = vpop.permute.xlu0 %2409
        %v2413 = vadd.f32 %v2348, %v2408
        %v2414 = vadd.f32 %v2349, %v2410
        %s2415 = sld [smem:[#allocation4 + $0x37]]
        %v2416 = vstv %s2415
        %v2417 = vmul.f32 %v2416, %v2238
        %v2418 = vmul.f32 %v2416, %v2239
        %2421 = vrot.lane.b32.xlu0 %v2417, 127
        %v2422 = vpop.permute.xlu0 %2421
        %2423 = vrot.lane.b32.xlu0 %v2418, 127
        %v2424 = vpop.permute.xlu0 %2423
        %v2427 = vadd.f32 %v2365, %v2422
        %v2428 = vadd.f32 %v2366, %v2424
        %s2429 = sld [smem:[#allocation4 + $0x5b]]
        %v2430 = vstv %s2429
        %v2431 = vmul.f32 %v2430, %v2238
        %v2432 = vmul.f32 %v2430, %v2239
        %2435 = vrot.lane.b32.xlu0 %v2431, 127
        %v2436 = vpop.permute.xlu0 %2435
        %2437 = vrot.lane.b32.xlu0 %v2432, 127
        %v2438 = vpop.permute.xlu0 %2437
        %v2441 = vadd.f32 %v2382, %v2436
        %v2442 = vadd.f32 %v2383, %v2438
        %s2443 = sld [smem:[#allocation4 + $0x7f]]
        %v2444 = vstv %s2443
        %v2445 = vmul.f32 %v2444, %v2238
        %v2446 = vmul.f32 %v2444, %v2239
        %2449 = vrot.lane.b32.xlu0 %v2445, 127
        %v2450 = vpop.permute.xlu0 %2449
        %2451 = vrot.lane.b32.xlu0 %v2446, 127
        %v2452 = vpop.permute.xlu0 %2451
        %v2455 = vadd.f32 %v2399, %v2450
        %v2456 = vadd.f32 %v2400, %v2452
        %s2457 = sld [smem:[#allocation4 + $0x16]]
        %v2458 = vstv %s2457
        %v2459 = vmul.f32 %v2458, %v2238
        %v2460 = vmul.f32 %v2458, %v2239
        %v2461 = vmul.f32 %v2458, %v2240
        %v2465 = vrot.slane %v2459, 1
        %v2466 = vrot.slane %v2460, 1
        %v2467 = vsel %vm1049, %v2465, %v2466
        %v2468 = vrot.slane %v2461, 1
        %v2469 = vsel %vm1049, %v2466, %v2468
        %2470 = vrot.lane.b32.xlu0 %v2467, 127
        %v2471 = vpop.permute.xlu0 %2470
        %2472 = vrot.lane.b32.xlu0 %v2469, 127
        %v2473 = vpop.permute.xlu0 %2472
        %v2476 = vadd.f32 %v2413, %v2471
        %v2477 = vadd.f32 %v2414, %v2473
        %s2478 = sld [smem:[#allocation4 + $0x3a]]
        %v2479 = vstv %s2478
        %v2480 = vmul.f32 %v2479, %v2238
        %v2481 = vmul.f32 %v2479, %v2239
        %v2482 = vmul.f32 %v2479, %v2240
        %v2486 = vrot.slane %v2480, 1
        %v2487 = vrot.slane %v2481, 1
        %v2488 = vsel %vm1049, %v2486, %v2487
        %v2489 = vrot.slane %v2482, 1
        %v2490 = vsel %vm1049, %v2487, %v2489
        %2491 = vrot.lane.b32.xlu0 %v2488, 127
        %v2492 = vpop.permute.xlu0 %2491
        %2493 = vrot.lane.b32.xlu0 %v2490, 127
        %v2494 = vpop.permute.xlu0 %2493
        %v2497 = vadd.f32 %v2427, %v2492
        %v2498 = vadd.f32 %v2428, %v2494
        %s2499 = sld [smem:[#allocation4 + $0x5e]]
        %v2500 = vstv %s2499
        %v2501 = vmul.f32 %v2500, %v2238
        %v2502 = vmul.f32 %v2500, %v2239
        %v2503 = vmul.f32 %v2500, %v2240
        %v2507 = vrot.slane %v2501, 1
        %v2508 = vrot.slane %v2502, 1
        %v2509 = vsel %vm1049, %v2507, %v2508
        %v2510 = vrot.slane %v2503, 1
        %v2511 = vsel %vm1049, %v2508, %v2510
        %2512 = vrot.lane.b32.xlu0 %v2509, 127
        %v2513 = vpop.permute.xlu0 %2512
        %2514 = vrot.lane.b32.xlu0 %v2511, 127
        %v2515 = vpop.permute.xlu0 %2514
        %v2518 = vadd.f32 %v2441, %v2513
        %v2519 = vadd.f32 %v2442, %v2515
        %s2520 = sld [smem:[#allocation4 + $0x82]]
        %v2521 = vstv %s2520
        %v2522 = vmul.f32 %v2521, %v2238
        %v2523 = vmul.f32 %v2521, %v2239
        %v2524 = vmul.f32 %v2521, %v2240
        %v2528 = vrot.slane %v2522, 1
        %v2529 = vrot.slane %v2523, 1
        %v2530 = vsel %vm1049, %v2528, %v2529
        %v2531 = vrot.slane %v2524, 1
        %v2532 = vsel %vm1049, %v2529, %v2531
        %2533 = vrot.lane.b32.xlu0 %v2530, 127
        %v2534 = vpop.permute.xlu0 %2533
        %2535 = vrot.lane.b32.xlu0 %v2532, 127
        %v2536 = vpop.permute.xlu0 %2535
        %v2539 = vadd.f32 %v2455, %v2534
        %v2540 = vadd.f32 %v2456, %v2536
        %s2541 = sld [smem:[#allocation4 + $0x19]]
        %v2542 = vstv %s2541
        %v2543 = vmul.f32 %v2542, %v2238
        %v2544 = vmul.f32 %v2542, %v2239
        %v2545 = vmul.f32 %v2542, %v2240
        %v2549 = vrot.slane %v2543, 2
        %v2550 = vrot.slane %v2544, 2
        %v2551 = vsel %vm1118, %v2549, %v2550
        %v2552 = vrot.slane %v2545, 2
        %v2553 = vsel %vm1118, %v2550, %v2552
        %2554 = vrot.lane.b32.xlu0 %v2551, 127
        %v2555 = vpop.permute.xlu0 %2554
        %2556 = vrot.lane.b32.xlu0 %v2553, 127
        %v2557 = vpop.permute.xlu0 %2556
        %v2560 = vadd.f32 %v2476, %v2555
        %v2561 = vadd.f32 %v2477, %v2557
        %s2562 = sld [smem:[#allocation4 + $0x3d]]
        %v2563 = vstv %s2562
        %v2564 = vmul.f32 %v2563, %v2238
        %v2565 = vmul.f32 %v2563, %v2239
        %v2566 = vmul.f32 %v2563, %v2240
        %v2570 = vrot.slane %v2564, 2
        %v2571 = vrot.slane %v2565, 2
        %v2572 = vsel %vm1118, %v2570, %v2571
        %v2573 = vrot.slane %v2566, 2
        %v2574 = vsel %vm1118, %v2571, %v2573
        %2575 = vrot.lane.b32.xlu0 %v2572, 127
        %v2576 = vpop.permute.xlu0 %2575
        %2577 = vrot.lane.b32.xlu0 %v2574, 127
        %v2578 = vpop.permute.xlu0 %2577
        %v2581 = vadd.f32 %v2497, %v2576
        %v2582 = vadd.f32 %v2498, %v2578
        %s2583 = sld [smem:[#allocation4 + $0x61]]
        %v2584 = vstv %s2583
        %v2585 = vmul.f32 %v2584, %v2238
        %v2586 = vmul.f32 %v2584, %v2239
        %v2587 = vmul.f32 %v2584, %v2240
        %v2591 = vrot.slane %v2585, 2
        %v2592 = vrot.slane %v2586, 2
        %v2593 = vsel %vm1118, %v2591, %v2592
        %v2594 = vrot.slane %v2587, 2
        %v2595 = vsel %vm1118, %v2592, %v2594
        %2596 = vrot.lane.b32.xlu0 %v2593, 127
        %v2597 = vpop.permute.xlu0 %2596
        %2598 = vrot.lane.b32.xlu0 %v2595, 127
        %v2599 = vpop.permute.xlu0 %2598
        %v2602 = vadd.f32 %v2518, %v2597
        %v2603 = vadd.f32 %v2519, %v2599
        %s2604 = sld [smem:[#allocation4 + $0x85]]
        %v2605 = vstv %s2604
        %v2606 = vmul.f32 %v2605, %v2238
        %v2607 = vmul.f32 %v2605, %v2239
        %v2608 = vmul.f32 %v2605, %v2240
        %v2612 = vrot.slane %v2606, 2
        %v2613 = vrot.slane %v2607, 2
        %v2614 = vsel %vm1118, %v2612, %v2613
        %v2615 = vrot.slane %v2608, 2
        %v2616 = vsel %vm1118, %v2613, %v2615
        %2617 = vrot.lane.b32.xlu0 %v2614, 127
        %v2618 = vpop.permute.xlu0 %2617
        %2619 = vrot.lane.b32.xlu0 %v2616, 127
        %v2620 = vpop.permute.xlu0 %2619
        %v2623 = vadd.f32 %v2539, %v2618
        %v2624 = vadd.f32 %v2540, %v2620
        %s2625 = sld [smem:[#allocation4 + $0x14]]
        %v2626 = vstv %s2625
        %v2627 = vmul.f32 %v2626, %v2238
        %v2628 = vmul.f32 %v2626, %v2239
        %2631 = vrot.lane.b32.xlu0 %v2627, 126
        %v2632 = vpop.permute.xlu0 %2631
        %2633 = vrot.lane.b32.xlu0 %v2628, 126
        %v2634 = vpop.permute.xlu0 %2633
        %v2637 = vadd.f32 %v2560, %v2632
        %v2638 = vadd.f32 %v2561, %v2634
        %s2639 = sld [smem:[#allocation4 + $0x38]]
        %v2640 = vstv %s2639
        %v2641 = vmul.f32 %v2640, %v2238
        %v2642 = vmul.f32 %v2640, %v2239
        %2645 = vrot.lane.b32.xlu0 %v2641, 126
        %v2646 = vpop.permute.xlu0 %2645
        %2647 = vrot.lane.b32.xlu0 %v2642, 126
        %v2648 = vpop.permute.xlu0 %2647
        %v2651 = vadd.f32 %v2581, %v2646
        %v2652 = vadd.f32 %v2582, %v2648
        %s2653 = sld [smem:[#allocation4 + $0x5c]]
        %v2654 = vstv %s2653
        %v2655 = vmul.f32 %v2654, %v2238
        %v2656 = vmul.f32 %v2654, %v2239
        %2659 = vrot.lane.b32.xlu0 %v2655, 126
        %v2660 = vpop.permute.xlu0 %2659
        %2661 = vrot.lane.b32.xlu0 %v2656, 126
        %v2662 = vpop.permute.xlu0 %2661
        %v2665 = vadd.f32 %v2602, %v2660
        %v2666 = vadd.f32 %v2603, %v2662
        %s2667 = sld [smem:[#allocation4 + $0x80]]
        %v2668 = vstv %s2667
        %v2669 = vmul.f32 %v2668, %v2238
        %v2670 = vmul.f32 %v2668, %v2239
        %2673 = vrot.lane.b32.xlu0 %v2669, 126
        %v2674 = vpop.permute.xlu0 %2673
        %2675 = vrot.lane.b32.xlu0 %v2670, 126
        %v2676 = vpop.permute.xlu0 %2675
        %v2679 = vadd.f32 %v2623, %v2674
        %v2680 = vadd.f32 %v2624, %v2676
        %s2681 = sld [smem:[#allocation4 + $0x17]]
        %v2682 = vstv %s2681
        %v2683 = vmul.f32 %v2682, %v2238
        %v2684 = vmul.f32 %v2682, %v2239
        %v2685 = vmul.f32 %v2682, %v2240
        %v2689 = vrot.slane %v2683, 1
        %v2690 = vrot.slane %v2684, 1
        %v2691 = vsel %vm1049, %v2689, %v2690
        %v2692 = vrot.slane %v2685, 1
        %v2693 = vsel %vm1049, %v2690, %v2692
        %2694 = vrot.lane.b32.xlu0 %v2691, 126
        %v2695 = vpop.permute.xlu0 %2694
        %2696 = vrot.lane.b32.xlu0 %v2693, 126
        %v2697 = vpop.permute.xlu0 %2696
        %v2700 = vadd.f32 %v2637, %v2695
        %v2701 = vadd.f32 %v2638, %v2697
        %s2702 = sld [smem:[#allocation4 + $0x3b]]
        %v2703 = vstv %s2702
        %v2704 = vmul.f32 %v2703, %v2238
        %v2705 = vmul.f32 %v2703, %v2239
        %v2706 = vmul.f32 %v2703, %v2240
        %v2710 = vrot.slane %v2704, 1
        %v2711 = vrot.slane %v2705, 1
        %v2712 = vsel %vm1049, %v2710, %v2711
        %v2713 = vrot.slane %v2706, 1
        %v2714 = vsel %vm1049, %v2711, %v2713
        %2715 = vrot.lane.b32.xlu0 %v2712, 126
        %v2716 = vpop.permute.xlu0 %2715
        %2717 = vrot.lane.b32.xlu0 %v2714, 126
        %v2718 = vpop.permute.xlu0 %2717
        %v2721 = vadd.f32 %v2651, %v2716
        %v2722 = vadd.f32 %v2652, %v2718
        %s2723 = sld [smem:[#allocation4 + $0x5f]]
        %v2724 = vstv %s2723
        %v2725 = vmul.f32 %v2724, %v2238
        %v2726 = vmul.f32 %v2724, %v2239
        %v2727 = vmul.f32 %v2724, %v2240
        %v2731 = vrot.slane %v2725, 1
        %v2732 = vrot.slane %v2726, 1
        %v2733 = vsel %vm1049, %v2731, %v2732
        %v2734 = vrot.slane %v2727, 1
        %v2735 = vsel %vm1049, %v2732, %v2734
        %2736 = vrot.lane.b32.xlu0 %v2733, 126
        %v2737 = vpop.permute.xlu0 %2736
        %2738 = vrot.lane.b32.xlu0 %v2735, 126
        %v2739 = vpop.permute.xlu0 %2738
        %v2742 = vadd.f32 %v2665, %v2737
        %v2743 = vadd.f32 %v2666, %v2739
        %s2744 = sld [smem:[#allocation4 + $0x83]]
        %v2745 = vstv %s2744
        %v2746 = vmul.f32 %v2745, %v2238
        %v2747 = vmul.f32 %v2745, %v2239
        %v2748 = vmul.f32 %v2745, %v2240
        %v2752 = vrot.slane %v2746, 1
        %v2753 = vrot.slane %v2747, 1
        %v2754 = vsel %vm1049, %v2752, %v2753
        %v2755 = vrot.slane %v2748, 1
        %v2756 = vsel %vm1049, %v2753, %v2755
        %2757 = vrot.lane.b32.xlu0 %v2754, 126
        %v2758 = vpop.permute.xlu0 %2757
        %2759 = vrot.lane.b32.xlu0 %v2756, 126
        %v2760 = vpop.permute.xlu0 %2759
        %v2763 = vadd.f32 %v2679, %v2758
        %v2764 = vadd.f32 %v2680, %v2760
        %s2765 = sld [smem:[#allocation4 + $0x1a]]
        %v2766 = vstv %s2765
        %v2767 = vmul.f32 %v2766, %v2238
        %v2768 = vmul.f32 %v2766, %v2239
        %v2769 = vmul.f32 %v2766, %v2240
        %v2773 = vrot.slane %v2767, 2
        %v2774 = vrot.slane %v2768, 2
        %v2775 = vsel %vm1118, %v2773, %v2774
        %v2776 = vrot.slane %v2769, 2
        %v2777 = vsel %vm1118, %v2774, %v2776
        %2778 = vrot.lane.b32.xlu0 %v2775, 126
        %v2779 = vpop.permute.xlu0 %2778
        %2780 = vrot.lane.b32.xlu0 %v2777, 126
        %v2781 = vpop.permute.xlu0 %2780
        %v2784 = vadd.f32 %v2700, %v2779
        %v2785 = vadd.f32 %v2701, %v2781
        %s2786 = sld [smem:[#allocation4 + $0x3e]]
        %v2787 = vstv %s2786
        %v2788 = vmul.f32 %v2787, %v2238
        %v2789 = vmul.f32 %v2787, %v2239
        %v2790 = vmul.f32 %v2787, %v2240
        %v2794 = vrot.slane %v2788, 2
        %v2795 = vrot.slane %v2789, 2
        %v2796 = vsel %vm1118, %v2794, %v2795
        %v2797 = vrot.slane %v2790, 2
        %v2798 = vsel %vm1118, %v2795, %v2797
        %2799 = vrot.lane.b32.xlu0 %v2796, 126
        %v2800 = vpop.permute.xlu0 %2799
        %2801 = vrot.lane.b32.xlu0 %v2798, 126
        %v2802 = vpop.permute.xlu0 %2801
        %v2805 = vadd.f32 %v2721, %v2800
        %v2806 = vadd.f32 %v2722, %v2802
        %s2807 = sld [smem:[#allocation4 + $0x62]]
        %v2808 = vstv %s2807
        %v2809 = vmul.f32 %v2808, %v2238
        %v2810 = vmul.f32 %v2808, %v2239
        %v2811 = vmul.f32 %v2808, %v2240
        %v2815 = vrot.slane %v2809, 2
        %v2816 = vrot.slane %v2810, 2
        %v2817 = vsel %vm1118, %v2815, %v2816
        %v2818 = vrot.slane %v2811, 2
        %v2819 = vsel %vm1118, %v2816, %v2818
        %2820 = vrot.lane.b32.xlu0 %v2817, 126
        %v2821 = vpop.permute.xlu0 %2820
        %2822 = vrot.lane.b32.xlu0 %v2819, 126
        %v2823 = vpop.permute.xlu0 %2822
        %v2826 = vadd.f32 %v2742, %v2821
        %v2827 = vadd.f32 %v2743, %v2823
        %s2828 = sld [smem:[#allocation4 + $0x86]]
        %v2829 = vstv %s2828
        %v2830 = vmul.f32 %v2829, %v2238
        %v2831 = vmul.f32 %v2829, %v2239
        %v2832 = vmul.f32 %v2829, %v2240
        %v2836 = vrot.slane %v2830, 2
        %v2837 = vrot.slane %v2831, 2
        %v2838 = vsel %vm1118, %v2836, %v2837
        %v2839 = vrot.slane %v2832, 2
        %v2840 = vsel %vm1118, %v2837, %v2839
        %2841 = vrot.lane.b32.xlu0 %v2838, 126
        %v2842 = vpop.permute.xlu0 %2841
        %2843 = vrot.lane.b32.xlu0 %v2840, 126
        %v2844 = vpop.permute.xlu0 %2843
        %v2847 = vadd.f32 %v2763, %v2842
        %v2848 = vadd.f32 %v2764, %v2844
        %v2849 = vld [vmem:[%s1003] sm:$0xff]
        %v2850 = vld [vmem:[%s1003 + $0x8] sm:$0xff]
        %v2851 = vld [vmem:[%s1003 + $0x10] sm:$0x3]
        %s2852 = sld [smem:[#allocation4 + $0x1b]]
        %v2853 = vstv %s2852
        %v2854 = vmul.f32 %v2853, %v2849
        %v2855 = vmul.f32 %v2853, %v2850
        %v2856 = vadd.f32 %v2784, %v2854
        %v2857 = vadd.f32 %v2785, %v2855
        %s2858 = sld [smem:[#allocation4 + $0x3f]]
        %v2859 = vstv %s2858
        %v2860 = vmul.f32 %v2859, %v2849
        %v2861 = vmul.f32 %v2859, %v2850
        %v2862 = vadd.f32 %v2805, %v2860
        %v2863 = vadd.f32 %v2806, %v2861
        %s2864 = sld [smem:[#allocation4 + $0x63]]
        %v2865 = vstv %s2864
        %v2866 = vmul.f32 %v2865, %v2849
        %v2867 = vmul.f32 %v2865, %v2850
        %v2868 = vadd.f32 %v2826, %v2866
        %v2869 = vadd.f32 %v2827, %v2867
        %s2870 = sld [smem:[#allocation4 + $0x87]]
        %v2871 = vstv %s2870
        %v2872 = vmul.f32 %v2871, %v2849
        %v2873 = vmul.f32 %v2871, %v2850
        %v2874 = vadd.f32 %v2847, %v2872
        %v2875 = vadd.f32 %v2848, %v2873
        %s2876 = sld [smem:[#allocation4 + $0x1e]]
        %v2877 = vstv %s2876
        %v2878 = vmul.f32 %v2877, %v2849
        %v2879 = vmul.f32 %v2877, %v2850
        %v2880 = vmul.f32 %v2877, %v2851
        %v2884 = vrot.slane %v2878, 1
        %v2885 = vrot.slane %v2879, 1
        %v2886 = vsel %vm1049, %v2884, %v2885
        %v2887 = vrot.slane %v2880, 1
        %v2888 = vsel %vm1049, %v2885, %v2887
        %v2891 = vadd.f32 %v2856, %v2886
        %v2892 = vadd.f32 %v2857, %v2888
        %s2893 = sld [smem:[#allocation4 + $0x42]]
        %v2894 = vstv %s2893
        %v2895 = vmul.f32 %v2894, %v2849
        %v2896 = vmul.f32 %v2894, %v2850
        %v2897 = vmul.f32 %v2894, %v2851
        %v2901 = vrot.slane %v2895, 1
        %v2902 = vrot.slane %v2896, 1
        %v2903 = vsel %vm1049, %v2901, %v2902
        %v2904 = vrot.slane %v2897, 1
        %v2905 = vsel %vm1049, %v2902, %v2904
        %v2908 = vadd.f32 %v2862, %v2903
        %v2909 = vadd.f32 %v2863, %v2905
        %s2910 = sld [smem:[#allocation4 + $0x66]]
        %v2911 = vstv %s2910
        %v2912 = vmul.f32 %v2911, %v2849
        %v2913 = vmul.f32 %v2911, %v2850
        %v2914 = vmul.f32 %v2911, %v2851
        %v2918 = vrot.slane %v2912, 1
        %v2919 = vrot.slane %v2913, 1
        %v2920 = vsel %vm1049, %v2918, %v2919
        %v2921 = vrot.slane %v2914, 1
        %v2922 = vsel %vm1049, %v2919, %v2921
        %v2925 = vadd.f32 %v2868, %v2920
        %v2926 = vadd.f32 %v2869, %v2922
        %s2927 = sld [smem:[#allocation4 + $0x8a]]
        %v2928 = vstv %s2927
        %v2929 = vmul.f32 %v2928, %v2849
        %v2930 = vmul.f32 %v2928, %v2850
        %v2931 = vmul.f32 %v2928, %v2851
        %v2935 = vrot.slane %v2929, 1
        %v2936 = vrot.slane %v2930, 1
        %v2937 = vsel %vm1049, %v2935, %v2936
        %v2938 = vrot.slane %v2931, 1
        %v2939 = vsel %vm1049, %v2936, %v2938
        %v2942 = vadd.f32 %v2874, %v2937
        %v2943 = vadd.f32 %v2875, %v2939
        %s2944 = sld [smem:[#allocation4 + $0x21]]
        %v2945 = vstv %s2944
        %v2946 = vmul.f32 %v2945, %v2849
        %v2947 = vmul.f32 %v2945, %v2850
        %v2948 = vmul.f32 %v2945, %v2851
        %v2952 = vrot.slane %v2946, 2
        %v2953 = vrot.slane %v2947, 2
        %v2954 = vsel %vm1118, %v2952, %v2953
        %v2955 = vrot.slane %v2948, 2
        %v2956 = vsel %vm1118, %v2953, %v2955
        %v2959 = vadd.f32 %v2891, %v2954
        %v2960 = vadd.f32 %v2892, %v2956
        %s2961 = sld [smem:[#allocation4 + $0x45]]
        %v2962 = vstv %s2961
        %v2963 = vmul.f32 %v2962, %v2849
        %v2964 = vmul.f32 %v2962, %v2850
        %v2965 = vmul.f32 %v2962, %v2851
        %v2969 = vrot.slane %v2963, 2
        %v2970 = vrot.slane %v2964, 2
        %v2971 = vsel %vm1118, %v2969, %v2970
        %v2972 = vrot.slane %v2965, 2
        %v2973 = vsel %vm1118, %v2970, %v2972
        %v2976 = vadd.f32 %v2908, %v2971
        %v2977 = vadd.f32 %v2909, %v2973
        %s2978 = sld [smem:[#allocation4 + $0x69]]
        %v2979 = vstv %s2978
        %v2980 = vmul.f32 %v2979, %v2849
        %v2981 = vmul.f32 %v2979, %v2850
        %v2982 = vmul.f32 %v2979, %v2851
        %v2986 = vrot.slane %v2980, 2
        %v2987 = vrot.slane %v2981, 2
        %v2988 = vsel %vm1118, %v2986, %v2987
        %v2989 = vrot.slane %v2982, 2
        %v2990 = vsel %vm1118, %v2987, %v2989
        %v2993 = vadd.f32 %v2925, %v2988
        %v2994 = vadd.f32 %v2926, %v2990
        %s2995 = sld [smem:[#allocation4 + $0x8d]]
        %v2996 = vstv %s2995
        %v2997 = vmul.f32 %v2996, %v2849
        %v2998 = vmul.f32 %v2996, %v2850
        %v2999 = vmul.f32 %v2996, %v2851
        %v3003 = vrot.slane %v2997, 2
        %v3004 = vrot.slane %v2998, 2
        %v3005 = vsel %vm1118, %v3003, %v3004
        %v3006 = vrot.slane %v2999, 2
        %v3007 = vsel %vm1118, %v3004, %v3006
        %v3010 = vadd.f32 %v2942, %v3005
        %v3011 = vadd.f32 %v2943, %v3007
        %s3012 = sld [smem:[#allocation4 + $0x1c]]
        %v3013 = vstv %s3012
        %v3014 = vmul.f32 %v3013, %v2849
        %v3015 = vmul.f32 %v3013, %v2850
        %3018 = vrot.lane.b32.xlu0 %v3014, 127
        %v3019 = vpop.permute.xlu0 %3018
        %3020 = vrot.lane.b32.xlu0 %v3015, 127
        %v3021 = vpop.permute.xlu0 %3020
        %v3024 = vadd.f32 %v2959, %v3019
        %v3025 = vadd.f32 %v2960, %v3021
        %s3026 = sld [smem:[#allocation4 + $0x40]]
        %v3027 = vstv %s3026
        %v3028 = vmul.f32 %v3027, %v2849
        %v3029 = vmul.f32 %v3027, %v2850
        %3032 = vrot.lane.b32.xlu0 %v3028, 127
        %v3033 = vpop.permute.xlu0 %3032
        %3034 = vrot.lane.b32.xlu0 %v3029, 127
        %v3035 = vpop.permute.xlu0 %3034
        %v3038 = vadd.f32 %v2976, %v3033
        %v3039 = vadd.f32 %v2977, %v3035
        %s3040 = sld [smem:[#allocation4 + $0x64]]
        %v3041 = vstv %s3040
        %v3042 = vmul.f32 %v3041, %v2849
        %v3043 = vmul.f32 %v3041, %v2850
        %3046 = vrot.lane.b32.xlu0 %v3042, 127
        %v3047 = vpop.permute.xlu0 %3046
        %3048 = vrot.lane.b32.xlu0 %v3043, 127
        %v3049 = vpop.permute.xlu0 %3048
        %v3052 = vadd.f32 %v2993, %v3047
        %v3053 = vadd.f32 %v2994, %v3049
        %s3054 = sld [smem:[#allocation4 + $0x88]]
        %v3055 = vstv %s3054
        %v3056 = vmul.f32 %v3055, %v2849
        %v3057 = vmul.f32 %v3055, %v2850
        %3060 = vrot.lane.b32.xlu0 %v3056, 127
        %v3061 = vpop.permute.xlu0 %3060
        %3062 = vrot.lane.b32.xlu0 %v3057, 127
        %v3063 = vpop.permute.xlu0 %3062
        %v3066 = vadd.f32 %v3010, %v3061
        %v3067 = vadd.f32 %v3011, %v3063
        %s3068 = sld [smem:[#allocation4 + $0x1f]]
        %v3069 = vstv %s3068
        %v3070 = vmul.f32 %v3069, %v2849
        %v3071 = vmul.f32 %v3069, %v2850
        %v3072 = vmul.f32 %v3069, %v2851
        %v3076 = vrot.slane %v3070, 1
        %v3077 = vrot.slane %v3071, 1
        %v3078 = vsel %vm1049, %v3076, %v3077
        %v3079 = vrot.slane %v3072, 1
        %v3080 = vsel %vm1049, %v3077, %v3079
        %3081 = vrot.lane.b32.xlu0 %v3078, 127
        %v3082 = vpop.permute.xlu0 %3081
        %3083 = vrot.lane.b32.xlu0 %v3080, 127
        %v3084 = vpop.permute.xlu0 %3083
        %v3087 = vadd.f32 %v3024, %v3082
        %v3088 = vadd.f32 %v3025, %v3084
        %s3089 = sld [smem:[#allocation4 + $0x43]]
        %v3090 = vstv %s3089
        %v3091 = vmul.f32 %v3090, %v2849
        %v3092 = vmul.f32 %v3090, %v2850
        %v3093 = vmul.f32 %v3090, %v2851
        %v3097 = vrot.slane %v3091, 1
        %v3098 = vrot.slane %v3092, 1
        %v3099 = vsel %vm1049, %v3097, %v3098
        %v3100 = vrot.slane %v3093, 1
        %v3101 = vsel %vm1049, %v3098, %v3100
        %3102 = vrot.lane.b32.xlu0 %v3099, 127
        %v3103 = vpop.permute.xlu0 %3102
        %3104 = vrot.lane.b32.xlu0 %v3101, 127
        %v3105 = vpop.permute.xlu0 %3104
        %v3108 = vadd.f32 %v3038, %v3103
        %v3109 = vadd.f32 %v3039, %v3105
        %s3110 = sld [smem:[#allocation4 + $0x67]]
        %v3111 = vstv %s3110
        %v3112 = vmul.f32 %v3111, %v2849
        %v3113 = vmul.f32 %v3111, %v2850
        %v3114 = vmul.f32 %v3111, %v2851
        %v3118 = vrot.slane %v3112, 1
        %v3119 = vrot.slane %v3113, 1
        %v3120 = vsel %vm1049, %v3118, %v3119
        %v3121 = vrot.slane %v3114, 1
        %v3122 = vsel %vm1049, %v3119, %v3121
        %3123 = vrot.lane.b32.xlu0 %v3120, 127
        %v3124 = vpop.permute.xlu0 %3123
        %3125 = vrot.lane.b32.xlu0 %v3122, 127
        %v3126 = vpop.permute.xlu0 %3125
        %v3129 = vadd.f32 %v3052, %v3124
        %v3130 = vadd.f32 %v3053, %v3126
        %s3131 = sld [smem:[#allocation4 + $0x8b]]
        %v3132 = vstv %s3131
        %v3133 = vmul.f32 %v3132, %v2849
        %v3134 = vmul.f32 %v3132, %v2850
        %v3135 = vmul.f32 %v3132, %v2851
        %v3139 = vrot.slane %v3133, 1
        %v3140 = vrot.slane %v3134, 1
        %v3141 = vsel %vm1049, %v3139, %v3140
        %v3142 = vrot.slane %v3135, 1
        %v3143 = vsel %vm1049, %v3140, %v3142
        %3144 = vrot.lane.b32.xlu0 %v3141, 127
        %v3145 = vpop.permute.xlu0 %3144
        %3146 = vrot.lane.b32.xlu0 %v3143, 127
        %v3147 = vpop.permute.xlu0 %3146
        %v3150 = vadd.f32 %v3066, %v3145
        %v3151 = vadd.f32 %v3067, %v3147
        %s3152 = sld [smem:[#allocation4 + $0x22]]
        %v3153 = vstv %s3152
        %v3154 = vmul.f32 %v3153, %v2849
        %v3155 = vmul.f32 %v3153, %v2850
        %v3156 = vmul.f32 %v3153, %v2851
        %v3160 = vrot.slane %v3154, 2
        %v3161 = vrot.slane %v3155, 2
        %v3162 = vsel %vm1118, %v3160, %v3161
        %v3163 = vrot.slane %v3156, 2
        %v3164 = vsel %vm1118, %v3161, %v3163
        %3165 = vrot.lane.b32.xlu0 %v3162, 127
        %v3166 = vpop.permute.xlu0 %3165
        %3167 = vrot.lane.b32.xlu0 %v3164, 127
        %v3168 = vpop.permute.xlu0 %3167
        %v3171 = vadd.f32 %v3087, %v3166
        %v3172 = vadd.f32 %v3088, %v3168
        %s3173 = sld [smem:[#allocation4 + $0x46]]
        %v3174 = vstv %s3173
        %v3175 = vmul.f32 %v3174, %v2849
        %v3176 = vmul.f32 %v3174, %v2850
        %v3177 = vmul.f32 %v3174, %v2851
        %v3181 = vrot.slane %v3175, 2
        %v3182 = vrot.slane %v3176, 2
        %v3183 = vsel %vm1118, %v3181, %v3182
        %v3184 = vrot.slane %v3177, 2
        %v3185 = vsel %vm1118, %v3182, %v3184
        %3186 = vrot.lane.b32.xlu0 %v3183, 127
        %v3187 = vpop.permute.xlu0 %3186
        %3188 = vrot.lane.b32.xlu0 %v3185, 127
        %v3189 = vpop.permute.xlu0 %3188
        %v3192 = vadd.f32 %v3108, %v3187
        %v3193 = vadd.f32 %v3109, %v3189
        %s3194 = sld [smem:[#allocation4 + $0x6a]]
        %v3195 = vstv %s3194
        %v3196 = vmul.f32 %v3195, %v2849
        %v3197 = vmul.f32 %v3195, %v2850
        %v3198 = vmul.f32 %v3195, %v2851
        %v3202 = vrot.slane %v3196, 2
        %v3203 = vrot.slane %v3197, 2
        %v3204 = vsel %vm1118, %v3202, %v3203
        %v3205 = vrot.slane %v3198, 2
        %v3206 = vsel %vm1118, %v3203, %v3205
        %3207 = vrot.lane.b32.xlu0 %v3204, 127
        %v3208 = vpop.permute.xlu0 %3207
        %3209 = vrot.lane.b32.xlu0 %v3206, 127
        %v3210 = vpop.permute.xlu0 %3209
        %v3213 = vadd.f32 %v3129, %v3208
        %v3214 = vadd.f32 %v3130, %v3210
        %s3215 = sld [smem:[#allocation4 + $0x8e]]
        %v3216 = vstv %s3215
        %v3217 = vmul.f32 %v3216, %v2849
        %v3218 = vmul.f32 %v3216, %v2850
        %v3219 = vmul.f32 %v3216, %v2851
        %v3223 = vrot.slane %v3217, 2
        %v3224 = vrot.slane %v3218, 2
        %v3225 = vsel %vm1118, %v3223, %v3224
        %v3226 = vrot.slane %v3219, 2
        %v3227 = vsel %vm1118, %v3224, %v3226
        %3228 = vrot.lane.b32.xlu0 %v3225, 127
        %v3229 = vpop.permute.xlu0 %3228
        %3230 = vrot.lane.b32.xlu0 %v3227, 127
        %v3231 = vpop.permute.xlu0 %3230
        %v3234 = vadd.f32 %v3150, %v3229
        %v3235 = vadd.f32 %v3151, %v3231
        %s3236 = sld [smem:[#allocation4 + $0x1d]]
        %v3237 = vstv %s3236
        %v3238 = vmul.f32 %v3237, %v2849
        %v3239 = vmul.f32 %v3237, %v2850
        %3242 = vrot.lane.b32.xlu0 %v3238, 126
        %v3243 = vpop.permute.xlu0 %3242
        %3244 = vrot.lane.b32.xlu0 %v3239, 126
        %v3245 = vpop.permute.xlu0 %3244
        %v3248 = vadd.f32 %v3171, %v3243
        %v3249 = vadd.f32 %v3172, %v3245
        %s3250 = sld [smem:[#allocation4 + $0x41]]
        %v3251 = vstv %s3250
        %v3252 = vmul.f32 %v3251, %v2849
        %v3253 = vmul.f32 %v3251, %v2850
        %3256 = vrot.lane.b32.xlu0 %v3252, 126
        %v3257 = vpop.permute.xlu0 %3256
        %3258 = vrot.lane.b32.xlu0 %v3253, 126
        %v3259 = vpop.permute.xlu0 %3258
        %v3262 = vadd.f32 %v3192, %v3257
        %v3263 = vadd.f32 %v3193, %v3259
        %s3264 = sld [smem:[#allocation4 + $0x65]]
        %v3265 = vstv %s3264
        %v3266 = vmul.f32 %v3265, %v2849
        %v3267 = vmul.f32 %v3265, %v2850
        %3270 = vrot.lane.b32.xlu0 %v3266, 126
        %v3271 = vpop.permute.xlu0 %3270
        %3272 = vrot.lane.b32.xlu0 %v3267, 126
        %v3273 = vpop.permute.xlu0 %3272
        %v3276 = vadd.f32 %v3213, %v3271
        %v3277 = vadd.f32 %v3214, %v3273
        %s3278 = sld [smem:[#allocation4 + $0x89]]
        %v3279 = vstv %s3278
        %v3280 = vmul.f32 %v3279, %v2849
        %v3281 = vmul.f32 %v3279, %v2850
        %3284 = vrot.lane.b32.xlu0 %v3280, 126
        %v3285 = vpop.permute.xlu0 %3284
        %3286 = vrot.lane.b32.xlu0 %v3281, 126
        %v3287 = vpop.permute.xlu0 %3286
        %v3290 = vadd.f32 %v3234, %v3285
        %v3291 = vadd.f32 %v3235, %v3287
        %s3292 = sld [smem:[#allocation4 + $0x20]]
        %v3293 = vstv %s3292
        %v3294 = vmul.f32 %v3293, %v2849
        %v3295 = vmul.f32 %v3293, %v2850
        %v3296 = vmul.f32 %v3293, %v2851
        %v3300 = vrot.slane %v3294, 1
        %v3301 = vrot.slane %v3295, 1
        %v3302 = vsel %vm1049, %v3300, %v3301
        %v3303 = vrot.slane %v3296, 1
        %v3304 = vsel %vm1049, %v3301, %v3303
        %3305 = vrot.lane.b32.xlu0 %v3302, 126
        %v3306 = vpop.permute.xlu0 %3305
        %3307 = vrot.lane.b32.xlu0 %v3304, 126
        %v3308 = vpop.permute.xlu0 %3307
        %v3311 = vadd.f32 %v3248, %v3306
        %v3312 = vadd.f32 %v3249, %v3308
        %s3313 = sld [smem:[#allocation4 + $0x44]]
        %v3314 = vstv %s3313
        %v3315 = vmul.f32 %v3314, %v2849
        %v3316 = vmul.f32 %v3314, %v2850
        %v3317 = vmul.f32 %v3314, %v2851
        %v3321 = vrot.slane %v3315, 1
        %v3322 = vrot.slane %v3316, 1
        %v3323 = vsel %vm1049, %v3321, %v3322
        %v3324 = vrot.slane %v3317, 1
        %v3325 = vsel %vm1049, %v3322, %v3324
        %3326 = vrot.lane.b32.xlu0 %v3323, 126
        %v3327 = vpop.permute.xlu0 %3326
        %3328 = vrot.lane.b32.xlu0 %v3325, 126
        %v3329 = vpop.permute.xlu0 %3328
        %v3332 = vadd.f32 %v3262, %v3327
        %v3333 = vadd.f32 %v3263, %v3329
        %s3334 = sld [smem:[#allocation4 + $0x68]]
        %v3335 = vstv %s3334
        %v3336 = vmul.f32 %v3335, %v2849
        %v3337 = vmul.f32 %v3335, %v2850
        %v3338 = vmul.f32 %v3335, %v2851
        %v3342 = vrot.slane %v3336, 1
        %v3343 = vrot.slane %v3337, 1
        %v3344 = vsel %vm1049, %v3342, %v3343
        %v3345 = vrot.slane %v3338, 1
        %v3346 = vsel %vm1049, %v3343, %v3345
        %3347 = vrot.lane.b32.xlu0 %v3344, 126
        %v3348 = vpop.permute.xlu0 %3347
        %3349 = vrot.lane.b32.xlu0 %v3346, 126
        %v3350 = vpop.permute.xlu0 %3349
        %v3353 = vadd.f32 %v3276, %v3348
        %v3354 = vadd.f32 %v3277, %v3350
        %s3355 = sld [smem:[#allocation4 + $0x8c]]
        %v3356 = vstv %s3355
        %v3357 = vmul.f32 %v3356, %v2849
        %v3358 = vmul.f32 %v3356, %v2850
        %v3359 = vmul.f32 %v3356, %v2851
        %v3363 = vrot.slane %v3357, 1
        %v3364 = vrot.slane %v3358, 1
        %v3365 = vsel %vm1049, %v3363, %v3364
        %v3366 = vrot.slane %v3359, 1
        %v3367 = vsel %vm1049, %v3364, %v3366
        %3368 = vrot.lane.b32.xlu0 %v3365, 126
        %v3369 = vpop.permute.xlu0 %3368
        %3370 = vrot.lane.b32.xlu0 %v3367, 126
        %v3371 = vpop.permute.xlu0 %3370
        %v3374 = vadd.f32 %v3290, %v3369
        %v3375 = vadd.f32 %v3291, %v3371
        %s3376 = sld [smem:[#allocation4 + $0x23]]
        %v3377 = vstv %s3376
        %v3378 = vmul.f32 %v3377, %v2849
        %v3379 = vmul.f32 %v3377, %v2850
        %v3380 = vmul.f32 %v3377, %v2851
        %v3384 = vrot.slane %v3378, 2
        %v3385 = vrot.slane %v3379, 2
        %v3386 = vsel %vm1118, %v3384, %v3385
        %v3387 = vrot.slane %v3380, 2
        %v3388 = vsel %vm1118, %v3385, %v3387
        %3389 = vrot.lane.b32.xlu0 %v3386, 126
        %v3390 = vpop.permute.xlu0 %3389
        %3391 = vrot.lane.b32.xlu0 %v3388, 126
        %v3392 = vpop.permute.xlu0 %3391
        %v3395 = vadd.f32 %v3311, %v3390
        %v3396 = vadd.f32 %v3312, %v3392
        %s3397 = sld [smem:[#allocation4 + $0x47]]
        %v3398 = vstv %s3397
        %v3399 = vmul.f32 %v3398, %v2849
        %v3400 = vmul.f32 %v3398, %v2850
        %v3401 = vmul.f32 %v3398, %v2851
        %v3405 = vrot.slane %v3399, 2
        %v3406 = vrot.slane %v3400, 2
        %v3407 = vsel %vm1118, %v3405, %v3406
        %v3408 = vrot.slane %v3401, 2
        %v3409 = vsel %vm1118, %v3406, %v3408
        %3410 = vrot.lane.b32.xlu0 %v3407, 126
        %v3411 = vpop.permute.xlu0 %3410
        %3412 = vrot.lane.b32.xlu0 %v3409, 126
        %v3413 = vpop.permute.xlu0 %3412
        %v3416 = vadd.f32 %v3332, %v3411
        %v3417 = vadd.f32 %v3333, %v3413
        %s3418 = sld [smem:[#allocation4 + $0x6b]]
        %v3419 = vstv %s3418
        %v3420 = vmul.f32 %v3419, %v2849
        %v3421 = vmul.f32 %v3419, %v2850
        %v3422 = vmul.f32 %v3419, %v2851
        %v3426 = vrot.slane %v3420, 2
        %v3427 = vrot.slane %v3421, 2
        %v3428 = vsel %vm1118, %v3426, %v3427
        %v3429 = vrot.slane %v3422, 2
        %v3430 = vsel %vm1118, %v3427, %v3429
        %3431 = vrot.lane.b32.xlu0 %v3428, 126
        %v3432 = vpop.permute.xlu0 %3431
        %3433 = vrot.lane.b32.xlu0 %v3430, 126
        %v3434 = vpop.permute.xlu0 %3433
        %v3437 = vadd.f32 %v3353, %v3432
        %v3438 = vadd.f32 %v3354, %v3434
        %s3439 = sld [smem:[#allocation4 + $0x8f]]
        %v3440 = vstv %s3439
        %v3441 = vmul.f32 %v3440, %v2849
        %v3442 = vmul.f32 %v3440, %v2850
        %v3443 = vmul.f32 %v3440, %v2851
        %v3447 = vrot.slane %v3441, 2
        %v3448 = vrot.slane %v3442, 2
        %v3449 = vsel %vm1118, %v3447, %v3448
        %v3450 = vrot.slane %v3443, 2
        %v3451 = vsel %vm1118, %v3448, %v3450
        %3452 = vrot.lane.b32.xlu0 %v3449, 126
        %v3453 = vpop.permute.xlu0 %3452
        %3454 = vrot.lane.b32.xlu0 %v3451, 126
        %v3455 = vpop.permute.xlu0 %3454
        %v3458 = vadd.f32 %v3374, %v3453
        %v3459 = vadd.f32 %v3375, %v3455
        %v3460 = vmax.f32 %v3395, 0.0
        %v3461 = vmax.f32 %v3396, 0.0
        %3464 = vrot.lane.b32.xlu0 %v3460, 1
        %v3465 = vpop.permute.xlu0 %3464
        %3466 = vrot.lane.b32.xlu0 %v3461, 1
        %v3467 = vpop.permute.xlu0 %3466
        %3470 = vst.msk [vmem:[#allocation3 + $0x1] sm:$0xff] %vm432, %v3465
        %3471 = vst.msk [vmem:[#allocation3 + $0x9] sm:$0xff] %vm432, %v3467
        %v3472 = vmax.f32 %v3416, 0.0
        %v3473 = vmax.f32 %v3417, 0.0
        %3476 = vrot.lane.b32.xlu0 %v3472, 1
        %v3477 = vpop.permute.xlu0 %3476
        %3478 = vrot.lane.b32.xlu0 %v3473, 1
        %v3479 = vpop.permute.xlu0 %3478
        %s3482 = scalar_lea.vmem [#allocation3], 24
        %3483 = vst.msk [vmem:[%s3482 + $0x1] sm:$0xff] %vm432, %v3477
        %3484 = vst.msk [vmem:[%s3482 + $0x9] sm:$0xff] %vm432, %v3479
        %v3485 = vmax.f32 %v3437, 0.0
        %v3486 = vmax.f32 %v3438, 0.0
        %3489 = vrot.lane.b32.xlu0 %v3485, 1
        %v3490 = vpop.permute.xlu0 %3489
        %3491 = vrot.lane.b32.xlu0 %v3486, 1
        %v3492 = vpop.permute.xlu0 %3491
        %s3495 = scalar_lea.vmem [#allocation3], 48
        %3496 = vst.msk [vmem:[%s3495 + $0x1] sm:$0xff] %vm432, %v3490
        %3497 = vst.msk [vmem:[%s3495 + $0x9] sm:$0xff] %vm432, %v3492
        %v3498 = vmax.f32 %v3458, 0.0
        %v3499 = vmax.f32 %v3459, 0.0
        %3502 = vrot.lane.b32.xlu0 %v3498, 1
        %v3503 = vpop.permute.xlu0 %3502
        %3504 = vrot.lane.b32.xlu0 %v3499, 1
        %v3505 = vpop.permute.xlu0 %3504
        %s3508 = scalar_lea.vmem [#allocation3], 72
        %3509 = vst.msk [vmem:[%s3508 + $0x1] sm:$0xff] %vm432, %v3503
        %3510 = vst.msk [vmem:[%s3508 + $0x9] sm:$0xff] %vm432, %v3505
        %s3511 = sld [smem:[#allocation11]]
        %v3512 = vstv %s3511
        %s3513 = sld [smem:[#allocation11 + $0x1]]
        %v3514 = vstv %s3513
        %s3515 = sld [smem:[#allocation11 + $0x2]]
        %v3516 = vstv %s3515
        %s3517 = sld [smem:[#allocation11 + $0x3]]
        %v3518 = vstv %s3517
        %v3519 = vld [vmem:[#allocation3] sm:$0xff]
        %v3520 = vld [vmem:[#allocation3 + $0x8] sm:$0xff]
        %v3521 = vld [vmem:[#allocation3 + $0x10] sm:$0x3]
        %s3522 = sld [smem:[#allocation10]]
        %v3523 = vstv %s3522
        %v3524 = vmul.f32 %v3523, %v3519
        %v3525 = vmul.f32 %v3523, %v3520
        %v3526 = vadd.f32 %v3512, %v3524
        %v3527 = vadd.f32 %v3512, %v3525
        %s3528 = sld [smem:[#allocation10 + $0x24]]
        %v3529 = vstv %s3528
        %v3530 = vmul.f32 %v3529, %v3519
        %v3531 = vmul.f32 %v3529, %v3520
        %v3532 = vadd.f32 %v3514, %v3530
        %v3533 = vadd.f32 %v3514, %v3531
        %s3534 = sld [smem:[#allocation10 + $0x48]]
        %v3535 = vstv %s3534
        %v3536 = vmul.f32 %v3535, %v3519
        %v3537 = vmul.f32 %v3535, %v3520
        %v3538 = vadd.f32 %v3516, %v3536
        %v3539 = vadd.f32 %v3516, %v3537
        %s3540 = sld [smem:[#allocation10 + $0x6c]]
        %v3541 = vstv %s3540
        %v3542 = vmul.f32 %v3541, %v3519
        %v3543 = vmul.f32 %v3541, %v3520
        %v3544 = vadd.f32 %v3518, %v3542
        %v3545 = vadd.f32 %v3518, %v3543
        %s3546 = sld [smem:[#allocation10 + $0x3]]
        %v3547 = vstv %s3546
        %v3548 = vmul.f32 %v3547, %v3519
        %v3549 = vmul.f32 %v3547, %v3520
        %v3550 = vmul.f32 %v3547, %v3521
        %v3554 = vrot.slane %v3548, 1
        %v3555 = vrot.slane %v3549, 1
        %v3556 = vsel %vm1049, %v3554, %v3555
        %v3557 = vrot.slane %v3550, 1
        %v3558 = vsel %vm1049, %v3555, %v3557
        %v3561 = vadd.f32 %v3526, %v3556
        %v3562 = vadd.f32 %v3527, %v3558
        %s3563 = sld [smem:[#allocation10 + $0x27]]
        %v3564 = vstv %s3563
        %v3565 = vmul.f32 %v3564, %v3519
        %v3566 = vmul.f32 %v3564, %v3520
        %v3567 = vmul.f32 %v3564, %v3521
        %v3571 = vrot.slane %v3565, 1
        %v3572 = vrot.slane %v3566, 1
        %v3573 = vsel %vm1049, %v3571, %v3572
        %v3574 = vrot.slane %v3567, 1
        %v3575 = vsel %vm1049, %v3572, %v3574
        %v3578 = vadd.f32 %v3532, %v3573
        %v3579 = vadd.f32 %v3533, %v3575
        %s3580 = sld [smem:[#allocation10 + $0x4b]]
        %v3581 = vstv %s3580
        %v3582 = vmul.f32 %v3581, %v3519
        %v3583 = vmul.f32 %v3581, %v3520
        %v3584 = vmul.f32 %v3581, %v3521
        %v3588 = vrot.slane %v3582, 1
        %v3589 = vrot.slane %v3583, 1
        %v3590 = vsel %vm1049, %v3588, %v3589
        %v3591 = vrot.slane %v3584, 1
        %v3592 = vsel %vm1049, %v3589, %v3591
        %v3595 = vadd.f32 %v3538, %v3590
        %v3596 = vadd.f32 %v3539, %v3592
        %s3597 = sld [smem:[#allocation10 + $0x6f]]
        %v3598 = vstv %s3597
        %v3599 = vmul.f32 %v3598, %v3519
        %v3600 = vmul.f32 %v3598, %v3520
        %v3601 = vmul.f32 %v3598, %v3521
        %v3605 = vrot.slane %v3599, 1
        %v3606 = vrot.slane %v3600, 1
        %v3607 = vsel %vm1049, %v3605, %v3606
        %v3608 = vrot.slane %v3601, 1
        %v3609 = vsel %vm1049, %v3606, %v3608
        %v3612 = vadd.f32 %v3544, %v3607
        %v3613 = vadd.f32 %v3545, %v3609
        %s3614 = sld [smem:[#allocation10 + $0x6]]
        %v3615 = vstv %s3614
        %v3616 = vmul.f32 %v3615, %v3519
        %v3617 = vmul.f32 %v3615, %v3520
        %v3618 = vmul.f32 %v3615, %v3521
        %v3622 = vrot.slane %v3616, 2
        %v3623 = vrot.slane %v3617, 2
        %v3624 = vsel %vm1118, %v3622, %v3623
        %v3625 = vrot.slane %v3618, 2
        %v3626 = vsel %vm1118, %v3623, %v3625
        %v3629 = vadd.f32 %v3561, %v3624
        %v3630 = vadd.f32 %v3562, %v3626
        %s3631 = sld [smem:[#allocation10 + $0x2a]]
        %v3632 = vstv %s3631
        %v3633 = vmul.f32 %v3632, %v3519
        %v3634 = vmul.f32 %v3632, %v3520
        %v3635 = vmul.f32 %v3632, %v3521
        %v3639 = vrot.slane %v3633, 2
        %v3640 = vrot.slane %v3634, 2
        %v3641 = vsel %vm1118, %v3639, %v3640
        %v3642 = vrot.slane %v3635, 2
        %v3643 = vsel %vm1118, %v3640, %v3642
        %v3646 = vadd.f32 %v3578, %v3641
        %v3647 = vadd.f32 %v3579, %v3643
        %s3648 = sld [smem:[#allocation10 + $0x4e]]
        %v3649 = vstv %s3648
        %v3650 = vmul.f32 %v3649, %v3519
        %v3651 = vmul.f32 %v3649, %v3520
        %v3652 = vmul.f32 %v3649, %v3521
        %v3656 = vrot.slane %v3650, 2
        %v3657 = vrot.slane %v3651, 2
        %v3658 = vsel %vm1118, %v3656, %v3657
        %v3659 = vrot.slane %v3652, 2
        %v3660 = vsel %vm1118, %v3657, %v3659
        %v3663 = vadd.f32 %v3595, %v3658
        %v3664 = vadd.f32 %v3596, %v3660
        %s3665 = sld [smem:[#allocation10 + $0x72]]
        %v3666 = vstv %s3665
        %v3667 = vmul.f32 %v3666, %v3519
        %v3668 = vmul.f32 %v3666, %v3520
        %v3669 = vmul.f32 %v3666, %v3521
        %v3673 = vrot.slane %v3667, 2
        %v3674 = vrot.slane %v3668, 2
        %v3675 = vsel %vm1118, %v3673, %v3674
        %v3676 = vrot.slane %v3669, 2
        %v3677 = vsel %vm1118, %v3674, %v3676
        %v3680 = vadd.f32 %v3612, %v3675
        %v3681 = vadd.f32 %v3613, %v3677
        %s3682 = sld [smem:[#allocation10 + $0x1]]
        %v3683 = vstv %s3682
        %v3684 = vmul.f32 %v3683, %v3519
        %v3685 = vmul.f32 %v3683, %v3520
        %3688 = vrot.lane.b32.xlu0 %v3684, 127
        %v3689 = vpop.permute.xlu0 %3688
        %3690 = vrot.lane.b32.xlu0 %v3685, 127
        %v3691 = vpop.permute.xlu0 %3690
        %v3694 = vadd.f32 %v3629, %v3689
        %v3695 = vadd.f32 %v3630, %v3691
        %s3696 = sld [smem:[#allocation10 + $0x25]]
        %v3697 = vstv %s3696
        %v3698 = vmul.f32 %v3697, %v3519
        %v3699 = vmul.f32 %v3697, %v3520
        %3702 = vrot.lane.b32.xlu0 %v3698, 127
        %v3703 = vpop.permute.xlu0 %3702
        %3704 = vrot.lane.b32.xlu0 %v3699, 127
        %v3705 = vpop.permute.xlu0 %3704
        %v3708 = vadd.f32 %v3646, %v3703
        %v3709 = vadd.f32 %v3647, %v3705
        %s3710 = sld [smem:[#allocation10 + $0x49]]
        %v3711 = vstv %s3710
        %v3712 = vmul.f32 %v3711, %v3519
        %v3713 = vmul.f32 %v3711, %v3520
        %3716 = vrot.lane.b32.xlu0 %v3712, 127
        %v3717 = vpop.permute.xlu0 %3716
        %3718 = vrot.lane.b32.xlu0 %v3713, 127
        %v3719 = vpop.permute.xlu0 %3718
        %v3722 = vadd.f32 %v3663, %v3717
        %v3723 = vadd.f32 %v3664, %v3719
        %s3724 = sld [smem:[#allocation10 + $0x6d]]
        %v3725 = vstv %s3724
        %v3726 = vmul.f32 %v3725, %v3519
        %v3727 = vmul.f32 %v3725, %v3520
        %3730 = vrot.lane.b32.xlu0 %v3726, 127
        %v3731 = vpop.permute.xlu0 %3730
        %3732 = vrot.lane.b32.xlu0 %v3727, 127
        %v3733 = vpop.permute.xlu0 %3732
        %v3736 = vadd.f32 %v3680, %v3731
        %v3737 = vadd.f32 %v3681, %v3733
        %s3738 = sld [smem:[#allocation10 + $0x4]]
        %v3739 = vstv %s3738
        %v3740 = vmul.f32 %v3739, %v3519
        %v3741 = vmul.f32 %v3739, %v3520
        %v3742 = vmul.f32 %v3739, %v3521
        %v3746 = vrot.slane %v3740, 1
        %v3747 = vrot.slane %v3741, 1
        %v3748 = vsel %vm1049, %v3746, %v3747
        %v3749 = vrot.slane %v3742, 1
        %v3750 = vsel %vm1049, %v3747, %v3749
        %3751 = vrot.lane.b32.xlu0 %v3748, 127
        %v3752 = vpop.permute.xlu0 %3751
        %3753 = vrot.lane.b32.xlu0 %v3750, 127
        %v3754 = vpop.permute.xlu0 %3753
        %v3757 = vadd.f32 %v3694, %v3752
        %v3758 = vadd.f32 %v3695, %v3754
        %s3759 = sld [smem:[#allocation10 + $0x28]]
        %v3760 = vstv %s3759
        %v3761 = vmul.f32 %v3760, %v3519
        %v3762 = vmul.f32 %v3760, %v3520
        %v3763 = vmul.f32 %v3760, %v3521
        %v3767 = vrot.slane %v3761, 1
        %v3768 = vrot.slane %v3762, 1
        %v3769 = vsel %vm1049, %v3767, %v3768
        %v3770 = vrot.slane %v3763, 1
        %v3771 = vsel %vm1049, %v3768, %v3770
        %3772 = vrot.lane.b32.xlu0 %v3769, 127
        %v3773 = vpop.permute.xlu0 %3772
        %3774 = vrot.lane.b32.xlu0 %v3771, 127
        %v3775 = vpop.permute.xlu0 %3774
        %v3778 = vadd.f32 %v3708, %v3773
        %v3779 = vadd.f32 %v3709, %v3775
        %s3780 = sld [smem:[#allocation10 + $0x4c]]
        %v3781 = vstv %s3780
        %v3782 = vmul.f32 %v3781, %v3519
        %v3783 = vmul.f32 %v3781, %v3520
        %v3784 = vmul.f32 %v3781, %v3521
        %v3788 = vrot.slane %v3782, 1
        %v3789 = vrot.slane %v3783, 1
        %v3790 = vsel %vm1049, %v3788, %v3789
        %v3791 = vrot.slane %v3784, 1
        %v3792 = vsel %vm1049, %v3789, %v3791
        %3793 = vrot.lane.b32.xlu0 %v3790, 127
        %v3794 = vpop.permute.xlu0 %3793
        %3795 = vrot.lane.b32.xlu0 %v3792, 127
        %v3796 = vpop.permute.xlu0 %3795
        %v3799 = vadd.f32 %v3722, %v3794
        %v3800 = vadd.f32 %v3723, %v3796
        %s3801 = sld [smem:[#allocation10 + $0x70]]
        %v3802 = vstv %s3801
        %v3803 = vmul.f32 %v3802, %v3519
        %v3804 = vmul.f32 %v3802, %v3520
        %v3805 = vmul.f32 %v3802, %v3521
        %v3809 = vrot.slane %v3803, 1
        %v3810 = vrot.slane %v3804, 1
        %v3811 = vsel %vm1049, %v3809, %v3810
        %v3812 = vrot.slane %v3805, 1
        %v3813 = vsel %vm1049, %v3810, %v3812
        %3814 = vrot.lane.b32.xlu0 %v3811, 127
        %v3815 = vpop.permute.xlu0 %3814
        %3816 = vrot.lane.b32.xlu0 %v3813, 127
        %v3817 = vpop.permute.xlu0 %3816
        %v3820 = vadd.f32 %v3736, %v3815
        %v3821 = vadd.f32 %v3737, %v3817
        %s3822 = sld [smem:[#allocation10 + $0x7]]
        %v3823 = vstv %s3822
        %v3824 = vmul.f32 %v3823, %v3519
        %v3825 = vmul.f32 %v3823, %v3520
        %v3826 = vmul.f32 %v3823, %v3521
        %v3830 = vrot.slane %v3824, 2
        %v3831 = vrot.slane %v3825, 2
        %v3832 = vsel %vm1118, %v3830, %v3831
        %v3833 = vrot.slane %v3826, 2
        %v3834 = vsel %vm1118, %v3831, %v3833
        %3835 = vrot.lane.b32.xlu0 %v3832, 127
        %v3836 = vpop.permute.xlu0 %3835
        %3837 = vrot.lane.b32.xlu0 %v3834, 127
        %v3838 = vpop.permute.xlu0 %3837
        %v3841 = vadd.f32 %v3757, %v3836
        %v3842 = vadd.f32 %v3758, %v3838
        %s3843 = sld [smem:[#allocation10 + $0x2b]]
        %v3844 = vstv %s3843
        %v3845 = vmul.f32 %v3844, %v3519
        %v3846 = vmul.f32 %v3844, %v3520
        %v3847 = vmul.f32 %v3844, %v3521
        %v3851 = vrot.slane %v3845, 2
        %v3852 = vrot.slane %v3846, 2
        %v3853 = vsel %vm1118, %v3851, %v3852
        %v3854 = vrot.slane %v3847, 2
        %v3855 = vsel %vm1118, %v3852, %v3854
        %3856 = vrot.lane.b32.xlu0 %v3853, 127
        %v3857 = vpop.permute.xlu0 %3856
        %3858 = vrot.lane.b32.xlu0 %v3855, 127
        %v3859 = vpop.permute.xlu0 %3858
        %v3862 = vadd.f32 %v3778, %v3857
        %v3863 = vadd.f32 %v3779, %v3859
        %s3864 = sld [smem:[#allocation10 + $0x4f]]
        %v3865 = vstv %s3864
        %v3866 = vmul.f32 %v3865, %v3519
        %v3867 = vmul.f32 %v3865, %v3520
        %v3868 = vmul.f32 %v3865, %v3521
        %v3872 = vrot.slane %v3866, 2
        %v3873 = vrot.slane %v3867, 2
        %v3874 = vsel %vm1118, %v3872, %v3873
        %v3875 = vrot.slane %v3868, 2
        %v3876 = vsel %vm1118, %v3873, %v3875
        %3877 = vrot.lane.b32.xlu0 %v3874, 127
        %v3878 = vpop.permute.xlu0 %3877
        %3879 = vrot.lane.b32.xlu0 %v3876, 127
        %v3880 = vpop.permute.xlu0 %3879
        %v3883 = vadd.f32 %v3799, %v3878
        %v3884 = vadd.f32 %v3800, %v3880
        %s3885 = sld [smem:[#allocation10 + $0x73]]
        %v3886 = vstv %s3885
        %v3887 = vmul.f32 %v3886, %v3519
        %v3888 = vmul.f32 %v3886, %v3520
        %v3889 = vmul.f32 %v3886, %v3521
        %v3893 = vrot.slane %v3887, 2
        %v3894 = vrot.slane %v3888, 2
        %v3895 = vsel %vm1118, %v3893, %v3894
        %v3896 = vrot.slane %v3889, 2
        %v3897 = vsel %vm1118, %v3894, %v3896
        %3898 = vrot.lane.b32.xlu0 %v3895, 127
        %v3899 = vpop.permute.xlu0 %3898
        %3900 = vrot.lane.b32.xlu0 %v3897, 127
        %v3901 = vpop.permute.xlu0 %3900
        %v3904 = vadd.f32 %v3820, %v3899
        %v3905 = vadd.f32 %v3821, %v3901
        %s3906 = sld [smem:[#allocation10 + $0x2]]
        %v3907 = vstv %s3906
        %v3908 = vmul.f32 %v3907, %v3519
        %v3909 = vmul.f32 %v3907, %v3520
        %3912 = vrot.lane.b32.xlu0 %v3908, 126
        %v3913 = vpop.permute.xlu0 %3912
        %3914 = vrot.lane.b32.xlu0 %v3909, 126
        %v3915 = vpop.permute.xlu0 %3914
        %v3918 = vadd.f32 %v3841, %v3913
        %v3919 = vadd.f32 %v3842, %v3915
        %s3920 = sld [smem:[#allocation10 + $0x26]]
        %v3921 = vstv %s3920
        %v3922 = vmul.f32 %v3921, %v3519
        %v3923 = vmul.f32 %v3921, %v3520
        %3926 = vrot.lane.b32.xlu0 %v3922, 126
        %v3927 = vpop.permute.xlu0 %3926
        %3928 = vrot.lane.b32.xlu0 %v3923, 126
        %v3929 = vpop.permute.xlu0 %3928
        %v3932 = vadd.f32 %v3862, %v3927
        %v3933 = vadd.f32 %v3863, %v3929
        %s3934 = sld [smem:[#allocation10 + $0x4a]]
        %v3935 = vstv %s3934
        %v3936 = vmul.f32 %v3935, %v3519
        %v3937 = vmul.f32 %v3935, %v3520
        %3940 = vrot.lane.b32.xlu0 %v3936, 126
        %v3941 = vpop.permute.xlu0 %3940
        %3942 = vrot.lane.b32.xlu0 %v3937, 126
        %v3943 = vpop.permute.xlu0 %3942
        %v3946 = vadd.f32 %v3883, %v3941
        %v3947 = vadd.f32 %v3884, %v3943
        %s3948 = sld [smem:[#allocation10 + $0x6e]]
        %v3949 = vstv %s3948
        %v3950 = vmul.f32 %v3949, %v3519
        %v3951 = vmul.f32 %v3949, %v3520
        %3954 = vrot.lane.b32.xlu0 %v3950, 126
        %v3955 = vpop.permute.xlu0 %3954
        %3956 = vrot.lane.b32.xlu0 %v3951, 126
        %v3957 = vpop.permute.xlu0 %3956
        %v3960 = vadd.f32 %v3904, %v3955
        %v3961 = vadd.f32 %v3905, %v3957
        %s3962 = sld [smem:[#allocation10 + $0x5]]
        %v3963 = vstv %s3962
        %v3964 = vmul.f32 %v3963, %v3519
        %v3965 = vmul.f32 %v3963, %v3520
        %v3966 = vmul.f32 %v3963, %v3521
        %v3970 = vrot.slane %v3964, 1
        %v3971 = vrot.slane %v3965, 1
        %v3972 = vsel %vm1049, %v3970, %v3971
        %v3973 = vrot.slane %v3966, 1
        %v3974 = vsel %vm1049, %v3971, %v3973
        %3975 = vrot.lane.b32.xlu0 %v3972, 126
        %v3976 = vpop.permute.xlu0 %3975
        %3977 = vrot.lane.b32.xlu0 %v3974, 126
        %v3978 = vpop.permute.xlu0 %3977
        %v3981 = vadd.f32 %v3918, %v3976
        %v3982 = vadd.f32 %v3919, %v3978
        %s3983 = sld [smem:[#allocation10 + $0x29]]
        %v3984 = vstv %s3983
        %v3985 = vmul.f32 %v3984, %v3519
        %v3986 = vmul.f32 %v3984, %v3520
        %v3987 = vmul.f32 %v3984, %v3521
        %v3991 = vrot.slane %v3985, 1
        %v3992 = vrot.slane %v3986, 1
        %v3993 = vsel %vm1049, %v3991, %v3992
        %v3994 = vrot.slane %v3987, 1
        %v3995 = vsel %vm1049, %v3992, %v3994
        %3996 = vrot.lane.b32.xlu0 %v3993, 126
        %v3997 = vpop.permute.xlu0 %3996
        %3998 = vrot.lane.b32.xlu0 %v3995, 126
        %v3999 = vpop.permute.xlu0 %3998
        %v4002 = vadd.f32 %v3932, %v3997
        %v4003 = vadd.f32 %v3933, %v3999
        %s4004 = sld [smem:[#allocation10 + $0x4d]]
        %v4005 = vstv %s4004
        %v4006 = vmul.f32 %v4005, %v3519
        %v4007 = vmul.f32 %v4005, %v3520
        %v4008 = vmul.f32 %v4005, %v3521
        %v4012 = vrot.slane %v4006, 1
        %v4013 = vrot.slane %v4007, 1
        %v4014 = vsel %vm1049, %v4012, %v4013
        %v4015 = vrot.slane %v4008, 1
        %v4016 = vsel %vm1049, %v4013, %v4015
        %4017 = vrot.lane.b32.xlu0 %v4014, 126
        %v4018 = vpop.permute.xlu0 %4017
        %4019 = vrot.lane.b32.xlu0 %v4016, 126
        %v4020 = vpop.permute.xlu0 %4019
        %v4023 = vadd.f32 %v3946, %v4018
        %v4024 = vadd.f32 %v3947, %v4020
        %s4025 = sld [smem:[#allocation10 + $0x71]]
        %v4026 = vstv %s4025
        %v4027 = vmul.f32 %v4026, %v3519
        %v4028 = vmul.f32 %v4026, %v3520
        %v4029 = vmul.f32 %v4026, %v3521
        %v4033 = vrot.slane %v4027, 1
        %v4034 = vrot.slane %v4028, 1
        %v4035 = vsel %vm1049, %v4033, %v4034
        %v4036 = vrot.slane %v4029, 1
        %v4037 = vsel %vm1049, %v4034, %v4036
        %4038 = vrot.lane.b32.xlu0 %v4035, 126
        %v4039 = vpop.permute.xlu0 %4038
        %4040 = vrot.lane.b32.xlu0 %v4037, 126
        %v4041 = vpop.permute.xlu0 %4040
        %v4044 = vadd.f32 %v3960, %v4039
        %v4045 = vadd.f32 %v3961, %v4041
        %s4046 = sld [smem:[#allocation10 + $0x8]]
        %v4047 = vstv %s4046
        %v4048 = vmul.f32 %v4047, %v3519
        %v4049 = vmul.f32 %v4047, %v3520
        %v4050 = vmul.f32 %v4047, %v3521
        %v4054 = vrot.slane %v4048, 2
        %v4055 = vrot.slane %v4049, 2
        %v4056 = vsel %vm1118, %v4054, %v4055
        %v4057 = vrot.slane %v4050, 2
        %v4058 = vsel %vm1118, %v4055, %v4057
        %4059 = vrot.lane.b32.xlu0 %v4056, 126
        %v4060 = vpop.permute.xlu0 %4059
        %4061 = vrot.lane.b32.xlu0 %v4058, 126
        %v4062 = vpop.permute.xlu0 %4061
        %v4065 = vadd.f32 %v3981, %v4060
        %v4066 = vadd.f32 %v3982, %v4062
        %s4067 = sld [smem:[#allocation10 + $0x2c]]
        %v4068 = vstv %s4067
        %v4069 = vmul.f32 %v4068, %v3519
        %v4070 = vmul.f32 %v4068, %v3520
        %v4071 = vmul.f32 %v4068, %v3521
        %v4075 = vrot.slane %v4069, 2
        %v4076 = vrot.slane %v4070, 2
        %v4077 = vsel %vm1118, %v4075, %v4076
        %v4078 = vrot.slane %v4071, 2
        %v4079 = vsel %vm1118, %v4076, %v4078
        %4080 = vrot.lane.b32.xlu0 %v4077, 126
        %v4081 = vpop.permute.xlu0 %4080
        %4082 = vrot.lane.b32.xlu0 %v4079, 126
        %v4083 = vpop.permute.xlu0 %4082
        %v4086 = vadd.f32 %v4002, %v4081
        %v4087 = vadd.f32 %v4003, %v4083
        %s4088 = sld [smem:[#allocation10 + $0x50]]
        %v4089 = vstv %s4088
        %v4090 = vmul.f32 %v4089, %v3519
        %v4091 = vmul.f32 %v4089, %v3520
        %v4092 = vmul.f32 %v4089, %v3521
        %v4096 = vrot.slane %v4090, 2
        %v4097 = vrot.slane %v4091, 2
        %v4098 = vsel %vm1118, %v4096, %v4097
        %v4099 = vrot.slane %v4092, 2
        %v4100 = vsel %vm1118, %v4097, %v4099
        %4101 = vrot.lane.b32.xlu0 %v4098, 126
        %v4102 = vpop.permute.xlu0 %4101
        %4103 = vrot.lane.b32.xlu0 %v4100, 126
        %v4104 = vpop.permute.xlu0 %4103
        %v4107 = vadd.f32 %v4023, %v4102
        %v4108 = vadd.f32 %v4024, %v4104
        %s4109 = sld [smem:[#allocation10 + $0x74]]
        %v4110 = vstv %s4109
        %v4111 = vmul.f32 %v4110, %v3519
        %v4112 = vmul.f32 %v4110, %v3520
        %v4113 = vmul.f32 %v4110, %v3521
        %v4117 = vrot.slane %v4111, 2
        %v4118 = vrot.slane %v4112, 2
        %v4119 = vsel %vm1118, %v4117, %v4118
        %v4120 = vrot.slane %v4113, 2
        %v4121 = vsel %vm1118, %v4118, %v4120
        %4122 = vrot.lane.b32.xlu0 %v4119, 126
        %v4123 = vpop.permute.xlu0 %4122
        %4124 = vrot.lane.b32.xlu0 %v4121, 126
        %v4125 = vpop.permute.xlu0 %4124
        %v4128 = vadd.f32 %v4044, %v4123
        %v4129 = vadd.f32 %v4045, %v4125
        %v4130 = vld [vmem:[%s3482] sm:$0xff]
        %v4131 = vld [vmem:[%s3482 + $0x8] sm:$0xff]
        %v4132 = vld [vmem:[%s3482 + $0x10] sm:$0x3]
        %s4133 = sld [smem:[#allocation10 + $0x9]]
        %v4134 = vstv %s4133
        %v4135 = vmul.f32 %v4134, %v4130
        %v4136 = vmul.f32 %v4134, %v4131
        %v4137 = vadd.f32 %v4065, %v4135
        %v4138 = vadd.f32 %v4066, %v4136
        %s4139 = sld [smem:[#allocation10 + $0x2d]]
        %v4140 = vstv %s4139
        %v4141 = vmul.f32 %v4140, %v4130
        %v4142 = vmul.f32 %v4140, %v4131
        %v4143 = vadd.f32 %v4086, %v4141
        %v4144 = vadd.f32 %v4087, %v4142
        %s4145 = sld [smem:[#allocation10 + $0x51]]
        %v4146 = vstv %s4145
        %v4147 = vmul.f32 %v4146, %v4130
        %v4148 = vmul.f32 %v4146, %v4131
        %v4149 = vadd.f32 %v4107, %v4147
        %v4150 = vadd.f32 %v4108, %v4148
        %s4151 = sld [smem:[#allocation10 + $0x75]]
        %v4152 = vstv %s4151
        %v4153 = vmul.f32 %v4152, %v4130
        %v4154 = vmul.f32 %v4152, %v4131
        %v4155 = vadd.f32 %v4128, %v4153
        %v4156 = vadd.f32 %v4129, %v4154
        %s4157 = sld [smem:[#allocation10 + $0xc]]
        %v4158 = vstv %s4157
        %v4159 = vmul.f32 %v4158, %v4130
        %v4160 = vmul.f32 %v4158, %v4131
        %v4161 = vmul.f32 %v4158, %v4132
        %v4165 = vrot.slane %v4159, 1
        %v4166 = vrot.slane %v4160, 1
        %v4167 = vsel %vm1049, %v4165, %v4166
        %v4168 = vrot.slane %v4161, 1
        %v4169 = vsel %vm1049, %v4166, %v4168
        %v4172 = vadd.f32 %v4137, %v4167
        %v4173 = vadd.f32 %v4138, %v4169
        %s4174 = sld [smem:[#allocation10 + $0x30]]
        %v4175 = vstv %s4174
        %v4176 = vmul.f32 %v4175, %v4130
        %v4177 = vmul.f32 %v4175, %v4131
        %v4178 = vmul.f32 %v4175, %v4132
        %v4182 = vrot.slane %v4176, 1
        %v4183 = vrot.slane %v4177, 1
        %v4184 = vsel %vm1049, %v4182, %v4183
        %v4185 = vrot.slane %v4178, 1
        %v4186 = vsel %vm1049, %v4183, %v4185
        %v4189 = vadd.f32 %v4143, %v4184
        %v4190 = vadd.f32 %v4144, %v4186
        %s4191 = sld [smem:[#allocation10 + $0x54]]
        %v4192 = vstv %s4191
        %v4193 = vmul.f32 %v4192, %v4130
        %v4194 = vmul.f32 %v4192, %v4131
        %v4195 = vmul.f32 %v4192, %v4132
        %v4199 = vrot.slane %v4193, 1
        %v4200 = vrot.slane %v4194, 1
        %v4201 = vsel %vm1049, %v4199, %v4200
        %v4202 = vrot.slane %v4195, 1
        %v4203 = vsel %vm1049, %v4200, %v4202
        %v4206 = vadd.f32 %v4149, %v4201
        %v4207 = vadd.f32 %v4150, %v4203
        %s4208 = sld [smem:[#allocation10 + $0x78]]
        %v4209 = vstv %s4208
        %v4210 = vmul.f32 %v4209, %v4130
        %v4211 = vmul.f32 %v4209, %v4131
        %v4212 = vmul.f32 %v4209, %v4132
        %v4216 = vrot.slane %v4210, 1
        %v4217 = vrot.slane %v4211, 1
        %v4218 = vsel %vm1049, %v4216, %v4217
        %v4219 = vrot.slane %v4212, 1
        %v4220 = vsel %vm1049, %v4217, %v4219
        %v4223 = vadd.f32 %v4155, %v4218
        %v4224 = vadd.f32 %v4156, %v4220
        %s4225 = sld [smem:[#allocation10 + $0xf]]
        %v4226 = vstv %s4225
        %v4227 = vmul.f32 %v4226, %v4130
        %v4228 = vmul.f32 %v4226, %v4131
        %v4229 = vmul.f32 %v4226, %v4132
        %v4233 = vrot.slane %v4227, 2
        %v4234 = vrot.slane %v4228, 2
        %v4235 = vsel %vm1118, %v4233, %v4234
        %v4236 = vrot.slane %v4229, 2
        %v4237 = vsel %vm1118, %v4234, %v4236
        %v4240 = vadd.f32 %v4172, %v4235
        %v4241 = vadd.f32 %v4173, %v4237
        %s4242 = sld [smem:[#allocation10 + $0x33]]
        %v4243 = vstv %s4242
        %v4244 = vmul.f32 %v4243, %v4130
        %v4245 = vmul.f32 %v4243, %v4131
        %v4246 = vmul.f32 %v4243, %v4132
        %v4250 = vrot.slane %v4244, 2
        %v4251 = vrot.slane %v4245, 2
        %v4252 = vsel %vm1118, %v4250, %v4251
        %v4253 = vrot.slane %v4246, 2
        %v4254 = vsel %vm1118, %v4251, %v4253
        %v4257 = vadd.f32 %v4189, %v4252
        %v4258 = vadd.f32 %v4190, %v4254
        %s4259 = sld [smem:[#allocation10 + $0x57]]
        %v4260 = vstv %s4259
        %v4261 = vmul.f32 %v4260, %v4130
        %v4262 = vmul.f32 %v4260, %v4131
        %v4263 = vmul.f32 %v4260, %v4132
        %v4267 = vrot.slane %v4261, 2
        %v4268 = vrot.slane %v4262, 2
        %v4269 = vsel %vm1118, %v4267, %v4268
        %v4270 = vrot.slane %v4263, 2
        %v4271 = vsel %vm1118, %v4268, %v4270
        %v4274 = vadd.f32 %v4206, %v4269
        %v4275 = vadd.f32 %v4207, %v4271
        %s4276 = sld [smem:[#allocation10 + $0x7b]]
        %v4277 = vstv %s4276
        %v4278 = vmul.f32 %v4277, %v4130
        %v4279 = vmul.f32 %v4277, %v4131
        %v4280 = vmul.f32 %v4277, %v4132
        %v4284 = vrot.slane %v4278, 2
        %v4285 = vrot.slane %v4279, 2
        %v4286 = vsel %vm1118, %v4284, %v4285
        %v4287 = vrot.slane %v4280, 2
        %v4288 = vsel %vm1118, %v4285, %v4287
        %v4291 = vadd.f32 %v4223, %v4286
        %v4292 = vadd.f32 %v4224, %v4288
        %s4293 = sld [smem:[#allocation10 + $0xa]]
        %v4294 = vstv %s4293
        %v4295 = vmul.f32 %v4294, %v4130
        %v4296 = vmul.f32 %v4294, %v4131
        %4299 = vrot.lane.b32.xlu0 %v4295, 127
        %v4300 = vpop.permute.xlu0 %4299
        %4301 = vrot.lane.b32.xlu0 %v4296, 127
        %v4302 = vpop.permute.xlu0 %4301
        %v4305 = vadd.f32 %v4240, %v4300
        %v4306 = vadd.f32 %v4241, %v4302
        %s4307 = sld [smem:[#allocation10 + $0x2e]]
        %v4308 = vstv %s4307
        %v4309 = vmul.f32 %v4308, %v4130
        %v4310 = vmul.f32 %v4308, %v4131
        %4313 = vrot.lane.b32.xlu0 %v4309, 127
        %v4314 = vpop.permute.xlu0 %4313
        %4315 = vrot.lane.b32.xlu0 %v4310, 127
        %v4316 = vpop.permute.xlu0 %4315
        %v4319 = vadd.f32 %v4257, %v4314
        %v4320 = vadd.f32 %v4258, %v4316
        %s4321 = sld [smem:[#allocation10 + $0x52]]
        %v4322 = vstv %s4321
        %v4323 = vmul.f32 %v4322, %v4130
        %v4324 = vmul.f32 %v4322, %v4131
        %4327 = vrot.lane.b32.xlu0 %v4323, 127
        %v4328 = vpop.permute.xlu0 %4327
        %4329 = vrot.lane.b32.xlu0 %v4324, 127
        %v4330 = vpop.permute.xlu0 %4329
        %v4333 = vadd.f32 %v4274, %v4328
        %v4334 = vadd.f32 %v4275, %v4330
        %s4335 = sld [smem:[#allocation10 + $0x76]]
        %v4336 = vstv %s4335
        %v4337 = vmul.f32 %v4336, %v4130
        %v4338 = vmul.f32 %v4336, %v4131
        %4341 = vrot.lane.b32.xlu0 %v4337, 127
        %v4342 = vpop.permute.xlu0 %4341
        %4343 = vrot.lane.b32.xlu0 %v4338, 127
        %v4344 = vpop.permute.xlu0 %4343
        %v4347 = vadd.f32 %v4291, %v4342
        %v4348 = vadd.f32 %v4292, %v4344
        %s4349 = sld [smem:[#allocation10 + $0xd]]
        %v4350 = vstv %s4349
        %v4351 = vmul.f32 %v4350, %v4130
        %v4352 = vmul.f32 %v4350, %v4131
        %v4353 = vmul.f32 %v4350, %v4132
        %v4357 = vrot.slane %v4351, 1
        %v4358 = vrot.slane %v4352, 1
        %v4359 = vsel %vm1049, %v4357, %v4358
        %v4360 = vrot.slane %v4353, 1
        %v4361 = vsel %vm1049, %v4358, %v4360
        %4362 = vrot.lane.b32.xlu0 %v4359, 127
        %v4363 = vpop.permute.xlu0 %4362
        %4364 = vrot.lane.b32.xlu0 %v4361, 127
        %v4365 = vpop.permute.xlu0 %4364
        %v4368 = vadd.f32 %v4305, %v4363
        %v4369 = vadd.f32 %v4306, %v4365
        %s4370 = sld [smem:[#allocation10 + $0x31]]
        %v4371 = vstv %s4370
        %v4372 = vmul.f32 %v4371, %v4130
        %v4373 = vmul.f32 %v4371, %v4131
        %v4374 = vmul.f32 %v4371, %v4132
        %v4378 = vrot.slane %v4372, 1
        %v4379 = vrot.slane %v4373, 1
        %v4380 = vsel %vm1049, %v4378, %v4379
        %v4381 = vrot.slane %v4374, 1
        %v4382 = vsel %vm1049, %v4379, %v4381
        %4383 = vrot.lane.b32.xlu0 %v4380, 127
        %v4384 = vpop.permute.xlu0 %4383
        %4385 = vrot.lane.b32.xlu0 %v4382, 127
        %v4386 = vpop.permute.xlu0 %4385
        %v4389 = vadd.f32 %v4319, %v4384
        %v4390 = vadd.f32 %v4320, %v4386
        %s4391 = sld [smem:[#allocation10 + $0x55]]
        %v4392 = vstv %s4391
        %v4393 = vmul.f32 %v4392, %v4130
        %v4394 = vmul.f32 %v4392, %v4131
        %v4395 = vmul.f32 %v4392, %v4132
        %v4399 = vrot.slane %v4393, 1
        %v4400 = vrot.slane %v4394, 1
        %v4401 = vsel %vm1049, %v4399, %v4400
        %v4402 = vrot.slane %v4395, 1
        %v4403 = vsel %vm1049, %v4400, %v4402
        %4404 = vrot.lane.b32.xlu0 %v4401, 127
        %v4405 = vpop.permute.xlu0 %4404
        %4406 = vrot.lane.b32.xlu0 %v4403, 127
        %v4407 = vpop.permute.xlu0 %4406
        %v4410 = vadd.f32 %v4333, %v4405
        %v4411 = vadd.f32 %v4334, %v4407
        %s4412 = sld [smem:[#allocation10 + $0x79]]
        %v4413 = vstv %s4412
        %v4414 = vmul.f32 %v4413, %v4130
        %v4415 = vmul.f32 %v4413, %v4131
        %v4416 = vmul.f32 %v4413, %v4132
        %v4420 = vrot.slane %v4414, 1
        %v4421 = vrot.slane %v4415, 1
        %v4422 = vsel %vm1049, %v4420, %v4421
        %v4423 = vrot.slane %v4416, 1
        %v4424 = vsel %vm1049, %v4421, %v4423
        %4425 = vrot.lane.b32.xlu0 %v4422, 127
        %v4426 = vpop.permute.xlu0 %4425
        %4427 = vrot.lane.b32.xlu0 %v4424, 127
        %v4428 = vpop.permute.xlu0 %4427
        %v4431 = vadd.f32 %v4347, %v4426
        %v4432 = vadd.f32 %v4348, %v4428
        %s4433 = sld [smem:[#allocation10 + $0x10]]
        %v4434 = vstv %s4433
        %v4435 = vmul.f32 %v4434, %v4130
        %v4436 = vmul.f32 %v4434, %v4131
        %v4437 = vmul.f32 %v4434, %v4132
        %v4441 = vrot.slane %v4435, 2
        %v4442 = vrot.slane %v4436, 2
        %v4443 = vsel %vm1118, %v4441, %v4442
        %v4444 = vrot.slane %v4437, 2
        %v4445 = vsel %vm1118, %v4442, %v4444
        %4446 = vrot.lane.b32.xlu0 %v4443, 127
        %v4447 = vpop.permute.xlu0 %4446
        %4448 = vrot.lane.b32.xlu0 %v4445, 127
        %v4449 = vpop.permute.xlu0 %4448
        %v4452 = vadd.f32 %v4368, %v4447
        %v4453 = vadd.f32 %v4369, %v4449
        %s4454 = sld [smem:[#allocation10 + $0x34]]
        %v4455 = vstv %s4454
        %v4456 = vmul.f32 %v4455, %v4130
        %v4457 = vmul.f32 %v4455, %v4131
        %v4458 = vmul.f32 %v4455, %v4132
        %v4462 = vrot.slane %v4456, 2
        %v4463 = vrot.slane %v4457, 2
        %v4464 = vsel %vm1118, %v4462, %v4463
        %v4465 = vrot.slane %v4458, 2
        %v4466 = vsel %vm1118, %v4463, %v4465
        %4467 = vrot.lane.b32.xlu0 %v4464, 127
        %v4468 = vpop.permute.xlu0 %4467
        %4469 = vrot.lane.b32.xlu0 %v4466, 127
        %v4470 = vpop.permute.xlu0 %4469
        %v4473 = vadd.f32 %v4389, %v4468
        %v4474 = vadd.f32 %v4390, %v4470
        %s4475 = sld [smem:[#allocation10 + $0x58]]
        %v4476 = vstv %s4475
        %v4477 = vmul.f32 %v4476, %v4130
        %v4478 = vmul.f32 %v4476, %v4131
        %v4479 = vmul.f32 %v4476, %v4132
        %v4483 = vrot.slane %v4477, 2
        %v4484 = vrot.slane %v4478, 2
        %v4485 = vsel %vm1118, %v4483, %v4484
        %v4486 = vrot.slane %v4479, 2
        %v4487 = vsel %vm1118, %v4484, %v4486
        %4488 = vrot.lane.b32.xlu0 %v4485, 127
        %v4489 = vpop.permute.xlu0 %4488
        %4490 = vrot.lane.b32.xlu0 %v4487, 127
        %v4491 = vpop.permute.xlu0 %4490
        %v4494 = vadd.f32 %v4410, %v4489
        %v4495 = vadd.f32 %v4411, %v4491
        %s4496 = sld [smem:[#allocation10 + $0x7c]]
        %v4497 = vstv %s4496
        %v4498 = vmul.f32 %v4497, %v4130
        %v4499 = vmul.f32 %v4497, %v4131
        %v4500 = vmul.f32 %v4497, %v4132
        %v4504 = vrot.slane %v4498, 2
        %v4505 = vrot.slane %v4499, 2
        %v4506 = vsel %vm1118, %v4504, %v4505
        %v4507 = vrot.slane %v4500, 2
        %v4508 = vsel %vm1118, %v4505, %v4507
        %4509 = vrot.lane.b32.xlu0 %v4506, 127
        %v4510 = vpop.permute.xlu0 %4509
        %4511 = vrot.lane.b32.xlu0 %v4508, 127
        %v4512 = vpop.permute.xlu0 %4511
        %v4515 = vadd.f32 %v4431, %v4510
        %v4516 = vadd.f32 %v4432, %v4512
        %s4517 = sld [smem:[#allocation10 + $0xb]]
        %v4518 = vstv %s4517
        %v4519 = vmul.f32 %v4518, %v4130
        %v4520 = vmul.f32 %v4518, %v4131
        %4523 = vrot.lane.b32.xlu0 %v4519, 126
        %v4524 = vpop.permute.xlu0 %4523
        %4525 = vrot.lane.b32.xlu0 %v4520, 126
        %v4526 = vpop.permute.xlu0 %4525
        %v4529 = vadd.f32 %v4452, %v4524
        %v4530 = vadd.f32 %v4453, %v4526
        %s4531 = sld [smem:[#allocation10 + $0x2f]]
        %v4532 = vstv %s4531
        %v4533 = vmul.f32 %v4532, %v4130
        %v4534 = vmul.f32 %v4532, %v4131
        %4537 = vrot.lane.b32.xlu0 %v4533, 126
        %v4538 = vpop.permute.xlu0 %4537
        %4539 = vrot.lane.b32.xlu0 %v4534, 126
        %v4540 = vpop.permute.xlu0 %4539
        %v4543 = vadd.f32 %v4473, %v4538
        %v4544 = vadd.f32 %v4474, %v4540
        %s4545 = sld [smem:[#allocation10 + $0x53]]
        %v4546 = vstv %s4545
        %v4547 = vmul.f32 %v4546, %v4130
        %v4548 = vmul.f32 %v4546, %v4131
        %4551 = vrot.lane.b32.xlu0 %v4547, 126
        %v4552 = vpop.permute.xlu0 %4551
        %4553 = vrot.lane.b32.xlu0 %v4548, 126
        %v4554 = vpop.permute.xlu0 %4553
        %v4557 = vadd.f32 %v4494, %v4552
        %v4558 = vadd.f32 %v4495, %v4554
        %s4559 = sld [smem:[#allocation10 + $0x77]]
        %v4560 = vstv %s4559
        %v4561 = vmul.f32 %v4560, %v4130
        %v4562 = vmul.f32 %v4560, %v4131
        %4565 = vrot.lane.b32.xlu0 %v4561, 126
        %v4566 = vpop.permute.xlu0 %4565
        %4567 = vrot.lane.b32.xlu0 %v4562, 126
        %v4568 = vpop.permute.xlu0 %4567
        %v4571 = vadd.f32 %v4515, %v4566
        %v4572 = vadd.f32 %v4516, %v4568
        %s4573 = sld [smem:[#allocation10 + $0xe]]
        %v4574 = vstv %s4573
        %v4575 = vmul.f32 %v4574, %v4130
        %v4576 = vmul.f32 %v4574, %v4131
        %v4577 = vmul.f32 %v4574, %v4132
        %v4581 = vrot.slane %v4575, 1
        %v4582 = vrot.slane %v4576, 1
        %v4583 = vsel %vm1049, %v4581, %v4582
        %v4584 = vrot.slane %v4577, 1
        %v4585 = vsel %vm1049, %v4582, %v4584
        %4586 = vrot.lane.b32.xlu0 %v4583, 126
        %v4587 = vpop.permute.xlu0 %4586
        %4588 = vrot.lane.b32.xlu0 %v4585, 126
        %v4589 = vpop.permute.xlu0 %4588
        %v4592 = vadd.f32 %v4529, %v4587
        %v4593 = vadd.f32 %v4530, %v4589
        %s4594 = sld [smem:[#allocation10 + $0x32]]
        %v4595 = vstv %s4594
        %v4596 = vmul.f32 %v4595, %v4130
        %v4597 = vmul.f32 %v4595, %v4131
        %v4598 = vmul.f32 %v4595, %v4132
        %v4602 = vrot.slane %v4596, 1
        %v4603 = vrot.slane %v4597, 1
        %v4604 = vsel %vm1049, %v4602, %v4603
        %v4605 = vrot.slane %v4598, 1
        %v4606 = vsel %vm1049, %v4603, %v4605
        %4607 = vrot.lane.b32.xlu0 %v4604, 126
        %v4608 = vpop.permute.xlu0 %4607
        %4609 = vrot.lane.b32.xlu0 %v4606, 126
        %v4610 = vpop.permute.xlu0 %4609
        %v4613 = vadd.f32 %v4543, %v4608
        %v4614 = vadd.f32 %v4544, %v4610
        %s4615 = sld [smem:[#allocation10 + $0x56]]
        %v4616 = vstv %s4615
        %v4617 = vmul.f32 %v4616, %v4130
        %v4618 = vmul.f32 %v4616, %v4131
        %v4619 = vmul.f32 %v4616, %v4132
        %v4623 = vrot.slane %v4617, 1
        %v4624 = vrot.slane %v4618, 1
        %v4625 = vsel %vm1049, %v4623, %v4624
        %v4626 = vrot.slane %v4619, 1
        %v4627 = vsel %vm1049, %v4624, %v4626
        %4628 = vrot.lane.b32.xlu0 %v4625, 126
        %v4629 = vpop.permute.xlu0 %4628
        %4630 = vrot.lane.b32.xlu0 %v4627, 126
        %v4631 = vpop.permute.xlu0 %4630
        %v4634 = vadd.f32 %v4557, %v4629
        %v4635 = vadd.f32 %v4558, %v4631
        %s4636 = sld [smem:[#allocation10 + $0x7a]]
        %v4637 = vstv %s4636
        %v4638 = vmul.f32 %v4637, %v4130
        %v4639 = vmul.f32 %v4637, %v4131
        %v4640 = vmul.f32 %v4637, %v4132
        %v4644 = vrot.slane %v4638, 1
        %v4645 = vrot.slane %v4639, 1
        %v4646 = vsel %vm1049, %v4644, %v4645
        %v4647 = vrot.slane %v4640, 1
        %v4648 = vsel %vm1049, %v4645, %v4647
        %4649 = vrot.lane.b32.xlu0 %v4646, 126
        %v4650 = vpop.permute.xlu0 %4649
        %4651 = vrot.lane.b32.xlu0 %v4648, 126
        %v4652 = vpop.permute.xlu0 %4651
        %v4655 = vadd.f32 %v4571, %v4650
        %v4656 = vadd.f32 %v4572, %v4652
        %s4657 = sld [smem:[#allocation10 + $0x11]]
        %v4658 = vstv %s4657
        %v4659 = vmul.f32 %v4658, %v4130
        %v4660 = vmul.f32 %v4658, %v4131
        %v4661 = vmul.f32 %v4658, %v4132
        %v4665 = vrot.slane %v4659, 2
        %v4666 = vrot.slane %v4660, 2
        %v4667 = vsel %vm1118, %v4665, %v4666
        %v4668 = vrot.slane %v4661, 2
        %v4669 = vsel %vm1118, %v4666, %v4668
        %4670 = vrot.lane.b32.xlu0 %v4667, 126
        %v4671 = vpop.permute.xlu0 %4670
        %4672 = vrot.lane.b32.xlu0 %v4669, 126
        %v4673 = vpop.permute.xlu0 %4672
        %v4676 = vadd.f32 %v4592, %v4671
        %v4677 = vadd.f32 %v4593, %v4673
        %s4678 = sld [smem:[#allocation10 + $0x35]]
        %v4679 = vstv %s4678
        %v4680 = vmul.f32 %v4679, %v4130
        %v4681 = vmul.f32 %v4679, %v4131
        %v4682 = vmul.f32 %v4679, %v4132
        %v4686 = vrot.slane %v4680, 2
        %v4687 = vrot.slane %v4681, 2
        %v4688 = vsel %vm1118, %v4686, %v4687
        %v4689 = vrot.slane %v4682, 2
        %v4690 = vsel %vm1118, %v4687, %v4689
        %4691 = vrot.lane.b32.xlu0 %v4688, 126
        %v4692 = vpop.permute.xlu0 %4691
        %4693 = vrot.lane.b32.xlu0 %v4690, 126
        %v4694 = vpop.permute.xlu0 %4693
        %v4697 = vadd.f32 %v4613, %v4692
        %v4698 = vadd.f32 %v4614, %v4694
        %s4699 = sld [smem:[#allocation10 + $0x59]]
        %v4700 = vstv %s4699
        %v4701 = vmul.f32 %v4700, %v4130
        %v4702 = vmul.f32 %v4700, %v4131
        %v4703 = vmul.f32 %v4700, %v4132
        %v4707 = vrot.slane %v4701, 2
        %v4708 = vrot.slane %v4702, 2
        %v4709 = vsel %vm1118, %v4707, %v4708
        %v4710 = vrot.slane %v4703, 2
        %v4711 = vsel %vm1118, %v4708, %v4710
        %4712 = vrot.lane.b32.xlu0 %v4709, 126
        %v4713 = vpop.permute.xlu0 %4712
        %4714 = vrot.lane.b32.xlu0 %v4711, 126
        %v4715 = vpop.permute.xlu0 %4714
        %v4718 = vadd.f32 %v4634, %v4713
        %v4719 = vadd.f32 %v4635, %v4715
        %s4720 = sld [smem:[#allocation10 + $0x7d]]
        %v4721 = vstv %s4720
        %v4722 = vmul.f32 %v4721, %v4130
        %v4723 = vmul.f32 %v4721, %v4131
        %v4724 = vmul.f32 %v4721, %v4132
        %v4728 = vrot.slane %v4722, 2
        %v4729 = vrot.slane %v4723, 2
        %v4730 = vsel %vm1118, %v4728, %v4729
        %v4731 = vrot.slane %v4724, 2
        %v4732 = vsel %vm1118, %v4729, %v4731
        %4733 = vrot.lane.b32.xlu0 %v4730, 126
        %v4734 = vpop.permute.xlu0 %4733
        %4735 = vrot.lane.b32.xlu0 %v4732, 126
        %v4736 = vpop.permute.xlu0 %4735
        %v4739 = vadd.f32 %v4655, %v4734
        %v4740 = vadd.f32 %v4656, %v4736
        %v4741 = vld [vmem:[%s3495] sm:$0xff]
        %v4742 = vld [vmem:[%s3495 + $0x8] sm:$0xff]
        %v4743 = vld [vmem:[%s3495 + $0x10] sm:$0x3]
        %s4744 = sld [smem:[#allocation10 + $0x12]]
        %v4745 = vstv %s4744
        %v4746 = vmul.f32 %v4745, %v4741
        %v4747 = vmul.f32 %v4745, %v4742
        %v4748 = vadd.f32 %v4676, %v4746
        %v4749 = vadd.f32 %v4677, %v4747
        %s4750 = sld [smem:[#allocation10 + $0x36]]
        %v4751 = vstv %s4750
        %v4752 = vmul.f32 %v4751, %v4741
        %v4753 = vmul.f32 %v4751, %v4742
        %v4754 = vadd.f32 %v4697, %v4752
        %v4755 = vadd.f32 %v4698, %v4753
        %s4756 = sld [smem:[#allocation10 + $0x5a]]
        %v4757 = vstv %s4756
        %v4758 = vmul.f32 %v4757, %v4741
        %v4759 = vmul.f32 %v4757, %v4742
        %v4760 = vadd.f32 %v4718, %v4758
        %v4761 = vadd.f32 %v4719, %v4759
        %s4762 = sld [smem:[#allocation10 + $0x7e]]
        %v4763 = vstv %s4762
        %v4764 = vmul.f32 %v4763, %v4741
        %v4765 = vmul.f32 %v4763, %v4742
        %v4766 = vadd.f32 %v4739, %v4764
        %v4767 = vadd.f32 %v4740, %v4765
        %s4768 = sld [smem:[#allocation10 + $0x15]]
        %v4769 = vstv %s4768
        %v4770 = vmul.f32 %v4769, %v4741
        %v4771 = vmul.f32 %v4769, %v4742
        %v4772 = vmul.f32 %v4769, %v4743
        %v4776 = vrot.slane %v4770, 1
        %v4777 = vrot.slane %v4771, 1
        %v4778 = vsel %vm1049, %v4776, %v4777
        %v4779 = vrot.slane %v4772, 1
        %v4780 = vsel %vm1049, %v4777, %v4779
        %v4783 = vadd.f32 %v4748, %v4778
        %v4784 = vadd.f32 %v4749, %v4780
        %s4785 = sld [smem:[#allocation10 + $0x39]]
        %v4786 = vstv %s4785
        %v4787 = vmul.f32 %v4786, %v4741
        %v4788 = vmul.f32 %v4786, %v4742
        %v4789 = vmul.f32 %v4786, %v4743
        %v4793 = vrot.slane %v4787, 1
        %v4794 = vrot.slane %v4788, 1
        %v4795 = vsel %vm1049, %v4793, %v4794
        %v4796 = vrot.slane %v4789, 1
        %v4797 = vsel %vm1049, %v4794, %v4796
        %v4800 = vadd.f32 %v4754, %v4795
        %v4801 = vadd.f32 %v4755, %v4797
        %s4802 = sld [smem:[#allocation10 + $0x5d]]
        %v4803 = vstv %s4802
        %v4804 = vmul.f32 %v4803, %v4741
        %v4805 = vmul.f32 %v4803, %v4742
        %v4806 = vmul.f32 %v4803, %v4743
        %v4810 = vrot.slane %v4804, 1
        %v4811 = vrot.slane %v4805, 1
        %v4812 = vsel %vm1049, %v4810, %v4811
        %v4813 = vrot.slane %v4806, 1
        %v4814 = vsel %vm1049, %v4811, %v4813
        %v4817 = vadd.f32 %v4760, %v4812
        %v4818 = vadd.f32 %v4761, %v4814
        %s4819 = sld [smem:[#allocation10 + $0x81]]
        %v4820 = vstv %s4819
        %v4821 = vmul.f32 %v4820, %v4741
        %v4822 = vmul.f32 %v4820, %v4742
        %v4823 = vmul.f32 %v4820, %v4743
        %v4827 = vrot.slane %v4821, 1
        %v4828 = vrot.slane %v4822, 1
        %v4829 = vsel %vm1049, %v4827, %v4828
        %v4830 = vrot.slane %v4823, 1
        %v4831 = vsel %vm1049, %v4828, %v4830
        %v4834 = vadd.f32 %v4766, %v4829
        %v4835 = vadd.f32 %v4767, %v4831
        %s4836 = sld [smem:[#allocation10 + $0x18]]
        %v4837 = vstv %s4836
        %v4838 = vmul.f32 %v4837, %v4741
        %v4839 = vmul.f32 %v4837, %v4742
        %v4840 = vmul.f32 %v4837, %v4743
        %v4844 = vrot.slane %v4838, 2
        %v4845 = vrot.slane %v4839, 2
        %v4846 = vsel %vm1118, %v4844, %v4845
        %v4847 = vrot.slane %v4840, 2
        %v4848 = vsel %vm1118, %v4845, %v4847
        %v4851 = vadd.f32 %v4783, %v4846
        %v4852 = vadd.f32 %v4784, %v4848
        %s4853 = sld [smem:[#allocation10 + $0x3c]]
        %v4854 = vstv %s4853
        %v4855 = vmul.f32 %v4854, %v4741
        %v4856 = vmul.f32 %v4854, %v4742
        %v4857 = vmul.f32 %v4854, %v4743
        %v4861 = vrot.slane %v4855, 2
        %v4862 = vrot.slane %v4856, 2
        %v4863 = vsel %vm1118, %v4861, %v4862
        %v4864 = vrot.slane %v4857, 2
        %v4865 = vsel %vm1118, %v4862, %v4864
        %v4868 = vadd.f32 %v4800, %v4863
        %v4869 = vadd.f32 %v4801, %v4865
        %s4870 = sld [smem:[#allocation10 + $0x60]]
        %v4871 = vstv %s4870
        %v4872 = vmul.f32 %v4871, %v4741
        %v4873 = vmul.f32 %v4871, %v4742
        %v4874 = vmul.f32 %v4871, %v4743
        %v4878 = vrot.slane %v4872, 2
        %v4879 = vrot.slane %v4873, 2
        %v4880 = vsel %vm1118, %v4878, %v4879
        %v4881 = vrot.slane %v4874, 2
        %v4882 = vsel %vm1118, %v4879, %v4881
        %v4885 = vadd.f32 %v4817, %v4880
        %v4886 = vadd.f32 %v4818, %v4882
        %s4887 = sld [smem:[#allocation10 + $0x84]]
        %v4888 = vstv %s4887
        %v4889 = vmul.f32 %v4888, %v4741
        %v4890 = vmul.f32 %v4888, %v4742
        %v4891 = vmul.f32 %v4888, %v4743
        %v4895 = vrot.slane %v4889, 2
        %v4896 = vrot.slane %v4890, 2
        %v4897 = vsel %vm1118, %v4895, %v4896
        %v4898 = vrot.slane %v4891, 2
        %v4899 = vsel %vm1118, %v4896, %v4898
        %v4902 = vadd.f32 %v4834, %v4897
        %v4903 = vadd.f32 %v4835, %v4899
        %s4904 = sld [smem:[#allocation10 + $0x13]]
        %v4905 = vstv %s4904
        %v4906 = vmul.f32 %v4905, %v4741
        %v4907 = vmul.f32 %v4905, %v4742
        %4910 = vrot.lane.b32.xlu0 %v4906, 127
        %v4911 = vpop.permute.xlu0 %4910
        %4912 = vrot.lane.b32.xlu0 %v4907, 127
        %v4913 = vpop.permute.xlu0 %4912
        %v4916 = vadd.f32 %v4851, %v4911
        %v4917 = vadd.f32 %v4852, %v4913
        %s4918 = sld [smem:[#allocation10 + $0x37]]
        %v4919 = vstv %s4918
        %v4920 = vmul.f32 %v4919, %v4741
        %v4921 = vmul.f32 %v4919, %v4742
        %4924 = vrot.lane.b32.xlu0 %v4920, 127
        %v4925 = vpop.permute.xlu0 %4924
        %4926 = vrot.lane.b32.xlu0 %v4921, 127
        %v4927 = vpop.permute.xlu0 %4926
        %v4930 = vadd.f32 %v4868, %v4925
        %v4931 = vadd.f32 %v4869, %v4927
        %s4932 = sld [smem:[#allocation10 + $0x5b]]
        %v4933 = vstv %s4932
        %v4934 = vmul.f32 %v4933, %v4741
        %v4935 = vmul.f32 %v4933, %v4742
        %4938 = vrot.lane.b32.xlu0 %v4934, 127
        %v4939 = vpop.permute.xlu0 %4938
        %4940 = vrot.lane.b32.xlu0 %v4935, 127
        %v4941 = vpop.permute.xlu0 %4940
        %v4944 = vadd.f32 %v4885, %v4939
        %v4945 = vadd.f32 %v4886, %v4941
        %s4946 = sld [smem:[#allocation10 + $0x7f]]
        %v4947 = vstv %s4946
        %v4948 = vmul.f32 %v4947, %v4741
        %v4949 = vmul.f32 %v4947, %v4742
        %4952 = vrot.lane.b32.xlu0 %v4948, 127
        %v4953 = vpop.permute.xlu0 %4952
        %4954 = vrot.lane.b32.xlu0 %v4949, 127
        %v4955 = vpop.permute.xlu0 %4954
        %v4958 = vadd.f32 %v4902, %v4953
        %v4959 = vadd.f32 %v4903, %v4955
        %s4960 = sld [smem:[#allocation10 + $0x16]]
        %v4961 = vstv %s4960
        %v4962 = vmul.f32 %v4961, %v4741
        %v4963 = vmul.f32 %v4961, %v4742
        %v4964 = vmul.f32 %v4961, %v4743
        %v4968 = vrot.slane %v4962, 1
        %v4969 = vrot.slane %v4963, 1
        %v4970 = vsel %vm1049, %v4968, %v4969
        %v4971 = vrot.slane %v4964, 1
        %v4972 = vsel %vm1049, %v4969, %v4971
        %4973 = vrot.lane.b32.xlu0 %v4970, 127
        %v4974 = vpop.permute.xlu0 %4973
        %4975 = vrot.lane.b32.xlu0 %v4972, 127
        %v4976 = vpop.permute.xlu0 %4975
        %v4979 = vadd.f32 %v4916, %v4974
        %v4980 = vadd.f32 %v4917, %v4976
        %s4981 = sld [smem:[#allocation10 + $0x3a]]
        %v4982 = vstv %s4981
        %v4983 = vmul.f32 %v4982, %v4741
        %v4984 = vmul.f32 %v4982, %v4742
        %v4985 = vmul.f32 %v4982, %v4743
        %v4989 = vrot.slane %v4983, 1
        %v4990 = vrot.slane %v4984, 1
        %v4991 = vsel %vm1049, %v4989, %v4990
        %v4992 = vrot.slane %v4985, 1
        %v4993 = vsel %vm1049, %v4990, %v4992
        %4994 = vrot.lane.b32.xlu0 %v4991, 127
        %v4995 = vpop.permute.xlu0 %4994
        %4996 = vrot.lane.b32.xlu0 %v4993, 127
        %v4997 = vpop.permute.xlu0 %4996
        %v5000 = vadd.f32 %v4930, %v4995
        %v5001 = vadd.f32 %v4931, %v4997
        %s5002 = sld [smem:[#allocation10 + $0x5e]]
        %v5003 = vstv %s5002
        %v5004 = vmul.f32 %v5003, %v4741
        %v5005 = vmul.f32 %v5003, %v4742
        %v5006 = vmul.f32 %v5003, %v4743
        %v5010 = vrot.slane %v5004, 1
        %v5011 = vrot.slane %v5005, 1
        %v5012 = vsel %vm1049, %v5010, %v5011
        %v5013 = vrot.slane %v5006, 1
        %v5014 = vsel %vm1049, %v5011, %v5013
        %5015 = vrot.lane.b32.xlu0 %v5012, 127
        %v5016 = vpop.permute.xlu0 %5015
        %5017 = vrot.lane.b32.xlu0 %v5014, 127
        %v5018 = vpop.permute.xlu0 %5017
        %v5021 = vadd.f32 %v4944, %v5016
        %v5022 = vadd.f32 %v4945, %v5018
        %s5023 = sld [smem:[#allocation10 + $0x82]]
        %v5024 = vstv %s5023
        %v5025 = vmul.f32 %v5024, %v4741
        %v5026 = vmul.f32 %v5024, %v4742
        %v5027 = vmul.f32 %v5024, %v4743
        %v5031 = vrot.slane %v5025, 1
        %v5032 = vrot.slane %v5026, 1
        %v5033 = vsel %vm1049, %v5031, %v5032
        %v5034 = vrot.slane %v5027, 1
        %v5035 = vsel %vm1049, %v5032, %v5034
        %5036 = vrot.lane.b32.xlu0 %v5033, 127
        %v5037 = vpop.permute.xlu0 %5036
        %5038 = vrot.lane.b32.xlu0 %v5035, 127
        %v5039 = vpop.permute.xlu0 %5038
        %v5042 = vadd.f32 %v4958, %v5037
        %v5043 = vadd.f32 %v4959, %v5039
        %s5044 = sld [smem:[#allocation10 + $0x19]]
        %v5045 = vstv %s5044
        %v5046 = vmul.f32 %v5045, %v4741
        %v5047 = vmul.f32 %v5045, %v4742
        %v5048 = vmul.f32 %v5045, %v4743
        %v5052 = vrot.slane %v5046, 2
        %v5053 = vrot.slane %v5047, 2
        %v5054 = vsel %vm1118, %v5052, %v5053
        %v5055 = vrot.slane %v5048, 2
        %v5056 = vsel %vm1118, %v5053, %v5055
        %5057 = vrot.lane.b32.xlu0 %v5054, 127
        %v5058 = vpop.permute.xlu0 %5057
        %5059 = vrot.lane.b32.xlu0 %v5056, 127
        %v5060 = vpop.permute.xlu0 %5059
        %v5063 = vadd.f32 %v4979, %v5058
        %v5064 = vadd.f32 %v4980, %v5060
        %s5065 = sld [smem:[#allocation10 + $0x3d]]
        %v5066 = vstv %s5065
        %v5067 = vmul.f32 %v5066, %v4741
        %v5068 = vmul.f32 %v5066, %v4742
        %v5069 = vmul.f32 %v5066, %v4743
        %v5073 = vrot.slane %v5067, 2
        %v5074 = vrot.slane %v5068, 2
        %v5075 = vsel %vm1118, %v5073, %v5074
        %v5076 = vrot.slane %v5069, 2
        %v5077 = vsel %vm1118, %v5074, %v5076
        %5078 = vrot.lane.b32.xlu0 %v5075, 127
        %v5079 = vpop.permute.xlu0 %5078
        %5080 = vrot.lane.b32.xlu0 %v5077, 127
        %v5081 = vpop.permute.xlu0 %5080
        %v5084 = vadd.f32 %v5000, %v5079
        %v5085 = vadd.f32 %v5001, %v5081
        %s5086 = sld [smem:[#allocation10 + $0x61]]
        %v5087 = vstv %s5086
        %v5088 = vmul.f32 %v5087, %v4741
        %v5089 = vmul.f32 %v5087, %v4742
        %v5090 = vmul.f32 %v5087, %v4743
        %v5094 = vrot.slane %v5088, 2
        %v5095 = vrot.slane %v5089, 2
        %v5096 = vsel %vm1118, %v5094, %v5095
        %v5097 = vrot.slane %v5090, 2
        %v5098 = vsel %vm1118, %v5095, %v5097
        %5099 = vrot.lane.b32.xlu0 %v5096, 127
        %v5100 = vpop.permute.xlu0 %5099
        %5101 = vrot.lane.b32.xlu0 %v5098, 127
        %v5102 = vpop.permute.xlu0 %5101
        %v5105 = vadd.f32 %v5021, %v5100
        %v5106 = vadd.f32 %v5022, %v5102
        %s5107 = sld [smem:[#allocation10 + $0x85]]
        %v5108 = vstv %s5107
        %v5109 = vmul.f32 %v5108, %v4741
        %v5110 = vmul.f32 %v5108, %v4742
        %v5111 = vmul.f32 %v5108, %v4743
        %v5115 = vrot.slane %v5109, 2
        %v5116 = vrot.slane %v5110, 2
        %v5117 = vsel %vm1118, %v5115, %v5116
        %v5118 = vrot.slane %v5111, 2
        %v5119 = vsel %vm1118, %v5116, %v5118
        %5120 = vrot.lane.b32.xlu0 %v5117, 127
        %v5121 = vpop.permute.xlu0 %5120
        %5122 = vrot.lane.b32.xlu0 %v5119, 127
        %v5123 = vpop.permute.xlu0 %5122
        %v5126 = vadd.f32 %v5042, %v5121
        %v5127 = vadd.f32 %v5043, %v5123
        %s5128 = sld [smem:[#allocation10 + $0x14]]
        %v5129 = vstv %s5128
        %v5130 = vmul.f32 %v5129, %v4741
        %v5131 = vmul.f32 %v5129, %v4742
        %5134 = vrot.lane.b32.xlu0 %v5130, 126
        %v5135 = vpop.permute.xlu0 %5134
        %5136 = vrot.lane.b32.xlu0 %v5131, 126
        %v5137 = vpop.permute.xlu0 %5136
        %v5140 = vadd.f32 %v5063, %v5135
        %v5141 = vadd.f32 %v5064, %v5137
        %s5142 = sld [smem:[#allocation10 + $0x38]]
        %v5143 = vstv %s5142
        %v5144 = vmul.f32 %v5143, %v4741
        %v5145 = vmul.f32 %v5143, %v4742
        %5148 = vrot.lane.b32.xlu0 %v5144, 126
        %v5149 = vpop.permute.xlu0 %5148
        %5150 = vrot.lane.b32.xlu0 %v5145, 126
        %v5151 = vpop.permute.xlu0 %5150
        %v5154 = vadd.f32 %v5084, %v5149
        %v5155 = vadd.f32 %v5085, %v5151
        %s5156 = sld [smem:[#allocation10 + $0x5c]]
        %v5157 = vstv %s5156
        %v5158 = vmul.f32 %v5157, %v4741
        %v5159 = vmul.f32 %v5157, %v4742
        %5162 = vrot.lane.b32.xlu0 %v5158, 126
        %v5163 = vpop.permute.xlu0 %5162
        %5164 = vrot.lane.b32.xlu0 %v5159, 126
        %v5165 = vpop.permute.xlu0 %5164
        %v5168 = vadd.f32 %v5105, %v5163
        %v5169 = vadd.f32 %v5106, %v5165
        %s5170 = sld [smem:[#allocation10 + $0x80]]
        %v5171 = vstv %s5170
        %v5172 = vmul.f32 %v5171, %v4741
        %v5173 = vmul.f32 %v5171, %v4742
        %5176 = vrot.lane.b32.xlu0 %v5172, 126
        %v5177 = vpop.permute.xlu0 %5176
        %5178 = vrot.lane.b32.xlu0 %v5173, 126
        %v5179 = vpop.permute.xlu0 %5178
        %v5182 = vadd.f32 %v5126, %v5177
        %v5183 = vadd.f32 %v5127, %v5179
        %s5184 = sld [smem:[#allocation10 + $0x17]]
        %v5185 = vstv %s5184
        %v5186 = vmul.f32 %v5185, %v4741
        %v5187 = vmul.f32 %v5185, %v4742
        %v5188 = vmul.f32 %v5185, %v4743
        %v5192 = vrot.slane %v5186, 1
        %v5193 = vrot.slane %v5187, 1
        %v5194 = vsel %vm1049, %v5192, %v5193
        %v5195 = vrot.slane %v5188, 1
        %v5196 = vsel %vm1049, %v5193, %v5195
        %5197 = vrot.lane.b32.xlu0 %v5194, 126
        %v5198 = vpop.permute.xlu0 %5197
        %5199 = vrot.lane.b32.xlu0 %v5196, 126
        %v5200 = vpop.permute.xlu0 %5199
        %v5203 = vadd.f32 %v5140, %v5198
        %v5204 = vadd.f32 %v5141, %v5200
        %s5205 = sld [smem:[#allocation10 + $0x3b]]
        %v5206 = vstv %s5205
        %v5207 = vmul.f32 %v5206, %v4741
        %v5208 = vmul.f32 %v5206, %v4742
        %v5209 = vmul.f32 %v5206, %v4743
        %v5213 = vrot.slane %v5207, 1
        %v5214 = vrot.slane %v5208, 1
        %v5215 = vsel %vm1049, %v5213, %v5214
        %v5216 = vrot.slane %v5209, 1
        %v5217 = vsel %vm1049, %v5214, %v5216
        %5218 = vrot.lane.b32.xlu0 %v5215, 126
        %v5219 = vpop.permute.xlu0 %5218
        %5220 = vrot.lane.b32.xlu0 %v5217, 126
        %v5221 = vpop.permute.xlu0 %5220
        %v5224 = vadd.f32 %v5154, %v5219
        %v5225 = vadd.f32 %v5155, %v5221
        %s5226 = sld [smem:[#allocation10 + $0x5f]]
        %v5227 = vstv %s5226
        %v5228 = vmul.f32 %v5227, %v4741
        %v5229 = vmul.f32 %v5227, %v4742
        %v5230 = vmul.f32 %v5227, %v4743
        %v5234 = vrot.slane %v5228, 1
        %v5235 = vrot.slane %v5229, 1
        %v5236 = vsel %vm1049, %v5234, %v5235
        %v5237 = vrot.slane %v5230, 1
        %v5238 = vsel %vm1049, %v5235, %v5237
        %5239 = vrot.lane.b32.xlu0 %v5236, 126
        %v5240 = vpop.permute.xlu0 %5239
        %5241 = vrot.lane.b32.xlu0 %v5238, 126
        %v5242 = vpop.permute.xlu0 %5241
        %v5245 = vadd.f32 %v5168, %v5240
        %v5246 = vadd.f32 %v5169, %v5242
        %s5247 = sld [smem:[#allocation10 + $0x83]]
        %v5248 = vstv %s5247
        %v5249 = vmul.f32 %v5248, %v4741
        %v5250 = vmul.f32 %v5248, %v4742
        %v5251 = vmul.f32 %v5248, %v4743
        %v5255 = vrot.slane %v5249, 1
        %v5256 = vrot.slane %v5250, 1
        %v5257 = vsel %vm1049, %v5255, %v5256
        %v5258 = vrot.slane %v5251, 1
        %v5259 = vsel %vm1049, %v5256, %v5258
        %5260 = vrot.lane.b32.xlu0 %v5257, 126
        %v5261 = vpop.permute.xlu0 %5260
        %5262 = vrot.lane.b32.xlu0 %v5259, 126
        %v5263 = vpop.permute.xlu0 %5262
        %v5266 = vadd.f32 %v5182, %v5261
        %v5267 = vadd.f32 %v5183, %v5263
        %s5268 = sld [smem:[#allocation10 + $0x1a]]
        %v5269 = vstv %s5268
        %v5270 = vmul.f32 %v5269, %v4741
        %v5271 = vmul.f32 %v5269, %v4742
        %v5272 = vmul.f32 %v5269, %v4743
        %v5276 = vrot.slane %v5270, 2
        %v5277 = vrot.slane %v5271, 2
        %v5278 = vsel %vm1118, %v5276, %v5277
        %v5279 = vrot.slane %v5272, 2
        %v5280 = vsel %vm1118, %v5277, %v5279
        %5281 = vrot.lane.b32.xlu0 %v5278, 126
        %v5282 = vpop.permute.xlu0 %5281
        %5283 = vrot.lane.b32.xlu0 %v5280, 126
        %v5284 = vpop.permute.xlu0 %5283
        %v5287 = vadd.f32 %v5203, %v5282
        %v5288 = vadd.f32 %v5204, %v5284
        %s5289 = sld [smem:[#allocation10 + $0x3e]]
        %v5290 = vstv %s5289
        %v5291 = vmul.f32 %v5290, %v4741
        %v5292 = vmul.f32 %v5290, %v4742
        %v5293 = vmul.f32 %v5290, %v4743
        %v5297 = vrot.slane %v5291, 2
        %v5298 = vrot.slane %v5292, 2
        %v5299 = vsel %vm1118, %v5297, %v5298
        %v5300 = vrot.slane %v5293, 2
        %v5301 = vsel %vm1118, %v5298, %v5300
        %5302 = vrot.lane.b32.xlu0 %v5299, 126
        %v5303 = vpop.permute.xlu0 %5302
        %5304 = vrot.lane.b32.xlu0 %v5301, 126
        %v5305 = vpop.permute.xlu0 %5304
        %v5308 = vadd.f32 %v5224, %v5303
        %v5309 = vadd.f32 %v5225, %v5305
        %s5310 = sld [smem:[#allocation10 + $0x62]]
        %v5311 = vstv %s5310
        %v5312 = vmul.f32 %v5311, %v4741
        %v5313 = vmul.f32 %v5311, %v4742
        %v5314 = vmul.f32 %v5311, %v4743
        %v5318 = vrot.slane %v5312, 2
        %v5319 = vrot.slane %v5313, 2
        %v5320 = vsel %vm1118, %v5318, %v5319
        %v5321 = vrot.slane %v5314, 2
        %v5322 = vsel %vm1118, %v5319, %v5321
        %5323 = vrot.lane.b32.xlu0 %v5320, 126
        %v5324 = vpop.permute.xlu0 %5323
        %5325 = vrot.lane.b32.xlu0 %v5322, 126
        %v5326 = vpop.permute.xlu0 %5325
        %v5329 = vadd.f32 %v5245, %v5324
        %v5330 = vadd.f32 %v5246, %v5326
        %s5331 = sld [smem:[#allocation10 + $0x86]]
        %v5332 = vstv %s5331
        %v5333 = vmul.f32 %v5332, %v4741
        %v5334 = vmul.f32 %v5332, %v4742
        %v5335 = vmul.f32 %v5332, %v4743
        %v5339 = vrot.slane %v5333, 2
        %v5340 = vrot.slane %v5334, 2
        %v5341 = vsel %vm1118, %v5339, %v5340
        %v5342 = vrot.slane %v5335, 2
        %v5343 = vsel %vm1118, %v5340, %v5342
        %5344 = vrot.lane.b32.xlu0 %v5341, 126
        %v5345 = vpop.permute.xlu0 %5344
        %5346 = vrot.lane.b32.xlu0 %v5343, 126
        %v5347 = vpop.permute.xlu0 %5346
        %v5350 = vadd.f32 %v5266, %v5345
        %v5351 = vadd.f32 %v5267, %v5347
        %v5352 = vld [vmem:[%s3508] sm:$0xff]
        %v5353 = vld [vmem:[%s3508 + $0x8] sm:$0xff]
        %v5354 = vld [vmem:[%s3508 + $0x10] sm:$0x3]
        %s5355 = sld [smem:[#allocation10 + $0x1b]]
        %v5356 = vstv %s5355
        %v5357 = vmul.f32 %v5356, %v5352
        %v5358 = vmul.f32 %v5356, %v5353
        %v5359 = vadd.f32 %v5287, %v5357
        %v5360 = vadd.f32 %v5288, %v5358
        %s5361 = sld [smem:[#allocation10 + $0x3f]]
        %v5362 = vstv %s5361
        %v5363 = vmul.f32 %v5362, %v5352
        %v5364 = vmul.f32 %v5362, %v5353
        %v5365 = vadd.f32 %v5308, %v5363
        %v5366 = vadd.f32 %v5309, %v5364
        %s5367 = sld [smem:[#allocation10 + $0x63]]
        %v5368 = vstv %s5367
        %v5369 = vmul.f32 %v5368, %v5352
        %v5370 = vmul.f32 %v5368, %v5353
        %v5371 = vadd.f32 %v5329, %v5369
        %v5372 = vadd.f32 %v5330, %v5370
        %s5373 = sld [smem:[#allocation10 + $0x87]]
        %v5374 = vstv %s5373
        %v5375 = vmul.f32 %v5374, %v5352
        %v5376 = vmul.f32 %v5374, %v5353
        %v5377 = vadd.f32 %v5350, %v5375
        %v5378 = vadd.f32 %v5351, %v5376
        %s5379 = sld [smem:[#allocation10 + $0x1e]]
        %v5380 = vstv %s5379
        %v5381 = vmul.f32 %v5380, %v5352
        %v5382 = vmul.f32 %v5380, %v5353
        %v5383 = vmul.f32 %v5380, %v5354
        %v5387 = vrot.slane %v5381, 1
        %v5388 = vrot.slane %v5382, 1
        %v5389 = vsel %vm1049, %v5387, %v5388
        %v5390 = vrot.slane %v5383, 1
        %v5391 = vsel %vm1049, %v5388, %v5390
        %v5394 = vadd.f32 %v5359, %v5389
        %v5395 = vadd.f32 %v5360, %v5391
        %s5396 = sld [smem:[#allocation10 + $0x42]]
        %v5397 = vstv %s5396
        %v5398 = vmul.f32 %v5397, %v5352
        %v5399 = vmul.f32 %v5397, %v5353
        %v5400 = vmul.f32 %v5397, %v5354
        %v5404 = vrot.slane %v5398, 1
        %v5405 = vrot.slane %v5399, 1
        %v5406 = vsel %vm1049, %v5404, %v5405
        %v5407 = vrot.slane %v5400, 1
        %v5408 = vsel %vm1049, %v5405, %v5407
        %v5411 = vadd.f32 %v5365, %v5406
        %v5412 = vadd.f32 %v5366, %v5408
        %s5413 = sld [smem:[#allocation10 + $0x66]]
        %v5414 = vstv %s5413
        %v5415 = vmul.f32 %v5414, %v5352
        %v5416 = vmul.f32 %v5414, %v5353
        %v5417 = vmul.f32 %v5414, %v5354
        %v5421 = vrot.slane %v5415, 1
        %v5422 = vrot.slane %v5416, 1
        %v5423 = vsel %vm1049, %v5421, %v5422
        %v5424 = vrot.slane %v5417, 1
        %v5425 = vsel %vm1049, %v5422, %v5424
        %v5428 = vadd.f32 %v5371, %v5423
        %v5429 = vadd.f32 %v5372, %v5425
        %s5430 = sld [smem:[#allocation10 + $0x8a]]
        %v5431 = vstv %s5430
        %v5432 = vmul.f32 %v5431, %v5352
        %v5433 = vmul.f32 %v5431, %v5353
        %v5434 = vmul.f32 %v5431, %v5354
        %v5438 = vrot.slane %v5432, 1
        %v5439 = vrot.slane %v5433, 1
        %v5440 = vsel %vm1049, %v5438, %v5439
        %v5441 = vrot.slane %v5434, 1
        %v5442 = vsel %vm1049, %v5439, %v5441
        %v5445 = vadd.f32 %v5377, %v5440
        %v5446 = vadd.f32 %v5378, %v5442
        %s5447 = sld [smem:[#allocation10 + $0x21]]
        %v5448 = vstv %s5447
        %v5449 = vmul.f32 %v5448, %v5352
        %v5450 = vmul.f32 %v5448, %v5353
        %v5451 = vmul.f32 %v5448, %v5354
        %v5455 = vrot.slane %v5449, 2
        %v5456 = vrot.slane %v5450, 2
        %v5457 = vsel %vm1118, %v5455, %v5456
        %v5458 = vrot.slane %v5451, 2
        %v5459 = vsel %vm1118, %v5456, %v5458
        %v5462 = vadd.f32 %v5394, %v5457
        %v5463 = vadd.f32 %v5395, %v5459
        %s5464 = sld [smem:[#allocation10 + $0x45]]
        %v5465 = vstv %s5464
        %v5466 = vmul.f32 %v5465, %v5352
        %v5467 = vmul.f32 %v5465, %v5353
        %v5468 = vmul.f32 %v5465, %v5354
        %v5472 = vrot.slane %v5466, 2
        %v5473 = vrot.slane %v5467, 2
        %v5474 = vsel %vm1118, %v5472, %v5473
        %v5475 = vrot.slane %v5468, 2
        %v5476 = vsel %vm1118, %v5473, %v5475
        %v5479 = vadd.f32 %v5411, %v5474
        %v5480 = vadd.f32 %v5412, %v5476
        %s5481 = sld [smem:[#allocation10 + $0x69]]
        %v5482 = vstv %s5481
        %v5483 = vmul.f32 %v5482, %v5352
        %v5484 = vmul.f32 %v5482, %v5353
        %v5485 = vmul.f32 %v5482, %v5354
        %v5489 = vrot.slane %v5483, 2
        %v5490 = vrot.slane %v5484, 2
        %v5491 = vsel %vm1118, %v5489, %v5490
        %v5492 = vrot.slane %v5485, 2
        %v5493 = vsel %vm1118, %v5490, %v5492
        %v5496 = vadd.f32 %v5428, %v5491
        %v5497 = vadd.f32 %v5429, %v5493
        %s5498 = sld [smem:[#allocation10 + $0x8d]]
        %v5499 = vstv %s5498
        %v5500 = vmul.f32 %v5499, %v5352
        %v5501 = vmul.f32 %v5499, %v5353
        %v5502 = vmul.f32 %v5499, %v5354
        %v5506 = vrot.slane %v5500, 2
        %v5507 = vrot.slane %v5501, 2
        %v5508 = vsel %vm1118, %v5506, %v5507
        %v5509 = vrot.slane %v5502, 2
        %v5510 = vsel %vm1118, %v5507, %v5509
        %v5513 = vadd.f32 %v5445, %v5508
        %v5514 = vadd.f32 %v5446, %v5510
        %s5515 = sld [smem:[#allocation10 + $0x1c]]
        %v5516 = vstv %s5515
        %v5517 = vmul.f32 %v5516, %v5352
        %v5518 = vmul.f32 %v5516, %v5353
        %5521 = vrot.lane.b32.xlu0 %v5517, 127
        %v5522 = vpop.permute.xlu0 %5521
        %5523 = vrot.lane.b32.xlu0 %v5518, 127
        %v5524 = vpop.permute.xlu0 %5523
        %v5527 = vadd.f32 %v5462, %v5522
        %v5528 = vadd.f32 %v5463, %v5524
        %s5529 = sld [smem:[#allocation10 + $0x40]]
        %v5530 = vstv %s5529
        %v5531 = vmul.f32 %v5530, %v5352
        %v5532 = vmul.f32 %v5530, %v5353
        %5535 = vrot.lane.b32.xlu0 %v5531, 127
        %v5536 = vpop.permute.xlu0 %5535
        %5537 = vrot.lane.b32.xlu0 %v5532, 127
        %v5538 = vpop.permute.xlu0 %5537
        %v5541 = vadd.f32 %v5479, %v5536
        %v5542 = vadd.f32 %v5480, %v5538
        %s5543 = sld [smem:[#allocation10 + $0x64]]
        %v5544 = vstv %s5543
        %v5545 = vmul.f32 %v5544, %v5352
        %v5546 = vmul.f32 %v5544, %v5353
        %5549 = vrot.lane.b32.xlu0 %v5545, 127
        %v5550 = vpop.permute.xlu0 %5549
        %5551 = vrot.lane.b32.xlu0 %v5546, 127
        %v5552 = vpop.permute.xlu0 %5551
        %v5555 = vadd.f32 %v5496, %v5550
        %v5556 = vadd.f32 %v5497, %v5552
        %s5557 = sld [smem:[#allocation10 + $0x88]]
        %v5558 = vstv %s5557
        %v5559 = vmul.f32 %v5558, %v5352
        %v5560 = vmul.f32 %v5558, %v5353
        %5563 = vrot.lane.b32.xlu0 %v5559, 127
        %v5564 = vpop.permute.xlu0 %5563
        %5565 = vrot.lane.b32.xlu0 %v5560, 127
        %v5566 = vpop.permute.xlu0 %5565
        %v5569 = vadd.f32 %v5513, %v5564
        %v5570 = vadd.f32 %v5514, %v5566
        %s5571 = sld [smem:[#allocation10 + $0x1f]]
        %v5572 = vstv %s5571
        %v5573 = vmul.f32 %v5572, %v5352
        %v5574 = vmul.f32 %v5572, %v5353
        %v5575 = vmul.f32 %v5572, %v5354
        %v5579 = vrot.slane %v5573, 1
        %v5580 = vrot.slane %v5574, 1
        %v5581 = vsel %vm1049, %v5579, %v5580
        %v5582 = vrot.slane %v5575, 1
        %v5583 = vsel %vm1049, %v5580, %v5582
        %5584 = vrot.lane.b32.xlu0 %v5581, 127
        %v5585 = vpop.permute.xlu0 %5584
        %5586 = vrot.lane.b32.xlu0 %v5583, 127
        %v5587 = vpop.permute.xlu0 %5586
        %v5590 = vadd.f32 %v5527, %v5585
        %v5591 = vadd.f32 %v5528, %v5587
        %s5592 = sld [smem:[#allocation10 + $0x43]]
        %v5593 = vstv %s5592
        %v5594 = vmul.f32 %v5593, %v5352
        %v5595 = vmul.f32 %v5593, %v5353
        %v5596 = vmul.f32 %v5593, %v5354
        %v5600 = vrot.slane %v5594, 1
        %v5601 = vrot.slane %v5595, 1
        %v5602 = vsel %vm1049, %v5600, %v5601
        %v5603 = vrot.slane %v5596, 1
        %v5604 = vsel %vm1049, %v5601, %v5603
        %5605 = vrot.lane.b32.xlu0 %v5602, 127
        %v5606 = vpop.permute.xlu0 %5605
        %5607 = vrot.lane.b32.xlu0 %v5604, 127
        %v5608 = vpop.permute.xlu0 %5607
        %v5611 = vadd.f32 %v5541, %v5606
        %v5612 = vadd.f32 %v5542, %v5608
        %s5613 = sld [smem:[#allocation10 + $0x67]]
        %v5614 = vstv %s5613
        %v5615 = vmul.f32 %v5614, %v5352
        %v5616 = vmul.f32 %v5614, %v5353
        %v5617 = vmul.f32 %v5614, %v5354
        %v5621 = vrot.slane %v5615, 1
        %v5622 = vrot.slane %v5616, 1
        %v5623 = vsel %vm1049, %v5621, %v5622
        %v5624 = vrot.slane %v5617, 1
        %v5625 = vsel %vm1049, %v5622, %v5624
        %5626 = vrot.lane.b32.xlu0 %v5623, 127
        %v5627 = vpop.permute.xlu0 %5626
        %5628 = vrot.lane.b32.xlu0 %v5625, 127
        %v5629 = vpop.permute.xlu0 %5628
        %v5632 = vadd.f32 %v5555, %v5627
        %v5633 = vadd.f32 %v5556, %v5629
        %s5634 = sld [smem:[#allocation10 + $0x8b]]
        %v5635 = vstv %s5634
        %v5636 = vmul.f32 %v5635, %v5352
        %v5637 = vmul.f32 %v5635, %v5353
        %v5638 = vmul.f32 %v5635, %v5354
        %v5642 = vrot.slane %v5636, 1
        %v5643 = vrot.slane %v5637, 1
        %v5644 = vsel %vm1049, %v5642, %v5643
        %v5645 = vrot.slane %v5638, 1
        %v5646 = vsel %vm1049, %v5643, %v5645
        %5647 = vrot.lane.b32.xlu0 %v5644, 127
        %v5648 = vpop.permute.xlu0 %5647
        %5649 = vrot.lane.b32.xlu0 %v5646, 127
        %v5650 = vpop.permute.xlu0 %5649
        %v5653 = vadd.f32 %v5569, %v5648
        %v5654 = vadd.f32 %v5570, %v5650
        %s5655 = sld [smem:[#allocation10 + $0x22]]
        %v5656 = vstv %s5655
        %v5657 = vmul.f32 %v5656, %v5352
        %v5658 = vmul.f32 %v5656, %v5353
        %v5659 = vmul.f32 %v5656, %v5354
        %v5663 = vrot.slane %v5657, 2
        %v5664 = vrot.slane %v5658, 2
        %v5665 = vsel %vm1118, %v5663, %v5664
        %v5666 = vrot.slane %v5659, 2
        %v5667 = vsel %vm1118, %v5664, %v5666
        %5668 = vrot.lane.b32.xlu0 %v5665, 127
        %v5669 = vpop.permute.xlu0 %5668
        %5670 = vrot.lane.b32.xlu0 %v5667, 127
        %v5671 = vpop.permute.xlu0 %5670
        %v5674 = vadd.f32 %v5590, %v5669
        %v5675 = vadd.f32 %v5591, %v5671
        %s5676 = sld [smem:[#allocation10 + $0x46]]
        %v5677 = vstv %s5676
        %v5678 = vmul.f32 %v5677, %v5352
        %v5679 = vmul.f32 %v5677, %v5353
        %v5680 = vmul.f32 %v5677, %v5354
        %v5684 = vrot.slane %v5678, 2
        %v5685 = vrot.slane %v5679, 2
        %v5686 = vsel %vm1118, %v5684, %v5685
        %v5687 = vrot.slane %v5680, 2
        %v5688 = vsel %vm1118, %v5685, %v5687
        %5689 = vrot.lane.b32.xlu0 %v5686, 127
        %v5690 = vpop.permute.xlu0 %5689
        %5691 = vrot.lane.b32.xlu0 %v5688, 127
        %v5692 = vpop.permute.xlu0 %5691
        %v5695 = vadd.f32 %v5611, %v5690
        %v5696 = vadd.f32 %v5612, %v5692
        %s5697 = sld [smem:[#allocation10 + $0x6a]]
        %v5698 = vstv %s5697
        %v5699 = vmul.f32 %v5698, %v5352
        %v5700 = vmul.f32 %v5698, %v5353
        %v5701 = vmul.f32 %v5698, %v5354
        %v5705 = vrot.slane %v5699, 2
        %v5706 = vrot.slane %v5700, 2
        %v5707 = vsel %vm1118, %v5705, %v5706
        %v5708 = vrot.slane %v5701, 2
        %v5709 = vsel %vm1118, %v5706, %v5708
        %5710 = vrot.lane.b32.xlu0 %v5707, 127
        %v5711 = vpop.permute.xlu0 %5710
        %5712 = vrot.lane.b32.xlu0 %v5709, 127
        %v5713 = vpop.permute.xlu0 %5712
        %v5716 = vadd.f32 %v5632, %v5711
        %v5717 = vadd.f32 %v5633, %v5713
        %s5718 = sld [smem:[#allocation10 + $0x8e]]
        %v5719 = vstv %s5718
        %v5720 = vmul.f32 %v5719, %v5352
        %v5721 = vmul.f32 %v5719, %v5353
        %v5722 = vmul.f32 %v5719, %v5354
        %v5726 = vrot.slane %v5720, 2
        %v5727 = vrot.slane %v5721, 2
        %v5728 = vsel %vm1118, %v5726, %v5727
        %v5729 = vrot.slane %v5722, 2
        %v5730 = vsel %vm1118, %v5727, %v5729
        %5731 = vrot.lane.b32.xlu0 %v5728, 127
        %v5732 = vpop.permute.xlu0 %5731
        %5733 = vrot.lane.b32.xlu0 %v5730, 127
        %v5734 = vpop.permute.xlu0 %5733
        %v5737 = vadd.f32 %v5653, %v5732
        %v5738 = vadd.f32 %v5654, %v5734
        %s5739 = sld [smem:[#allocation10 + $0x1d]]
        %v5740 = vstv %s5739
        %v5741 = vmul.f32 %v5740, %v5352
        %v5742 = vmul.f32 %v5740, %v5353
        %5745 = vrot.lane.b32.xlu0 %v5741, 126
        %v5746 = vpop.permute.xlu0 %5745
        %5747 = vrot.lane.b32.xlu0 %v5742, 126
        %v5748 = vpop.permute.xlu0 %5747
        %v5751 = vadd.f32 %v5674, %v5746
        %v5752 = vadd.f32 %v5675, %v5748
        %s5753 = sld [smem:[#allocation10 + $0x41]]
        %v5754 = vstv %s5753
        %v5755 = vmul.f32 %v5754, %v5352
        %v5756 = vmul.f32 %v5754, %v5353
        %5759 = vrot.lane.b32.xlu0 %v5755, 126
        %v5760 = vpop.permute.xlu0 %5759
        %5761 = vrot.lane.b32.xlu0 %v5756, 126
        %v5762 = vpop.permute.xlu0 %5761
        %v5765 = vadd.f32 %v5695, %v5760
        %v5766 = vadd.f32 %v5696, %v5762
        %s5767 = sld [smem:[#allocation10 + $0x65]]
        %v5768 = vstv %s5767
        %v5769 = vmul.f32 %v5768, %v5352
        %v5770 = vmul.f32 %v5768, %v5353
        %5773 = vrot.lane.b32.xlu0 %v5769, 126
        %v5774 = vpop.permute.xlu0 %5773
        %5775 = vrot.lane.b32.xlu0 %v5770, 126
        %v5776 = vpop.permute.xlu0 %5775
        %v5779 = vadd.f32 %v5716, %v5774
        %v5780 = vadd.f32 %v5717, %v5776
        %s5781 = sld [smem:[#allocation10 + $0x89]]
        %v5782 = vstv %s5781
        %v5783 = vmul.f32 %v5782, %v5352
        %v5784 = vmul.f32 %v5782, %v5353
        %5787 = vrot.lane.b32.xlu0 %v5783, 126
        %v5788 = vpop.permute.xlu0 %5787
        %5789 = vrot.lane.b32.xlu0 %v5784, 126
        %v5790 = vpop.permute.xlu0 %5789
        %v5793 = vadd.f32 %v5737, %v5788
        %v5794 = vadd.f32 %v5738, %v5790
        %s5795 = sld [smem:[#allocation10 + $0x20]]
        %v5796 = vstv %s5795
        %v5797 = vmul.f32 %v5796, %v5352
        %v5798 = vmul.f32 %v5796, %v5353
        %v5799 = vmul.f32 %v5796, %v5354
        %v5803 = vrot.slane %v5797, 1
        %v5804 = vrot.slane %v5798, 1
        %v5805 = vsel %vm1049, %v5803, %v5804
        %v5806 = vrot.slane %v5799, 1
        %v5807 = vsel %vm1049, %v5804, %v5806
        %5808 = vrot.lane.b32.xlu0 %v5805, 126
        %v5809 = vpop.permute.xlu0 %5808
        %5810 = vrot.lane.b32.xlu0 %v5807, 126
        %v5811 = vpop.permute.xlu0 %5810
        %v5814 = vadd.f32 %v5751, %v5809
        %v5815 = vadd.f32 %v5752, %v5811
        %s5816 = sld [smem:[#allocation10 + $0x44]]
        %v5817 = vstv %s5816
        %v5818 = vmul.f32 %v5817, %v5352
        %v5819 = vmul.f32 %v5817, %v5353
        %v5820 = vmul.f32 %v5817, %v5354
        %v5824 = vrot.slane %v5818, 1
        %v5825 = vrot.slane %v5819, 1
        %v5826 = vsel %vm1049, %v5824, %v5825
        %v5827 = vrot.slane %v5820, 1
        %v5828 = vsel %vm1049, %v5825, %v5827
        %5829 = vrot.lane.b32.xlu0 %v5826, 126
        %v5830 = vpop.permute.xlu0 %5829
        %5831 = vrot.lane.b32.xlu0 %v5828, 126
        %v5832 = vpop.permute.xlu0 %5831
        %v5835 = vadd.f32 %v5765, %v5830
        %v5836 = vadd.f32 %v5766, %v5832
        %s5837 = sld [smem:[#allocation10 + $0x68]]
        %v5838 = vstv %s5837
        %v5839 = vmul.f32 %v5838, %v5352
        %v5840 = vmul.f32 %v5838, %v5353
        %v5841 = vmul.f32 %v5838, %v5354
        %v5845 = vrot.slane %v5839, 1
        %v5846 = vrot.slane %v5840, 1
        %v5847 = vsel %vm1049, %v5845, %v5846
        %v5848 = vrot.slane %v5841, 1
        %v5849 = vsel %vm1049, %v5846, %v5848
        %5850 = vrot.lane.b32.xlu0 %v5847, 126
        %v5851 = vpop.permute.xlu0 %5850
        %5852 = vrot.lane.b32.xlu0 %v5849, 126
        %v5853 = vpop.permute.xlu0 %5852
        %v5856 = vadd.f32 %v5779, %v5851
        %v5857 = vadd.f32 %v5780, %v5853
        %s5858 = sld [smem:[#allocation10 + $0x8c]]
        %v5859 = vstv %s5858
        %v5860 = vmul.f32 %v5859, %v5352
        %v5861 = vmul.f32 %v5859, %v5353
        %v5862 = vmul.f32 %v5859, %v5354
        %v5866 = vrot.slane %v5860, 1
        %v5867 = vrot.slane %v5861, 1
        %v5868 = vsel %vm1049, %v5866, %v5867
        %v5869 = vrot.slane %v5862, 1
        %v5870 = vsel %vm1049, %v5867, %v5869
        %5871 = vrot.lane.b32.xlu0 %v5868, 126
        %v5872 = vpop.permute.xlu0 %5871
        %5873 = vrot.lane.b32.xlu0 %v5870, 126
        %v5874 = vpop.permute.xlu0 %5873
        %v5877 = vadd.f32 %v5793, %v5872
        %v5878 = vadd.f32 %v5794, %v5874
        %s5879 = sld [smem:[#allocation10 + $0x23]]
        %v5880 = vstv %s5879
        %v5881 = vmul.f32 %v5880, %v5352
        %v5882 = vmul.f32 %v5880, %v5353
        %v5883 = vmul.f32 %v5880, %v5354
        %v5887 = vrot.slane %v5881, 2
        %v5888 = vrot.slane %v5882, 2
        %v5889 = vsel %vm1118, %v5887, %v5888
        %v5890 = vrot.slane %v5883, 2
        %v5891 = vsel %vm1118, %v5888, %v5890
        %5892 = vrot.lane.b32.xlu0 %v5889, 126
        %v5893 = vpop.permute.xlu0 %5892
        %5894 = vrot.lane.b32.xlu0 %v5891, 126
        %v5895 = vpop.permute.xlu0 %5894
        %v5898 = vadd.f32 %v5814, %v5893
        %v5899 = vadd.f32 %v5815, %v5895
        %s5900 = sld [smem:[#allocation10 + $0x47]]
        %v5901 = vstv %s5900
        %v5902 = vmul.f32 %v5901, %v5352
        %v5903 = vmul.f32 %v5901, %v5353
        %v5904 = vmul.f32 %v5901, %v5354
        %v5908 = vrot.slane %v5902, 2
        %v5909 = vrot.slane %v5903, 2
        %v5910 = vsel %vm1118, %v5908, %v5909
        %v5911 = vrot.slane %v5904, 2
        %v5912 = vsel %vm1118, %v5909, %v5911
        %5913 = vrot.lane.b32.xlu0 %v5910, 126
        %v5914 = vpop.permute.xlu0 %5913
        %5915 = vrot.lane.b32.xlu0 %v5912, 126
        %v5916 = vpop.permute.xlu0 %5915
        %v5919 = vadd.f32 %v5835, %v5914
        %v5920 = vadd.f32 %v5836, %v5916
        %s5921 = sld [smem:[#allocation10 + $0x6b]]
        %v5922 = vstv %s5921
        %v5923 = vmul.f32 %v5922, %v5352
        %v5924 = vmul.f32 %v5922, %v5353
        %v5925 = vmul.f32 %v5922, %v5354
        %v5929 = vrot.slane %v5923, 2
        %v5930 = vrot.slane %v5924, 2
        %v5931 = vsel %vm1118, %v5929, %v5930
        %v5932 = vrot.slane %v5925, 2
        %v5933 = vsel %vm1118, %v5930, %v5932
        %5934 = vrot.lane.b32.xlu0 %v5931, 126
        %v5935 = vpop.permute.xlu0 %5934
        %5936 = vrot.lane.b32.xlu0 %v5933, 126
        %v5937 = vpop.permute.xlu0 %5936
        %v5940 = vadd.f32 %v5856, %v5935
        %v5941 = vadd.f32 %v5857, %v5937
        %s5942 = sld [smem:[#allocation10 + $0x8f]]
        %v5943 = vstv %s5942
        %v5944 = vmul.f32 %v5943, %v5352
        %v5945 = vmul.f32 %v5943, %v5353
        %v5946 = vmul.f32 %v5943, %v5354
        %v5950 = vrot.slane %v5944, 2
        %v5951 = vrot.slane %v5945, 2
        %v5952 = vsel %vm1118, %v5950, %v5951
        %v5953 = vrot.slane %v5946, 2
        %v5954 = vsel %vm1118, %v5951, %v5953
        %5955 = vrot.lane.b32.xlu0 %v5952, 126
        %v5956 = vpop.permute.xlu0 %5955
        %5957 = vrot.lane.b32.xlu0 %v5954, 126
        %v5958 = vpop.permute.xlu0 %5957
        %v5961 = vadd.f32 %v5877, %v5956
        %v5962 = vadd.f32 %v5878, %v5958
        %v5963 = vmax.f32 %v5898, 0.0
        %v5964 = vmax.f32 %v5899, 0.0
        %vm5965 = vcmask 130048
        %5966 = vst.msk [vmem:[%s390] sm:$0xff] %vm5965, %v5963
        %5967 = vst.msk [vmem:[%s390 + $0x8] sm:$0xff] %vm5965, %v5964
        %v5968 = vmax.f32 %v5919, 0.0
        %v5969 = vmax.f32 %v5920, 0.0
        %s5970 = scalar_lea.vmem %s390, 16 [#allocation14]
        %5971 = vst.msk [vmem:[%s5970] sm:$0xff] %vm5965, %v5968
        %5972 = vst.msk [vmem:[%s5970 + $0x8] sm:$0xff] %vm5965, %v5969
        %v5973 = vmax.f32 %v5940, 0.0
        %v5974 = vmax.f32 %v5941, 0.0
        %s5975 = scalar_lea.vmem %s390, 32 [#allocation14]
        %5976 = vst.msk [vmem:[%s5975] sm:$0xff] %vm5965, %v5973
        %5977 = vst.msk [vmem:[%s5975 + $0x8] sm:$0xff] %vm5965, %v5974
        %v5978 = vmax.f32 %v5961, 0.0
        %v5979 = vmax.f32 %v5962, 0.0
        %s5980 = scalar_lea.vmem %s390, 48 [#allocation14]
        %5981 = vst.msk [vmem:[%s5980] sm:$0xff] %vm5965, %v5978
        %5982 = vst.msk [vmem:[%s5980 + $0x8] sm:$0xff] %vm5965, %v5979
        %s5983 = sand.u32 %s214, 1
        %s5984 = scalar_lea.sflag [#allocation6], %s5983
        %s5985 = sand.u32 %s214, 1
        %s5986 = smul.addr %s5985, 64
        %s5987 = scalar_lea.vmem [#allocation14], %s5986
        // Predicated region
        $region73: #{tpu_custom_call.1} parent=51 // pred_check
          %p5988 = pneg %p224
        $region74: #{tpu_custom_call.1} parent=51 // pred_check_branch
          %5990 = sbr.rel (%p5988) target = $region76
        $region75: #{tpu_custom_call.1} parent=51 // pred_region
          %s5992 = ssub.s32 1024, 1024
          %5993 = vsyncadd %s5984, %s5992
          %s5994 = smul.addr %s28, 8
          %s5995 = smul.addr %s5994, 128
          %s5996 = scalar_lea.hbm %s8, %s5995
          %s5997 = sshll.u32 %s5987, 4
          %s5998 = int_to_ptr.vmem [resolvable:$true] %s5997
          %6003 = dma.vmem_to_hbm [thread:$0]  %s5998, 1024, %s5996, %s5984, 128, 128, 8
        $region76: #{tpu_custom_call.1} parent=51 // pred_fallthru
          _
      $region52: #{tpu_custom_call.1} parent=5 // pred_fallthru
        _
      %p6004 = scmp.le.s32.totalorder 2, %s23
      // Predicated region
      $region77: #{tpu_custom_call.1} parent=5 // pred_check
        %p6005 = pneg %p6004
      $region78: #{tpu_custom_call.1} parent=5 // pred_check_branch
        %6007 = sbr.rel (%p6005) target = $region80
      $region79: #{tpu_custom_call.1} parent=5 // pred_region
        %s6008 = ssub.s32 %s23, 2
        // Predicated region
        $region81: #{tpu_custom_call.1} parent=79 // pred_check
          %p6009 = pneg %p230
        $region82: #{tpu_custom_call.1} parent=79 // pred_check_branch
          %6011 = sbr.rel (%p6009) target = $region84
        $region83: #{tpu_custom_call.1} parent=79 // pred_region
          %s6012 = sand.u32 %s215, 1
          %s6013 = scalar_lea.sflag [#allocation6], %s6012
          %s6014 = sand.u32 %s215, 1
          %s6015 = smul.addr %s6014, 64
          %s6016 = scalar_lea.vmem [#allocation14], %s6015
          %6017 = dma.done %s6013, 1024
        $region84: #{tpu_custom_call.1} parent=79 // pred_fallthru
          _
      $region80: #{tpu_custom_call.1} parent=5 // pred_fallthru
        _
    $region6: #{tpu_custom_call.1} parent=1 // loop_footer
      %s27 = sadd.s32 1, %s23
    $region7: #{tpu_custom_call.1} parent=1 // loop_footer_branch
      %22 = sbr.rel target = $region3
    $region8: #{tpu_custom_call.1} parent=1 // loop_exit
      _
    %6018 = vsyncpa [#allocation5], 1
    %s6019 = scalar_lea.sflag [#allocation5], 1
    %6020 = vsyncpa %s6019, 1
    %6021 = vsyncpa [#allocation6], 1
    %s6022 = scalar_lea.sflag [#allocation6], 1
    %6023 = vsyncpa %s6022, 1
    %6024 = vsyncpa [#allocation7], 1
    %s6025 = scalar_lea.sflag [#allocation7], 1
    %6026 = vsyncpa %s6025, 1
    %6027 = vsyncpa [#allocation9], 1
    %6028 = vsyncpa [#allocation12], 1

</llo_original>
